<compile_context>
chip_gen: v5e
topology: v5e:2x2
jax: 0.10.0
libtpu: 0.0.40
codegen_flags: <defaults>
</compile_context>

<pallas_src>
import jax
import jax.numpy as jnp
from jax.experimental import pallas as pl
from jax.experimental.pallas import tpu as pltpu

OUTC = 32            # SpecialBlock out_channels
NUM_CLASSES = 7
OUT_PAD = 128        # lane-dense padded FC output width (first 14 are real logits)
BN_EPS = 1e-5
MXU_DTYPE = jnp.bfloat16   # branch-conv MXU operand dtype (f32 accumulation)


def soundnet_kernel(x_ref, w0_ref, bns_ref, bnb_ref, wl_ref, wm_ref, wh_ref,
                    wfc_ref, bfc_ref, out_ref):
    bt = out_ref.shape[0]
    N = x_ref.shape[-1]           # bt * L lanes (samples stacked along lanes)
    L = N // bt

    x = x_ref[...]                # (8, N) f32
    w0 = w0_ref[...]              # (32, 24)   f32  Conv1d(8,32,3)  tap-major
    wl = wl_ref[...]              # (32, 96)   bf16 k=3
    wm = wm_ref[...]              # (32, 160)  bf16 k=5
    wh = wh_ref[...]              # (32, 224)  bf16 k=7
    bn_s = bns_ref[...]           # (3, 32, 1) f32  (loaded once per grid step)
    bn_b = bnb_ref[...]           # (3, 32, 1) f32

    # Per-sample position within its L-lane segment (reused by every im2col mask).
    pos_l = jax.lax.broadcasted_iota(jnp.int32, (1, L), 1)
    pos = jnp.concatenate([pos_l] * bt, axis=-1)             # (1, N)

    def im2col(a, k, dtype):
        # a: (C, N) f32 -> (C*k, N) `dtype`, taps stacked tap-major along sublanes.
        # Each tap offset d = j - pad is an XLU lane rotation of the whole (C, N)
        # tile; the iota mask zeroes both the 'same'-padding edge positions and the
        # lanes that wrapped across a sample boundary (|d| <= 3 << L).
        pad = (k - 1) // 2
        taps = []
        for j in range(k):
            d = j - pad
            if d == 0:
                t = a
            else:
                t = pltpu.roll(a, shift=(-d) % N, axis=1)    # t[:, i] = a[:, i + d]
                keep = (pos < L - d) if d > 0 else (pos >= -d)
                t = jnp.where(keep, t, 0.0)
            taps.append(t.astype(dtype))
        return jnp.concatenate(taps, axis=0)                 # (C*k, N)

    # --- NormBlock: per-sample (x - min) / (max - min) over all 8*L elements ---
    colmin = jnp.min(x, axis=0, keepdims=True)               # (1, N)
    colmax = jnp.max(x, axis=0, keepdims=True)               # (1, N)
    xn_parts = []
    for s in range(bt):                                      # scalar-only per-sample work
        sl = slice(s * L, (s + 1) * L)                       # lane-aligned slice
        mn = jnp.min(colmin[:, sl], axis=-1, keepdims=True)  # (1, 1)
        mx = jnp.max(colmax[:, sl], axis=-1, keepdims=True)  # (1, 1)
        # Exact divide on the (1,1) scale (review: approx reciprocal was the weakest
        # numeric link).  NOTE: a constant sample (mx == mn) yields inf/NaN, matching
        # the PyTorch/JAX reference by design.
        xn_parts.append((x[:, sl] - mn) * (1.0 / (mx - mn)))
    xn = jnp.concatenate(xn_parts, axis=-1)                  # (8, N) f32

    # --- SpecialBlock(8, 32, 5): conv0 -> 3 x (BN + ReLU + conv) ---
    out0 = jnp.dot(w0, im2col(xn, 3, jnp.float32),
                   preferred_element_type=jnp.float32)       # (32, N) f32

    def seg_max(a):
        # Per-sample per-channel max over L.  MaxPool1d(4, stride=2, padding=1)
        # followed by AdaptiveMaxPool1d(1): the overlapping stride-2 windows
        # (PyTorch pads with -inf) cover every position 0..L-1, so the composition
        # is exactly the global max over L.  Lane-aligned static slices; tiny XLU work.
        return jnp.concatenate(
            [jnp.max(a[:, s * L:(s + 1) * L], axis=-1, keepdims=True)
             for s in range(bt)], axis=-1)                   # (32, bt)

    def branch(i, w, k):
        # BatchNorm1d (eval mode, folded to scale/shift) + ReLU + Conv1d(k).
        act = jnp.maximum(out0 * bn_s[i] + bn_b[i], 0.0)     # f32 VPU
        y = jnp.dot(w, im2col(act, k, MXU_DTYPE),
                    preferred_element_type=jnp.float32)      # (32, N) f32
        return seg_max(y)                                    # branch output dies here

    low = branch(0, wl, 3)
    mid = branch(1, wm, 5)
    high = branch(2, wh, 7)

    # The three repeated `out0` feature slots of the original torch.cat are folded
    # into the FC weight (wrapper), so only [low, mid, high, out0] maxes are needed
    # and no (192, N) concat is ever materialized.
    feats = jnp.concatenate([low, mid, high, seg_max(out0)], axis=0)   # (128, bt)

    # TODO(synk): Dropout(0.2) is identity in eval mode; stochastic mask omitted.
    # FC kept in f32 (tiny).  wfc is zero-padded to 128 output lanes so the final
    # store is a dense (bt, 128) tile.
    logits = jax.lax.dot_general(
        feats, wfc_ref[...],
        dimension_numbers=(((0,), (0,)), ((), ())),
        preferred_element_type=jnp.float32)                  # (bt, 128)
    out_ref[...] = logits + bfc_ref[...]


def _flatten_conv_tap_major(w):
    # (Cout, Cin, k) -> (Cout, k*Cin) matching the im2col tap-major row order.
    o, c, k = w.shape
    return jnp.transpose(w, (0, 2, 1)).reshape(o, k * c)


def _fold_fc(wfc, bfc):
    # wfc: (14, 192) torch Linear layout.  Original feature order is
    # [low, out0, mid, out0, high, out0] (6 x 32).  Fold the three out0 slots and
    # reorder to [low, mid, high, out0]; zero-pad outputs to OUT_PAD lanes.
    wt = wfc.T                                                   # (192, 14)
    w_fold = jnp.concatenate(
        [wt[0:32], wt[64:96], wt[128:160],
         wt[32:64] + wt[96:128] + wt[160:192]], axis=0)          # (128, 14)
    w_pad = jnp.pad(w_fold, ((0, 0), (0, OUT_PAD - wt.shape[1])))
    b_pad = jnp.pad(bfc, (0, OUT_PAD - bfc.shape[0]))[None, :]   # (1, OUT_PAD)
    return w_pad, b_pad


def _pick_bt(batch):
    # (8,128) output tiles are sublane/lane-dense; drop to 4 only when 8 would leave
    # a single grid block (v7x: two TensorCores share the "parallel" batch axis).
    if pl.cdiv(batch, 8) >= 2 or batch <= 4:
        return 8
    return 4


def soundnet_forward(x, params, *, bt=None):
    """x: (B, 8, L) float32 -> (out_a (B, 7), out_b (B, 7))."""
    B, C, L = x.shape
    assert C == 8 and L % 128 == 0
    if bt is None:
        bt = _pick_bt(B)
    w0, wl, wm, wh, bn_scale, bn_shift, wfc, bfc = params

    # Wrapper-side layout plumbing only (no compute hoisted out of the kernel):
    #  * conv weights flattened tap-major; branch weights pre-cast to bf16
    #  * FC weight folded + zero-padded to 128 lanes
    #  * input transposed to (8, B*L) so BT samples stack along the lane axis
    w0f = _flatten_conv_tap_major(w0)                        # (32, 24)  f32
    wlf = _flatten_conv_tap_major(wl).astype(MXU_DTYPE)      # (32, 96)  bf16
    wmf = _flatten_conv_tap_major(wm).astype(MXU_DTYPE)      # (32, 160) bf16
    whf = _flatten_conv_tap_major(wh).astype(MXU_DTYPE)      # (32, 224) bf16
    wfc_fold, bfc_pad = _fold_fc(wfc, bfc)

    # Pad the batch to a multiple of bt (repeat last sample: an all-zero pad sample
    # would hit the NormBlock divide-by-zero).
    pad = (-B) % bt
    if pad:
        x = jnp.concatenate([x, jnp.broadcast_to(x[-1:], (pad, C, L))], axis=0)
    bp = B + pad
    g = bp // bt
    xt = jnp.transpose(x, (1, 0, 2)).reshape(C, bp * L)      # (8, bp*L) lane-dense

    out = pl.pallas_call(
        soundnet_kernel,
        out_shape=jax.ShapeDtypeStruct((bp, OUT_PAD), jnp.float32),
        grid_spec=pltpu.PrefetchScalarGridSpec(
            num_scalar_prefetch=0,
            grid=(g,),
            in_specs=[
                pl.BlockSpec((C, bt * L), lambda b: (0, b)),
                pl.BlockSpec(w0f.shape, lambda b: (0, 0)),
                pl.BlockSpec(bn_scale.shape, lambda b: (0, 0, 0)),
                pl.BlockSpec(bn_shift.shape, lambda b: (0, 0, 0)),
                pl.BlockSpec(wlf.shape, lambda b: (0, 0)),
                pl.BlockSpec(wmf.shape, lambda b: (0, 0)),
                pl.BlockSpec(whf.shape, lambda b: (0, 0)),
                pl.BlockSpec(wfc_fold.shape, lambda b: (0, 0)),
                pl.BlockSpec(bfc_pad.shape, lambda b: (0, 0)),
            ],
            out_specs=pl.BlockSpec((bt, OUT_PAD), lambda b: (b, 0)),
        ),
        # Batch blocks are independent -> "parallel" lets Mosaic shard the grid
        # across both TensorCores on v7x (harmless on single-TC v5e/v6e).
        # vmem_limit raised above v5e's 16 MiB default scoped limit for larger L.
        compiler_params=pltpu.CompilerParams(
            dimension_semantics=("parallel",),
            vmem_limit_bytes=32 * 1024 * 1024),
    )(xt, w0f, bn_scale, bn_shift, wlf, wmf, whf, wfc_fold, bfc_pad)

    logits = out[:B, :2 * NUM_CLASSES]
    return logits[:, :NUM_CLASSES], logits[:, NUM_CLASSES:]


def init_params(key):
    ks = jax.random.split(key, 10)

    def conv_w(k, shape):
        fan_in = shape[1] * shape[2]
        bound = 1.0 / jnp.sqrt(jnp.float32(fan_in))
        return jax.random.uniform(k, shape, jnp.float32, -bound, bound)

    w0 = conv_w(ks[0], (OUTC, 8, 3))
    wl = conv_w(ks[1], (OUTC, OUTC, 3))
    wm = conv_w(ks[2], (OUTC, OUTC, 5))
    wh = conv_w(ks[3], (OUTC, OUTC, 7))

    # BatchNorm1d params for low/middle/high branches (eval mode, folded).
    gamma = jax.random.uniform(ks[4], (3, OUTC), jnp.float32, 0.5, 1.5)
    beta = 0.1 * jax.random.normal(ks[5], (3, OUTC), jnp.float32)
    rmean = 0.1 * jax.random.normal(ks[6], (3, OUTC), jnp.float32)
    rvar = jax.random.uniform(ks[7], (3, OUTC), jnp.float32, 0.5, 1.5)
    scale = gamma / jnp.sqrt(rvar + BN_EPS)
    shift = beta - rmean * scale
    bn_scale = scale[:, :, None]      # (3, 32, 1)
    bn_shift = shift[:, :, None]      # (3, 32, 1)

    feat = 6 * OUTC                   # 192 = 96 * 2
    bound = 1.0 / jnp.sqrt(jnp.float32(feat))
    wfc = jax.random.uniform(ks[8], (2 * NUM_CLASSES, feat), jnp.float32, -bound, bound)
    bfc = jax.random.uniform(ks[9], (2 * NUM_CLASSES,), jnp.float32, -bound, bound)
    return (w0, wl, wm, wh, bn_scale, bn_shift, wfc, bfc)


def reference_forward(x, params):
    """Pure-JAX reference mirroring the PyTorch forward (eval mode)."""
    w0, wl, wm, wh, bn_scale, bn_shift, wfc, bfc = params
    B, _, L = x.shape

    flat = x.reshape(B, -1)
    flat = flat - flat.min(axis=1, keepdims=True)
    flat = flat / flat.max(axis=1, keepdims=True)
    xn = flat.reshape(-1, 8, L)

    def conv(inp, w, pad):
        return jax.lax.conv_general_dilated(
            inp, w, window_strides=(1,), padding=[(pad, pad)],
            dimension_numbers=('NCH', 'OIH', 'NCH'))

    out0 = conv(xn, w0, 1)

    def bn_relu(i):
        return jnp.maximum(out0 * bn_scale[i] + bn_shift[i], 0.0)

    low = conv(bn_relu(0), wl, 1)
    mid = conv(bn_relu(1), wm, 2)
    high = conv(bn_relu(2), wh, 3)
    feat = jnp.concatenate([low, out0, mid, out0, high, out0], axis=1)

    pooled = jax.lax.reduce_window(
        feat, -jnp.inf, jax.lax.max,
        window_dimensions=(1, 1, 4), window_strides=(1, 1, 2),
        padding=[(0, 0), (0, 0), (1, 1)])           # MaxPool1d(4, 2, 1)
    gmax = pooled.max(axis=-1)                      # AdaptiveMaxPool1d(1)

    logits = gmax @ wfc.T + bfc
    return logits[:, :NUM_CLASSES], logits[:, NUM_CLASSES:]


if __name__ == "__main__":
    key = jax.random.PRNGKey(0)
    kx, kp = jax.random.split(key)

    B, C, L = 16, 8, 256                # small frame_len consistent with the module
    x = jax.random.normal(kx, (B, C, L), jnp.float32)
    params = init_params(kp)

    out_a, out_b = soundnet_forward(x, params)      # bt=8 -> grid of 2 blocks
    out_a = jax.block_until_ready(out_a)
    out_b = jax.block_until_ready(out_b)

    ref_a, ref_b = reference_forward(x, params)
    ref_a = jax.block_until_ready(ref_a)
    ref_b = jax.block_until_ready(ref_b)

    assert out_a.shape == (B, NUM_CLASSES) and out_b.shape == (B, NUM_CLASSES)
    assert jnp.allclose(out_a, ref_a, atol=5e-3, rtol=5e-3)
    assert jnp.allclose(out_b, ref_b, atol=5e-3, rtol=5e-3)

    print("KERNEL_OK")
</pallas_src>

<mosaic_0001>
module attributes {stable_mosaic.version = 11 : i64} {
  func.func @soundnet_kernel(%arg0: i32, %arg1: memref<8x2048xf32, #tpu.memory_space<vmem>>, %arg2: memref<32x24xf32, #tpu.memory_space<vmem>>, %arg3: memref<3x32x1xf32, #tpu.memory_space<vmem>>, %arg4: memref<3x32x1xf32, #tpu.memory_space<vmem>>, %arg5: memref<32x96xbf16, #tpu.memory_space<vmem>>, %arg6: memref<32x160xbf16, #tpu.memory_space<vmem>>, %arg7: memref<32x224xbf16, #tpu.memory_space<vmem>>, %arg8: memref<128x128xf32, #tpu.memory_space<vmem>>, %arg9: memref<1x128xf32, #tpu.memory_space<vmem>>, %arg10: memref<8x128xf32, #tpu.memory_space<vmem>>) attributes {dimension_semantics = [#tpu.dimension_semantics<parallel>], iteration_bounds = array<i64: 2>, scalar_prefetch = 0 : i64, scratch_operands = 0 : i64, tpu.core_type = #tpu.core_type<tc>, window_params = [{transform_indices = @transform_0, window_bounds = array<i64: 8, 2048>}, {pipeline_mode = #tpu.pipeline_mode<synchronous>, transform_indices = @transform_1, window_bounds = array<i64: 32, 24>}, {pipeline_mode = #tpu.pipeline_mode<synchronous>, transform_indices = @transform_2, window_bounds = array<i64: 3, 32, 1>}, {pipeline_mode = #tpu.pipeline_mode<synchronous>, transform_indices = @transform_3, window_bounds = array<i64: 3, 32, 1>}, {pipeline_mode = #tpu.pipeline_mode<synchronous>, transform_indices = @transform_4, window_bounds = array<i64: 32, 96>}, {pipeline_mode = #tpu.pipeline_mode<synchronous>, transform_indices = @transform_5, window_bounds = array<i64: 32, 160>}, {pipeline_mode = #tpu.pipeline_mode<synchronous>, transform_indices = @transform_6, window_bounds = array<i64: 32, 224>}, {pipeline_mode = #tpu.pipeline_mode<synchronous>, transform_indices = @transform_7, window_bounds = array<i64: 128, 128>}, {pipeline_mode = #tpu.pipeline_mode<synchronous>, transform_indices = @transform_8, window_bounds = array<i64: 1, 128>}, {transform_indices = @transform_9, window_bounds = array<i64: 8, 128>}]} {
    %c0 = arith.constant 0 : index
    %c0_0 = arith.constant 0 : index
    %0 = vector.load %arg1[%c0, %c0_0] : memref<8x2048xf32, #tpu.memory_space<vmem>>, vector<8x2048xf32>
    %c0_1 = arith.constant 0 : index
    %c0_2 = arith.constant 0 : index
    %1 = vector.load %arg2[%c0_1, %c0_2] : memref<32x24xf32, #tpu.memory_space<vmem>>, vector<32x24xf32>
    %c0_3 = arith.constant 0 : index
    %c0_4 = arith.constant 0 : index
    %2 = vector.load %arg5[%c0_3, %c0_4] : memref<32x96xbf16, #tpu.memory_space<vmem>>, vector<32x96xbf16>
    %c0_5 = arith.constant 0 : index
    %c0_6 = arith.constant 0 : index
    %3 = vector.load %arg6[%c0_5, %c0_6] : memref<32x160xbf16, #tpu.memory_space<vmem>>, vector<32x160xbf16>
    %c0_7 = arith.constant 0 : index
    %c0_8 = arith.constant 0 : index
    %4 = vector.load %arg7[%c0_7, %c0_8] : memref<32x224xbf16, #tpu.memory_space<vmem>>, vector<32x224xbf16>
    %c0_9 = arith.constant 0 : index
    %c0_10 = arith.constant 0 : index
    %c0_11 = arith.constant 0 : index
    %5 = vector.load %arg3[%c0_9, %c0_10, %c0_11] : memref<3x32x1xf32, #tpu.memory_space<vmem>>, vector<3x32x1xf32>
    %c0_12 = arith.constant 0 : index
    %c0_13 = arith.constant 0 : index
    %c0_14 = arith.constant 0 : index
    %6 = vector.load %arg4[%c0_12, %c0_13, %c0_14] : memref<3x32x1xf32, #tpu.memory_space<vmem>>, vector<3x32x1xf32>
    %7 = tpu.iota {dimensions = array<i32: 1>} : vector<1x256xi32>
    %8 = tpu.concatenate %7, %7, %7, %7, %7, %7, %7, %7 in 1 : vector<1x256xi32>, vector<1x256xi32>, vector<1x256xi32>, vector<1x256xi32>, vector<1x256xi32>, vector<1x256xi32>, vector<1x256xi32>, vector<1x256xi32> -> vector<1x2048xi32>
    %cst = arith.constant dense<0x7F800000> : vector<2048xf32>
    %9 = vector.multi_reduction <minimumf>, %0, %cst [0] : vector<8x2048xf32> to vector<2048xf32>
    %10 = vector.shape_cast %9 : vector<2048xf32> to vector<1x2048xf32>
    %cst_15 = arith.constant dense<0xFF800000> : vector<2048xf32>
    %11 = vector.multi_reduction <maximumf>, %0, %cst_15 [0] : vector<8x2048xf32> to vector<2048xf32>
    %12 = vector.shape_cast %11 : vector<2048xf32> to vector<1x2048xf32>
    %13 = vector.extract_strided_slice %10 {offsets = [0, 0], sizes = [1, 256], strides = [1, 1]} : vector<1x2048xf32> to vector<1x256xf32>
    %cst_16 = arith.constant dense<0x7F800000> : vector<1xf32>
    %14 = vector.multi_reduction <minimumf>, %13, %cst_16 [1] : vector<1x256xf32> to vector<1xf32>
    %15 = vector.shape_cast %14 : vector<1xf32> to vector<1x1xf32>
    %16 = vector.extract_strided_slice %12 {offsets = [0, 0], sizes = [1, 256], strides = [1, 1]} : vector<1x2048xf32> to vector<1x256xf32>
    %cst_17 = arith.constant dense<0xFF800000> : vector<1xf32>
    %17 = vector.multi_reduction <maximumf>, %16, %cst_17 [1] : vector<1x256xf32> to vector<1xf32>
    %18 = vector.shape_cast %17 : vector<1xf32> to vector<1x1xf32>
    %19 = vector.extract_strided_slice %0 {offsets = [0, 0], sizes = [8, 256], strides = [1, 1]} : vector<8x2048xf32> to vector<8x256xf32>
    %20 = vector.broadcast %15 : vector<1x1xf32> to vector<8x256xf32>
    %21 = arith.subf %19, %20 : vector<8x256xf32>
    %22 = arith.subf %18, %15 : vector<1x1xf32>
    %cst_18 = arith.constant 1.000000e+00 : f32
    %23 = vector.broadcast %cst_18 : f32 to vector<1x1xf32>
    %24 = arith.divf %23, %22 : vector<1x1xf32>
    %25 = vector.broadcast %24 : vector<1x1xf32> to vector<8x256xf32>
    %26 = arith.mulf %21, %25 : vector<8x256xf32>
    %27 = vector.extract_strided_slice %10 {offsets = [0, 256], sizes = [1, 256], strides = [1, 1]} : vector<1x2048xf32> to vector<1x256xf32>
    %cst_19 = arith.constant dense<0x7F800000> : vector<1xf32>
    %28 = vector.multi_reduction <minimumf>, %27, %cst_19 [1] : vector<1x256xf32> to vector<1xf32>
    %29 = vector.shape_cast %28 : vector<1xf32> to vector<1x1xf32>
    %30 = vector.extract_strided_slice %12 {offsets = [0, 256], sizes = [1, 256], strides = [1, 1]} : vector<1x2048xf32> to vector<1x256xf32>
    %cst_20 = arith.constant dense<0xFF800000> : vector<1xf32>
    %31 = vector.multi_reduction <maximumf>, %30, %cst_20 [1] : vector<1x256xf32> to vector<1xf32>
    %32 = vector.shape_cast %31 : vector<1xf32> to vector<1x1xf32>
    %33 = vector.extract_strided_slice %0 {offsets = [0, 256], sizes = [8, 256], strides = [1, 1]} : vector<8x2048xf32> to vector<8x256xf32>
    %34 = vector.broadcast %29 : vector<1x1xf32> to vector<8x256xf32>
    %35 = arith.subf %33, %34 : vector<8x256xf32>
    %36 = arith.subf %32, %29 : vector<1x1xf32>
    %cst_21 = arith.constant 1.000000e+00 : f32
    %37 = vector.broadcast %cst_21 : f32 to vector<1x1xf32>
    %38 = arith.divf %37, %36 : vector<1x1xf32>
    %39 = vector.broadcast %38 : vector<1x1xf32> to vector<8x256xf32>
    %40 = arith.mulf %35, %39 : vector<8x256xf32>
    %41 = vector.extract_strided_slice %10 {offsets = [0, 512], sizes = [1, 256], strides = [1, 1]} : vector<1x2048xf32> to vector<1x256xf32>
    %cst_22 = arith.constant dense<0x7F800000> : vector<1xf32>
    %42 = vector.multi_reduction <minimumf>, %41, %cst_22 [1] : vector<1x256xf32> to vector<1xf32>
    %43 = vector.shape_cast %42 : vector<1xf32> to vector<1x1xf32>
    %44 = vector.extract_strided_slice %12 {offsets = [0, 512], sizes = [1, 256], strides = [1, 1]} : vector<1x2048xf32> to vector<1x256xf32>
    %cst_23 = arith.constant dense<0xFF800000> : vector<1xf32>
    %45 = vector.multi_reduction <maximumf>, %44, %cst_23 [1] : vector<1x256xf32> to vector<1xf32>
    %46 = vector.shape_cast %45 : vector<1xf32> to vector<1x1xf32>
    %47 = vector.extract_strided_slice %0 {offsets = [0, 512], sizes = [8, 256], strides = [1, 1]} : vector<8x2048xf32> to vector<8x256xf32>
    %48 = vector.broadcast %43 : vector<1x1xf32> to vector<8x256xf32>
    %49 = arith.subf %47, %48 : vector<8x256xf32>
    %50 = arith.subf %46, %43 : vector<1x1xf32>
    %cst_24 = arith.constant 1.000000e+00 : f32
    %51 = vector.broadcast %cst_24 : f32 to vector<1x1xf32>
    %52 = arith.divf %51, %50 : vector<1x1xf32>
    %53 = vector.broadcast %52 : vector<1x1xf32> to vector<8x256xf32>
    %54 = arith.mulf %49, %53 : vector<8x256xf32>
    %55 = vector.extract_strided_slice %10 {offsets = [0, 768], sizes = [1, 256], strides = [1, 1]} : vector<1x2048xf32> to vector<1x256xf32>
    %cst_25 = arith.constant dense<0x7F800000> : vector<1xf32>
    %56 = vector.multi_reduction <minimumf>, %55, %cst_25 [1] : vector<1x256xf32> to vector<1xf32>
    %57 = vector.shape_cast %56 : vector<1xf32> to vector<1x1xf32>
    %58 = vector.extract_strided_slice %12 {offsets = [0, 768], sizes = [1, 256], strides = [1, 1]} : vector<1x2048xf32> to vector<1x256xf32>
    %cst_26 = arith.constant dense<0xFF800000> : vector<1xf32>
    %59 = vector.multi_reduction <maximumf>, %58, %cst_26 [1] : vector<1x256xf32> to vector<1xf32>
    %60 = vector.shape_cast %59 : vector<1xf32> to vector<1x1xf32>
    %61 = vector.extract_strided_slice %0 {offsets = [0, 768], sizes = [8, 256], strides = [1, 1]} : vector<8x2048xf32> to vector<8x256xf32>
    %62 = vector.broadcast %57 : vector<1x1xf32> to vector<8x256xf32>
    %63 = arith.subf %61, %62 : vector<8x256xf32>
    %64 = arith.subf %60, %57 : vector<1x1xf32>
    %cst_27 = arith.constant 1.000000e+00 : f32
    %65 = vector.broadcast %cst_27 : f32 to vector<1x1xf32>
    %66 = arith.divf %65, %64 : vector<1x1xf32>
    %67 = vector.broadcast %66 : vector<1x1xf32> to vector<8x256xf32>
    %68 = arith.mulf %63, %67 : vector<8x256xf32>
    %69 = vector.extract_strided_slice %10 {offsets = [0, 1024], sizes = [1, 256], strides = [1, 1]} : vector<1x2048xf32> to vector<1x256xf32>
    %cst_28 = arith.constant dense<0x7F800000> : vector<1xf32>
    %70 = vector.multi_reduction <minimumf>, %69, %cst_28 [1] : vector<1x256xf32> to vector<1xf32>
    %71 = vector.shape_cast %70 : vector<1xf32> to vector<1x1xf32>
    %72 = vector.extract_strided_slice %12 {offsets = [0, 1024], sizes = [1, 256], strides = [1, 1]} : vector<1x2048xf32> to vector<1x256xf32>
    %cst_29 = arith.constant dense<0xFF800000> : vector<1xf32>
    %73 = vector.multi_reduction <maximumf>, %72, %cst_29 [1] : vector<1x256xf32> to vector<1xf32>
    %74 = vector.shape_cast %73 : vector<1xf32> to vector<1x1xf32>
    %75 = vector.extract_strided_slice %0 {offsets = [0, 1024], sizes = [8, 256], strides = [1, 1]} : vector<8x2048xf32> to vector<8x256xf32>
    %76 = vector.broadcast %71 : vector<1x1xf32> to vector<8x256xf32>
    %77 = arith.subf %75, %76 : vector<8x256xf32>
    %78 = arith.subf %74, %71 : vector<1x1xf32>
    %cst_30 = arith.constant 1.000000e+00 : f32
    %79 = vector.broadcast %cst_30 : f32 to vector<1x1xf32>
    %80 = arith.divf %79, %78 : vector<1x1xf32>
    %81 = vector.broadcast %80 : vector<1x1xf32> to vector<8x256xf32>
    %82 = arith.mulf %77, %81 : vector<8x256xf32>
    %83 = vector.extract_strided_slice %10 {offsets = [0, 1280], sizes = [1, 256], strides = [1, 1]} : vector<1x2048xf32> to vector<1x256xf32>
    %cst_31 = arith.constant dense<0x7F800000> : vector<1xf32>
    %84 = vector.multi_reduction <minimumf>, %83, %cst_31 [1] : vector<1x256xf32> to vector<1xf32>
    %85 = vector.shape_cast %84 : vector<1xf32> to vector<1x1xf32>
    %86 = vector.extract_strided_slice %12 {offsets = [0, 1280], sizes = [1, 256], strides = [1, 1]} : vector<1x2048xf32> to vector<1x256xf32>
    %cst_32 = arith.constant dense<0xFF800000> : vector<1xf32>
    %87 = vector.multi_reduction <maximumf>, %86, %cst_32 [1] : vector<1x256xf32> to vector<1xf32>
    %88 = vector.shape_cast %87 : vector<1xf32> to vector<1x1xf32>
    %89 = vector.extract_strided_slice %0 {offsets = [0, 1280], sizes = [8, 256], strides = [1, 1]} : vector<8x2048xf32> to vector<8x256xf32>
    %90 = vector.broadcast %85 : vector<1x1xf32> to vector<8x256xf32>
    %91 = arith.subf %89, %90 : vector<8x256xf32>
    %92 = arith.subf %88, %85 : vector<1x1xf32>
    %cst_33 = arith.constant 1.000000e+00 : f32
    %93 = vector.broadcast %cst_33 : f32 to vector<1x1xf32>
    %94 = arith.divf %93, %92 : vector<1x1xf32>
    %95 = vector.broadcast %94 : vector<1x1xf32> to vector<8x256xf32>
    %96 = arith.mulf %91, %95 : vector<8x256xf32>
    %97 = vector.extract_strided_slice %10 {offsets = [0, 1536], sizes = [1, 256], strides = [1, 1]} : vector<1x2048xf32> to vector<1x256xf32>
    %cst_34 = arith.constant dense<0x7F800000> : vector<1xf32>
    %98 = vector.multi_reduction <minimumf>, %97, %cst_34 [1] : vector<1x256xf32> to vector<1xf32>
    %99 = vector.shape_cast %98 : vector<1xf32> to vector<1x1xf32>
    %100 = vector.extract_strided_slice %12 {offsets = [0, 1536], sizes = [1, 256], strides = [1, 1]} : vector<1x2048xf32> to vector<1x256xf32>
    %cst_35 = arith.constant dense<0xFF800000> : vector<1xf32>
    %101 = vector.multi_reduction <maximumf>, %100, %cst_35 [1] : vector<1x256xf32> to vector<1xf32>
    %102 = vector.shape_cast %101 : vector<1xf32> to vector<1x1xf32>
    %103 = vector.extract_strided_slice %0 {offsets = [0, 1536], sizes = [8, 256], strides = [1, 1]} : vector<8x2048xf32> to vector<8x256xf32>
    %104 = vector.broadcast %99 : vector<1x1xf32> to vector<8x256xf32>
    %105 = arith.subf %103, %104 : vector<8x256xf32>
    %106 = arith.subf %102, %99 : vector<1x1xf32>
    %cst_36 = arith.constant 1.000000e+00 : f32
    %107 = vector.broadcast %cst_36 : f32 to vector<1x1xf32>
    %108 = arith.divf %107, %106 : vector<1x1xf32>
    %109 = vector.broadcast %108 : vector<1x1xf32> to vector<8x256xf32>
    %110 = arith.mulf %105, %109 : vector<8x256xf32>
    %111 = vector.extract_strided_slice %10 {offsets = [0, 1792], sizes = [1, 256], strides = [1, 1]} : vector<1x2048xf32> to vector<1x256xf32>
    %cst_37 = arith.constant dense<0x7F800000> : vector<1xf32>
    %112 = vector.multi_reduction <minimumf>, %111, %cst_37 [1] : vector<1x256xf32> to vector<1xf32>
    %113 = vector.shape_cast %112 : vector<1xf32> to vector<1x1xf32>
    %114 = vector.extract_strided_slice %12 {offsets = [0, 1792], sizes = [1, 256], strides = [1, 1]} : vector<1x2048xf32> to vector<1x256xf32>
    %cst_38 = arith.constant dense<0xFF800000> : vector<1xf32>
    %115 = vector.multi_reduction <maximumf>, %114, %cst_38 [1] : vector<1x256xf32> to vector<1xf32>
    %116 = vector.shape_cast %115 : vector<1xf32> to vector<1x1xf32>
    %117 = vector.extract_strided_slice %0 {offsets = [0, 1792], sizes = [8, 256], strides = [1, 1]} : vector<8x2048xf32> to vector<8x256xf32>
    %118 = vector.broadcast %113 : vector<1x1xf32> to vector<8x256xf32>
    %119 = arith.subf %117, %118 : vector<8x256xf32>
    %120 = arith.subf %116, %113 : vector<1x1xf32>
    %cst_39 = arith.constant 1.000000e+00 : f32
    %121 = vector.broadcast %cst_39 : f32 to vector<1x1xf32>
    %122 = arith.divf %121, %120 : vector<1x1xf32>
    %123 = vector.broadcast %122 : vector<1x1xf32> to vector<8x256xf32>
    %124 = arith.mulf %119, %123 : vector<8x256xf32>
    %125 = tpu.concatenate %26, %40, %54, %68, %82, %96, %110, %124 in 1 : vector<8x256xf32>, vector<8x256xf32>, vector<8x256xf32>, vector<8x256xf32>, vector<8x256xf32>, vector<8x256xf32>, vector<8x256xf32>, vector<8x256xf32> -> vector<8x2048xf32>
    %c1_i32 = arith.constant 1 : i32
    %126 = tpu.dynamic_rotate %125 by %c1_i32 dim 1 : vector<8x2048xf32>, i32 -> vector<8x2048xf32>
    %c1_i32_40 = arith.constant 1 : i32
    %127 = vector.broadcast %c1_i32_40 : i32 to vector<1x2048xi32>
    %128 = arith.cmpi sge, %8, %127 : vector<1x2048xi32>
    %cst_41 = arith.constant 0.000000e+00 : f32
    %129 = vector.shape_cast %128 : vector<1x2048xi1> to vector<1x2048xi1>
    %130 = vector.broadcast %129 : vector<1x2048xi1> to vector<8x2048xi1>
    %131 = vector.broadcast %cst_41 : f32 to vector<8x2048xf32>
    %132 = arith.select %130, %126, %131 : vector<8x2048xi1>, vector<8x2048xf32>
    %c2047_i32 = arith.constant 2047 : i32
    %133 = tpu.dynamic_rotate %125 by %c2047_i32 dim 1 : vector<8x2048xf32>, i32 -> vector<8x2048xf32>
    %c255_i32 = arith.constant 255 : i32
    %134 = vector.broadcast %c255_i32 : i32 to vector<1x2048xi32>
    %135 = arith.cmpi slt, %8, %134 : vector<1x2048xi32>
    %cst_42 = arith.constant 0.000000e+00 : f32
    %136 = vector.shape_cast %135 : vector<1x2048xi1> to vector<1x2048xi1>
    %137 = vector.broadcast %136 : vector<1x2048xi1> to vector<8x2048xi1>
    %138 = vector.broadcast %cst_42 : f32 to vector<8x2048xf32>
    %139 = arith.select %137, %133, %138 : vector<8x2048xi1>, vector<8x2048xf32>
    %140 = tpu.concatenate %132, %125, %139 in 0 : vector<8x2048xf32>, vector<8x2048xf32>, vector<8x2048xf32> -> vector<24x2048xf32>
    %cst_43 = arith.constant dense<0.000000e+00> : vector<32x2048xf32>
    %141 = tpu.matmul %1, %140, %cst_43 {dimension_numbers = #tpu.dot_dimension_numbers<[1], [0], [0], [1], [0, 0, 1, 1], [], []>} : vector<32x24xf32>, vector<24x2048xf32>, vector<32x2048xf32> -> vector<32x2048xf32>
    %142 = vector.extract_strided_slice %5 {offsets = [0, 0, 0], sizes = [1, 32, 1], strides = [1, 1, 1]} : vector<3x32x1xf32> to vector<1x32x1xf32>
    %143 = vector.shape_cast %142 : vector<1x32x1xf32> to vector<32x1xf32>
    %144 = vector.broadcast %143 : vector<32x1xf32> to vector<32x2048xf32>
    %145 = arith.mulf %141, %144 : vector<32x2048xf32>
    %146 = vector.extract_strided_slice %6 {offsets = [0, 0, 0], sizes = [1, 32, 1], strides = [1, 1, 1]} : vector<3x32x1xf32> to vector<1x32x1xf32>
    %147 = vector.shape_cast %146 : vector<1x32x1xf32> to vector<32x1xf32>
    %148 = vector.broadcast %147 : vector<32x1xf32> to vector<32x2048xf32>
    %149 = arith.addf %145, %148 : vector<32x2048xf32>
    %cst_44 = arith.constant 0.000000e+00 : f32
    %150 = vector.broadcast %cst_44 : f32 to vector<32x2048xf32>
    %151 = arith.maximumf %149, %150 : vector<32x2048xf32>
    %c1_i32_45 = arith.constant 1 : i32
    %152 = tpu.dynamic_rotate %151 by %c1_i32_45 dim 1 : vector<32x2048xf32>, i32 -> vector<32x2048xf32>
    %c1_i32_46 = arith.constant 1 : i32
    %153 = vector.broadcast %c1_i32_46 : i32 to vector<1x2048xi32>
    %154 = arith.cmpi sge, %8, %153 : vector<1x2048xi32>
    %cst_47 = arith.constant 0.000000e+00 : f32
    %155 = vector.shape_cast %154 : vector<1x2048xi1> to vector<1x2048xi1>
    %156 = vector.broadcast %155 : vector<1x2048xi1> to vector<32x2048xi1>
    %157 = vector.broadcast %cst_47 : f32 to vector<32x2048xf32>
    %158 = arith.select %156, %152, %157 : vector<32x2048xi1>, vector<32x2048xf32>
    %159 = arith.truncf %158 : vector<32x2048xf32> to vector<32x2048xbf16>
    %160 = arith.truncf %151 : vector<32x2048xf32> to vector<32x2048xbf16>
    %c2047_i32_48 = arith.constant 2047 : i32
    %161 = tpu.dynamic_rotate %151 by %c2047_i32_48 dim 1 : vector<32x2048xf32>, i32 -> vector<32x2048xf32>
    %c255_i32_49 = arith.constant 255 : i32
    %162 = vector.broadcast %c255_i32_49 : i32 to vector<1x2048xi32>
    %163 = arith.cmpi slt, %8, %162 : vector<1x2048xi32>
    %cst_50 = arith.constant 0.000000e+00 : f32
    %164 = vector.shape_cast %163 : vector<1x2048xi1> to vector<1x2048xi1>
    %165 = vector.broadcast %164 : vector<1x2048xi1> to vector<32x2048xi1>
    %166 = vector.broadcast %cst_50 : f32 to vector<32x2048xf32>
    %167 = arith.select %165, %161, %166 : vector<32x2048xi1>, vector<32x2048xf32>
    %168 = arith.truncf %167 : vector<32x2048xf32> to vector<32x2048xbf16>
    %169 = tpu.concatenate %159, %160, %168 in 0 : vector<32x2048xbf16>, vector<32x2048xbf16>, vector<32x2048xbf16> -> vector<96x2048xbf16>
    %cst_51 = arith.constant dense<0.000000e+00> : vector<32x2048xf32>
    %170 = tpu.matmul %2, %169, %cst_51 {dimension_numbers = #tpu.dot_dimension_numbers<[1], [0], [0], [1], [0, 0, 1, 1], [], []>} : vector<32x96xbf16>, vector<96x2048xbf16>, vector<32x2048xf32> -> vector<32x2048xf32>
    %171 = vector.extract_strided_slice %170 {offsets = [0, 0], sizes = [32, 256], strides = [1, 1]} : vector<32x2048xf32> to vector<32x256xf32>
    %cst_52 = arith.constant dense<0xFF800000> : vector<32xf32>
    %172 = vector.multi_reduction <maximumf>, %171, %cst_52 [1] : vector<32x256xf32> to vector<32xf32>
    %173 = vector.shape_cast %172 : vector<32xf32> to vector<32x1xf32>
    %174 = vector.extract_strided_slice %170 {offsets = [0, 256], sizes = [32, 256], strides = [1, 1]} : vector<32x2048xf32> to vector<32x256xf32>
    %cst_53 = arith.constant dense<0xFF800000> : vector<32xf32>
    %175 = vector.multi_reduction <maximumf>, %174, %cst_53 [1] : vector<32x256xf32> to vector<32xf32>
    %176 = vector.shape_cast %175 : vector<32xf32> to vector<32x1xf32>
    %177 = vector.extract_strided_slice %170 {offsets = [0, 512], sizes = [32, 256], strides = [1, 1]} : vector<32x2048xf32> to vector<32x256xf32>
    %cst_54 = arith.constant dense<0xFF800000> : vector<32xf32>
    %178 = vector.multi_reduction <maximumf>, %177, %cst_54 [1] : vector<32x256xf32> to vector<32xf32>
    %179 = vector.shape_cast %178 : vector<32xf32> to vector<32x1xf32>
    %180 = vector.extract_strided_slice %170 {offsets = [0, 768], sizes = [32, 256], strides = [1, 1]} : vector<32x2048xf32> to vector<32x256xf32>
    %cst_55 = arith.constant dense<0xFF800000> : vector<32xf32>
    %181 = vector.multi_reduction <maximumf>, %180, %cst_55 [1] : vector<32x256xf32> to vector<32xf32>
    %182 = vector.shape_cast %181 : vector<32xf32> to vector<32x1xf32>
    %183 = vector.extract_strided_slice %170 {offsets = [0, 1024], sizes = [32, 256], strides = [1, 1]} : vector<32x2048xf32> to vector<32x256xf32>
    %cst_56 = arith.constant dense<0xFF800000> : vector<32xf32>
    %184 = vector.multi_reduction <maximumf>, %183, %cst_56 [1] : vector<32x256xf32> to vector<32xf32>
    %185 = vector.shape_cast %184 : vector<32xf32> to vector<32x1xf32>
    %186 = vector.extract_strided_slice %170 {offsets = [0, 1280], sizes = [32, 256], strides = [1, 1]} : vector<32x2048xf32> to vector<32x256xf32>
    %cst_57 = arith.constant dense<0xFF800000> : vector<32xf32>
    %187 = vector.multi_reduction <maximumf>, %186, %cst_57 [1] : vector<32x256xf32> to vector<32xf32>
    %188 = vector.shape_cast %187 : vector<32xf32> to vector<32x1xf32>
    %189 = vector.extract_strided_slice %170 {offsets = [0, 1536], sizes = [32, 256], strides = [1, 1]} : vector<32x2048xf32> to vector<32x256xf32>
    %cst_58 = arith.constant dense<0xFF800000> : vector<32xf32>
    %190 = vector.multi_reduction <maximumf>, %189, %cst_58 [1] : vector<32x256xf32> to vector<32xf32>
    %191 = vector.shape_cast %190 : vector<32xf32> to vector<32x1xf32>
    %192 = vector.extract_strided_slice %170 {offsets = [0, 1792], sizes = [32, 256], strides = [1, 1]} : vector<32x2048xf32> to vector<32x256xf32>
    %cst_59 = arith.constant dense<0xFF800000> : vector<32xf32>
    %193 = vector.multi_reduction <maximumf>, %192, %cst_59 [1] : vector<32x256xf32> to vector<32xf32>
    %194 = vector.shape_cast %193 : vector<32xf32> to vector<32x1xf32>
    %195 = tpu.concatenate %173, %176, %179, %182, %185, %188, %191, %194 in 1 : vector<32x1xf32>, vector<32x1xf32>, vector<32x1xf32>, vector<32x1xf32>, vector<32x1xf32>, vector<32x1xf32>, vector<32x1xf32>, vector<32x1xf32> -> vector<32x8xf32>
    %196 = vector.extract_strided_slice %5 {offsets = [1, 0, 0], sizes = [1, 32, 1], strides = [1, 1, 1]} : vector<3x32x1xf32> to vector<1x32x1xf32>
    %197 = vector.shape_cast %196 : vector<1x32x1xf32> to vector<32x1xf32>
    %198 = vector.broadcast %197 : vector<32x1xf32> to vector<32x2048xf32>
    %199 = arith.mulf %141, %198 : vector<32x2048xf32>
    %200 = vector.extract_strided_slice %6 {offsets = [1, 0, 0], sizes = [1, 32, 1], strides = [1, 1, 1]} : vector<3x32x1xf32> to vector<1x32x1xf32>
    %201 = vector.shape_cast %200 : vector<1x32x1xf32> to vector<32x1xf32>
    %202 = vector.broadcast %201 : vector<32x1xf32> to vector<32x2048xf32>
    %203 = arith.addf %199, %202 : vector<32x2048xf32>
    %cst_60 = arith.constant 0.000000e+00 : f32
    %204 = vector.broadcast %cst_60 : f32 to vector<32x2048xf32>
    %205 = arith.maximumf %203, %204 : vector<32x2048xf32>
    %c2_i32 = arith.constant 2 : i32
    %206 = tpu.dynamic_rotate %205 by %c2_i32 dim 1 : vector<32x2048xf32>, i32 -> vector<32x2048xf32>
    %c2_i32_61 = arith.constant 2 : i32
    %207 = vector.broadcast %c2_i32_61 : i32 to vector<1x2048xi32>
    %208 = arith.cmpi sge, %8, %207 : vector<1x2048xi32>
    %cst_62 = arith.constant 0.000000e+00 : f32
    %209 = vector.shape_cast %208 : vector<1x2048xi1> to vector<1x2048xi1>
    %210 = vector.broadcast %209 : vector<1x2048xi1> to vector<32x2048xi1>
    %211 = vector.broadcast %cst_62 : f32 to vector<32x2048xf32>
    %212 = arith.select %210, %206, %211 : vector<32x2048xi1>, vector<32x2048xf32>
    %213 = arith.truncf %212 : vector<32x2048xf32> to vector<32x2048xbf16>
    %c1_i32_63 = arith.constant 1 : i32
    %214 = tpu.dynamic_rotate %205 by %c1_i32_63 dim 1 : vector<32x2048xf32>, i32 -> vector<32x2048xf32>
    %c1_i32_64 = arith.constant 1 : i32
    %215 = vector.broadcast %c1_i32_64 : i32 to vector<1x2048xi32>
    %216 = arith.cmpi sge, %8, %215 : vector<1x2048xi32>
    %cst_65 = arith.constant 0.000000e+00 : f32
    %217 = vector.shape_cast %216 : vector<1x2048xi1> to vector<1x2048xi1>
    %218 = vector.broadcast %217 : vector<1x2048xi1> to vector<32x2048xi1>
    %219 = vector.broadcast %cst_65 : f32 to vector<32x2048xf32>
    %220 = arith.select %218, %214, %219 : vector<32x2048xi1>, vector<32x2048xf32>
    %221 = arith.truncf %220 : vector<32x2048xf32> to vector<32x2048xbf16>
    %222 = arith.truncf %205 : vector<32x2048xf32> to vector<32x2048xbf16>
    %c2047_i32_66 = arith.constant 2047 : i32
    %223 = tpu.dynamic_rotate %205 by %c2047_i32_66 dim 1 : vector<32x2048xf32>, i32 -> vector<32x2048xf32>
    %c255_i32_67 = arith.constant 255 : i32
    %224 = vector.broadcast %c255_i32_67 : i32 to vector<1x2048xi32>
    %225 = arith.cmpi slt, %8, %224 : vector<1x2048xi32>
    %cst_68 = arith.constant 0.000000e+00 : f32
    %226 = vector.shape_cast %225 : vector<1x2048xi1> to vector<1x2048xi1>
    %227 = vector.broadcast %226 : vector<1x2048xi1> to vector<32x2048xi1>
    %228 = vector.broadcast %cst_68 : f32 to vector<32x2048xf32>
    %229 = arith.select %227, %223, %228 : vector<32x2048xi1>, vector<32x2048xf32>
    %230 = arith.truncf %229 : vector<32x2048xf32> to vector<32x2048xbf16>
    %c2046_i32 = arith.constant 2046 : i32
    %231 = tpu.dynamic_rotate %205 by %c2046_i32 dim 1 : vector<32x2048xf32>, i32 -> vector<32x2048xf32>
    %c254_i32 = arith.constant 254 : i32
    %232 = vector.broadcast %c254_i32 : i32 to vector<1x2048xi32>
    %233 = arith.cmpi slt, %8, %232 : vector<1x2048xi32>
    %cst_69 = arith.constant 0.000000e+00 : f32
    %234 = vector.shape_cast %233 : vector<1x2048xi1> to vector<1x2048xi1>
    %235 = vector.broadcast %234 : vector<1x2048xi1> to vector<32x2048xi1>
    %236 = vector.broadcast %cst_69 : f32 to vector<32x2048xf32>
    %237 = arith.select %235, %231, %236 : vector<32x2048xi1>, vector<32x2048xf32>
    %238 = arith.truncf %237 : vector<32x2048xf32> to vector<32x2048xbf16>
    %239 = tpu.concatenate %213, %221, %222, %230, %238 in 0 : vector<32x2048xbf16>, vector<32x2048xbf16>, vector<32x2048xbf16>, vector<32x2048xbf16>, vector<32x2048xbf16> -> vector<160x2048xbf16>
    %cst_70 = arith.constant dense<0.000000e+00> : vector<32x2048xf32>
    %240 = tpu.matmul %3, %239, %cst_70 {dimension_numbers = #tpu.dot_dimension_numbers<[1], [0], [0], [1], [0, 0, 1, 1], [], []>} : vector<32x160xbf16>, vector<160x2048xbf16>, vector<32x2048xf32> -> vector<32x2048xf32>
    %241 = vector.extract_strided_slice %240 {offsets = [0, 0], sizes = [32, 256], strides = [1, 1]} : vector<32x2048xf32> to vector<32x256xf32>
    %cst_71 = arith.constant dense<0xFF800000> : vector<32xf32>
    %242 = vector.multi_reduction <maximumf>, %241, %cst_71 [1] : vector<32x256xf32> to vector<32xf32>
    %243 = vector.shape_cast %242 : vector<32xf32> to vector<32x1xf32>
    %244 = vector.extract_strided_slice %240 {offsets = [0, 256], sizes = [32, 256], strides = [1, 1]} : vector<32x2048xf32> to vector<32x256xf32>
    %cst_72 = arith.constant dense<0xFF800000> : vector<32xf32>
    %245 = vector.multi_reduction <maximumf>, %244, %cst_72 [1] : vector<32x256xf32> to vector<32xf32>
    %246 = vector.shape_cast %245 : vector<32xf32> to vector<32x1xf32>
    %247 = vector.extract_strided_slice %240 {offsets = [0, 512], sizes = [32, 256], strides = [1, 1]} : vector<32x2048xf32> to vector<32x256xf32>
    %cst_73 = arith.constant dense<0xFF800000> : vector<32xf32>
    %248 = vector.multi_reduction <maximumf>, %247, %cst_73 [1] : vector<32x256xf32> to vector<32xf32>
    %249 = vector.shape_cast %248 : vector<32xf32> to vector<32x1xf32>
    %250 = vector.extract_strided_slice %240 {offsets = [0, 768], sizes = [32, 256], strides = [1, 1]} : vector<32x2048xf32> to vector<32x256xf32>
    %cst_74 = arith.constant dense<0xFF800000> : vector<32xf32>
    %251 = vector.multi_reduction <maximumf>, %250, %cst_74 [1] : vector<32x256xf32> to vector<32xf32>
    %252 = vector.shape_cast %251 : vector<32xf32> to vector<32x1xf32>
    %253 = vector.extract_strided_slice %240 {offsets = [0, 1024], sizes = [32, 256], strides = [1, 1]} : vector<32x2048xf32> to vector<32x256xf32>
    %cst_75 = arith.constant dense<0xFF800000> : vector<32xf32>
    %254 = vector.multi_reduction <maximumf>, %253, %cst_75 [1] : vector<32x256xf32> to vector<32xf32>
    %255 = vector.shape_cast %254 : vector<32xf32> to vector<32x1xf32>
    %256 = vector.extract_strided_slice %240 {offsets = [0, 1280], sizes = [32, 256], strides = [1, 1]} : vector<32x2048xf32> to vector<32x256xf32>
    %cst_76 = arith.constant dense<0xFF800000> : vector<32xf32>
    %257 = vector.multi_reduction <maximumf>, %256, %cst_76 [1] : vector<32x256xf32> to vector<32xf32>
    %258 = vector.shape_cast %257 : vector<32xf32> to vector<32x1xf32>
    %259 = vector.extract_strided_slice %240 {offsets = [0, 1536], sizes = [32, 256], strides = [1, 1]} : vector<32x2048xf32> to vector<32x256xf32>
    %cst_77 = arith.constant dense<0xFF800000> : vector<32xf32>
    %260 = vector.multi_reduction <maximumf>, %259, %cst_77 [1] : vector<32x256xf32> to vector<32xf32>
    %261 = vector.shape_cast %260 : vector<32xf32> to vector<32x1xf32>
    %262 = vector.extract_strided_slice %240 {offsets = [0, 1792], sizes = [32, 256], strides = [1, 1]} : vector<32x2048xf32> to vector<32x256xf32>
    %cst_78 = arith.constant dense<0xFF800000> : vector<32xf32>
    %263 = vector.multi_reduction <maximumf>, %262, %cst_78 [1] : vector<32x256xf32> to vector<32xf32>
    %264 = vector.shape_cast %263 : vector<32xf32> to vector<32x1xf32>
    %265 = tpu.concatenate %243, %246, %249, %252, %255, %258, %261, %264 in 1 : vector<32x1xf32>, vector<32x1xf32>, vector<32x1xf32>, vector<32x1xf32>, vector<32x1xf32>, vector<32x1xf32>, vector<32x1xf32>, vector<32x1xf32> -> vector<32x8xf32>
    %266 = vector.extract_strided_slice %5 {offsets = [2, 0, 0], sizes = [1, 32, 1], strides = [1, 1, 1]} : vector<3x32x1xf32> to vector<1x32x1xf32>
    %267 = vector.shape_cast %266 : vector<1x32x1xf32> to vector<32x1xf32>
    %268 = vector.broadcast %267 : vector<32x1xf32> to vector<32x2048xf32>
    %269 = arith.mulf %141, %268 : vector<32x2048xf32>
    %270 = vector.extract_strided_slice %6 {offsets = [2, 0, 0], sizes = [1, 32, 1], strides = [1, 1, 1]} : vector<3x32x1xf32> to vector<1x32x1xf32>
    %271 = vector.shape_cast %270 : vector<1x32x1xf32> to vector<32x1xf32>
    %272 = vector.broadcast %271 : vector<32x1xf32> to vector<32x2048xf32>
    %273 = arith.addf %269, %272 : vector<32x2048xf32>
    %cst_79 = arith.constant 0.000000e+00 : f32
    %274 = vector.broadcast %cst_79 : f32 to vector<32x2048xf32>
    %275 = arith.maximumf %273, %274 : vector<32x2048xf32>
    %c3_i32 = arith.constant 3 : i32
    %276 = tpu.dynamic_rotate %275 by %c3_i32 dim 1 : vector<32x2048xf32>, i32 -> vector<32x2048xf32>
    %c3_i32_80 = arith.constant 3 : i32
    %277 = vector.broadcast %c3_i32_80 : i32 to vector<1x2048xi32>
    %278 = arith.cmpi sge, %8, %277 : vector<1x2048xi32>
    %cst_81 = arith.constant 0.000000e+00 : f32
    %279 = vector.shape_cast %278 : vector<1x2048xi1> to vector<1x2048xi1>
    %280 = vector.broadcast %279 : vector<1x2048xi1> to vector<32x2048xi1>
    %281 = vector.broadcast %cst_81 : f32 to vector<32x2048xf32>
    %282 = arith.select %280, %276, %281 : vector<32x2048xi1>, vector<32x2048xf32>
    %283 = arith.truncf %282 : vector<32x2048xf32> to vector<32x2048xbf16>
    %c2_i32_82 = arith.constant 2 : i32
    %284 = tpu.dynamic_rotate %275 by %c2_i32_82 dim 1 : vector<32x2048xf32>, i32 -> vector<32x2048xf32>
    %c2_i32_83 = arith.constant 2 : i32
    %285 = vector.broadcast %c2_i32_83 : i32 to vector<1x2048xi32>
    %286 = arith.cmpi sge, %8, %285 : vector<1x2048xi32>
    %cst_84 = arith.constant 0.000000e+00 : f32
    %287 = vector.shape_cast %286 : vector<1x2048xi1> to vector<1x2048xi1>
    %288 = vector.broadcast %287 : vector<1x2048xi1> to vector<32x2048xi1>
    %289 = vector.broadcast %cst_84 : f32 to vector<32x2048xf32>
    %290 = arith.select %288, %284, %289 : vector<32x2048xi1>, vector<32x2048xf32>
    %291 = arith.truncf %290 : vector<32x2048xf32> to vector<32x2048xbf16>
    %c1_i32_85 = arith.constant 1 : i32
    %292 = tpu.dynamic_rotate %275 by %c1_i32_85 dim 1 : vector<32x2048xf32>, i32 -> vector<32x2048xf32>
    %c1_i32_86 = arith.constant 1 : i32
    %293 = vector.broadcast %c1_i32_86 : i32 to vector<1x2048xi32>
    %294 = arith.cmpi sge, %8, %293 : vector<1x2048xi32>
    %cst_87 = arith.constant 0.000000e+00 : f32
    %295 = vector.shape_cast %294 : vector<1x2048xi1> to vector<1x2048xi1>
    %296 = vector.broadcast %295 : vector<1x2048xi1> to vector<32x2048xi1>
    %297 = vector.broadcast %cst_87 : f32 to vector<32x2048xf32>
    %298 = arith.select %296, %292, %297 : vector<32x2048xi1>, vector<32x2048xf32>
    %299 = arith.truncf %298 : vector<32x2048xf32> to vector<32x2048xbf16>
    %300 = arith.truncf %275 : vector<32x2048xf32> to vector<32x2048xbf16>
    %c2047_i32_88 = arith.constant 2047 : i32
    %301 = tpu.dynamic_rotate %275 by %c2047_i32_88 dim 1 : vector<32x2048xf32>, i32 -> vector<32x2048xf32>
    %c255_i32_89 = arith.constant 255 : i32
    %302 = vector.broadcast %c255_i32_89 : i32 to vector<1x2048xi32>
    %303 = arith.cmpi slt, %8, %302 : vector<1x2048xi32>
    %cst_90 = arith.constant 0.000000e+00 : f32
    %304 = vector.shape_cast %303 : vector<1x2048xi1> to vector<1x2048xi1>
    %305 = vector.broadcast %304 : vector<1x2048xi1> to vector<32x2048xi1>
    %306 = vector.broadcast %cst_90 : f32 to vector<32x2048xf32>
    %307 = arith.select %305, %301, %306 : vector<32x2048xi1>, vector<32x2048xf32>
    %308 = arith.truncf %307 : vector<32x2048xf32> to vector<32x2048xbf16>
    %c2046_i32_91 = arith.constant 2046 : i32
    %309 = tpu.dynamic_rotate %275 by %c2046_i32_91 dim 1 : vector<32x2048xf32>, i32 -> vector<32x2048xf32>
    %c254_i32_92 = arith.constant 254 : i32
    %310 = vector.broadcast %c254_i32_92 : i32 to vector<1x2048xi32>
    %311 = arith.cmpi slt, %8, %310 : vector<1x2048xi32>
    %cst_93 = arith.constant 0.000000e+00 : f32
    %312 = vector.shape_cast %311 : vector<1x2048xi1> to vector<1x2048xi1>
    %313 = vector.broadcast %312 : vector<1x2048xi1> to vector<32x2048xi1>
    %314 = vector.broadcast %cst_93 : f32 to vector<32x2048xf32>
    %315 = arith.select %313, %309, %314 : vector<32x2048xi1>, vector<32x2048xf32>
    %316 = arith.truncf %315 : vector<32x2048xf32> to vector<32x2048xbf16>
    %c2045_i32 = arith.constant 2045 : i32
    %317 = tpu.dynamic_rotate %275 by %c2045_i32 dim 1 : vector<32x2048xf32>, i32 -> vector<32x2048xf32>
    %c253_i32 = arith.constant 253 : i32
    %318 = vector.broadcast %c253_i32 : i32 to vector<1x2048xi32>
    %319 = arith.cmpi slt, %8, %318 : vector<1x2048xi32>
    %cst_94 = arith.constant 0.000000e+00 : f32
    %320 = vector.shape_cast %319 : vector<1x2048xi1> to vector<1x2048xi1>
    %321 = vector.broadcast %320 : vector<1x2048xi1> to vector<32x2048xi1>
    %322 = vector.broadcast %cst_94 : f32 to vector<32x2048xf32>
    %323 = arith.select %321, %317, %322 : vector<32x2048xi1>, vector<32x2048xf32>
    %324 = arith.truncf %323 : vector<32x2048xf32> to vector<32x2048xbf16>
    %325 = tpu.concatenate %283, %291, %299, %300, %308, %316, %324 in 0 : vector<32x2048xbf16>, vector<32x2048xbf16>, vector<32x2048xbf16>, vector<32x2048xbf16>, vector<32x2048xbf16>, vector<32x2048xbf16>, vector<32x2048xbf16> -> vector<224x2048xbf16>
    %cst_95 = arith.constant dense<0.000000e+00> : vector<32x2048xf32>
    %326 = tpu.matmul %4, %325, %cst_95 {dimension_numbers = #tpu.dot_dimension_numbers<[1], [0], [0], [1], [0, 0, 1, 1], [], []>} : vector<32x224xbf16>, vector<224x2048xbf16>, vector<32x2048xf32> -> vector<32x2048xf32>
    %327 = vector.extract_strided_slice %326 {offsets = [0, 0], sizes = [32, 256], strides = [1, 1]} : vector<32x2048xf32> to vector<32x256xf32>
    %cst_96 = arith.constant dense<0xFF800000> : vector<32xf32>
    %328 = vector.multi_reduction <maximumf>, %327, %cst_96 [1] : vector<32x256xf32> to vector<32xf32>
    %329 = vector.shape_cast %328 : vector<32xf32> to vector<32x1xf32>
    %330 = vector.extract_strided_slice %326 {offsets = [0, 256], sizes = [32, 256], strides = [1, 1]} : vector<32x2048xf32> to vector<32x256xf32>
    %cst_97 = arith.constant dense<0xFF800000> : vector<32xf32>
    %331 = vector.multi_reduction <maximumf>, %330, %cst_97 [1] : vector<32x256xf32> to vector<32xf32>
    %332 = vector.shape_cast %331 : vector<32xf32> to vector<32x1xf32>
    %333 = vector.extract_strided_slice %326 {offsets = [0, 512], sizes = [32, 256], strides = [1, 1]} : vector<32x2048xf32> to vector<32x256xf32>
    %cst_98 = arith.constant dense<0xFF800000> : vector<32xf32>
    %334 = vector.multi_reduction <maximumf>, %333, %cst_98 [1] : vector<32x256xf32> to vector<32xf32>
    %335 = vector.shape_cast %334 : vector<32xf32> to vector<32x1xf32>
    %336 = vector.extract_strided_slice %326 {offsets = [0, 768], sizes = [32, 256], strides = [1, 1]} : vector<32x2048xf32> to vector<32x256xf32>
    %cst_99 = arith.constant dense<0xFF800000> : vector<32xf32>
    %337 = vector.multi_reduction <maximumf>, %336, %cst_99 [1] : vector<32x256xf32> to vector<32xf32>
    %338 = vector.shape_cast %337 : vector<32xf32> to vector<32x1xf32>
    %339 = vector.extract_strided_slice %326 {offsets = [0, 1024], sizes = [32, 256], strides = [1, 1]} : vector<32x2048xf32> to vector<32x256xf32>
    %cst_100 = arith.constant dense<0xFF800000> : vector<32xf32>
    %340 = vector.multi_reduction <maximumf>, %339, %cst_100 [1] : vector<32x256xf32> to vector<32xf32>
    %341 = vector.shape_cast %340 : vector<32xf32> to vector<32x1xf32>
    %342 = vector.extract_strided_slice %326 {offsets = [0, 1280], sizes = [32, 256], strides = [1, 1]} : vector<32x2048xf32> to vector<32x256xf32>
    %cst_101 = arith.constant dense<0xFF800000> : vector<32xf32>
    %343 = vector.multi_reduction <maximumf>, %342, %cst_101 [1] : vector<32x256xf32> to vector<32xf32>
    %344 = vector.shape_cast %343 : vector<32xf32> to vector<32x1xf32>
    %345 = vector.extract_strided_slice %326 {offsets = [0, 1536], sizes = [32, 256], strides = [1, 1]} : vector<32x2048xf32> to vector<32x256xf32>
    %cst_102 = arith.constant dense<0xFF800000> : vector<32xf32>
    %346 = vector.multi_reduction <maximumf>, %345, %cst_102 [1] : vector<32x256xf32> to vector<32xf32>
    %347 = vector.shape_cast %346 : vector<32xf32> to vector<32x1xf32>
    %348 = vector.extract_strided_slice %326 {offsets = [0, 1792], sizes = [32, 256], strides = [1, 1]} : vector<32x2048xf32> to vector<32x256xf32>
    %cst_103 = arith.constant dense<0xFF800000> : vector<32xf32>
    %349 = vector.multi_reduction <maximumf>, %348, %cst_103 [1] : vector<32x256xf32> to vector<32xf32>
    %350 = vector.shape_cast %349 : vector<32xf32> to vector<32x1xf32>
    %351 = tpu.concatenate %329, %332, %335, %338, %341, %344, %347, %350 in 1 : vector<32x1xf32>, vector<32x1xf32>, vector<32x1xf32>, vector<32x1xf32>, vector<32x1xf32>, vector<32x1xf32>, vector<32x1xf32>, vector<32x1xf32> -> vector<32x8xf32>
    %352 = vector.extract_strided_slice %141 {offsets = [0, 0], sizes = [32, 256], strides = [1, 1]} : vector<32x2048xf32> to vector<32x256xf32>
    %cst_104 = arith.constant dense<0xFF800000> : vector<32xf32>
    %353 = vector.multi_reduction <maximumf>, %352, %cst_104 [1] : vector<32x256xf32> to vector<32xf32>
    %354 = vector.shape_cast %353 : vector<32xf32> to vector<32x1xf32>
    %355 = vector.extract_strided_slice %141 {offsets = [0, 256], sizes = [32, 256], strides = [1, 1]} : vector<32x2048xf32> to vector<32x256xf32>
    %cst_105 = arith.constant dense<0xFF800000> : vector<32xf32>
    %356 = vector.multi_reduction <maximumf>, %355, %cst_105 [1] : vector<32x256xf32> to vector<32xf32>
    %357 = vector.shape_cast %356 : vector<32xf32> to vector<32x1xf32>
    %358 = vector.extract_strided_slice %141 {offsets = [0, 512], sizes = [32, 256], strides = [1, 1]} : vector<32x2048xf32> to vector<32x256xf32>
    %cst_106 = arith.constant dense<0xFF800000> : vector<32xf32>
    %359 = vector.multi_reduction <maximumf>, %358, %cst_106 [1] : vector<32x256xf32> to vector<32xf32>
    %360 = vector.shape_cast %359 : vector<32xf32> to vector<32x1xf32>
    %361 = vector.extract_strided_slice %141 {offsets = [0, 768], sizes = [32, 256], strides = [1, 1]} : vector<32x2048xf32> to vector<32x256xf32>
    %cst_107 = arith.constant dense<0xFF800000> : vector<32xf32>
    %362 = vector.multi_reduction <maximumf>, %361, %cst_107 [1] : vector<32x256xf32> to vector<32xf32>
    %363 = vector.shape_cast %362 : vector<32xf32> to vector<32x1xf32>
    %364 = vector.extract_strided_slice %141 {offsets = [0, 1024], sizes = [32, 256], strides = [1, 1]} : vector<32x2048xf32> to vector<32x256xf32>
    %cst_108 = arith.constant dense<0xFF800000> : vector<32xf32>
    %365 = vector.multi_reduction <maximumf>, %364, %cst_108 [1] : vector<32x256xf32> to vector<32xf32>
    %366 = vector.shape_cast %365 : vector<32xf32> to vector<32x1xf32>
    %367 = vector.extract_strided_slice %141 {offsets = [0, 1280], sizes = [32, 256], strides = [1, 1]} : vector<32x2048xf32> to vector<32x256xf32>
    %cst_109 = arith.constant dense<0xFF800000> : vector<32xf32>
    %368 = vector.multi_reduction <maximumf>, %367, %cst_109 [1] : vector<32x256xf32> to vector<32xf32>
    %369 = vector.shape_cast %368 : vector<32xf32> to vector<32x1xf32>
    %370 = vector.extract_strided_slice %141 {offsets = [0, 1536], sizes = [32, 256], strides = [1, 1]} : vector<32x2048xf32> to vector<32x256xf32>
    %cst_110 = arith.constant dense<0xFF800000> : vector<32xf32>
    %371 = vector.multi_reduction <maximumf>, %370, %cst_110 [1] : vector<32x256xf32> to vector<32xf32>
    %372 = vector.shape_cast %371 : vector<32xf32> to vector<32x1xf32>
    %373 = vector.extract_strided_slice %141 {offsets = [0, 1792], sizes = [32, 256], strides = [1, 1]} : vector<32x2048xf32> to vector<32x256xf32>
    %cst_111 = arith.constant dense<0xFF800000> : vector<32xf32>
    %374 = vector.multi_reduction <maximumf>, %373, %cst_111 [1] : vector<32x256xf32> to vector<32xf32>
    %375 = vector.shape_cast %374 : vector<32xf32> to vector<32x1xf32>
    %376 = tpu.concatenate %354, %357, %360, %363, %366, %369, %372, %375 in 1 : vector<32x1xf32>, vector<32x1xf32>, vector<32x1xf32>, vector<32x1xf32>, vector<32x1xf32>, vector<32x1xf32>, vector<32x1xf32>, vector<32x1xf32> -> vector<32x8xf32>
    %377 = tpu.concatenate %195, %265, %351, %376 in 0 : vector<32x8xf32>, vector<32x8xf32>, vector<32x8xf32>, vector<32x8xf32> -> vector<128x8xf32>
    %c0_112 = arith.constant 0 : index
    %c0_113 = arith.constant 0 : index
    %378 = vector.load %arg8[%c0_112, %c0_113] : memref<128x128xf32, #tpu.memory_space<vmem>>, vector<128x128xf32>
    %cst_114 = arith.constant dense<0.000000e+00> : vector<8x128xf32>
    %379 = tpu.matmul %377, %378, %cst_114 {dimension_numbers = #tpu.dot_dimension_numbers<[0], [0], [1], [1], [0, 1, 1, 1], [], []>} : vector<128x8xf32>, vector<128x128xf32>, vector<8x128xf32> -> vector<8x128xf32>
    %c0_115 = arith.constant 0 : index
    %c0_116 = arith.constant 0 : index
    %380 = vector.load %arg9[%c0_115, %c0_116] : memref<1x128xf32, #tpu.memory_space<vmem>>, vector<1x128xf32>
    %381 = vector.broadcast %380 : vector<1x128xf32> to vector<8x128xf32>
    %382 = arith.addf %379, %381 : vector<8x128xf32>
    %c0_117 = arith.constant 0 : index
    %c0_118 = arith.constant 0 : index
    %383 = vector.load %arg10[%c0_117, %c0_118] : memref<8x128xf32, #tpu.memory_space<vmem>>, vector<8x128xf32>
    tpu.vector_store %arg10[%c0_117, %c0_118], %382 {strides = array<i32>} : memref<8x128xf32, #tpu.memory_space<vmem>>, vector<8x128xf32>,
    return
  }
  func.func @transform_0(%arg0: i32) -> (i32, i32) {
    %c0_i32 = arith.constant 0 : i32
    %c0_i32_0 = arith.constant 0 : i32
    return %c0_i32, %arg0 : i32, i32
  }
  func.func @transform_1(%arg0: i32) -> (i32, i32) {
    %c0_i32 = arith.constant 0 : i32
    %c0_i32_0 = arith.constant 0 : i32
    %c0_i32_1 = arith.constant 0 : i32
    return %c0_i32, %c0_i32_0 : i32, i32
  }
  func.func @transform_2(%arg0: i32) -> (i32, i32, i32) {
    %c0_i32 = arith.constant 0 : i32
    %c0_i32_0 = arith.constant 0 : i32
    %c0_i32_1 = arith.constant 0 : i32
    %c0_i32_2 = arith.constant 0 : i32
    return %c0_i32, %c0_i32_0, %c0_i32_1 : i32, i32, i32
  }
  func.func @transform_3(%arg0: i32) -> (i32, i32, i32) {
    %c0_i32 = arith.constant 0 : i32
    %c0_i32_0 = arith.constant 0 : i32
    %c0_i32_1 = arith.constant 0 : i32
    %c0_i32_2 = arith.constant 0 : i32
    return %c0_i32, %c0_i32_0, %c0_i32_1 : i32, i32, i32
  }
  func.func @transform_4(%arg0: i32) -> (i32, i32) {
    %c0_i32 = arith.constant 0 : i32
    %c0_i32_0 = arith.constant 0 : i32
    %c0_i32_1 = arith.constant 0 : i32
    return %c0_i32, %c0_i32_0 : i32, i32
  }
  func.func @transform_5(%arg0: i32) -> (i32, i32) {
    %c0_i32 = arith.constant 0 : i32
    %c0_i32_0 = arith.constant 0 : i32
    %c0_i32_1 = arith.constant 0 : i32
    return %c0_i32, %c0_i32_0 : i32, i32
  }
  func.func @transform_6(%arg0: i32) -> (i32, i32) {
    %c0_i32 = arith.constant 0 : i32
    %c0_i32_0 = arith.constant 0 : i32
    %c0_i32_1 = arith.constant 0 : i32
    return %c0_i32, %c0_i32_0 : i32, i32
  }
  func.func @transform_7(%arg0: i32) -> (i32, i32) {
    %c0_i32 = arith.constant 0 : i32
    %c0_i32_0 = arith.constant 0 : i32
    %c0_i32_1 = arith.constant 0 : i32
    return %c0_i32, %c0_i32_0 : i32, i32
  }
  func.func @transform_8(%arg0: i32) -> (i32, i32) {
    %c0_i32 = arith.constant 0 : i32
    %c0_i32_0 = arith.constant 0 : i32
    %c0_i32_1 = arith.constant 0 : i32
    return %c0_i32, %c0_i32_0 : i32, i32
  }
  func.func @transform_9(%arg0: i32) -> (i32, i32) {
    %c0_i32 = arith.constant 0 : i32
    %c0_i32_0 = arith.constant 0 : i32
    return %arg0, %c0_i32 : i32, i32
  }
}

</mosaic_0001>

<llo_original>
// kernel: tpu_custom_call.1
$region0: #{tpu_custom_call.1}
  #allocation0 [shape = 'u32[]', space=smem, size = 0x4, offset = 0x4, fixed_abs, tag = 'smem constant byte address 0x4 - core index']
  #allocation1 [shape = 'u32[72,128]{1,0:T(1,128)}', space=vmem, size = 0x9000, scoped, tag = 'internal scratch']
  %s0 = inlined_call_operand.hbm [shape: f32[8,4096], index: 0, kind: input, shape index: {}]
  %s1 = inlined_call_operand.vmem [shape: f32[32,24], index: 1, kind: input, shape index: {}]
  %s2 = inlined_call_operand.vmem [shape: f32[3,32,1], index: 2, kind: input, shape index: {}]
  %s3 = inlined_call_operand.vmem [shape: f32[3,32,1], index: 3, kind: input, shape index: {}]
  %s4 = inlined_call_operand.vmem [shape: bf16[32,96], index: 4, kind: input, shape index: {}]
  %s5 = inlined_call_operand.vmem [shape: bf16[32,160], index: 5, kind: input, shape index: {}]
  %s6 = inlined_call_operand.vmem [shape: bf16[32,224], index: 6, kind: input, shape index: {}]
  %s7 = inlined_call_operand.vmem [shape: f32[128,128], index: 7, kind: input, shape index: {}]
  %s8 = inlined_call_operand.vmem [shape: f32[1,128], index: 8, kind: input, shape index: {}]
  %s9 = inlined_call_operand.hbm [shape: f32[16,128], index: 9, kind: output, shape index: {}]
  %s10 = sld [smem:[#allocation0]]
  $region73: #{tpu_custom_call.1} parent=0
    _
  %s12 = ssub.s32 1, %s10
  %s13 = scalar_select 0, %s12, %s10
  $region1: #{tpu_custom_call.1} parent=0
    #allocation2 [shape = 'u8[131072]{0}', space=vmem, size = 0x20000, scoped, tag = 'input window, operand 0']
    #allocation3 [shape = 's32[2]{0}', space=sflag, size = 0x8, scoped, tag = 'scoped memory for tpu_custom_call.1']
    #allocation4 [shape = 's32[2]{0}', space=sflag, size = 0x8, scoped, tag = 'scoped memory for tpu_custom_call.1']
    #allocation5 [shape = 'u8[8192]{0}', space=vmem, size = 0x2000, scoped, tag = 'output window, operand 0']
    %14 = vsyncpa [#allocation3], 0
    %s15 = scalar_lea.sflag [#allocation3], 1
    %16 = vsyncpa %s15, 0
    %17 = vsyncpa [#allocation4], 0
    %s18 = scalar_lea.sflag [#allocation4], 1
    %19 = vsyncpa %s18, 0
    loop: start=0, step=1, limit=4
    $region2: #{tpu_custom_call.1} parent=1 // loop_pre_header
      _
    $region3: #{tpu_custom_call.1} parent=1 // loop_header
      %s21 = sphi 0, %s25
      %p22 = scmp.ge.s32.totalorder %s21, 4
      %s31 = sphi 0, %s33
      %s34 = sphi 0, %s31
      %s35 = sphi 0, %s34
      %s51 = sphi 0, %s35
      %s55 = sphi 0, %s55
      %s57 = sphi 0, %s55
      %s58 = sphi 0, %s57
      %s72 = sphi 0, %s58
      %s76 = sphi 0, %s76
      %s78 = sphi 0, %s76
      %s79 = sphi 0, %s78
      %s93 = sphi 0, %s79
      %s97 = sphi 0, %s97
      %s99 = sphi 0, %s97
      %s100 = sphi 0, %s99
      %s114 = sphi 0, %s100
      %s118 = sphi 0, %s118
      %s120 = sphi 0, %s118
      %s121 = sphi 0, %s120
      %s135 = sphi 0, %s121
      %s139 = sphi 0, %s139
      %s141 = sphi 0, %s139
      %s142 = sphi 0, %s141
      %s156 = sphi 0, %s142
      %s160 = sphi 0, %s160
      %s162 = sphi 0, %s160
      %s163 = sphi 0, %s162
      %s177 = sphi 0, %s163
      %s181 = sphi 0, %s181
      %s183 = sphi 0, %s181
      %s184 = sphi 0, %s183
      %s198 = sphi 0, %s184
      %s202 = sphi 0, %s202
      %s204 = sphi 0, %s202
      %s205 = sphi 0, %s204
      %s219 = sphi 0, %s205
      %s225 = sphi 0, %s227
      %s228 = sphi 0, %s225
      %s229 = sphi 0, %s228
      %s245 = sphi 0, %s229
    $region4: #{tpu_custom_call.1} parent=1 // loop_header_branch
      %24 = sbr.rel (%p22) target = $region8
    $region5: #{tpu_custom_call.1} parent=1 // loop_body
      %s26 = ssub.s32 %s21, 1
      %s27 = ssub.s32 %s21, 2
      %s28 = sadd.s32 %s21, 1
      %s29 = ssub.s32 %s21, %s28
      %p30 = scmp.eq.s32.totalorder %s29, 0
      %s32 = sadd.s32 %s31, 1
      %s33 = scalar_select %p30, %s31, %s32
      %p36 = pneg %p30
      %p37 = scmp.eq.s32.totalorder %s21, 1
      %p38 = por %p36, %p37
      %p39 = scmp.ne.s32.totalorder %s31, %s34
      %p40 = scmp.eq.s32.totalorder %s21, 0
      %p41 = por %p39, %p40
      %p42 = scmp.ne.s32.totalorder %s31, %s34
      %p43 = scmp.eq.s32.totalorder %s26, 1
      %p44 = por %p42, %p43
      %p45 = scmp.ne.s32.totalorder %s34, %s35
      %p46 = scmp.eq.s32.totalorder %s26, 0
      %p47 = por %p45, %p46
      %p48 = scmp.ne.s32.totalorder %s34, %s35
      %p49 = scmp.eq.s32.totalorder %s27, 1
      %p50 = por %p48, %p49
      %p52 = scmp.ne.s32.totalorder %s35, %s51
      %p53 = scmp.eq.s32.totalorder %s27, 0
      %p54 = por %p52, %p53
      %s56 = sadd.s32 %s55, 1
      %p59 = scmp.eq.s32.totalorder %s21, 1
      %p60 = scmp.ne.s32.totalorder %s55, %s57
      %p61 = scmp.eq.s32.totalorder %s21, 0
      %p62 = por %p60, %p61
      %p63 = scmp.ne.s32.totalorder %s55, %s57
      %p64 = scmp.eq.s32.totalorder %s26, 1
      %p65 = por %p63, %p64
      %p66 = scmp.ne.s32.totalorder %s57, %s58
      %p67 = scmp.eq.s32.totalorder %s26, 0
      %p68 = por %p66, %p67
      %p69 = scmp.ne.s32.totalorder %s57, %s58
      %p70 = scmp.eq.s32.totalorder %s27, 1
      %p71 = por %p69, %p70
      %p73 = scmp.ne.s32.totalorder %s58, %s72
      %p74 = scmp.eq.s32.totalorder %s27, 0
      %p75 = por %p73, %p74
      %s77 = sadd.s32 %s76, 1
      %p80 = scmp.eq.s32.totalorder %s21, 1
      %p81 = scmp.ne.s32.totalorder %s76, %s78
      %p82 = scmp.eq.s32.totalorder %s21, 0
      %p83 = por %p81, %p82
      %p84 = scmp.ne.s32.totalorder %s76, %s78
      %p85 = scmp.eq.s32.totalorder %s26, 1
      %p86 = por %p84, %p85
      %p87 = scmp.ne.s32.totalorder %s78, %s79
      %p88 = scmp.eq.s32.totalorder %s26, 0
      %p89 = por %p87, %p88
      %p90 = scmp.ne.s32.totalorder %s78, %s79
      %p91 = scmp.eq.s32.totalorder %s27, 1
      %p92 = por %p90, %p91
      %p94 = scmp.ne.s32.totalorder %s79, %s93
      %p95 = scmp.eq.s32.totalorder %s27, 0
      %p96 = por %p94, %p95
      %s98 = sadd.s32 %s97, 1
      %p101 = scmp.eq.s32.totalorder %s21, 1
      %p102 = scmp.ne.s32.totalorder %s97, %s99
      %p103 = scmp.eq.s32.totalorder %s21, 0
      %p104 = por %p102, %p103
      %p105 = scmp.ne.s32.totalorder %s97, %s99
      %p106 = scmp.eq.s32.totalorder %s26, 1
      %p107 = por %p105, %p106
      %p108 = scmp.ne.s32.totalorder %s99, %s100
      %p109 = scmp.eq.s32.totalorder %s26, 0
      %p110 = por %p108, %p109
      %p111 = scmp.ne.s32.totalorder %s99, %s100
      %p112 = scmp.eq.s32.totalorder %s27, 1
      %p113 = por %p111, %p112
      %p115 = scmp.ne.s32.totalorder %s100, %s114
      %p116 = scmp.eq.s32.totalorder %s27, 0
      %p117 = por %p115, %p116
      %s119 = sadd.s32 %s118, 1
      %p122 = scmp.eq.s32.totalorder %s21, 1
      %p123 = scmp.ne.s32.totalorder %s118, %s120
      %p124 = scmp.eq.s32.totalorder %s21, 0
      %p125 = por %p123, %p124
      %p126 = scmp.ne.s32.totalorder %s118, %s120
      %p127 = scmp.eq.s32.totalorder %s26, 1
      %p128 = por %p126, %p127
      %p129 = scmp.ne.s32.totalorder %s120, %s121
      %p130 = scmp.eq.s32.totalorder %s26, 0
      %p131 = por %p129, %p130
      %p132 = scmp.ne.s32.totalorder %s120, %s121
      %p133 = scmp.eq.s32.totalorder %s27, 1
      %p134 = por %p132, %p133
      %p136 = scmp.ne.s32.totalorder %s121, %s135
      %p137 = scmp.eq.s32.totalorder %s27, 0
      %p138 = por %p136, %p137
      %s140 = sadd.s32 %s139, 1
      %p143 = scmp.eq.s32.totalorder %s21, 1
      %p144 = scmp.ne.s32.totalorder %s139, %s141
      %p145 = scmp.eq.s32.totalorder %s21, 0
      %p146 = por %p144, %p145
      %p147 = scmp.ne.s32.totalorder %s139, %s141
      %p148 = scmp.eq.s32.totalorder %s26, 1
      %p149 = por %p147, %p148
      %p150 = scmp.ne.s32.totalorder %s141, %s142
      %p151 = scmp.eq.s32.totalorder %s26, 0
      %p152 = por %p150, %p151
      %p153 = scmp.ne.s32.totalorder %s141, %s142
      %p154 = scmp.eq.s32.totalorder %s27, 1
      %p155 = por %p153, %p154
      %p157 = scmp.ne.s32.totalorder %s142, %s156
      %p158 = scmp.eq.s32.totalorder %s27, 0
      %p159 = por %p157, %p158
      %s161 = sadd.s32 %s160, 1
      %p164 = scmp.eq.s32.totalorder %s21, 1
      %p165 = scmp.ne.s32.totalorder %s160, %s162
      %p166 = scmp.eq.s32.totalorder %s21, 0
      %p167 = por %p165, %p166
      %p168 = scmp.ne.s32.totalorder %s160, %s162
      %p169 = scmp.eq.s32.totalorder %s26, 1
      %p170 = por %p168, %p169
      %p171 = scmp.ne.s32.totalorder %s162, %s163
      %p172 = scmp.eq.s32.totalorder %s26, 0
      %p173 = por %p171, %p172
      %p174 = scmp.ne.s32.totalorder %s162, %s163
      %p175 = scmp.eq.s32.totalorder %s27, 1
      %p176 = por %p174, %p175
      %p178 = scmp.ne.s32.totalorder %s163, %s177
      %p179 = scmp.eq.s32.totalorder %s27, 0
      %p180 = por %p178, %p179
      %s182 = sadd.s32 %s181, 1
      %p185 = scmp.eq.s32.totalorder %s21, 1
      %p186 = scmp.ne.s32.totalorder %s181, %s183
      %p187 = scmp.eq.s32.totalorder %s21, 0
      %p188 = por %p186, %p187
      %p189 = scmp.ne.s32.totalorder %s181, %s183
      %p190 = scmp.eq.s32.totalorder %s26, 1
      %p191 = por %p189, %p190
      %p192 = scmp.ne.s32.totalorder %s183, %s184
      %p193 = scmp.eq.s32.totalorder %s26, 0
      %p194 = por %p192, %p193
      %p195 = scmp.ne.s32.totalorder %s183, %s184
      %p196 = scmp.eq.s32.totalorder %s27, 1
      %p197 = por %p195, %p196
      %p199 = scmp.ne.s32.totalorder %s184, %s198
      %p200 = scmp.eq.s32.totalorder %s27, 0
      %p201 = por %p199, %p200
      %s203 = sadd.s32 %s202, 1
      %p206 = scmp.eq.s32.totalorder %s21, 1
      %p207 = scmp.ne.s32.totalorder %s202, %s204
      %p208 = scmp.eq.s32.totalorder %s21, 0
      %p209 = por %p207, %p208
      %p210 = scmp.ne.s32.totalorder %s202, %s204
      %p211 = scmp.eq.s32.totalorder %s26, 1
      %p212 = por %p210, %p211
      %p213 = scmp.ne.s32.totalorder %s204, %s205
      %p214 = scmp.eq.s32.totalorder %s26, 0
      %p215 = por %p213, %p214
      %p216 = scmp.ne.s32.totalorder %s204, %s205
      %p217 = scmp.eq.s32.totalorder %s27, 1
      %p218 = por %p216, %p217
      %p220 = scmp.ne.s32.totalorder %s205, %s219
      %p221 = scmp.eq.s32.totalorder %s27, 0
      %p222 = por %p220, %p221
      %s223 = ssub.s32 %s21, %s28
      %p224 = scmp.eq.s32.totalorder %s223, 0
      %s226 = sadd.s32 %s225, 1
      %s227 = scalar_select %p224, %s225, %s226
      %p230 = pneg %p224
      %p231 = scmp.eq.s32.totalorder %s21, 1
      %p232 = por %p230, %p231
      %p233 = scmp.ne.s32.totalorder %s225, %s228
      %p234 = scmp.eq.s32.totalorder %s21, 0
      %p235 = por %p233, %p234
      %p236 = scmp.ne.s32.totalorder %s225, %s228
      %p237 = scmp.eq.s32.totalorder %s26, 1
      %p238 = por %p236, %p237
      %p239 = scmp.ne.s32.totalorder %s228, %s229
      %p240 = scmp.eq.s32.totalorder %s26, 0
      %p241 = por %p239, %p240
      %p242 = scmp.ne.s32.totalorder %s228, %s229
      %p243 = scmp.eq.s32.totalorder %s27, 1
      %p244 = por %p242, %p243
      %p246 = scmp.ne.s32.totalorder %s229, %s245
      %p247 = scmp.eq.s32.totalorder %s27, 0
      %p248 = por %p246, %p247
      %p249 = scmp.le.s32.totalorder 1, %s21
      %p250 = scmp.lt.s32.totalorder %s21, 3
      %p251 = pnand %p249, %p250
      %p252 = pneg %p251
      // Predicated region
      $region9: #{tpu_custom_call.1} parent=5 // pred_check
        _
      $region10: #{tpu_custom_call.1} parent=5 // pred_check_branch
        %254 = sbr.rel (%p251) target = $region12
      $region11: #{tpu_custom_call.1} parent=5 // pred_region
        %s255 = ssub.s32 %s21, 1
        // Predicated region
        $region13: #{tpu_custom_call.1} parent=11 // pred_check
          %p256 = pneg %p68
        $region14: #{tpu_custom_call.1} parent=11 // pred_check_branch
          %258 = sbr.rel (%p256) target = $region16
        $region15: #{tpu_custom_call.1} parent=11 // pred_region
          _
        $region16: #{tpu_custom_call.1} parent=11 // pred_fallthru
          _
        // Predicated region
        $region17: #{tpu_custom_call.1} parent=11 // pred_check
          %p259 = pneg %p89
        $region18: #{tpu_custom_call.1} parent=11 // pred_check_branch
          %261 = sbr.rel (%p259) target = $region20
        $region19: #{tpu_custom_call.1} parent=11 // pred_region
          _
        $region20: #{tpu_custom_call.1} parent=11 // pred_fallthru
          _
        // Predicated region
        $region21: #{tpu_custom_call.1} parent=11 // pred_check
          %p262 = pneg %p110
        $region22: #{tpu_custom_call.1} parent=11 // pred_check_branch
          %264 = sbr.rel (%p262) target = $region24
        $region23: #{tpu_custom_call.1} parent=11 // pred_region
          _
        $region24: #{tpu_custom_call.1} parent=11 // pred_fallthru
          _
        // Predicated region
        $region25: #{tpu_custom_call.1} parent=11 // pred_check
          %p265 = pneg %p131
        $region26: #{tpu_custom_call.1} parent=11 // pred_check_branch
          %267 = sbr.rel (%p265) target = $region28
        $region27: #{tpu_custom_call.1} parent=11 // pred_region
          _
        $region28: #{tpu_custom_call.1} parent=11 // pred_fallthru
          _
        // Predicated region
        $region29: #{tpu_custom_call.1} parent=11 // pred_check
          %p268 = pneg %p152
        $region30: #{tpu_custom_call.1} parent=11 // pred_check_branch
          %270 = sbr.rel (%p268) target = $region32
        $region31: #{tpu_custom_call.1} parent=11 // pred_region
          _
        $region32: #{tpu_custom_call.1} parent=11 // pred_fallthru
          _
        // Predicated region
        $region33: #{tpu_custom_call.1} parent=11 // pred_check
          %p271 = pneg %p173
        $region34: #{tpu_custom_call.1} parent=11 // pred_check_branch
          %273 = sbr.rel (%p271) target = $region36
        $region35: #{tpu_custom_call.1} parent=11 // pred_region
          _
        $region36: #{tpu_custom_call.1} parent=11 // pred_fallthru
          _
        // Predicated region
        $region37: #{tpu_custom_call.1} parent=11 // pred_check
          %p274 = pneg %p194
        $region38: #{tpu_custom_call.1} parent=11 // pred_check_branch
          %276 = sbr.rel (%p274) target = $region40
        $region39: #{tpu_custom_call.1} parent=11 // pred_region
          _
        $region40: #{tpu_custom_call.1} parent=11 // pred_fallthru
          _
        // Predicated region
        $region41: #{tpu_custom_call.1} parent=11 // pred_check
          %p277 = pneg %p215
        $region42: #{tpu_custom_call.1} parent=11 // pred_check_branch
          %279 = sbr.rel (%p277) target = $region44
        $region43: #{tpu_custom_call.1} parent=11 // pred_region
          _
        $region44: #{tpu_custom_call.1} parent=11 // pred_fallthru
          _
      $region12: #{tpu_custom_call.1} parent=5 // pred_fallthru
        _
      %p280 = scmp.lt.s32.totalorder %s21, 2
      // Predicated region
      $region45: #{tpu_custom_call.1} parent=5 // pred_check
        %p281 = pneg %p280
      $region46: #{tpu_custom_call.1} parent=5 // pred_check_branch
        %283 = sbr.rel (%p281) target = $region48
      $region47: #{tpu_custom_call.1} parent=5 // pred_region
        // Predicated region
        $region49: #{tpu_custom_call.1} parent=47 // pred_check
          %p284 = pneg %p41
        $region50: #{tpu_custom_call.1} parent=47 // pred_check_branch
          %286 = sbr.rel (%p284) target = $region52
        $region51: #{tpu_custom_call.1} parent=47 // pred_region
          %s287 = sand.u32 %s31, 1
          %s288 = scalar_lea.sflag [#allocation3], %s287
          %s289 = sand.u32 %s31, 1
          %s290 = smul.addr %s289, 128
          %s291 = scalar_lea.vmem [#allocation2], %s290
          %s292 = smul.u32 16, %s21
          %294 = vsyncadd %s288, 0
          %s295 = smul.addr %s292, 8
          %s296 = scalar_lea.hbm %s0, %s295
          %s298 = sshll.u32 %s296, 4
          %s299 = int_to_ptr.hbm [resolvable:$true] %s298
          %s300 = sshll.u32 %s291, 4
          %s301 = int_to_ptr.vmem [resolvable:$true] %s300
          %303 = dma.hbm_to_vmem [thread:$0]  %s299, 2048, %s301, %s288
        $region52: #{tpu_custom_call.1} parent=47 // pred_fallthru
          _
      $region48: #{tpu_custom_call.1} parent=5 // pred_fallthru
        _
      %p304 = scmp.le.s32.totalorder 1, %s21
      %p305 = scmp.lt.s32.totalorder %s21, 3
      %p306 = pnand %p304, %p305
      %p307 = pneg %p306
      // Predicated region
      $region53: #{tpu_custom_call.1} parent=5 // pred_check
        _
      $region54: #{tpu_custom_call.1} parent=5 // pred_check_branch
        %309 = sbr.rel (%p306) target = $region56
      $region55: #{tpu_custom_call.1} parent=5 // pred_region
        %s310 = ssub.s32 %s21, 1
        %s311 = sand.u32 %s34, 1
        %s312 = scalar_lea.sflag [#allocation3], %s311
        %s313 = sand.u32 %s34, 1
        %s314 = smul.addr %s313, 128
        %s315 = scalar_lea.vmem [#allocation2], %s314
        // Predicated region
        $region57: #{tpu_custom_call.1} parent=55 // pred_check
          %p316 = pneg %p47
        $region58: #{tpu_custom_call.1} parent=55 // pred_check_branch
          %318 = sbr.rel (%p316) target = $region60
        $region59: #{tpu_custom_call.1} parent=55 // pred_region
          %320 = dma.done %s312, 2048
        $region60: #{tpu_custom_call.1} parent=55 // pred_fallthru
          _
        %s321 = sand.u32 %s34, 1
        %s322 = scalar_lea.sflag [#allocation3], %s321
        %s323 = sand.u32 %s34, 1
        %s324 = smul.addr %s323, 128
        %s325 = scalar_lea.vmem [#allocation2], %s324
        %p326 = pneg %p47
        %p327 = pneg %p44
        %p328 = pneg %p68
        %p329 = pneg %p65
        %p330 = pneg %p89
        %p331 = pneg %p86
        %p332 = pneg %p110
        %p333 = pneg %p107
        %p334 = pneg %p131
        %p335 = pneg %p128
        %p336 = pneg %p152
        %p337 = pneg %p149
        %p338 = pneg %p173
        %p339 = pneg %p170
        %p340 = pneg %p194
        %p341 = pneg %p191
        %p342 = pneg %p215
        %p343 = pneg %p212
        %p344 = pneg %p241
        %p345 = pneg %p238
        %s346 = sand.u32 %s228, 1
        %s347 = scalar_lea.sflag [#allocation4], %s346
        %s348 = sand.u32 %s228, 1
        %s349 = smul.addr %s348, 8
        %s350 = scalar_lea.vmem [#allocation5], %s349
        %s351 = smul.u32 16, %s26
        %v353 = vld [vmem:[%s315] sm:$0xff]
        %v354 = vld [vmem:[%s315 + $0x8] sm:$0xff]
        %v355 = vld [vmem:[%s315 + $0x10] sm:$0xff]
        %v356 = vld [vmem:[%s315 + $0x18] sm:$0xff]
        %v357 = vld [vmem:[%s315 + $0x20] sm:$0xff]
        %v358 = vld [vmem:[%s315 + $0x28] sm:$0xff]
        %v359 = vld [vmem:[%s315 + $0x30] sm:$0xff]
        %v360 = vld [vmem:[%s315 + $0x38] sm:$0xff]
        %v361 = vld [vmem:[%s315 + $0x40] sm:$0xff]
        %v362 = vld [vmem:[%s315 + $0x48] sm:$0xff]
        %v363 = vld [vmem:[%s315 + $0x50] sm:$0xff]
        %v364 = vld [vmem:[%s315 + $0x58] sm:$0xff]
        %v365 = vld [vmem:[%s315 + $0x60] sm:$0xff]
        %v366 = vld [vmem:[%s315 + $0x68] sm:$0xff]
        %v367 = vld [vmem:[%s315 + $0x70] sm:$0xff]
        %v368 = vld [vmem:[%s315 + $0x78] sm:$0xff]
        %v369 = vld [vmem:[%s1] sm:$0xff]
        %v370 = vld [vmem:[%s1 + $0x8] sm:$0xff]
        %v371 = vld [vmem:[%s1 + $0x10] sm:$0xff]
        %v372 = vld [vmem:[%s1 + $0x18] sm:$0xff]
        %v373 = vld [vmem:[%s4] sm:$0xf]
        %v374 = vld [vmem:[%s4 + $0x4] sm:$0xf]
        %v375 = vld [vmem:[%s4 + $0x8] sm:$0xf]
        %v376 = vld [vmem:[%s4 + $0xc] sm:$0xf]
        %v377 = vld [vmem:[%s5] sm:$0xff]
        %v378 = vld [vmem:[%s5 + $0x8] sm:$0xff]
        %v379 = vld [vmem:[%s5 + $0x10] sm:$0xff]
        %v380 = vld [vmem:[%s5 + $0x18] sm:$0xff]
        %v381 = vld [vmem:[%s6] sm:$0xff]
        %v382 = vld [vmem:[%s6 + $0x8] sm:$0xff]
        %v383 = vld [vmem:[%s6 + $0x10] sm:$0xff]
        %v384 = vld [vmem:[%s6 + $0x18] sm:$0xff]
        %v385 = vld [vmem:[%s2] sm:$0xff]
        %v386 = vld [vmem:[%s2 + $0x8] sm:$0xff]
        %v387 = vld [vmem:[%s2 + $0x10] sm:$0xff]
        %v388 = vld [vmem:[%s2 + $0x18] sm:$0xff]
        %v389 = vld [vmem:[%s2 + $0x20] sm:$0xff]
        %v390 = vld [vmem:[%s2 + $0x28] sm:$0xff]
        %v391 = vld [vmem:[%s2 + $0x30] sm:$0xff]
        %v392 = vld [vmem:[%s2 + $0x38] sm:$0xff]
        %v393 = vld [vmem:[%s2 + $0x40] sm:$0xff]
        %v394 = vld [vmem:[%s2 + $0x48] sm:$0xff]
        %v395 = vld [vmem:[%s2 + $0x50] sm:$0xff]
        %v396 = vld [vmem:[%s2 + $0x58] sm:$0xff]
        %v397 = vld [vmem:[%s3] sm:$0xff]
        %v398 = vld [vmem:[%s3 + $0x8] sm:$0xff]
        %v399 = vld [vmem:[%s3 + $0x10] sm:$0xff]
        %v400 = vld [vmem:[%s3 + $0x18] sm:$0xff]
        %v401 = vld [vmem:[%s3 + $0x20] sm:$0xff]
        %v402 = vld [vmem:[%s3 + $0x28] sm:$0xff]
        %v403 = vld [vmem:[%s3 + $0x30] sm:$0xff]
        %v404 = vld [vmem:[%s3 + $0x38] sm:$0xff]
        %v405 = vld [vmem:[%s3 + $0x40] sm:$0xff]
        %v406 = vld [vmem:[%s3 + $0x48] sm:$0xff]
        %v407 = vld [vmem:[%s3 + $0x50] sm:$0xff]
        %v408 = vld [vmem:[%s3 + $0x58] sm:$0xff]
        %v409 = vlaneseq
        %v410 = vand.u32 %v409, 127
        %v411 = vadd.s32 %v410, 128
        %v412 = vrot.slane %v353, 4
        %v413 = vmin.f32 %v353, %v412
        %v414 = vrot.slane %v413, 2
        %v415 = vmin.f32 %v413, %v414
        %v416 = vrot.slane %v415, 1
        %v417 = vmin.f32 %v415, %v416
        %v418 = vrot.slane %v354, 4
        %v419 = vmin.f32 %v354, %v418
        %v420 = vrot.slane %v419, 2
        %v421 = vmin.f32 %v419, %v420
        %v422 = vrot.slane %v421, 1
        %v423 = vmin.f32 %v421, %v422
        %v424 = vrot.slane %v355, 4
        %v425 = vmin.f32 %v355, %v424
        %v426 = vrot.slane %v425, 2
        %v427 = vmin.f32 %v425, %v426
        %v428 = vrot.slane %v427, 1
        %v429 = vmin.f32 %v427, %v428
        %v430 = vrot.slane %v356, 4
        %v431 = vmin.f32 %v356, %v430
        %v432 = vrot.slane %v431, 2
        %v433 = vmin.f32 %v431, %v432
        %v434 = vrot.slane %v433, 1
        %v435 = vmin.f32 %v433, %v434
        %v436 = vrot.slane %v357, 4
        %v437 = vmin.f32 %v357, %v436
        %v438 = vrot.slane %v437, 2
        %v439 = vmin.f32 %v437, %v438
        %v440 = vrot.slane %v439, 1
        %v441 = vmin.f32 %v439, %v440
        %v442 = vrot.slane %v358, 4
        %v443 = vmin.f32 %v358, %v442
        %v444 = vrot.slane %v443, 2
        %v445 = vmin.f32 %v443, %v444
        %v446 = vrot.slane %v445, 1
        %v447 = vmin.f32 %v445, %v446
        %v448 = vrot.slane %v359, 4
        %v449 = vmin.f32 %v359, %v448
        %v450 = vrot.slane %v449, 2
        %v451 = vmin.f32 %v449, %v450
        %v452 = vrot.slane %v451, 1
        %v453 = vmin.f32 %v451, %v452
        %v454 = vrot.slane %v360, 4
        %v455 = vmin.f32 %v360, %v454
        %v456 = vrot.slane %v455, 2
        %v457 = vmin.f32 %v455, %v456
        %v458 = vrot.slane %v457, 1
        %v459 = vmin.f32 %v457, %v458
        %v460 = vrot.slane %v361, 4
        %v461 = vmin.f32 %v361, %v460
        %v462 = vrot.slane %v461, 2
        %v463 = vmin.f32 %v461, %v462
        %v464 = vrot.slane %v463, 1
        %v465 = vmin.f32 %v463, %v464
        %v466 = vrot.slane %v362, 4
        %v467 = vmin.f32 %v362, %v466
        %v468 = vrot.slane %v467, 2
        %v469 = vmin.f32 %v467, %v468
        %v470 = vrot.slane %v469, 1
        %v471 = vmin.f32 %v469, %v470
        %v472 = vrot.slane %v363, 4
        %v473 = vmin.f32 %v363, %v472
        %v474 = vrot.slane %v473, 2
        %v475 = vmin.f32 %v473, %v474
        %v476 = vrot.slane %v475, 1
        %v477 = vmin.f32 %v475, %v476
        %v478 = vrot.slane %v364, 4
        %v479 = vmin.f32 %v364, %v478
        %v480 = vrot.slane %v479, 2
        %v481 = vmin.f32 %v479, %v480
        %v482 = vrot.slane %v481, 1
        %v483 = vmin.f32 %v481, %v482
        %v484 = vrot.slane %v365, 4
        %v485 = vmin.f32 %v365, %v484
        %v486 = vrot.slane %v485, 2
        %v487 = vmin.f32 %v485, %v486
        %v488 = vrot.slane %v487, 1
        %v489 = vmin.f32 %v487, %v488
        %v490 = vrot.slane %v366, 4
        %v491 = vmin.f32 %v366, %v490
        %v492 = vrot.slane %v491, 2
        %v493 = vmin.f32 %v491, %v492
        %v494 = vrot.slane %v493, 1
        %v495 = vmin.f32 %v493, %v494
        %v496 = vrot.slane %v367, 4
        %v497 = vmin.f32 %v367, %v496
        %v498 = vrot.slane %v497, 2
        %v499 = vmin.f32 %v497, %v498
        %v500 = vrot.slane %v499, 1
        %v501 = vmin.f32 %v499, %v500
        %v502 = vrot.slane %v368, 4
        %v503 = vmin.f32 %v368, %v502
        %v504 = vrot.slane %v503, 2
        %v505 = vmin.f32 %v503, %v504
        %v506 = vrot.slane %v505, 1
        %v507 = vmin.f32 %v505, %v506
        %v508 = vrot.slane %v353, 4
        %v509 = vmax.f32 %v353, %v508
        %v510 = vrot.slane %v509, 2
        %v511 = vmax.f32 %v509, %v510
        %v512 = vrot.slane %v511, 1
        %v513 = vmax.f32 %v511, %v512
        %v514 = vrot.slane %v354, 4
        %v515 = vmax.f32 %v354, %v514
        %v516 = vrot.slane %v515, 2
        %v517 = vmax.f32 %v515, %v516
        %v518 = vrot.slane %v517, 1
        %v519 = vmax.f32 %v517, %v518
        %v520 = vrot.slane %v355, 4
        %v521 = vmax.f32 %v355, %v520
        %v522 = vrot.slane %v521, 2
        %v523 = vmax.f32 %v521, %v522
        %v524 = vrot.slane %v523, 1
        %v525 = vmax.f32 %v523, %v524
        %v526 = vrot.slane %v356, 4
        %v527 = vmax.f32 %v356, %v526
        %v528 = vrot.slane %v527, 2
        %v529 = vmax.f32 %v527, %v528
        %v530 = vrot.slane %v529, 1
        %v531 = vmax.f32 %v529, %v530
        %v532 = vrot.slane %v357, 4
        %v533 = vmax.f32 %v357, %v532
        %v534 = vrot.slane %v533, 2
        %v535 = vmax.f32 %v533, %v534
        %v536 = vrot.slane %v535, 1
        %v537 = vmax.f32 %v535, %v536
        %v538 = vrot.slane %v358, 4
        %v539 = vmax.f32 %v358, %v538
        %v540 = vrot.slane %v539, 2
        %v541 = vmax.f32 %v539, %v540
        %v542 = vrot.slane %v541, 1
        %v543 = vmax.f32 %v541, %v542
        %v544 = vrot.slane %v359, 4
        %v545 = vmax.f32 %v359, %v544
        %v546 = vrot.slane %v545, 2
        %v547 = vmax.f32 %v545, %v546
        %v548 = vrot.slane %v547, 1
        %v549 = vmax.f32 %v547, %v548
        %v550 = vrot.slane %v360, 4
        %v551 = vmax.f32 %v360, %v550
        %v552 = vrot.slane %v551, 2
        %v553 = vmax.f32 %v551, %v552
        %v554 = vrot.slane %v553, 1
        %v555 = vmax.f32 %v553, %v554
        %v556 = vrot.slane %v361, 4
        %v557 = vmax.f32 %v361, %v556
        %v558 = vrot.slane %v557, 2
        %v559 = vmax.f32 %v557, %v558
        %v560 = vrot.slane %v559, 1
        %v561 = vmax.f32 %v559, %v560
        %v562 = vrot.slane %v362, 4
        %v563 = vmax.f32 %v362, %v562
        %v564 = vrot.slane %v563, 2
        %v565 = vmax.f32 %v563, %v564
        %v566 = vrot.slane %v565, 1
        %v567 = vmax.f32 %v565, %v566
        %v568 = vrot.slane %v363, 4
        %v569 = vmax.f32 %v363, %v568
        %v570 = vrot.slane %v569, 2
        %v571 = vmax.f32 %v569, %v570
        %v572 = vrot.slane %v571, 1
        %v573 = vmax.f32 %v571, %v572
        %v574 = vrot.slane %v364, 4
        %v575 = vmax.f32 %v364, %v574
        %v576 = vrot.slane %v575, 2
        %v577 = vmax.f32 %v575, %v576
        %v578 = vrot.slane %v577, 1
        %v579 = vmax.f32 %v577, %v578
        %v580 = vrot.slane %v365, 4
        %v581 = vmax.f32 %v365, %v580
        %v582 = vrot.slane %v581, 2
        %v583 = vmax.f32 %v581, %v582
        %v584 = vrot.slane %v583, 1
        %v585 = vmax.f32 %v583, %v584
        %v586 = vrot.slane %v366, 4
        %v587 = vmax.f32 %v366, %v586
        %v588 = vrot.slane %v587, 2
        %v589 = vmax.f32 %v587, %v588
        %v590 = vrot.slane %v589, 1
        %v591 = vmax.f32 %v589, %v590
        %v592 = vrot.slane %v367, 4
        %v593 = vmax.f32 %v367, %v592
        %v594 = vrot.slane %v593, 2
        %v595 = vmax.f32 %v593, %v594
        %v596 = vrot.slane %v595, 1
        %v597 = vmax.f32 %v595, %v596
        %v598 = vrot.slane %v368, 4
        %v599 = vmax.f32 %v368, %v598
        %v600 = vrot.slane %v599, 2
        %v601 = vmax.f32 %v599, %v600
        %v602 = vrot.slane %v601, 1
        %v603 = vmax.f32 %v601, %v602
        %v604 = vmin.f32 %v417, %v423
        %605 = vmin.xlane.f32.xlu0 %v604
        %v606 = vpop.xlane.xlu0 %605
        %v607 = vmax.f32 %v513, %v519
        %608 = vmax.xlane.f32.xlu0 %v607
        %v609 = vpop.xlane.xlu0 %608
        %v610 = vsub.f32 %v353, %v606
        %v611 = vsub.f32 %v354, %v606
        %v612 = vsub.f32 %v609, %v606
        %v613 = vrcp.pop %v612
        %v614 = vmul.f32 %v612, %v613
        %v615 = vsub.f32 1.0, %v614
        %v616 = vmul.f32 %v613, %v615
        %v617 = vadd.f32 %v613, %v616
        %vm618 = vweird.f32 %v612
        %vm619 = vweird.f32 %v613
        %vm620 = vmor %vm618, %vm619
        %v621 = vsel %vm620, %v613, %v617
        %v622 = vand.u32 2147483647, %v612
        %vm623 = vcmp.eq.f32.partialorder %v622, 8.507059e+37
        %v624 = vand.u32 %v612, 2147483648
        %v625 = vor.u32 1.1754944e-38, %v624
        %v626 = vsel %vm623, %v625, %v621
        %v627 = vmul.f32 1.0, %v626
        %v628 = vmul.f32 %v610, %v627
        %v629 = vmul.f32 %v611, %v627
        %v630 = vmin.f32 %v429, %v435
        %631 = vmin.xlane.f32.xlu0 %v630
        %v632 = vpop.xlane.xlu0 %631
        %v633 = vmax.f32 %v525, %v531
        %634 = vmax.xlane.f32.xlu0 %v633
        %v635 = vpop.xlane.xlu0 %634
        %v636 = vsub.f32 %v355, %v632
        %v637 = vsub.f32 %v356, %v632
        %v638 = vsub.f32 %v635, %v632
        %v639 = vrcp.pop %v638
        %v640 = vmul.f32 %v638, %v639
        %v641 = vsub.f32 1.0, %v640
        %v642 = vmul.f32 %v639, %v641
        %v643 = vadd.f32 %v639, %v642
        %vm644 = vweird.f32 %v638
        %vm645 = vweird.f32 %v639
        %vm646 = vmor %vm644, %vm645
        %v647 = vsel %vm646, %v639, %v643
        %v648 = vand.u32 2147483647, %v638
        %vm649 = vcmp.eq.f32.partialorder %v648, 8.507059e+37
        %v650 = vand.u32 %v638, 2147483648
        %v651 = vor.u32 1.1754944e-38, %v650
        %v652 = vsel %vm649, %v651, %v647
        %v653 = vmul.f32 1.0, %v652
        %v654 = vmul.f32 %v636, %v653
        %v655 = vmul.f32 %v637, %v653
        %v656 = vmin.f32 %v441, %v447
        %657 = vmin.xlane.f32.xlu0 %v656
        %v658 = vpop.xlane.xlu0 %657
        %v659 = vmax.f32 %v537, %v543
        %660 = vmax.xlane.f32.xlu0 %v659
        %v661 = vpop.xlane.xlu0 %660
        %v662 = vsub.f32 %v357, %v658
        %v663 = vsub.f32 %v358, %v658
        %v664 = vsub.f32 %v661, %v658
        %v665 = vrcp.pop %v664
        %v666 = vmul.f32 %v664, %v665
        %v667 = vsub.f32 1.0, %v666
        %v668 = vmul.f32 %v665, %v667
        %v669 = vadd.f32 %v665, %v668
        %vm670 = vweird.f32 %v664
        %vm671 = vweird.f32 %v665
        %vm672 = vmor %vm670, %vm671
        %v673 = vsel %vm672, %v665, %v669
        %v674 = vand.u32 2147483647, %v664
        %vm675 = vcmp.eq.f32.partialorder %v674, 8.507059e+37
        %v676 = vand.u32 %v664, 2147483648
        %v677 = vor.u32 1.1754944e-38, %v676
        %v678 = vsel %vm675, %v677, %v673
        %v679 = vmul.f32 1.0, %v678
        %v680 = vmul.f32 %v662, %v679
        %v681 = vmul.f32 %v663, %v679
        %v682 = vmin.f32 %v453, %v459
        %683 = vmin.xlane.f32.xlu0 %v682
        %v684 = vpop.xlane.xlu0 %683
        %v685 = vmax.f32 %v549, %v555
        %686 = vmax.xlane.f32.xlu0 %v685
        %v687 = vpop.xlane.xlu0 %686
        %v688 = vsub.f32 %v359, %v684
        %v689 = vsub.f32 %v360, %v684
        %v690 = vsub.f32 %v687, %v684
        %v691 = vrcp.pop %v690
        %v692 = vmul.f32 %v690, %v691
        %v693 = vsub.f32 1.0, %v692
        %v694 = vmul.f32 %v691, %v693
        %v695 = vadd.f32 %v691, %v694
        %vm696 = vweird.f32 %v690
        %vm697 = vweird.f32 %v691
        %vm698 = vmor %vm696, %vm697
        %v699 = vsel %vm698, %v691, %v695
        %v700 = vand.u32 2147483647, %v690
        %vm701 = vcmp.eq.f32.partialorder %v700, 8.507059e+37
        %v702 = vand.u32 %v690, 2147483648
        %v703 = vor.u32 1.1754944e-38, %v702
        %v704 = vsel %vm701, %v703, %v699
        %v705 = vmul.f32 1.0, %v704
        %v706 = vmul.f32 %v688, %v705
        %v707 = vmul.f32 %v689, %v705
        %v708 = vmin.f32 %v465, %v471
        %709 = vmin.xlane.f32.xlu0 %v708
        %v710 = vpop.xlane.xlu0 %709
        %v711 = vmax.f32 %v561, %v567
        %712 = vmax.xlane.f32.xlu0 %v711
        %v713 = vpop.xlane.xlu0 %712
        %v714 = vsub.f32 %v361, %v710
        %v715 = vsub.f32 %v362, %v710
        %v716 = vsub.f32 %v713, %v710
        %v717 = vrcp.pop %v716
        %v718 = vmul.f32 %v716, %v717
        %v719 = vsub.f32 1.0, %v718
        %v720 = vmul.f32 %v717, %v719
        %v721 = vadd.f32 %v717, %v720
        %vm722 = vweird.f32 %v716
        %vm723 = vweird.f32 %v717
        %vm724 = vmor %vm722, %vm723
        %v725 = vsel %vm724, %v717, %v721
        %v726 = vand.u32 2147483647, %v716
        %vm727 = vcmp.eq.f32.partialorder %v726, 8.507059e+37
        %v728 = vand.u32 %v716, 2147483648
        %v729 = vor.u32 1.1754944e-38, %v728
        %v730 = vsel %vm727, %v729, %v725
        %v731 = vmul.f32 1.0, %v730
        %v732 = vmul.f32 %v714, %v731
        %v733 = vmul.f32 %v715, %v731
        %v734 = vmin.f32 %v477, %v483
        %735 = vmin.xlane.f32.xlu0 %v734
        %v736 = vpop.xlane.xlu0 %735
        %v737 = vmax.f32 %v573, %v579
        %738 = vmax.xlane.f32.xlu0 %v737
        %v739 = vpop.xlane.xlu0 %738
        %v740 = vsub.f32 %v363, %v736
        %v741 = vsub.f32 %v364, %v736
        %v742 = vsub.f32 %v739, %v736
        %v743 = vrcp.pop %v742
        %v744 = vmul.f32 %v742, %v743
        %v745 = vsub.f32 1.0, %v744
        %v746 = vmul.f32 %v743, %v745
        %v747 = vadd.f32 %v743, %v746
        %vm748 = vweird.f32 %v742
        %vm749 = vweird.f32 %v743
        %vm750 = vmor %vm748, %vm749
        %v751 = vsel %vm750, %v743, %v747
        %v752 = vand.u32 2147483647, %v742
        %vm753 = vcmp.eq.f32.partialorder %v752, 8.507059e+37
        %v754 = vand.u32 %v742, 2147483648
        %v755 = vor.u32 1.1754944e-38, %v754
        %v756 = vsel %vm753, %v755, %v751
        %v757 = vmul.f32 1.0, %v756
        %v758 = vmul.f32 %v740, %v757
        %v759 = vmul.f32 %v741, %v757
        %v760 = vmin.f32 %v489, %v495
        %761 = vmin.xlane.f32.xlu0 %v760
        %v762 = vpop.xlane.xlu0 %761
        %v763 = vmax.f32 %v585, %v591
        %764 = vmax.xlane.f32.xlu0 %v763
        %v765 = vpop.xlane.xlu0 %764
        %v766 = vsub.f32 %v365, %v762
        %v767 = vsub.f32 %v366, %v762
        %v768 = vsub.f32 %v765, %v762
        %v769 = vrcp.pop %v768
        %v770 = vmul.f32 %v768, %v769
        %v771 = vsub.f32 1.0, %v770
        %v772 = vmul.f32 %v769, %v771
        %v773 = vadd.f32 %v769, %v772
        %vm774 = vweird.f32 %v768
        %vm775 = vweird.f32 %v769
        %vm776 = vmor %vm774, %vm775
        %v777 = vsel %vm776, %v769, %v773
        %v778 = vand.u32 2147483647, %v768
        %vm779 = vcmp.eq.f32.partialorder %v778, 8.507059e+37
        %v780 = vand.u32 %v768, 2147483648
        %v781 = vor.u32 1.1754944e-38, %v780
        %v782 = vsel %vm779, %v781, %v777
        %v783 = vmul.f32 1.0, %v782
        %v784 = vmul.f32 %v766, %v783
        %v785 = vmul.f32 %v767, %v783
        %v786 = vmin.f32 %v501, %v507
        %787 = vmin.xlane.f32.xlu0 %v786
        %v788 = vpop.xlane.xlu0 %787
        %v789 = vmax.f32 %v597, %v603
        %790 = vmax.xlane.f32.xlu0 %v789
        %v791 = vpop.xlane.xlu0 %790
        %v792 = vsub.f32 %v367, %v788
        %v793 = vsub.f32 %v368, %v788
        %v794 = vsub.f32 %v791, %v788
        %v795 = vrcp.pop %v794
        %v796 = vmul.f32 %v794, %v795
        %v797 = vsub.f32 1.0, %v796
        %v798 = vmul.f32 %v795, %v797
        %v799 = vadd.f32 %v795, %v798
        %vm800 = vweird.f32 %v794
        %vm801 = vweird.f32 %v795
        %vm802 = vmor %vm800, %vm801
        %v803 = vsel %vm802, %v795, %v799
        %v804 = vand.u32 2147483647, %v794
        %vm805 = vcmp.eq.f32.partialorder %v804, 8.507059e+37
        %v806 = vand.u32 %v794, 2147483648
        %v807 = vor.u32 1.1754944e-38, %v806
        %v808 = vsel %vm805, %v807, %v803
        %v809 = vmul.f32 1.0, %v808
        %v810 = vmul.f32 %v792, %v809
        %v811 = vmul.f32 %v793, %v809
        %812 = vrot.lane.b32.xlu0 %v628, 1
        %v813 = vpop.permute.xlu0 %812
        %814 = vrot.lane.b32.xlu0 %v629, 1
        %v815 = vpop.permute.xlu0 %814
        %816 = vrot.lane.b32.xlu0 %v654, 1
        %v817 = vpop.permute.xlu0 %816
        %818 = vrot.lane.b32.xlu0 %v655, 1
        %v819 = vpop.permute.xlu0 %818
        %820 = vrot.lane.b32.xlu0 %v680, 1
        %v821 = vpop.permute.xlu0 %820
        %822 = vrot.lane.b32.xlu0 %v681, 1
        %v823 = vpop.permute.xlu0 %822
        %824 = vrot.lane.b32.xlu0 %v706, 1
        %v825 = vpop.permute.xlu0 %824
        %826 = vrot.lane.b32.xlu0 %v707, 1
        %v827 = vpop.permute.xlu0 %826
        %828 = vrot.lane.b32.xlu0 %v732, 1
        %v829 = vpop.permute.xlu0 %828
        %830 = vrot.lane.b32.xlu0 %v733, 1
        %v831 = vpop.permute.xlu0 %830
        %832 = vrot.lane.b32.xlu0 %v758, 1
        %v833 = vpop.permute.xlu0 %832
        %834 = vrot.lane.b32.xlu0 %v759, 1
        %v835 = vpop.permute.xlu0 %834
        %836 = vrot.lane.b32.xlu0 %v784, 1
        %v837 = vpop.permute.xlu0 %836
        %838 = vrot.lane.b32.xlu0 %v785, 1
        %v839 = vpop.permute.xlu0 %838
        %840 = vrot.lane.b32.xlu0 %v810, 1
        %v841 = vpop.permute.xlu0 %840
        %842 = vrot.lane.b32.xlu0 %v811, 1
        %v843 = vpop.permute.xlu0 %842
        %vm844 = vcmp.lt.s32.totalorder %v410, 1
        %v845 = vsel %vm844, %v841, %v843
        %v846 = vsel %vm844, %v839, %v841
        %v847 = vsel %vm844, %v837, %v839
        %v848 = vsel %vm844, %v835, %v837
        %v849 = vsel %vm844, %v833, %v835
        %v850 = vsel %vm844, %v831, %v833
        %v851 = vsel %vm844, %v829, %v831
        %v852 = vsel %vm844, %v827, %v829
        %v853 = vsel %vm844, %v825, %v827
        %v854 = vsel %vm844, %v823, %v825
        %v855 = vsel %vm844, %v821, %v823
        %v856 = vsel %vm844, %v819, %v821
        %v857 = vsel %vm844, %v817, %v819
        %v858 = vsel %vm844, %v815, %v817
        %v859 = vsel %vm844, %v813, %v815
        %v860 = vsel %vm844, %v843, %v813
        %vm861 = vcmp.ge.s32.totalorder %v410, 1
        %vm862 = vcmp.ge.s32.totalorder %v411, 1
        %v863 = vsel %vm861, 1, 0
        %v864 = vsel %vm862, 1, 0
        %v865 = vperm.slane %v863, 0
        %v866 = vperm.slane %v864, 0
        %vm867 = vcmp.eq.s32.totalorder %v865, 1
        %vm868 = vcmp.eq.s32.totalorder %v866, 1
        %v869 = vsel %vm867, %v860, 0.0
        %v870 = vsel %vm868, %v859, 0.0
        %v871 = vsel %vm867, %v858, 0.0
        %v872 = vsel %vm868, %v857, 0.0
        %v873 = vsel %vm867, %v856, 0.0
        %v874 = vsel %vm868, %v855, 0.0
        %v875 = vsel %vm867, %v854, 0.0
        %v876 = vsel %vm868, %v853, 0.0
        %v877 = vsel %vm867, %v852, 0.0
        %v878 = vsel %vm868, %v851, 0.0
        %v879 = vsel %vm867, %v850, 0.0
        %v880 = vsel %vm868, %v849, 0.0
        %v881 = vsel %vm867, %v848, 0.0
        %v882 = vsel %vm868, %v847, 0.0
        %v883 = vsel %vm867, %v846, 0.0
        %v884 = vsel %vm868, %v845, 0.0
        %885 = vrot.lane.b32.xlu0 %v628, 127
        %v886 = vpop.permute.xlu0 %885
        %887 = vrot.lane.b32.xlu0 %v629, 127
        %v888 = vpop.permute.xlu0 %887
        %889 = vrot.lane.b32.xlu0 %v654, 127
        %v890 = vpop.permute.xlu0 %889
        %891 = vrot.lane.b32.xlu0 %v655, 127
        %v892 = vpop.permute.xlu0 %891
        %893 = vrot.lane.b32.xlu0 %v680, 127
        %v894 = vpop.permute.xlu0 %893
        %895 = vrot.lane.b32.xlu0 %v681, 127
        %v896 = vpop.permute.xlu0 %895
        %897 = vrot.lane.b32.xlu0 %v706, 127
        %v898 = vpop.permute.xlu0 %897
        %899 = vrot.lane.b32.xlu0 %v707, 127
        %v900 = vpop.permute.xlu0 %899
        %901 = vrot.lane.b32.xlu0 %v732, 127
        %v902 = vpop.permute.xlu0 %901
        %903 = vrot.lane.b32.xlu0 %v733, 127
        %v904 = vpop.permute.xlu0 %903
        %905 = vrot.lane.b32.xlu0 %v758, 127
        %v906 = vpop.permute.xlu0 %905
        %907 = vrot.lane.b32.xlu0 %v759, 127
        %v908 = vpop.permute.xlu0 %907
        %909 = vrot.lane.b32.xlu0 %v784, 127
        %v910 = vpop.permute.xlu0 %909
        %911 = vrot.lane.b32.xlu0 %v785, 127
        %v912 = vpop.permute.xlu0 %911
        %913 = vrot.lane.b32.xlu0 %v810, 127
        %v914 = vpop.permute.xlu0 %913
        %915 = vrot.lane.b32.xlu0 %v811, 127
        %v916 = vpop.permute.xlu0 %915
        %vm917 = vcmp.lt.s32.totalorder %v410, 127
        %v918 = vsel %vm917, %v914, %v916
        %v919 = vsel %vm917, %v912, %v914
        %v920 = vsel %vm917, %v910, %v912
        %v921 = vsel %vm917, %v908, %v910
        %v922 = vsel %vm917, %v906, %v908
        %v923 = vsel %vm917, %v904, %v906
        %v924 = vsel %vm917, %v902, %v904
        %v925 = vsel %vm917, %v900, %v902
        %v926 = vsel %vm917, %v898, %v900
        %v927 = vsel %vm917, %v896, %v898
        %v928 = vsel %vm917, %v894, %v896
        %v929 = vsel %vm917, %v892, %v894
        %v930 = vsel %vm917, %v890, %v892
        %v931 = vsel %vm917, %v888, %v890
        %v932 = vsel %vm917, %v886, %v888
        %v933 = vsel %vm917, %v916, %v886
        %vm934 = vcmp.lt.s32.totalorder %v410, 255
        %vm935 = vcmp.lt.s32.totalorder %v411, 255
        %v936 = vsel %vm934, 1, 0
        %v937 = vsel %vm935, 1, 0
        %v938 = vperm.slane %v936, 0
        %v939 = vperm.slane %v937, 0
        %vm940 = vcmp.eq.s32.totalorder %v938, 1
        %vm941 = vcmp.eq.s32.totalorder %v939, 1
        %v942 = vsel %vm940, %v932, 0.0
        %v943 = vsel %vm941, %v931, 0.0
        %v944 = vsel %vm940, %v930, 0.0
        %v945 = vsel %vm941, %v929, 0.0
        %v946 = vsel %vm940, %v928, 0.0
        %v947 = vsel %vm941, %v927, 0.0
        %v948 = vsel %vm940, %v926, 0.0
        %v949 = vsel %vm941, %v925, 0.0
        %v950 = vsel %vm940, %v924, 0.0
        %v951 = vsel %vm941, %v923, 0.0
        %v952 = vsel %vm940, %v922, 0.0
        %v953 = vsel %vm941, %v921, 0.0
        %v954 = vsel %vm940, %v920, 0.0
        %v955 = vsel %vm941, %v919, 0.0
        %v956 = vsel %vm940, %v918, 0.0
        %v957 = vsel %vm941, %v933, 0.0
        %vm958 = vcmask 195584
        %v960 = vsel %vm958, %v369, 0
        %v963 = vsel %vm958, %v370, 0
        %v966 = vsel %vm958, %v371, 0
        %v969 = vsel %vm958, %v372, 0
        %971 = vmatpush.msra.mxu0 0.0
        %972 = vmatpush.msra.mxu0 0.0
        %973 = vmatpush.msra.mxu0 0.0
        %974 = vmatpush.msra.mxu0 0.0
        %975 = vmatpush.msra.mxu0 0.0
        %976 = vmatpush.msra.mxu0 0.0
        %977 = vmatpush.msra.mxu0 0.0
        %978 = vmatpush.msra.mxu0 0.0
        %979 = vmatpush.msra.mxu0 0.0
        %980 = vmatpush.msra.mxu0 0.0
        %981 = vmatpush.msra.mxu0 0.0
        %982 = vmatpush.msra.mxu0 0.0
        %983 = vmatpush.msra.mxu0 0.0
        %984 = vmatpush.msra.mxu0 %v942
        %985 = vmatpush.msra.mxu0 %v628
        %986 = vmatpush.msra.mxu0 %v869
        %987 = vmatmul.f32.gmra.mxu0 %v960
        %v988 = vpop.f32.mrf.mxu0
        %v989 = vadd.f32 0.0, %v988
        %990 = vmatmul.f32.gmra.mxu0 %v963
        %v991 = vpop.f32.mrf.mxu0
        %v992 = vadd.f32 0.0, %v991
        %993 = vmatmul.f32.gmra.mxu0 %v966
        %v994 = vpop.f32.mrf.mxu0
        %v995 = vadd.f32 0.0, %v994
        %996 = vmatmul.f32.gmra.mxu0 %v969
        %v997 = vpop.f32.mrf.mxu0
        %v998 = vadd.f32 0.0, %v997
        %999 = vdwg.mxu0
        %1000 = vmatpush.msra.mxu0 0.0
        %1001 = vmatpush.msra.mxu0 0.0
        %1002 = vmatpush.msra.mxu0 0.0
        %1003 = vmatpush.msra.mxu0 0.0
        %1004 = vmatpush.msra.mxu0 0.0
        %1005 = vmatpush.msra.mxu0 0.0
        %1006 = vmatpush.msra.mxu0 0.0
        %1007 = vmatpush.msra.mxu0 0.0
        %1008 = vmatpush.msra.mxu0 0.0
        %1009 = vmatpush.msra.mxu0 0.0
        %1010 = vmatpush.msra.mxu0 0.0
        %1011 = vmatpush.msra.mxu0 0.0
        %1012 = vmatpush.msra.mxu0 0.0
        %1013 = vmatpush.msra.mxu0 %v943
        %1014 = vmatpush.msra.mxu0 %v629
        %1015 = vmatpush.msra.mxu0 %v870
        %1016 = vmatmul.f32.gmra.mxu0 %v960
        %v1017 = vpop.f32.mrf.mxu0
        %v1018 = vadd.f32 0.0, %v1017
        %1019 = vmatmul.f32.gmra.mxu0 %v963
        %v1020 = vpop.f32.mrf.mxu0
        %v1021 = vadd.f32 0.0, %v1020
        %1022 = vmatmul.f32.gmra.mxu0 %v966
        %v1023 = vpop.f32.mrf.mxu0
        %v1024 = vadd.f32 0.0, %v1023
        %1025 = vmatmul.f32.gmra.mxu0 %v969
        %v1026 = vpop.f32.mrf.mxu0
        %v1027 = vadd.f32 0.0, %v1026
        %1028 = vdwg.mxu0
        %1029 = vmatpush.msra.mxu0 0.0
        %1030 = vmatpush.msra.mxu0 0.0
        %1031 = vmatpush.msra.mxu0 0.0
        %1032 = vmatpush.msra.mxu0 0.0
        %1033 = vmatpush.msra.mxu0 0.0
        %1034 = vmatpush.msra.mxu0 0.0
        %1035 = vmatpush.msra.mxu0 0.0
        %1036 = vmatpush.msra.mxu0 0.0
        %1037 = vmatpush.msra.mxu0 0.0
        %1038 = vmatpush.msra.mxu0 0.0
        %1039 = vmatpush.msra.mxu0 0.0
        %1040 = vmatpush.msra.mxu0 0.0
        %1041 = vmatpush.msra.mxu0 0.0
        %1042 = vmatpush.msra.mxu0 %v944
        %1043 = vmatpush.msra.mxu0 %v654
        %1044 = vmatpush.msra.mxu0 %v871
        %1045 = vmatmul.f32.gmra.mxu0 %v960
        %v1046 = vpop.f32.mrf.mxu0
        %v1047 = vadd.f32 0.0, %v1046
        %1048 = vmatmul.f32.gmra.mxu0 %v963
        %v1049 = vpop.f32.mrf.mxu0
        %v1050 = vadd.f32 0.0, %v1049
        %1051 = vmatmul.f32.gmra.mxu0 %v966
        %v1052 = vpop.f32.mrf.mxu0
        %v1053 = vadd.f32 0.0, %v1052
        %1054 = vmatmul.f32.gmra.mxu0 %v969
        %v1055 = vpop.f32.mrf.mxu0
        %v1056 = vadd.f32 0.0, %v1055
        %1057 = vdwg.mxu0
        %1058 = vmatpush.msra.mxu0 0.0
        %1059 = vmatpush.msra.mxu0 0.0
        %1060 = vmatpush.msra.mxu0 0.0
        %1061 = vmatpush.msra.mxu0 0.0
        %1062 = vmatpush.msra.mxu0 0.0
        %1063 = vmatpush.msra.mxu0 0.0
        %1064 = vmatpush.msra.mxu0 0.0
        %1065 = vmatpush.msra.mxu0 0.0
        %1066 = vmatpush.msra.mxu0 0.0
        %1067 = vmatpush.msra.mxu0 0.0
        %1068 = vmatpush.msra.mxu0 0.0
        %1069 = vmatpush.msra.mxu0 0.0
        %1070 = vmatpush.msra.mxu0 0.0
        %1071 = vmatpush.msra.mxu0 %v945
        %1072 = vmatpush.msra.mxu0 %v655
        %1073 = vmatpush.msra.mxu0 %v872
        %1074 = vmatmul.f32.gmra.mxu0 %v960
        %v1075 = vpop.f32.mrf.mxu0
        %v1076 = vadd.f32 0.0, %v1075
        %1077 = vmatmul.f32.gmra.mxu0 %v963
        %v1078 = vpop.f32.mrf.mxu0
        %v1079 = vadd.f32 0.0, %v1078
        %1080 = vmatmul.f32.gmra.mxu0 %v966
        %v1081 = vpop.f32.mrf.mxu0
        %v1082 = vadd.f32 0.0, %v1081
        %1083 = vmatmul.f32.gmra.mxu0 %v969
        %v1084 = vpop.f32.mrf.mxu0
        %v1085 = vadd.f32 0.0, %v1084
        %1086 = vdwg.mxu0
        %1087 = vmatpush.msra.mxu0 0.0
        %1088 = vmatpush.msra.mxu0 0.0
        %1089 = vmatpush.msra.mxu0 0.0
        %1090 = vmatpush.msra.mxu0 0.0
        %1091 = vmatpush.msra.mxu0 0.0
        %1092 = vmatpush.msra.mxu0 0.0
        %1093 = vmatpush.msra.mxu0 0.0
        %1094 = vmatpush.msra.mxu0 0.0
        %1095 = vmatpush.msra.mxu0 0.0
        %1096 = vmatpush.msra.mxu0 0.0
        %1097 = vmatpush.msra.mxu0 0.0
        %1098 = vmatpush.msra.mxu0 0.0
        %1099 = vmatpush.msra.mxu0 0.0
        %1100 = vmatpush.msra.mxu0 %v946
        %1101 = vmatpush.msra.mxu0 %v680
        %1102 = vmatpush.msra.mxu0 %v873
        %1103 = vmatmul.f32.gmra.mxu0 %v960
        %v1104 = vpop.f32.mrf.mxu0
        %v1105 = vadd.f32 0.0, %v1104
        %1106 = vmatmul.f32.gmra.mxu0 %v963
        %v1107 = vpop.f32.mrf.mxu0
        %v1108 = vadd.f32 0.0, %v1107
        %1109 = vmatmul.f32.gmra.mxu0 %v966
        %v1110 = vpop.f32.mrf.mxu0
        %v1111 = vadd.f32 0.0, %v1110
        %1112 = vmatmul.f32.gmra.mxu0 %v969
        %v1113 = vpop.f32.mrf.mxu0
        %v1114 = vadd.f32 0.0, %v1113
        %1115 = vdwg.mxu0
        %1116 = vmatpush.msra.mxu0 0.0
        %1117 = vmatpush.msra.mxu0 0.0
        %1118 = vmatpush.msra.mxu0 0.0
        %1119 = vmatpush.msra.mxu0 0.0
        %1120 = vmatpush.msra.mxu0 0.0
        %1121 = vmatpush.msra.mxu0 0.0
        %1122 = vmatpush.msra.mxu0 0.0
        %1123 = vmatpush.msra.mxu0 0.0
        %1124 = vmatpush.msra.mxu0 0.0
        %1125 = vmatpush.msra.mxu0 0.0
        %1126 = vmatpush.msra.mxu0 0.0
        %1127 = vmatpush.msra.mxu0 0.0
        %1128 = vmatpush.msra.mxu0 0.0
        %1129 = vmatpush.msra.mxu0 %v947
        %1130 = vmatpush.msra.mxu0 %v681
        %1131 = vmatpush.msra.mxu0 %v874
        %1132 = vmatmul.f32.gmra.mxu0 %v960
        %v1133 = vpop.f32.mrf.mxu0
        %v1134 = vadd.f32 0.0, %v1133
        %1135 = vmatmul.f32.gmra.mxu0 %v963
        %v1136 = vpop.f32.mrf.mxu0
        %v1137 = vadd.f32 0.0, %v1136
        %1138 = vmatmul.f32.gmra.mxu0 %v966
        %v1139 = vpop.f32.mrf.mxu0
        %v1140 = vadd.f32 0.0, %v1139
        %1141 = vmatmul.f32.gmra.mxu0 %v969
        %v1142 = vpop.f32.mrf.mxu0
        %v1143 = vadd.f32 0.0, %v1142
        %1144 = vdwg.mxu0
        %1145 = vmatpush.msra.mxu0 0.0
        %1146 = vmatpush.msra.mxu0 0.0
        %1147 = vmatpush.msra.mxu0 0.0
        %1148 = vmatpush.msra.mxu0 0.0
        %1149 = vmatpush.msra.mxu0 0.0
        %1150 = vmatpush.msra.mxu0 0.0
        %1151 = vmatpush.msra.mxu0 0.0
        %1152 = vmatpush.msra.mxu0 0.0
        %1153 = vmatpush.msra.mxu0 0.0
        %1154 = vmatpush.msra.mxu0 0.0
        %1155 = vmatpush.msra.mxu0 0.0
        %1156 = vmatpush.msra.mxu0 0.0
        %1157 = vmatpush.msra.mxu0 0.0
        %1158 = vmatpush.msra.mxu0 %v948
        %1159 = vmatpush.msra.mxu0 %v706
        %1160 = vmatpush.msra.mxu0 %v875
        %1161 = vmatmul.f32.gmra.mxu0 %v960
        %v1162 = vpop.f32.mrf.mxu0
        %v1163 = vadd.f32 0.0, %v1162
        %1164 = vmatmul.f32.gmra.mxu0 %v963
        %v1165 = vpop.f32.mrf.mxu0
        %v1166 = vadd.f32 0.0, %v1165
        %1167 = vmatmul.f32.gmra.mxu0 %v966
        %v1168 = vpop.f32.mrf.mxu0
        %v1169 = vadd.f32 0.0, %v1168
        %1170 = vmatmul.f32.gmra.mxu0 %v969
        %v1171 = vpop.f32.mrf.mxu0
        %v1172 = vadd.f32 0.0, %v1171
        %1173 = vdwg.mxu0
        %1174 = vmatpush.msra.mxu0 0.0
        %1175 = vmatpush.msra.mxu0 0.0
        %1176 = vmatpush.msra.mxu0 0.0
        %1177 = vmatpush.msra.mxu0 0.0
        %1178 = vmatpush.msra.mxu0 0.0
        %1179 = vmatpush.msra.mxu0 0.0
        %1180 = vmatpush.msra.mxu0 0.0
        %1181 = vmatpush.msra.mxu0 0.0
        %1182 = vmatpush.msra.mxu0 0.0
        %1183 = vmatpush.msra.mxu0 0.0
        %1184 = vmatpush.msra.mxu0 0.0
        %1185 = vmatpush.msra.mxu0 0.0
        %1186 = vmatpush.msra.mxu0 0.0
        %1187 = vmatpush.msra.mxu0 %v949
        %1188 = vmatpush.msra.mxu0 %v707
        %1189 = vmatpush.msra.mxu0 %v876
        %1190 = vmatmul.f32.gmra.mxu0 %v960
        %v1191 = vpop.f32.mrf.mxu0
        %v1192 = vadd.f32 0.0, %v1191
        %1193 = vmatmul.f32.gmra.mxu0 %v963
        %v1194 = vpop.f32.mrf.mxu0
        %v1195 = vadd.f32 0.0, %v1194
        %1196 = vmatmul.f32.gmra.mxu0 %v966
        %v1197 = vpop.f32.mrf.mxu0
        %v1198 = vadd.f32 0.0, %v1197
        %1199 = vmatmul.f32.gmra.mxu0 %v969
        %v1200 = vpop.f32.mrf.mxu0
        %v1201 = vadd.f32 0.0, %v1200
        %1202 = vdwg.mxu0
        %1203 = vmatpush.msra.mxu0 0.0
        %1204 = vmatpush.msra.mxu0 0.0
        %1205 = vmatpush.msra.mxu0 0.0
        %1206 = vmatpush.msra.mxu0 0.0
        %1207 = vmatpush.msra.mxu0 0.0
        %1208 = vmatpush.msra.mxu0 0.0
        %1209 = vmatpush.msra.mxu0 0.0
        %1210 = vmatpush.msra.mxu0 0.0
        %1211 = vmatpush.msra.mxu0 0.0
        %1212 = vmatpush.msra.mxu0 0.0
        %1213 = vmatpush.msra.mxu0 0.0
        %1214 = vmatpush.msra.mxu0 0.0
        %1215 = vmatpush.msra.mxu0 0.0
        %1216 = vmatpush.msra.mxu0 %v950
        %1217 = vmatpush.msra.mxu0 %v732
        %1218 = vmatpush.msra.mxu0 %v877
        %1219 = vmatmul.f32.gmra.mxu0 %v960
        %v1220 = vpop.f32.mrf.mxu0
        %v1221 = vadd.f32 0.0, %v1220
        %1222 = vmatmul.f32.gmra.mxu0 %v963
        %v1223 = vpop.f32.mrf.mxu0
        %v1224 = vadd.f32 0.0, %v1223
        %1225 = vmatmul.f32.gmra.mxu0 %v966
        %v1226 = vpop.f32.mrf.mxu0
        %v1227 = vadd.f32 0.0, %v1226
        %1228 = vmatmul.f32.gmra.mxu0 %v969
        %v1229 = vpop.f32.mrf.mxu0
        %v1230 = vadd.f32 0.0, %v1229
        %1231 = vdwg.mxu0
        %1232 = vmatpush.msra.mxu0 0.0
        %1233 = vmatpush.msra.mxu0 0.0
        %1234 = vmatpush.msra.mxu0 0.0
        %1235 = vmatpush.msra.mxu0 0.0
        %1236 = vmatpush.msra.mxu0 0.0
        %1237 = vmatpush.msra.mxu0 0.0
        %1238 = vmatpush.msra.mxu0 0.0
        %1239 = vmatpush.msra.mxu0 0.0
        %1240 = vmatpush.msra.mxu0 0.0
        %1241 = vmatpush.msra.mxu0 0.0
        %1242 = vmatpush.msra.mxu0 0.0
        %1243 = vmatpush.msra.mxu0 0.0
        %1244 = vmatpush.msra.mxu0 0.0
        %1245 = vmatpush.msra.mxu0 %v951
        %1246 = vmatpush.msra.mxu0 %v733
        %1247 = vmatpush.msra.mxu0 %v878
        %1248 = vmatmul.f32.gmra.mxu0 %v960
        %v1249 = vpop.f32.mrf.mxu0
        %v1250 = vadd.f32 0.0, %v1249
        %1251 = vmatmul.f32.gmra.mxu0 %v963
        %v1252 = vpop.f32.mrf.mxu0
        %v1253 = vadd.f32 0.0, %v1252
        %1254 = vmatmul.f32.gmra.mxu0 %v966
        %v1255 = vpop.f32.mrf.mxu0
        %v1256 = vadd.f32 0.0, %v1255
        %1257 = vmatmul.f32.gmra.mxu0 %v969
        %v1258 = vpop.f32.mrf.mxu0
        %v1259 = vadd.f32 0.0, %v1258
        %1260 = vdwg.mxu0
        %1261 = vmatpush.msra.mxu0 0.0
        %1262 = vmatpush.msra.mxu0 0.0
        %1263 = vmatpush.msra.mxu0 0.0
        %1264 = vmatpush.msra.mxu0 0.0
        %1265 = vmatpush.msra.mxu0 0.0
        %1266 = vmatpush.msra.mxu0 0.0
        %1267 = vmatpush.msra.mxu0 0.0
        %1268 = vmatpush.msra.mxu0 0.0
        %1269 = vmatpush.msra.mxu0 0.0
        %1270 = vmatpush.msra.mxu0 0.0
        %1271 = vmatpush.msra.mxu0 0.0
        %1272 = vmatpush.msra.mxu0 0.0
        %1273 = vmatpush.msra.mxu0 0.0
        %1274 = vmatpush.msra.mxu0 %v952
        %1275 = vmatpush.msra.mxu0 %v758
        %1276 = vmatpush.msra.mxu0 %v879
        %1277 = vmatmul.f32.gmra.mxu0 %v960
        %v1278 = vpop.f32.mrf.mxu0
        %v1279 = vadd.f32 0.0, %v1278
        %1280 = vmatmul.f32.gmra.mxu0 %v963
        %v1281 = vpop.f32.mrf.mxu0
        %v1282 = vadd.f32 0.0, %v1281
        %1283 = vmatmul.f32.gmra.mxu0 %v966
        %v1284 = vpop.f32.mrf.mxu0
        %v1285 = vadd.f32 0.0, %v1284
        %1286 = vmatmul.f32.gmra.mxu0 %v969
        %v1287 = vpop.f32.mrf.mxu0
        %v1288 = vadd.f32 0.0, %v1287
        %1289 = vdwg.mxu0
        %1290 = vmatpush.msra.mxu0 0.0
        %1291 = vmatpush.msra.mxu0 0.0
        %1292 = vmatpush.msra.mxu0 0.0
        %1293 = vmatpush.msra.mxu0 0.0
        %1294 = vmatpush.msra.mxu0 0.0
        %1295 = vmatpush.msra.mxu0 0.0
        %1296 = vmatpush.msra.mxu0 0.0
        %1297 = vmatpush.msra.mxu0 0.0
        %1298 = vmatpush.msra.mxu0 0.0
        %1299 = vmatpush.msra.mxu0 0.0
        %1300 = vmatpush.msra.mxu0 0.0
        %1301 = vmatpush.msra.mxu0 0.0
        %1302 = vmatpush.msra.mxu0 0.0
        %1303 = vmatpush.msra.mxu0 %v953
        %1304 = vmatpush.msra.mxu0 %v759
        %1305 = vmatpush.msra.mxu0 %v880
        %1306 = vmatmul.f32.gmra.mxu0 %v960
        %v1307 = vpop.f32.mrf.mxu0
        %v1308 = vadd.f32 0.0, %v1307
        %1309 = vmatmul.f32.gmra.mxu0 %v963
        %v1310 = vpop.f32.mrf.mxu0
        %v1311 = vadd.f32 0.0, %v1310
        %1312 = vmatmul.f32.gmra.mxu0 %v966
        %v1313 = vpop.f32.mrf.mxu0
        %v1314 = vadd.f32 0.0, %v1313
        %1315 = vmatmul.f32.gmra.mxu0 %v969
        %v1316 = vpop.f32.mrf.mxu0
        %v1317 = vadd.f32 0.0, %v1316
        %1318 = vdwg.mxu0
        %1319 = vmatpush.msra.mxu0 0.0
        %1320 = vmatpush.msra.mxu0 0.0
        %1321 = vmatpush.msra.mxu0 0.0
        %1322 = vmatpush.msra.mxu0 0.0
        %1323 = vmatpush.msra.mxu0 0.0
        %1324 = vmatpush.msra.mxu0 0.0
        %1325 = vmatpush.msra.mxu0 0.0
        %1326 = vmatpush.msra.mxu0 0.0
        %1327 = vmatpush.msra.mxu0 0.0
        %1328 = vmatpush.msra.mxu0 0.0
        %1329 = vmatpush.msra.mxu0 0.0
        %1330 = vmatpush.msra.mxu0 0.0
        %1331 = vmatpush.msra.mxu0 0.0
        %1332 = vmatpush.msra.mxu0 %v954
        %1333 = vmatpush.msra.mxu0 %v784
        %1334 = vmatpush.msra.mxu0 %v881
        %1335 = vmatmul.f32.gmra.mxu0 %v960
        %v1336 = vpop.f32.mrf.mxu0
        %v1337 = vadd.f32 0.0, %v1336
        %1338 = vmatmul.f32.gmra.mxu0 %v963
        %v1339 = vpop.f32.mrf.mxu0
        %v1340 = vadd.f32 0.0, %v1339
        %1341 = vmatmul.f32.gmra.mxu0 %v966
        %v1342 = vpop.f32.mrf.mxu0
        %v1343 = vadd.f32 0.0, %v1342
        %1344 = vmatmul.f32.gmra.mxu0 %v969
        %v1345 = vpop.f32.mrf.mxu0
        %v1346 = vadd.f32 0.0, %v1345
        %1347 = vdwg.mxu0
        %1348 = vmatpush.msra.mxu0 0.0
        %1349 = vmatpush.msra.mxu0 0.0
        %1350 = vmatpush.msra.mxu0 0.0
        %1351 = vmatpush.msra.mxu0 0.0
        %1352 = vmatpush.msra.mxu0 0.0
        %1353 = vmatpush.msra.mxu0 0.0
        %1354 = vmatpush.msra.mxu0 0.0
        %1355 = vmatpush.msra.mxu0 0.0
        %1356 = vmatpush.msra.mxu0 0.0
        %1357 = vmatpush.msra.mxu0 0.0
        %1358 = vmatpush.msra.mxu0 0.0
        %1359 = vmatpush.msra.mxu0 0.0
        %1360 = vmatpush.msra.mxu0 0.0
        %1361 = vmatpush.msra.mxu0 %v955
        %1362 = vmatpush.msra.mxu0 %v785
        %1363 = vmatpush.msra.mxu0 %v882
        %1364 = vmatmul.f32.gmra.mxu0 %v960
        %v1365 = vpop.f32.mrf.mxu0
        %v1366 = vadd.f32 0.0, %v1365
        %1367 = vmatmul.f32.gmra.mxu0 %v963
        %v1368 = vpop.f32.mrf.mxu0
        %v1369 = vadd.f32 0.0, %v1368
        %1370 = vmatmul.f32.gmra.mxu0 %v966
        %v1371 = vpop.f32.mrf.mxu0
        %v1372 = vadd.f32 0.0, %v1371
        %1373 = vmatmul.f32.gmra.mxu0 %v969
        %v1374 = vpop.f32.mrf.mxu0
        %v1375 = vadd.f32 0.0, %v1374
        %1376 = vdwg.mxu0
        %1377 = vmatpush.msra.mxu0 0.0
        %1378 = vmatpush.msra.mxu0 0.0
        %1379 = vmatpush.msra.mxu0 0.0
        %1380 = vmatpush.msra.mxu0 0.0
        %1381 = vmatpush.msra.mxu0 0.0
        %1382 = vmatpush.msra.mxu0 0.0
        %1383 = vmatpush.msra.mxu0 0.0
        %1384 = vmatpush.msra.mxu0 0.0
        %1385 = vmatpush.msra.mxu0 0.0
        %1386 = vmatpush.msra.mxu0 0.0
        %1387 = vmatpush.msra.mxu0 0.0
        %1388 = vmatpush.msra.mxu0 0.0
        %1389 = vmatpush.msra.mxu0 0.0
        %1390 = vmatpush.msra.mxu0 %v956
        %1391 = vmatpush.msra.mxu0 %v810
        %1392 = vmatpush.msra.mxu0 %v883
        %1393 = vmatmul.f32.gmra.mxu0 %v960
        %v1394 = vpop.f32.mrf.mxu0
        %v1395 = vadd.f32 0.0, %v1394
        %1396 = vmatmul.f32.gmra.mxu0 %v963
        %v1397 = vpop.f32.mrf.mxu0
        %v1398 = vadd.f32 0.0, %v1397
        %1399 = vmatmul.f32.gmra.mxu0 %v966
        %v1400 = vpop.f32.mrf.mxu0
        %v1401 = vadd.f32 0.0, %v1400
        %1402 = vmatmul.f32.gmra.mxu0 %v969
        %v1403 = vpop.f32.mrf.mxu0
        %v1404 = vadd.f32 0.0, %v1403
        %1405 = vdwg.mxu0
        %1406 = vmatpush.msra.mxu0 0.0
        %1407 = vmatpush.msra.mxu0 0.0
        %1408 = vmatpush.msra.mxu0 0.0
        %1409 = vmatpush.msra.mxu0 0.0
        %1410 = vmatpush.msra.mxu0 0.0
        %1411 = vmatpush.msra.mxu0 0.0
        %1412 = vmatpush.msra.mxu0 0.0
        %1413 = vmatpush.msra.mxu0 0.0
        %1414 = vmatpush.msra.mxu0 0.0
        %1415 = vmatpush.msra.mxu0 0.0
        %1416 = vmatpush.msra.mxu0 0.0
        %1417 = vmatpush.msra.mxu0 0.0
        %1418 = vmatpush.msra.mxu0 0.0
        %1419 = vmatpush.msra.mxu0 %v957
        %1420 = vmatpush.msra.mxu0 %v811
        %1421 = vmatpush.msra.mxu0 %v884
        %1422 = vmatmul.f32.gmra.mxu0 %v960
        %v1423 = vpop.f32.mrf.mxu0
        %v1424 = vadd.f32 0.0, %v1423
        %1425 = vmatmul.f32.gmra.mxu0 %v963
        %v1426 = vpop.f32.mrf.mxu0
        %v1427 = vadd.f32 0.0, %v1426
        %1428 = vmatmul.f32.gmra.mxu0 %v966
        %v1429 = vpop.f32.mrf.mxu0
        %v1430 = vadd.f32 0.0, %v1429
        %1431 = vmatmul.f32.gmra.mxu0 %v969
        %v1432 = vpop.f32.mrf.mxu0
        %v1433 = vadd.f32 0.0, %v1432
        %1434 = vdwg.mxu0
        %1436 = vset.pattern.permute.xlu0 0
        %1437 = vperm.xlu0 %1436, %v385
        %v1438 = vpop.permute.xlu0 %1437
        %1441 = vset.pattern.permute.xlu0 0
        %1442 = vperm.xlu0 %1441, %v386
        %v1443 = vpop.permute.xlu0 %1442
        %1446 = vset.pattern.permute.xlu0 0
        %1447 = vperm.xlu0 %1446, %v387
        %v1448 = vpop.permute.xlu0 %1447
        %1451 = vset.pattern.permute.xlu0 0
        %1452 = vperm.xlu0 %1451, %v388
        %v1453 = vpop.permute.xlu0 %1452
        %v1455 = vmul.f32 %v989, %v1438
        %v1456 = vmul.f32 %v1018, %v1438
        %v1457 = vmul.f32 %v1047, %v1438
        %v1458 = vmul.f32 %v1076, %v1438
        %v1459 = vmul.f32 %v1105, %v1438
        %v1460 = vmul.f32 %v1134, %v1438
        %v1461 = vmul.f32 %v1163, %v1438
        %v1462 = vmul.f32 %v1192, %v1438
        %v1463 = vmul.f32 %v1221, %v1438
        %v1464 = vmul.f32 %v1250, %v1438
        %v1465 = vmul.f32 %v1279, %v1438
        %v1466 = vmul.f32 %v1308, %v1438
        %v1467 = vmul.f32 %v1337, %v1438
        %v1468 = vmul.f32 %v1366, %v1438
        %v1469 = vmul.f32 %v1395, %v1438
        %v1470 = vmul.f32 %v1424, %v1438
        %v1471 = vmul.f32 %v992, %v1443
        %v1472 = vmul.f32 %v1021, %v1443
        %v1473 = vmul.f32 %v1050, %v1443
        %v1474 = vmul.f32 %v1079, %v1443
        %v1475 = vmul.f32 %v1108, %v1443
        %v1476 = vmul.f32 %v1137, %v1443
        %v1477 = vmul.f32 %v1166, %v1443
        %v1478 = vmul.f32 %v1195, %v1443
        %v1479 = vmul.f32 %v1224, %v1443
        %v1480 = vmul.f32 %v1253, %v1443
        %v1481 = vmul.f32 %v1282, %v1443
        %v1482 = vmul.f32 %v1311, %v1443
        %v1483 = vmul.f32 %v1340, %v1443
        %v1484 = vmul.f32 %v1369, %v1443
        %v1485 = vmul.f32 %v1398, %v1443
        %v1486 = vmul.f32 %v1427, %v1443
        %v1487 = vmul.f32 %v995, %v1448
        %v1488 = vmul.f32 %v1024, %v1448
        %v1489 = vmul.f32 %v1053, %v1448
        %v1490 = vmul.f32 %v1082, %v1448
        %v1491 = vmul.f32 %v1111, %v1448
        %v1492 = vmul.f32 %v1140, %v1448
        %v1493 = vmul.f32 %v1169, %v1448
        %v1494 = vmul.f32 %v1198, %v1448
        %v1495 = vmul.f32 %v1227, %v1448
        %v1496 = vmul.f32 %v1256, %v1448
        %v1497 = vmul.f32 %v1285, %v1448
        %v1498 = vmul.f32 %v1314, %v1448
        %v1499 = vmul.f32 %v1343, %v1448
        %v1500 = vmul.f32 %v1372, %v1448
        %v1501 = vmul.f32 %v1401, %v1448
        %v1502 = vmul.f32 %v1430, %v1448
        %v1503 = vmul.f32 %v998, %v1453
        %v1504 = vmul.f32 %v1027, %v1453
        %v1505 = vmul.f32 %v1056, %v1453
        %v1506 = vmul.f32 %v1085, %v1453
        %v1507 = vmul.f32 %v1114, %v1453
        %v1508 = vmul.f32 %v1143, %v1453
        %v1509 = vmul.f32 %v1172, %v1453
        %v1510 = vmul.f32 %v1201, %v1453
        %v1511 = vmul.f32 %v1230, %v1453
        %v1512 = vmul.f32 %v1259, %v1453
        %v1513 = vmul.f32 %v1288, %v1453
        %v1514 = vmul.f32 %v1317, %v1453
        %v1515 = vmul.f32 %v1346, %v1453
        %v1516 = vmul.f32 %v1375, %v1453
        %v1517 = vmul.f32 %v1404, %v1453
        %v1518 = vmul.f32 %v1433, %v1453
        %1520 = vset.pattern.permute.xlu0 0
        %1521 = vperm.xlu0 %1520, %v397
        %v1522 = vpop.permute.xlu0 %1521
        %1525 = vset.pattern.permute.xlu0 0
        %1526 = vperm.xlu0 %1525, %v398
        %v1527 = vpop.permute.xlu0 %1526
        %1530 = vset.pattern.permute.xlu0 0
        %1531 = vperm.xlu0 %1530, %v399
        %v1532 = vpop.permute.xlu0 %1531
        %1535 = vset.pattern.permute.xlu0 0
        %1536 = vperm.xlu0 %1535, %v400
        %v1537 = vpop.permute.xlu0 %1536
        %v1539 = vadd.f32 %v1455, %v1522
        %v1540 = vadd.f32 %v1456, %v1522
        %v1541 = vadd.f32 %v1457, %v1522
        %v1542 = vadd.f32 %v1458, %v1522
        %v1543 = vadd.f32 %v1459, %v1522
        %v1544 = vadd.f32 %v1460, %v1522
        %v1545 = vadd.f32 %v1461, %v1522
        %v1546 = vadd.f32 %v1462, %v1522
        %v1547 = vadd.f32 %v1463, %v1522
        %v1548 = vadd.f32 %v1464, %v1522
        %v1549 = vadd.f32 %v1465, %v1522
        %v1550 = vadd.f32 %v1466, %v1522
        %v1551 = vadd.f32 %v1467, %v1522
        %v1552 = vadd.f32 %v1468, %v1522
        %v1553 = vadd.f32 %v1469, %v1522
        %v1554 = vadd.f32 %v1470, %v1522
        %v1555 = vadd.f32 %v1471, %v1527
        %v1556 = vadd.f32 %v1472, %v1527
        %v1557 = vadd.f32 %v1473, %v1527
        %v1558 = vadd.f32 %v1474, %v1527
        %v1559 = vadd.f32 %v1475, %v1527
        %v1560 = vadd.f32 %v1476, %v1527
        %v1561 = vadd.f32 %v1477, %v1527
        %v1562 = vadd.f32 %v1478, %v1527
        %v1563 = vadd.f32 %v1479, %v1527
        %v1564 = vadd.f32 %v1480, %v1527
        %v1565 = vadd.f32 %v1481, %v1527
        %v1566 = vadd.f32 %v1482, %v1527
        %v1567 = vadd.f32 %v1483, %v1527
        %v1568 = vadd.f32 %v1484, %v1527
        %v1569 = vadd.f32 %v1485, %v1527
        %v1570 = vadd.f32 %v1486, %v1527
        %v1571 = vadd.f32 %v1487, %v1532
        %v1572 = vadd.f32 %v1488, %v1532
        %v1573 = vadd.f32 %v1489, %v1532
        %v1574 = vadd.f32 %v1490, %v1532
        %v1575 = vadd.f32 %v1491, %v1532
        %v1576 = vadd.f32 %v1492, %v1532
        %v1577 = vadd.f32 %v1493, %v1532
        %v1578 = vadd.f32 %v1494, %v1532
        %v1579 = vadd.f32 %v1495, %v1532
        %v1580 = vadd.f32 %v1496, %v1532
        %v1581 = vadd.f32 %v1497, %v1532
        %v1582 = vadd.f32 %v1498, %v1532
        %v1583 = vadd.f32 %v1499, %v1532
        %v1584 = vadd.f32 %v1500, %v1532
        %v1585 = vadd.f32 %v1501, %v1532
        %v1586 = vadd.f32 %v1502, %v1532
        %v1587 = vadd.f32 %v1503, %v1537
        %v1588 = vadd.f32 %v1504, %v1537
        %v1589 = vadd.f32 %v1505, %v1537
        %v1590 = vadd.f32 %v1506, %v1537
        %v1591 = vadd.f32 %v1507, %v1537
        %v1592 = vadd.f32 %v1508, %v1537
        %v1593 = vadd.f32 %v1509, %v1537
        %v1594 = vadd.f32 %v1510, %v1537
        %v1595 = vadd.f32 %v1511, %v1537
        %v1596 = vadd.f32 %v1512, %v1537
        %v1597 = vadd.f32 %v1513, %v1537
        %v1598 = vadd.f32 %v1514, %v1537
        %v1599 = vadd.f32 %v1515, %v1537
        %v1600 = vadd.f32 %v1516, %v1537
        %v1601 = vadd.f32 %v1517, %v1537
        %v1602 = vadd.f32 %v1518, %v1537
        %v1603 = vmax.f32 %v1539, 0.0
        %v1604 = vmax.f32 %v1540, 0.0
        %v1605 = vmax.f32 %v1541, 0.0
        %v1606 = vmax.f32 %v1542, 0.0
        %v1607 = vmax.f32 %v1543, 0.0
        %v1608 = vmax.f32 %v1544, 0.0
        %v1609 = vmax.f32 %v1545, 0.0
        %v1610 = vmax.f32 %v1546, 0.0
        %v1611 = vmax.f32 %v1547, 0.0
        %v1612 = vmax.f32 %v1548, 0.0
        %v1613 = vmax.f32 %v1549, 0.0
        %v1614 = vmax.f32 %v1550, 0.0
        %v1615 = vmax.f32 %v1551, 0.0
        %v1616 = vmax.f32 %v1552, 0.0
        %v1617 = vmax.f32 %v1553, 0.0
        %v1618 = vmax.f32 %v1554, 0.0
        %v1619 = vmax.f32 %v1555, 0.0
        %v1620 = vmax.f32 %v1556, 0.0
        %v1621 = vmax.f32 %v1557, 0.0
        %v1622 = vmax.f32 %v1558, 0.0
        %v1623 = vmax.f32 %v1559, 0.0
        %v1624 = vmax.f32 %v1560, 0.0
        %v1625 = vmax.f32 %v1561, 0.0
        %v1626 = vmax.f32 %v1562, 0.0
        %v1627 = vmax.f32 %v1563, 0.0
        %v1628 = vmax.f32 %v1564, 0.0
        %v1629 = vmax.f32 %v1565, 0.0
        %v1630 = vmax.f32 %v1566, 0.0
        %v1631 = vmax.f32 %v1567, 0.0
        %v1632 = vmax.f32 %v1568, 0.0
        %v1633 = vmax.f32 %v1569, 0.0
        %v1634 = vmax.f32 %v1570, 0.0
        %v1635 = vmax.f32 %v1571, 0.0
        %v1636 = vmax.f32 %v1572, 0.0
        %v1637 = vmax.f32 %v1573, 0.0
        %v1638 = vmax.f32 %v1574, 0.0
        %v1639 = vmax.f32 %v1575, 0.0
        %v1640 = vmax.f32 %v1576, 0.0
        %v1641 = vmax.f32 %v1577, 0.0
        %v1642 = vmax.f32 %v1578, 0.0
        %v1643 = vmax.f32 %v1579, 0.0
        %v1644 = vmax.f32 %v1580, 0.0
        %v1645 = vmax.f32 %v1581, 0.0
        %v1646 = vmax.f32 %v1582, 0.0
        %v1647 = vmax.f32 %v1583, 0.0
        %v1648 = vmax.f32 %v1584, 0.0
        %v1649 = vmax.f32 %v1585, 0.0
        %v1650 = vmax.f32 %v1586, 0.0
        %v1651 = vmax.f32 %v1587, 0.0
        %v1652 = vmax.f32 %v1588, 0.0
        %v1653 = vmax.f32 %v1589, 0.0
        %v1654 = vmax.f32 %v1590, 0.0
        %v1655 = vmax.f32 %v1591, 0.0
        %v1656 = vmax.f32 %v1592, 0.0
        %v1657 = vmax.f32 %v1593, 0.0
        %v1658 = vmax.f32 %v1594, 0.0
        %v1659 = vmax.f32 %v1595, 0.0
        %v1660 = vmax.f32 %v1596, 0.0
        %v1661 = vmax.f32 %v1597, 0.0
        %v1662 = vmax.f32 %v1598, 0.0
        %v1663 = vmax.f32 %v1599, 0.0
        %v1664 = vmax.f32 %v1600, 0.0
        %v1665 = vmax.f32 %v1601, 0.0
        %v1666 = vmax.f32 %v1602, 0.0
        %1667 = vrot.lane.b32.xlu0 %v1603, 1
        %v1668 = vpop.permute.xlu0 %1667
        %1669 = vrot.lane.b32.xlu0 %v1619, 1
        %v1670 = vpop.permute.xlu0 %1669
        %1671 = vrot.lane.b32.xlu0 %v1635, 1
        %v1672 = vpop.permute.xlu0 %1671
        %1673 = vrot.lane.b32.xlu0 %v1651, 1
        %v1674 = vpop.permute.xlu0 %1673
        %1675 = vrot.lane.b32.xlu0 %v1604, 1
        %v1676 = vpop.permute.xlu0 %1675
        %1677 = vrot.lane.b32.xlu0 %v1620, 1
        %v1678 = vpop.permute.xlu0 %1677
        %1679 = vrot.lane.b32.xlu0 %v1636, 1
        %v1680 = vpop.permute.xlu0 %1679
        %1681 = vrot.lane.b32.xlu0 %v1652, 1
        %v1682 = vpop.permute.xlu0 %1681
        %1683 = vrot.lane.b32.xlu0 %v1605, 1
        %v1684 = vpop.permute.xlu0 %1683
        %1685 = vrot.lane.b32.xlu0 %v1621, 1
        %v1686 = vpop.permute.xlu0 %1685
        %1687 = vrot.lane.b32.xlu0 %v1637, 1
        %v1688 = vpop.permute.xlu0 %1687
        %1689 = vrot.lane.b32.xlu0 %v1653, 1
        %v1690 = vpop.permute.xlu0 %1689
        %1691 = vrot.lane.b32.xlu0 %v1606, 1
        %v1692 = vpop.permute.xlu0 %1691
        %1693 = vrot.lane.b32.xlu0 %v1622, 1
        %v1694 = vpop.permute.xlu0 %1693
        %1695 = vrot.lane.b32.xlu0 %v1638, 1
        %v1696 = vpop.permute.xlu0 %1695
        %1697 = vrot.lane.b32.xlu0 %v1654, 1
        %v1698 = vpop.permute.xlu0 %1697
        %1699 = vrot.lane.b32.xlu0 %v1607, 1
        %v1700 = vpop.permute.xlu0 %1699
        %1701 = vrot.lane.b32.xlu0 %v1623, 1
        %v1702 = vpop.permute.xlu0 %1701
        %1703 = vrot.lane.b32.xlu0 %v1639, 1
        %v1704 = vpop.permute.xlu0 %1703
        %1705 = vrot.lane.b32.xlu0 %v1655, 1
        %v1706 = vpop.permute.xlu0 %1705
        %1707 = vrot.lane.b32.xlu0 %v1608, 1
        %v1708 = vpop.permute.xlu0 %1707
        %1709 = vrot.lane.b32.xlu0 %v1624, 1
        %v1710 = vpop.permute.xlu0 %1709
        %1711 = vrot.lane.b32.xlu0 %v1640, 1
        %v1712 = vpop.permute.xlu0 %1711
        %1713 = vrot.lane.b32.xlu0 %v1656, 1
        %v1714 = vpop.permute.xlu0 %1713
        %1715 = vrot.lane.b32.xlu0 %v1609, 1
        %v1716 = vpop.permute.xlu0 %1715
        %1717 = vrot.lane.b32.xlu0 %v1625, 1
        %v1718 = vpop.permute.xlu0 %1717
        %1719 = vrot.lane.b32.xlu0 %v1641, 1
        %v1720 = vpop.permute.xlu0 %1719
        %1721 = vrot.lane.b32.xlu0 %v1657, 1
        %v1722 = vpop.permute.xlu0 %1721
        %1723 = vrot.lane.b32.xlu0 %v1610, 1
        %v1724 = vpop.permute.xlu0 %1723
        %1725 = vrot.lane.b32.xlu0 %v1626, 1
        %v1726 = vpop.permute.xlu0 %1725
        %1727 = vrot.lane.b32.xlu0 %v1642, 1
        %v1728 = vpop.permute.xlu0 %1727
        %1729 = vrot.lane.b32.xlu0 %v1658, 1
        %v1730 = vpop.permute.xlu0 %1729
        %1731 = vrot.lane.b32.xlu0 %v1611, 1
        %v1732 = vpop.permute.xlu0 %1731
        %1733 = vrot.lane.b32.xlu0 %v1627, 1
        %v1734 = vpop.permute.xlu0 %1733
        %1735 = vrot.lane.b32.xlu0 %v1643, 1
        %v1736 = vpop.permute.xlu0 %1735
        %1737 = vrot.lane.b32.xlu0 %v1659, 1
        %v1738 = vpop.permute.xlu0 %1737
        %1739 = vrot.lane.b32.xlu0 %v1612, 1
        %v1740 = vpop.permute.xlu0 %1739
        %1741 = vrot.lane.b32.xlu0 %v1628, 1
        %v1742 = vpop.permute.xlu0 %1741
        %1743 = vrot.lane.b32.xlu0 %v1644, 1
        %v1744 = vpop.permute.xlu0 %1743
        %1745 = vrot.lane.b32.xlu0 %v1660, 1
        %v1746 = vpop.permute.xlu0 %1745
        %1747 = vrot.lane.b32.xlu0 %v1613, 1
        %v1748 = vpop.permute.xlu0 %1747
        %1749 = vrot.lane.b32.xlu0 %v1629, 1
        %v1750 = vpop.permute.xlu0 %1749
        %1751 = vrot.lane.b32.xlu0 %v1645, 1
        %v1752 = vpop.permute.xlu0 %1751
        %1753 = vrot.lane.b32.xlu0 %v1661, 1
        %v1754 = vpop.permute.xlu0 %1753
        %1755 = vrot.lane.b32.xlu0 %v1614, 1
        %v1756 = vpop.permute.xlu0 %1755
        %1757 = vrot.lane.b32.xlu0 %v1630, 1
        %v1758 = vpop.permute.xlu0 %1757
        %1759 = vrot.lane.b32.xlu0 %v1646, 1
        %v1760 = vpop.permute.xlu0 %1759
        %1761 = vrot.lane.b32.xlu0 %v1662, 1
        %v1762 = vpop.permute.xlu0 %1761
        %1763 = vrot.lane.b32.xlu0 %v1615, 1
        %v1764 = vpop.permute.xlu0 %1763
        %1765 = vrot.lane.b32.xlu0 %v1631, 1
        %v1766 = vpop.permute.xlu0 %1765
        %1767 = vrot.lane.b32.xlu0 %v1647, 1
        %v1768 = vpop.permute.xlu0 %1767
        %1769 = vrot.lane.b32.xlu0 %v1663, 1
        %v1770 = vpop.permute.xlu0 %1769
        %1771 = vrot.lane.b32.xlu0 %v1616, 1
        %v1772 = vpop.permute.xlu0 %1771
        %1773 = vrot.lane.b32.xlu0 %v1632, 1
        %v1774 = vpop.permute.xlu0 %1773
        %1775 = vrot.lane.b32.xlu0 %v1648, 1
        %v1776 = vpop.permute.xlu0 %1775
        %1777 = vrot.lane.b32.xlu0 %v1664, 1
        %v1778 = vpop.permute.xlu0 %1777
        %1779 = vrot.lane.b32.xlu0 %v1617, 1
        %v1780 = vpop.permute.xlu0 %1779
        %1781 = vrot.lane.b32.xlu0 %v1633, 1
        %v1782 = vpop.permute.xlu0 %1781
        %1783 = vrot.lane.b32.xlu0 %v1649, 1
        %v1784 = vpop.permute.xlu0 %1783
        %1785 = vrot.lane.b32.xlu0 %v1665, 1
        %v1786 = vpop.permute.xlu0 %1785
        %1787 = vrot.lane.b32.xlu0 %v1618, 1
        %v1788 = vpop.permute.xlu0 %1787
        %1789 = vrot.lane.b32.xlu0 %v1634, 1
        %v1790 = vpop.permute.xlu0 %1789
        %1791 = vrot.lane.b32.xlu0 %v1650, 1
        %v1792 = vpop.permute.xlu0 %1791
        %1793 = vrot.lane.b32.xlu0 %v1666, 1
        %v1794 = vpop.permute.xlu0 %1793
        %v1795 = vsel %vm844, %v1780, %v1788
        %v1796 = vsel %vm844, %v1782, %v1790
        %v1797 = vsel %vm844, %v1784, %v1792
        %v1798 = vsel %vm844, %v1786, %v1794
        %v1799 = vsel %vm844, %v1772, %v1780
        %v1800 = vsel %vm844, %v1774, %v1782
        %v1801 = vsel %vm844, %v1776, %v1784
        %v1802 = vsel %vm844, %v1778, %v1786
        %v1803 = vsel %vm844, %v1764, %v1772
        %v1804 = vsel %vm844, %v1766, %v1774
        %v1805 = vsel %vm844, %v1768, %v1776
        %v1806 = vsel %vm844, %v1770, %v1778
        %v1807 = vsel %vm844, %v1756, %v1764
        %v1808 = vsel %vm844, %v1758, %v1766
        %v1809 = vsel %vm844, %v1760, %v1768
        %v1810 = vsel %vm844, %v1762, %v1770
        %v1811 = vsel %vm844, %v1748, %v1756
        %v1812 = vsel %vm844, %v1750, %v1758
        %v1813 = vsel %vm844, %v1752, %v1760
        %v1814 = vsel %vm844, %v1754, %v1762
        %v1815 = vsel %vm844, %v1740, %v1748
        %v1816 = vsel %vm844, %v1742, %v1750
        %v1817 = vsel %vm844, %v1744, %v1752
        %v1818 = vsel %vm844, %v1746, %v1754
        %v1819 = vsel %vm844, %v1732, %v1740
        %v1820 = vsel %vm844, %v1734, %v1742
        %v1821 = vsel %vm844, %v1736, %v1744
        %v1822 = vsel %vm844, %v1738, %v1746
        %v1823 = vsel %vm844, %v1724, %v1732
        %v1824 = vsel %vm844, %v1726, %v1734
        %v1825 = vsel %vm844, %v1728, %v1736
        %v1826 = vsel %vm844, %v1730, %v1738
        %v1827 = vsel %vm844, %v1716, %v1724
        %v1828 = vsel %vm844, %v1718, %v1726
        %v1829 = vsel %vm844, %v1720, %v1728
        %v1830 = vsel %vm844, %v1722, %v1730
        %v1831 = vsel %vm844, %v1708, %v1716
        %v1832 = vsel %vm844, %v1710, %v1718
        %v1833 = vsel %vm844, %v1712, %v1720
        %v1834 = vsel %vm844, %v1714, %v1722
        %v1835 = vsel %vm844, %v1700, %v1708
        %v1836 = vsel %vm844, %v1702, %v1710
        %v1837 = vsel %vm844, %v1704, %v1712
        %v1838 = vsel %vm844, %v1706, %v1714
        %v1839 = vsel %vm844, %v1692, %v1700
        %v1840 = vsel %vm844, %v1694, %v1702
        %v1841 = vsel %vm844, %v1696, %v1704
        %v1842 = vsel %vm844, %v1698, %v1706
        %v1843 = vsel %vm844, %v1684, %v1692
        %v1844 = vsel %vm844, %v1686, %v1694
        %v1845 = vsel %vm844, %v1688, %v1696
        %v1846 = vsel %vm844, %v1690, %v1698
        %v1847 = vsel %vm844, %v1676, %v1684
        %v1848 = vsel %vm844, %v1678, %v1686
        %v1849 = vsel %vm844, %v1680, %v1688
        %v1850 = vsel %vm844, %v1682, %v1690
        %v1851 = vsel %vm844, %v1668, %v1676
        %v1852 = vsel %vm844, %v1670, %v1678
        %v1853 = vsel %vm844, %v1672, %v1680
        %v1854 = vsel %vm844, %v1674, %v1682
        %v1855 = vsel %vm844, %v1788, %v1668
        %v1856 = vsel %vm844, %v1790, %v1670
        %v1857 = vsel %vm844, %v1792, %v1672
        %v1858 = vsel %vm844, %v1794, %v1674
        %v1859 = vsel %vm867, %v1855, 0.0
        %v1860 = vsel %vm868, %v1851, 0.0
        %v1861 = vsel %vm867, %v1847, 0.0
        %v1862 = vsel %vm868, %v1843, 0.0
        %v1863 = vsel %vm867, %v1839, 0.0
        %v1864 = vsel %vm868, %v1835, 0.0
        %v1865 = vsel %vm867, %v1831, 0.0
        %v1866 = vsel %vm868, %v1827, 0.0
        %v1867 = vsel %vm867, %v1823, 0.0
        %v1868 = vsel %vm868, %v1819, 0.0
        %v1869 = vsel %vm867, %v1815, 0.0
        %v1870 = vsel %vm868, %v1811, 0.0
        %v1871 = vsel %vm867, %v1807, 0.0
        %v1872 = vsel %vm868, %v1803, 0.0
        %v1873 = vsel %vm867, %v1799, 0.0
        %v1874 = vsel %vm868, %v1795, 0.0
        %v1875 = vsel %vm867, %v1856, 0.0
        %v1876 = vsel %vm868, %v1852, 0.0
        %v1877 = vsel %vm867, %v1848, 0.0
        %v1878 = vsel %vm868, %v1844, 0.0
        %v1879 = vsel %vm867, %v1840, 0.0
        %v1880 = vsel %vm868, %v1836, 0.0
        %v1881 = vsel %vm867, %v1832, 0.0
        %v1882 = vsel %vm868, %v1828, 0.0
        %v1883 = vsel %vm867, %v1824, 0.0
        %v1884 = vsel %vm868, %v1820, 0.0
        %v1885 = vsel %vm867, %v1816, 0.0
        %v1886 = vsel %vm868, %v1812, 0.0
        %v1887 = vsel %vm867, %v1808, 0.0
        %v1888 = vsel %vm868, %v1804, 0.0
        %v1889 = vsel %vm867, %v1800, 0.0
        %v1890 = vsel %vm868, %v1796, 0.0
        %v1891 = vsel %vm867, %v1857, 0.0
        %v1892 = vsel %vm868, %v1853, 0.0
        %v1893 = vsel %vm867, %v1849, 0.0
        %v1894 = vsel %vm868, %v1845, 0.0
        %v1895 = vsel %vm867, %v1841, 0.0
        %v1896 = vsel %vm868, %v1837, 0.0
        %v1897 = vsel %vm867, %v1833, 0.0
        %v1898 = vsel %vm868, %v1829, 0.0
        %v1899 = vsel %vm867, %v1825, 0.0
        %v1900 = vsel %vm868, %v1821, 0.0
        %v1901 = vsel %vm867, %v1817, 0.0
        %v1902 = vsel %vm868, %v1813, 0.0
        %v1903 = vsel %vm867, %v1809, 0.0
        %v1904 = vsel %vm868, %v1805, 0.0
        %v1905 = vsel %vm867, %v1801, 0.0
        %v1906 = vsel %vm868, %v1797, 0.0
        %v1907 = vsel %vm867, %v1858, 0.0
        %v1908 = vsel %vm868, %v1854, 0.0
        %v1909 = vsel %vm867, %v1850, 0.0
        %v1910 = vsel %vm868, %v1846, 0.0
        %v1911 = vsel %vm867, %v1842, 0.0
        %v1912 = vsel %vm868, %v1838, 0.0
        %v1913 = vsel %vm867, %v1834, 0.0
        %v1914 = vsel %vm868, %v1830, 0.0
        %v1915 = vsel %vm867, %v1826, 0.0
        %v1916 = vsel %vm868, %v1822, 0.0
        %v1917 = vsel %vm867, %v1818, 0.0
        %v1918 = vsel %vm868, %v1814, 0.0
        %v1919 = vsel %vm867, %v1810, 0.0
        %v1920 = vsel %vm868, %v1806, 0.0
        %v1921 = vsel %vm867, %v1802, 0.0
        %v1922 = vsel %vm868, %v1798, 0.0
        %v1923 = vpack.c.bf16 %v1860, %v1859
        %v1924 = vpack.c.bf16 %v1862, %v1861
        %v1925 = vpack.c.bf16 %v1864, %v1863
        %v1926 = vpack.c.bf16 %v1866, %v1865
        %v1927 = vpack.c.bf16 %v1868, %v1867
        %v1928 = vpack.c.bf16 %v1870, %v1869
        %v1929 = vpack.c.bf16 %v1872, %v1871
        %v1930 = vpack.c.bf16 %v1874, %v1873
        %v1931 = vpack.c.bf16 %v1876, %v1875
        %v1932 = vpack.c.bf16 %v1878, %v1877
        %v1933 = vpack.c.bf16 %v1880, %v1879
        %v1934 = vpack.c.bf16 %v1882, %v1881
        %v1935 = vpack.c.bf16 %v1884, %v1883
        %v1936 = vpack.c.bf16 %v1886, %v1885
        %v1937 = vpack.c.bf16 %v1888, %v1887
        %v1938 = vpack.c.bf16 %v1890, %v1889
        %v1939 = vpack.c.bf16 %v1892, %v1891
        %v1940 = vpack.c.bf16 %v1894, %v1893
        %v1941 = vpack.c.bf16 %v1896, %v1895
        %v1942 = vpack.c.bf16 %v1898, %v1897
        %v1943 = vpack.c.bf16 %v1900, %v1899
        %v1944 = vpack.c.bf16 %v1902, %v1901
        %v1945 = vpack.c.bf16 %v1904, %v1903
        %v1946 = vpack.c.bf16 %v1906, %v1905
        %v1947 = vpack.c.bf16 %v1908, %v1907
        %v1948 = vpack.c.bf16 %v1910, %v1909
        %v1949 = vpack.c.bf16 %v1912, %v1911
        %v1950 = vpack.c.bf16 %v1914, %v1913
        %v1951 = vpack.c.bf16 %v1916, %v1915
        %v1952 = vpack.c.bf16 %v1918, %v1917
        %v1953 = vpack.c.bf16 %v1920, %v1919
        %v1954 = vpack.c.bf16 %v1922, %v1921
        %v1955 = vpack.c.bf16 %v1604, %v1603
        %v1956 = vpack.c.bf16 %v1606, %v1605
        %v1957 = vpack.c.bf16 %v1608, %v1607
        %v1958 = vpack.c.bf16 %v1610, %v1609
        %v1959 = vpack.c.bf16 %v1612, %v1611
        %v1960 = vpack.c.bf16 %v1614, %v1613
        %v1961 = vpack.c.bf16 %v1616, %v1615
        %v1962 = vpack.c.bf16 %v1618, %v1617
        %v1963 = vpack.c.bf16 %v1620, %v1619
        %v1964 = vpack.c.bf16 %v1622, %v1621
        %v1965 = vpack.c.bf16 %v1624, %v1623
        %v1966 = vpack.c.bf16 %v1626, %v1625
        %v1967 = vpack.c.bf16 %v1628, %v1627
        %v1968 = vpack.c.bf16 %v1630, %v1629
        %v1969 = vpack.c.bf16 %v1632, %v1631
        %v1970 = vpack.c.bf16 %v1634, %v1633
        %v1971 = vpack.c.bf16 %v1636, %v1635
        %v1972 = vpack.c.bf16 %v1638, %v1637
        %v1973 = vpack.c.bf16 %v1640, %v1639
        %v1974 = vpack.c.bf16 %v1642, %v1641
        %v1975 = vpack.c.bf16 %v1644, %v1643
        %v1976 = vpack.c.bf16 %v1646, %v1645
        %v1977 = vpack.c.bf16 %v1648, %v1647
        %v1978 = vpack.c.bf16 %v1650, %v1649
        %v1979 = vpack.c.bf16 %v1652, %v1651
        %v1980 = vpack.c.bf16 %v1654, %v1653
        %v1981 = vpack.c.bf16 %v1656, %v1655
        %v1982 = vpack.c.bf16 %v1658, %v1657
        %v1983 = vpack.c.bf16 %v1660, %v1659
        %v1984 = vpack.c.bf16 %v1662, %v1661
        %v1985 = vpack.c.bf16 %v1664, %v1663
        %v1986 = vpack.c.bf16 %v1666, %v1665
        %1987 = vrot.lane.b32.xlu0 %v1603, 127
        %v1988 = vpop.permute.xlu0 %1987
        %1989 = vrot.lane.b32.xlu0 %v1619, 127
        %v1990 = vpop.permute.xlu0 %1989
        %1991 = vrot.lane.b32.xlu0 %v1635, 127
        %v1992 = vpop.permute.xlu0 %1991
        %1993 = vrot.lane.b32.xlu0 %v1651, 127
        %v1994 = vpop.permute.xlu0 %1993
        %1995 = vrot.lane.b32.xlu0 %v1604, 127
        %v1996 = vpop.permute.xlu0 %1995
        %1997 = vrot.lane.b32.xlu0 %v1620, 127
        %v1998 = vpop.permute.xlu0 %1997
        %1999 = vrot.lane.b32.xlu0 %v1636, 127
        %v2000 = vpop.permute.xlu0 %1999
        %2001 = vrot.lane.b32.xlu0 %v1652, 127
        %v2002 = vpop.permute.xlu0 %2001
        %2003 = vrot.lane.b32.xlu0 %v1605, 127
        %v2004 = vpop.permute.xlu0 %2003
        %2005 = vrot.lane.b32.xlu0 %v1621, 127
        %v2006 = vpop.permute.xlu0 %2005
        %2007 = vrot.lane.b32.xlu0 %v1637, 127
        %v2008 = vpop.permute.xlu0 %2007
        %2009 = vrot.lane.b32.xlu0 %v1653, 127
        %v2010 = vpop.permute.xlu0 %2009
        %2011 = vrot.lane.b32.xlu0 %v1606, 127
        %v2012 = vpop.permute.xlu0 %2011
        %2013 = vrot.lane.b32.xlu0 %v1622, 127
        %v2014 = vpop.permute.xlu0 %2013
        %2015 = vrot.lane.b32.xlu0 %v1638, 127
        %v2016 = vpop.permute.xlu0 %2015
        %2017 = vrot.lane.b32.xlu0 %v1654, 127
        %v2018 = vpop.permute.xlu0 %2017
        %2019 = vrot.lane.b32.xlu0 %v1607, 127
        %v2020 = vpop.permute.xlu0 %2019
        %2021 = vrot.lane.b32.xlu0 %v1623, 127
        %v2022 = vpop.permute.xlu0 %2021
        %2023 = vrot.lane.b32.xlu0 %v1639, 127
        %v2024 = vpop.permute.xlu0 %2023
        %2025 = vrot.lane.b32.xlu0 %v1655, 127
        %v2026 = vpop.permute.xlu0 %2025
        %2027 = vrot.lane.b32.xlu0 %v1608, 127
        %v2028 = vpop.permute.xlu0 %2027
        %2029 = vrot.lane.b32.xlu0 %v1624, 127
        %v2030 = vpop.permute.xlu0 %2029
        %2031 = vrot.lane.b32.xlu0 %v1640, 127
        %v2032 = vpop.permute.xlu0 %2031
        %2033 = vrot.lane.b32.xlu0 %v1656, 127
        %v2034 = vpop.permute.xlu0 %2033
        %2035 = vrot.lane.b32.xlu0 %v1609, 127
        %v2036 = vpop.permute.xlu0 %2035
        %2037 = vrot.lane.b32.xlu0 %v1625, 127
        %v2038 = vpop.permute.xlu0 %2037
        %2039 = vrot.lane.b32.xlu0 %v1641, 127
        %v2040 = vpop.permute.xlu0 %2039
        %2041 = vrot.lane.b32.xlu0 %v1657, 127
        %v2042 = vpop.permute.xlu0 %2041
        %2043 = vrot.lane.b32.xlu0 %v1610, 127
        %v2044 = vpop.permute.xlu0 %2043
        %2045 = vrot.lane.b32.xlu0 %v1626, 127
        %v2046 = vpop.permute.xlu0 %2045
        %2047 = vrot.lane.b32.xlu0 %v1642, 127
        %v2048 = vpop.permute.xlu0 %2047
        %2049 = vrot.lane.b32.xlu0 %v1658, 127
        %v2050 = vpop.permute.xlu0 %2049
        %2051 = vrot.lane.b32.xlu0 %v1611, 127
        %v2052 = vpop.permute.xlu0 %2051
        %2053 = vrot.lane.b32.xlu0 %v1627, 127
        %v2054 = vpop.permute.xlu0 %2053
        %2055 = vrot.lane.b32.xlu0 %v1643, 127
        %v2056 = vpop.permute.xlu0 %2055
        %2057 = vrot.lane.b32.xlu0 %v1659, 127
        %v2058 = vpop.permute.xlu0 %2057
        %2059 = vrot.lane.b32.xlu0 %v1612, 127
        %v2060 = vpop.permute.xlu0 %2059
        %2061 = vrot.lane.b32.xlu0 %v1628, 127
        %v2062 = vpop.permute.xlu0 %2061
        %2063 = vrot.lane.b32.xlu0 %v1644, 127
        %v2064 = vpop.permute.xlu0 %2063
        %2065 = vrot.lane.b32.xlu0 %v1660, 127
        %v2066 = vpop.permute.xlu0 %2065
        %2067 = vrot.lane.b32.xlu0 %v1613, 127
        %v2068 = vpop.permute.xlu0 %2067
        %2069 = vrot.lane.b32.xlu0 %v1629, 127
        %v2070 = vpop.permute.xlu0 %2069
        %2071 = vrot.lane.b32.xlu0 %v1645, 127
        %v2072 = vpop.permute.xlu0 %2071
        %2073 = vrot.lane.b32.xlu0 %v1661, 127
        %v2074 = vpop.permute.xlu0 %2073
        %2075 = vrot.lane.b32.xlu0 %v1614, 127
        %v2076 = vpop.permute.xlu0 %2075
        %2077 = vrot.lane.b32.xlu0 %v1630, 127
        %v2078 = vpop.permute.xlu0 %2077
        %2079 = vrot.lane.b32.xlu0 %v1646, 127
        %v2080 = vpop.permute.xlu0 %2079
        %2081 = vrot.lane.b32.xlu0 %v1662, 127
        %v2082 = vpop.permute.xlu0 %2081
        %2083 = vrot.lane.b32.xlu0 %v1615, 127
        %v2084 = vpop.permute.xlu0 %2083
        %2085 = vrot.lane.b32.xlu0 %v1631, 127
        %v2086 = vpop.permute.xlu0 %2085
        %2087 = vrot.lane.b32.xlu0 %v1647, 127
        %v2088 = vpop.permute.xlu0 %2087
        %2089 = vrot.lane.b32.xlu0 %v1663, 127
        %v2090 = vpop.permute.xlu0 %2089
        %2091 = vrot.lane.b32.xlu0 %v1616, 127
        %v2092 = vpop.permute.xlu0 %2091
        %2093 = vrot.lane.b32.xlu0 %v1632, 127
        %v2094 = vpop.permute.xlu0 %2093
        %2095 = vrot.lane.b32.xlu0 %v1648, 127
        %v2096 = vpop.permute.xlu0 %2095
        %2097 = vrot.lane.b32.xlu0 %v1664, 127
        %v2098 = vpop.permute.xlu0 %2097
        %2099 = vrot.lane.b32.xlu0 %v1617, 127
        %v2100 = vpop.permute.xlu0 %2099
        %2101 = vrot.lane.b32.xlu0 %v1633, 127
        %v2102 = vpop.permute.xlu0 %2101
        %2103 = vrot.lane.b32.xlu0 %v1649, 127
        %v2104 = vpop.permute.xlu0 %2103
        %2105 = vrot.lane.b32.xlu0 %v1665, 127
        %v2106 = vpop.permute.xlu0 %2105
        %2107 = vrot.lane.b32.xlu0 %v1618, 127
        %v2108 = vpop.permute.xlu0 %2107
        %2109 = vrot.lane.b32.xlu0 %v1634, 127
        %v2110 = vpop.permute.xlu0 %2109
        %2111 = vrot.lane.b32.xlu0 %v1650, 127
        %v2112 = vpop.permute.xlu0 %2111
        %2113 = vrot.lane.b32.xlu0 %v1666, 127
        %v2114 = vpop.permute.xlu0 %2113
        %v2115 = vsel %vm917, %v2100, %v2108
        %v2116 = vsel %vm917, %v2102, %v2110
        %v2117 = vsel %vm917, %v2104, %v2112
        %v2118 = vsel %vm917, %v2106, %v2114
        %v2119 = vsel %vm917, %v2092, %v2100
        %v2120 = vsel %vm917, %v2094, %v2102
        %v2121 = vsel %vm917, %v2096, %v2104
        %v2122 = vsel %vm917, %v2098, %v2106
        %v2123 = vsel %vm917, %v2084, %v2092
        %v2124 = vsel %vm917, %v2086, %v2094
        %v2125 = vsel %vm917, %v2088, %v2096
        %v2126 = vsel %vm917, %v2090, %v2098
        %v2127 = vsel %vm917, %v2076, %v2084
        %v2128 = vsel %vm917, %v2078, %v2086
        %v2129 = vsel %vm917, %v2080, %v2088
        %v2130 = vsel %vm917, %v2082, %v2090
        %v2131 = vsel %vm917, %v2068, %v2076
        %v2132 = vsel %vm917, %v2070, %v2078
        %v2133 = vsel %vm917, %v2072, %v2080
        %v2134 = vsel %vm917, %v2074, %v2082
        %v2135 = vsel %vm917, %v2060, %v2068
        %v2136 = vsel %vm917, %v2062, %v2070
        %v2137 = vsel %vm917, %v2064, %v2072
        %v2138 = vsel %vm917, %v2066, %v2074
        %v2139 = vsel %vm917, %v2052, %v2060
        %v2140 = vsel %vm917, %v2054, %v2062
        %v2141 = vsel %vm917, %v2056, %v2064
        %v2142 = vsel %vm917, %v2058, %v2066
        %v2143 = vsel %vm917, %v2044, %v2052
        %v2144 = vsel %vm917, %v2046, %v2054
        %v2145 = vsel %vm917, %v2048, %v2056
        %v2146 = vsel %vm917, %v2050, %v2058
        %v2147 = vsel %vm917, %v2036, %v2044
        %v2148 = vsel %vm917, %v2038, %v2046
        %v2149 = vsel %vm917, %v2040, %v2048
        %v2150 = vsel %vm917, %v2042, %v2050
        %v2151 = vsel %vm917, %v2028, %v2036
        %v2152 = vsel %vm917, %v2030, %v2038
        %v2153 = vsel %vm917, %v2032, %v2040
        %v2154 = vsel %vm917, %v2034, %v2042
        %v2155 = vsel %vm917, %v2020, %v2028
        %v2156 = vsel %vm917, %v2022, %v2030
        %v2157 = vsel %vm917, %v2024, %v2032
        %v2158 = vsel %vm917, %v2026, %v2034
        %v2159 = vsel %vm917, %v2012, %v2020
        %v2160 = vsel %vm917, %v2014, %v2022
        %v2161 = vsel %vm917, %v2016, %v2024
        %v2162 = vsel %vm917, %v2018, %v2026
        %v2163 = vsel %vm917, %v2004, %v2012
        %v2164 = vsel %vm917, %v2006, %v2014
        %v2165 = vsel %vm917, %v2008, %v2016
        %v2166 = vsel %vm917, %v2010, %v2018
        %v2167 = vsel %vm917, %v1996, %v2004
        %v2168 = vsel %vm917, %v1998, %v2006
        %v2169 = vsel %vm917, %v2000, %v2008
        %v2170 = vsel %vm917, %v2002, %v2010
        %v2171 = vsel %vm917, %v1988, %v1996
        %v2172 = vsel %vm917, %v1990, %v1998
        %v2173 = vsel %vm917, %v1992, %v2000
        %v2174 = vsel %vm917, %v1994, %v2002
        %v2175 = vsel %vm917, %v2108, %v1988
        %v2176 = vsel %vm917, %v2110, %v1990
        %v2177 = vsel %vm917, %v2112, %v1992
        %v2178 = vsel %vm917, %v2114, %v1994
        %v2179 = vsel %vm940, %v2171, 0.0
        %v2180 = vsel %vm941, %v2167, 0.0
        %v2181 = vsel %vm940, %v2163, 0.0
        %v2182 = vsel %vm941, %v2159, 0.0
        %v2183 = vsel %vm940, %v2155, 0.0
        %v2184 = vsel %vm941, %v2151, 0.0
        %v2185 = vsel %vm940, %v2147, 0.0
        %v2186 = vsel %vm941, %v2143, 0.0
        %v2187 = vsel %vm940, %v2139, 0.0
        %v2188 = vsel %vm941, %v2135, 0.0
        %v2189 = vsel %vm940, %v2131, 0.0
        %v2190 = vsel %vm941, %v2127, 0.0
        %v2191 = vsel %vm940, %v2123, 0.0
        %v2192 = vsel %vm941, %v2119, 0.0
        %v2193 = vsel %vm940, %v2115, 0.0
        %v2194 = vsel %vm941, %v2175, 0.0
        %v2195 = vsel %vm940, %v2172, 0.0
        %v2196 = vsel %vm941, %v2168, 0.0
        %v2197 = vsel %vm940, %v2164, 0.0
        %v2198 = vsel %vm941, %v2160, 0.0
        %v2199 = vsel %vm940, %v2156, 0.0
        %v2200 = vsel %vm941, %v2152, 0.0
        %v2201 = vsel %vm940, %v2148, 0.0
        %v2202 = vsel %vm941, %v2144, 0.0
        %v2203 = vsel %vm940, %v2140, 0.0
        %v2204 = vsel %vm941, %v2136, 0.0
        %v2205 = vsel %vm940, %v2132, 0.0
        %v2206 = vsel %vm941, %v2128, 0.0
        %v2207 = vsel %vm940, %v2124, 0.0
        %v2208 = vsel %vm941, %v2120, 0.0
        %v2209 = vsel %vm940, %v2116, 0.0
        %v2210 = vsel %vm941, %v2176, 0.0
        %v2211 = vsel %vm940, %v2173, 0.0
        %v2212 = vsel %vm941, %v2169, 0.0
        %v2213 = vsel %vm940, %v2165, 0.0
        %v2214 = vsel %vm941, %v2161, 0.0
        %v2215 = vsel %vm940, %v2157, 0.0
        %v2216 = vsel %vm941, %v2153, 0.0
        %v2217 = vsel %vm940, %v2149, 0.0
        %v2218 = vsel %vm941, %v2145, 0.0
        %v2219 = vsel %vm940, %v2141, 0.0
        %v2220 = vsel %vm941, %v2137, 0.0
        %v2221 = vsel %vm940, %v2133, 0.0
        %v2222 = vsel %vm941, %v2129, 0.0
        %v2223 = vsel %vm940, %v2125, 0.0
        %v2224 = vsel %vm941, %v2121, 0.0
        %v2225 = vsel %vm940, %v2117, 0.0
        %v2226 = vsel %vm941, %v2177, 0.0
        %v2227 = vsel %vm940, %v2174, 0.0
        %v2228 = vsel %vm941, %v2170, 0.0
        %v2229 = vsel %vm940, %v2166, 0.0
        %v2230 = vsel %vm941, %v2162, 0.0
        %v2231 = vsel %vm940, %v2158, 0.0
        %v2232 = vsel %vm941, %v2154, 0.0
        %v2233 = vsel %vm940, %v2150, 0.0
        %v2234 = vsel %vm941, %v2146, 0.0
        %v2235 = vsel %vm940, %v2142, 0.0
        %v2236 = vsel %vm941, %v2138, 0.0
        %v2237 = vsel %vm940, %v2134, 0.0
        %v2238 = vsel %vm941, %v2130, 0.0
        %v2239 = vsel %vm940, %v2126, 0.0
        %v2240 = vsel %vm941, %v2122, 0.0
        %v2241 = vsel %vm940, %v2118, 0.0
        %v2242 = vsel %vm941, %v2178, 0.0
        %v2243 = vpack.c.bf16 %v2180, %v2179
        %v2244 = vpack.c.bf16 %v2182, %v2181
        %v2245 = vpack.c.bf16 %v2184, %v2183
        %v2246 = vpack.c.bf16 %v2186, %v2185
        %v2247 = vpack.c.bf16 %v2188, %v2187
        %v2248 = vpack.c.bf16 %v2190, %v2189
        %v2249 = vpack.c.bf16 %v2192, %v2191
        %v2250 = vpack.c.bf16 %v2194, %v2193
        %v2251 = vpack.c.bf16 %v2196, %v2195
        %v2252 = vpack.c.bf16 %v2198, %v2197
        %v2253 = vpack.c.bf16 %v2200, %v2199
        %v2254 = vpack.c.bf16 %v2202, %v2201
        %v2255 = vpack.c.bf16 %v2204, %v2203
        %v2256 = vpack.c.bf16 %v2206, %v2205
        %v2257 = vpack.c.bf16 %v2208, %v2207
        %v2258 = vpack.c.bf16 %v2210, %v2209
        %v2259 = vpack.c.bf16 %v2212, %v2211
        %v2260 = vpack.c.bf16 %v2214, %v2213
        %v2261 = vpack.c.bf16 %v2216, %v2215
        %v2262 = vpack.c.bf16 %v2218, %v2217
        %v2263 = vpack.c.bf16 %v2220, %v2219
        %v2264 = vpack.c.bf16 %v2222, %v2221
        %v2265 = vpack.c.bf16 %v2224, %v2223
        %v2266 = vpack.c.bf16 %v2226, %v2225
        %v2267 = vpack.c.bf16 %v2228, %v2227
        %v2268 = vpack.c.bf16 %v2230, %v2229
        %v2269 = vpack.c.bf16 %v2232, %v2231
        %v2270 = vpack.c.bf16 %v2234, %v2233
        %v2271 = vpack.c.bf16 %v2236, %v2235
        %v2272 = vpack.c.bf16 %v2238, %v2237
        %v2273 = vpack.c.bf16 %v2240, %v2239
        %v2274 = vpack.c.bf16 %v2242, %v2241
        %v2307 = vunpack.c.l.b16 %v1923
        %v2308 = vunpack.c.h.b16 %v1923
        %v2309 = vunpack.c.l.b16 %v1924
        %v2310 = vunpack.c.h.b16 %v1924
        %v2311 = vunpack.c.l.b16 %v1925
        %v2312 = vunpack.c.h.b16 %v1925
        %v2313 = vunpack.c.l.b16 %v1926
        %v2314 = vunpack.c.h.b16 %v1926
        %v2315 = vunpack.c.l.b16 %v1927
        %v2316 = vunpack.c.h.b16 %v1927
        %v2317 = vunpack.c.l.b16 %v1928
        %v2318 = vunpack.c.h.b16 %v1928
        %v2319 = vunpack.c.l.b16 %v1929
        %v2320 = vunpack.c.h.b16 %v1929
        %v2321 = vunpack.c.l.b16 %v1930
        %v2322 = vunpack.c.h.b16 %v1930
        %v2323 = vunpack.c.l.b16 %v1931
        %v2324 = vunpack.c.h.b16 %v1931
        %v2325 = vunpack.c.l.b16 %v1932
        %v2326 = vunpack.c.h.b16 %v1932
        %v2327 = vunpack.c.l.b16 %v1933
        %v2328 = vunpack.c.h.b16 %v1933
        %v2329 = vunpack.c.l.b16 %v1934
        %v2330 = vunpack.c.h.b16 %v1934
        %v2331 = vunpack.c.l.b16 %v1935
        %v2332 = vunpack.c.h.b16 %v1935
        %v2333 = vunpack.c.l.b16 %v1936
        %v2334 = vunpack.c.h.b16 %v1936
        %v2335 = vunpack.c.l.b16 %v1937
        %v2336 = vunpack.c.h.b16 %v1937
        %v2337 = vunpack.c.l.b16 %v1938
        %v2338 = vunpack.c.h.b16 %v1938
        %v2339 = vunpack.c.l.b16 %v1939
        %v2340 = vunpack.c.h.b16 %v1939
        %v2341 = vunpack.c.l.b16 %v1940
        %v2342 = vunpack.c.h.b16 %v1940
        %v2343 = vunpack.c.l.b16 %v1941
        %v2344 = vunpack.c.h.b16 %v1941
        %v2345 = vunpack.c.l.b16 %v1942
        %v2346 = vunpack.c.h.b16 %v1942
        %v2347 = vunpack.c.l.b16 %v1943
        %v2348 = vunpack.c.h.b16 %v1943
        %v2349 = vunpack.c.l.b16 %v1944
        %v2350 = vunpack.c.h.b16 %v1944
        %v2351 = vunpack.c.l.b16 %v1945
        %v2352 = vunpack.c.h.b16 %v1945
        %v2353 = vunpack.c.l.b16 %v1946
        %v2354 = vunpack.c.h.b16 %v1946
        %v2355 = vunpack.c.l.b16 %v1947
        %v2356 = vunpack.c.h.b16 %v1947
        %v2357 = vunpack.c.l.b16 %v1948
        %v2358 = vunpack.c.h.b16 %v1948
        %v2359 = vunpack.c.l.b16 %v1949
        %v2360 = vunpack.c.h.b16 %v1949
        %v2361 = vunpack.c.l.b16 %v1950
        %v2362 = vunpack.c.h.b16 %v1950
        %v2363 = vunpack.c.l.b16 %v1951
        %v2364 = vunpack.c.h.b16 %v1951
        %v2365 = vunpack.c.l.b16 %v1952
        %v2366 = vunpack.c.h.b16 %v1952
        %v2367 = vunpack.c.l.b16 %v1953
        %v2368 = vunpack.c.h.b16 %v1953
        %v2369 = vunpack.c.l.b16 %v1954
        %v2370 = vunpack.c.h.b16 %v1954
        %v2371 = vpack.c.b16 %v2323, %v2307
        %v2372 = vpack.c.b16 %v2324, %v2308
        %v2373 = vpack.c.b16 %v2325, %v2309
        %v2374 = vpack.c.b16 %v2326, %v2310
        %v2375 = vpack.c.b16 %v2327, %v2311
        %v2376 = vpack.c.b16 %v2328, %v2312
        %v2377 = vpack.c.b16 %v2329, %v2313
        %v2378 = vpack.c.b16 %v2330, %v2314
        %v2379 = vpack.c.b16 %v2331, %v2315
        %v2380 = vpack.c.b16 %v2332, %v2316
        %v2381 = vpack.c.b16 %v2333, %v2317
        %v2382 = vpack.c.b16 %v2334, %v2318
        %v2383 = vpack.c.b16 %v2335, %v2319
        %v2384 = vpack.c.b16 %v2336, %v2320
        %v2385 = vpack.c.b16 %v2337, %v2321
        %v2386 = vpack.c.b16 %v2338, %v2322
        %v2387 = vpack.c.b16 %v2355, %v2339
        %v2388 = vpack.c.b16 %v2356, %v2340
        %v2389 = vpack.c.b16 %v2357, %v2341
        %v2390 = vpack.c.b16 %v2358, %v2342
        %v2391 = vpack.c.b16 %v2359, %v2343
        %v2392 = vpack.c.b16 %v2360, %v2344
        %v2393 = vpack.c.b16 %v2361, %v2345
        %v2394 = vpack.c.b16 %v2362, %v2346
        %v2395 = vpack.c.b16 %v2363, %v2347
        %v2396 = vpack.c.b16 %v2364, %v2348
        %v2397 = vpack.c.b16 %v2365, %v2349
        %v2398 = vpack.c.b16 %v2366, %v2350
        %v2399 = vpack.c.b16 %v2367, %v2351
        %v2400 = vpack.c.b16 %v2368, %v2352
        %v2401 = vpack.c.b16 %v2369, %v2353
        %v2402 = vpack.c.b16 %v2370, %v2354
        %v2467 = vunpack.c.l.b16 %v1955
        %v2468 = vunpack.c.h.b16 %v1955
        %v2469 = vunpack.c.l.b16 %v1956
        %v2470 = vunpack.c.h.b16 %v1956
        %v2471 = vunpack.c.l.b16 %v1957
        %v2472 = vunpack.c.h.b16 %v1957
        %v2473 = vunpack.c.l.b16 %v1958
        %v2474 = vunpack.c.h.b16 %v1958
        %v2475 = vunpack.c.l.b16 %v1959
        %v2476 = vunpack.c.h.b16 %v1959
        %v2477 = vunpack.c.l.b16 %v1960
        %v2478 = vunpack.c.h.b16 %v1960
        %v2479 = vunpack.c.l.b16 %v1961
        %v2480 = vunpack.c.h.b16 %v1961
        %v2481 = vunpack.c.l.b16 %v1962
        %v2482 = vunpack.c.h.b16 %v1962
        %v2483 = vunpack.c.l.b16 %v1963
        %v2484 = vunpack.c.h.b16 %v1963
        %v2485 = vunpack.c.l.b16 %v1964
        %v2486 = vunpack.c.h.b16 %v1964
        %v2487 = vunpack.c.l.b16 %v1965
        %v2488 = vunpack.c.h.b16 %v1965
        %v2489 = vunpack.c.l.b16 %v1966
        %v2490 = vunpack.c.h.b16 %v1966
        %v2491 = vunpack.c.l.b16 %v1967
        %v2492 = vunpack.c.h.b16 %v1967
        %v2493 = vunpack.c.l.b16 %v1968
        %v2494 = vunpack.c.h.b16 %v1968
        %v2495 = vunpack.c.l.b16 %v1969
        %v2496 = vunpack.c.h.b16 %v1969
        %v2497 = vunpack.c.l.b16 %v1970
        %v2498 = vunpack.c.h.b16 %v1970
        %v2499 = vunpack.c.l.b16 %v1971
        %v2500 = vunpack.c.h.b16 %v1971
        %v2501 = vunpack.c.l.b16 %v1972
        %v2502 = vunpack.c.h.b16 %v1972
        %v2503 = vunpack.c.l.b16 %v1973
        %v2504 = vunpack.c.h.b16 %v1973
        %v2505 = vunpack.c.l.b16 %v1974
        %v2506 = vunpack.c.h.b16 %v1974
        %v2507 = vunpack.c.l.b16 %v1975
        %v2508 = vunpack.c.h.b16 %v1975
        %v2509 = vunpack.c.l.b16 %v1976
        %v2510 = vunpack.c.h.b16 %v1976
        %v2511 = vunpack.c.l.b16 %v1977
        %v2512 = vunpack.c.h.b16 %v1977
        %v2513 = vunpack.c.l.b16 %v1978
        %v2514 = vunpack.c.h.b16 %v1978
        %v2515 = vunpack.c.l.b16 %v1979
        %v2516 = vunpack.c.h.b16 %v1979
        %v2517 = vunpack.c.l.b16 %v1980
        %v2518 = vunpack.c.h.b16 %v1980
        %v2519 = vunpack.c.l.b16 %v1981
        %v2520 = vunpack.c.h.b16 %v1981
        %v2521 = vunpack.c.l.b16 %v1982
        %v2522 = vunpack.c.h.b16 %v1982
        %v2523 = vunpack.c.l.b16 %v1983
        %v2524 = vunpack.c.h.b16 %v1983
        %v2525 = vunpack.c.l.b16 %v1984
        %v2526 = vunpack.c.h.b16 %v1984
        %v2527 = vunpack.c.l.b16 %v1985
        %v2528 = vunpack.c.h.b16 %v1985
        %v2529 = vunpack.c.l.b16 %v1986
        %v2530 = vunpack.c.h.b16 %v1986
        %v2531 = vpack.c.b16 %v2483, %v2467
        %v2532 = vpack.c.b16 %v2484, %v2468
        %v2533 = vpack.c.b16 %v2485, %v2469
        %v2534 = vpack.c.b16 %v2486, %v2470
        %v2535 = vpack.c.b16 %v2487, %v2471
        %v2536 = vpack.c.b16 %v2488, %v2472
        %v2537 = vpack.c.b16 %v2489, %v2473
        %v2538 = vpack.c.b16 %v2490, %v2474
        %v2539 = vpack.c.b16 %v2491, %v2475
        %v2540 = vpack.c.b16 %v2492, %v2476
        %v2541 = vpack.c.b16 %v2493, %v2477
        %v2542 = vpack.c.b16 %v2494, %v2478
        %v2543 = vpack.c.b16 %v2495, %v2479
        %v2544 = vpack.c.b16 %v2496, %v2480
        %v2545 = vpack.c.b16 %v2497, %v2481
        %v2546 = vpack.c.b16 %v2498, %v2482
        %v2547 = vpack.c.b16 %v2515, %v2499
        %v2548 = vpack.c.b16 %v2516, %v2500
        %v2549 = vpack.c.b16 %v2517, %v2501
        %v2550 = vpack.c.b16 %v2518, %v2502
        %v2551 = vpack.c.b16 %v2519, %v2503
        %v2552 = vpack.c.b16 %v2520, %v2504
        %v2553 = vpack.c.b16 %v2521, %v2505
        %v2554 = vpack.c.b16 %v2522, %v2506
        %v2555 = vpack.c.b16 %v2523, %v2507
        %v2556 = vpack.c.b16 %v2524, %v2508
        %v2557 = vpack.c.b16 %v2525, %v2509
        %v2558 = vpack.c.b16 %v2526, %v2510
        %v2559 = vpack.c.b16 %v2527, %v2511
        %v2560 = vpack.c.b16 %v2528, %v2512
        %v2561 = vpack.c.b16 %v2529, %v2513
        %v2562 = vpack.c.b16 %v2530, %v2514
        %v2627 = vunpack.c.l.b16 %v2243
        %v2628 = vunpack.c.h.b16 %v2243
        %v2629 = vunpack.c.l.b16 %v2244
        %v2630 = vunpack.c.h.b16 %v2244
        %v2631 = vunpack.c.l.b16 %v2245
        %v2632 = vunpack.c.h.b16 %v2245
        %v2633 = vunpack.c.l.b16 %v2246
        %v2634 = vunpack.c.h.b16 %v2246
        %v2635 = vunpack.c.l.b16 %v2247
        %v2636 = vunpack.c.h.b16 %v2247
        %v2637 = vunpack.c.l.b16 %v2248
        %v2638 = vunpack.c.h.b16 %v2248
        %v2639 = vunpack.c.l.b16 %v2249
        %v2640 = vunpack.c.h.b16 %v2249
        %v2641 = vunpack.c.l.b16 %v2250
        %v2642 = vunpack.c.h.b16 %v2250
        %v2643 = vunpack.c.l.b16 %v2251
        %v2644 = vunpack.c.h.b16 %v2251
        %v2645 = vunpack.c.l.b16 %v2252
        %v2646 = vunpack.c.h.b16 %v2252
        %v2647 = vunpack.c.l.b16 %v2253
        %v2648 = vunpack.c.h.b16 %v2253
        %v2649 = vunpack.c.l.b16 %v2254
        %v2650 = vunpack.c.h.b16 %v2254
        %v2651 = vunpack.c.l.b16 %v2255
        %v2652 = vunpack.c.h.b16 %v2255
        %v2653 = vunpack.c.l.b16 %v2256
        %v2654 = vunpack.c.h.b16 %v2256
        %v2655 = vunpack.c.l.b16 %v2257
        %v2656 = vunpack.c.h.b16 %v2257
        %v2657 = vunpack.c.l.b16 %v2258
        %v2658 = vunpack.c.h.b16 %v2258
        %v2659 = vunpack.c.l.b16 %v2259
        %v2660 = vunpack.c.h.b16 %v2259
        %v2661 = vunpack.c.l.b16 %v2260
        %v2662 = vunpack.c.h.b16 %v2260
        %v2663 = vunpack.c.l.b16 %v2261
        %v2664 = vunpack.c.h.b16 %v2261
        %v2665 = vunpack.c.l.b16 %v2262
        %v2666 = vunpack.c.h.b16 %v2262
        %v2667 = vunpack.c.l.b16 %v2263
        %v2668 = vunpack.c.h.b16 %v2263
        %v2669 = vunpack.c.l.b16 %v2264
        %v2670 = vunpack.c.h.b16 %v2264
        %v2671 = vunpack.c.l.b16 %v2265
        %v2672 = vunpack.c.h.b16 %v2265
        %v2673 = vunpack.c.l.b16 %v2266
        %v2674 = vunpack.c.h.b16 %v2266
        %v2675 = vunpack.c.l.b16 %v2267
        %v2676 = vunpack.c.h.b16 %v2267
        %v2677 = vunpack.c.l.b16 %v2268
        %v2678 = vunpack.c.h.b16 %v2268
        %v2679 = vunpack.c.l.b16 %v2269
        %v2680 = vunpack.c.h.b16 %v2269
        %v2681 = vunpack.c.l.b16 %v2270
        %v2682 = vunpack.c.h.b16 %v2270
        %v2683 = vunpack.c.l.b16 %v2271
        %v2684 = vunpack.c.h.b16 %v2271
        %v2685 = vunpack.c.l.b16 %v2272
        %v2686 = vunpack.c.h.b16 %v2272
        %v2687 = vunpack.c.l.b16 %v2273
        %v2688 = vunpack.c.h.b16 %v2273
        %v2689 = vunpack.c.l.b16 %v2274
        %v2690 = vunpack.c.h.b16 %v2274
        %v2691 = vpack.c.b16 %v2643, %v2627
        %v2692 = vpack.c.b16 %v2644, %v2628
        %v2693 = vpack.c.b16 %v2645, %v2629
        %v2694 = vpack.c.b16 %v2646, %v2630
        %v2695 = vpack.c.b16 %v2647, %v2631
        %v2696 = vpack.c.b16 %v2648, %v2632
        %v2697 = vpack.c.b16 %v2649, %v2633
        %v2698 = vpack.c.b16 %v2650, %v2634
        %v2699 = vpack.c.b16 %v2651, %v2635
        %v2700 = vpack.c.b16 %v2652, %v2636
        %v2701 = vpack.c.b16 %v2653, %v2637
        %v2702 = vpack.c.b16 %v2654, %v2638
        %v2703 = vpack.c.b16 %v2655, %v2639
        %v2704 = vpack.c.b16 %v2656, %v2640
        %v2705 = vpack.c.b16 %v2657, %v2641
        %v2706 = vpack.c.b16 %v2658, %v2642
        %v2707 = vpack.c.b16 %v2675, %v2659
        %v2708 = vpack.c.b16 %v2676, %v2660
        %v2709 = vpack.c.b16 %v2677, %v2661
        %v2710 = vpack.c.b16 %v2678, %v2662
        %v2711 = vpack.c.b16 %v2679, %v2663
        %v2712 = vpack.c.b16 %v2680, %v2664
        %v2713 = vpack.c.b16 %v2681, %v2665
        %v2714 = vpack.c.b16 %v2682, %v2666
        %v2715 = vpack.c.b16 %v2683, %v2667
        %v2716 = vpack.c.b16 %v2684, %v2668
        %v2717 = vpack.c.b16 %v2685, %v2669
        %v2718 = vpack.c.b16 %v2686, %v2670
        %v2719 = vpack.c.b16 %v2687, %v2671
        %v2720 = vpack.c.b16 %v2688, %v2672
        %v2721 = vpack.c.b16 %v2689, %v2673
        %v2722 = vpack.c.b16 %v2690, %v2674
        %v2759 = vunpack.c.l.b16 %v373
        %v2760 = vunpack.c.l.b16 %v374
        %v2761 = vunpack.c.l.b16 %v375
        %v2762 = vunpack.c.l.b16 %v376
        %v2763 = vpack.c.b16 %v2760, %v2759
        %v2764 = vpack.c.b16 %v2762, %v2761
        %vm2765 = vcmask 785408
        %v2767 = vsel %vm2765, %v2763, 0
        %v2770 = vsel %vm2765, %v2764, 0
        %2772 = vmatpush.bf16.msra.mxu0 0
        %2773 = vmatpush.bf16.msra.mxu0 0
        %2774 = vmatpush.bf16.msra.mxu0 %v2707
        %2775 = vmatpush.bf16.msra.mxu0 %v2691
        %2776 = vmatpush.bf16.msra.mxu0 %v2547
        %2777 = vmatpush.bf16.msra.mxu0 %v2531
        %2778 = vmatpush.bf16.msra.mxu0 %v2387
        %2779 = vmatpush.bf16.msra.mxu0 %v2371
        %2780 = vmatmul.bf16.gmra.mxu0 %v2767
        %v2781 = vpop.f32.mrf.mxu0
        %v2782 = vadd.f32 0.0, %v2781
        %v2783 = vpop.f32.mrf.mxu0
        %v2784 = vadd.f32 0.0, %v2783
        %2785 = vmatmul.bf16.gmra.mxu0 %v2770
        %v2786 = vpop.f32.mrf.mxu0
        %v2787 = vadd.f32 0.0, %v2786
        %v2788 = vpop.f32.mrf.mxu0
        %v2789 = vadd.f32 0.0, %v2788
        %2790 = vdwg.mxu0
        %2791 = vmatpush.bf16.msra.mxu0 0
        %2792 = vmatpush.bf16.msra.mxu0 0
        %2793 = vmatpush.bf16.msra.mxu0 %v2708
        %2794 = vmatpush.bf16.msra.mxu0 %v2692
        %2795 = vmatpush.bf16.msra.mxu0 %v2548
        %2796 = vmatpush.bf16.msra.mxu0 %v2532
        %2797 = vmatpush.bf16.msra.mxu0 %v2388
        %2798 = vmatpush.bf16.msra.mxu0 %v2372
        %2799 = vmatmul.bf16.gmra.mxu0 %v2767
        %v2800 = vpop.f32.mrf.mxu0
        %v2801 = vadd.f32 0.0, %v2800
        %v2802 = vpop.f32.mrf.mxu0
        %v2803 = vadd.f32 0.0, %v2802
        %2804 = vmatmul.bf16.gmra.mxu0 %v2770
        %v2805 = vpop.f32.mrf.mxu0
        %v2806 = vadd.f32 0.0, %v2805
        %v2807 = vpop.f32.mrf.mxu0
        %v2808 = vadd.f32 0.0, %v2807
        %2809 = vdwg.mxu0
        %2810 = vmatpush.bf16.msra.mxu0 0
        %2811 = vmatpush.bf16.msra.mxu0 0
        %2812 = vmatpush.bf16.msra.mxu0 %v2709
        %2813 = vmatpush.bf16.msra.mxu0 %v2693
        %2814 = vmatpush.bf16.msra.mxu0 %v2549
        %2815 = vmatpush.bf16.msra.mxu0 %v2533
        %2816 = vmatpush.bf16.msra.mxu0 %v2389
        %2817 = vmatpush.bf16.msra.mxu0 %v2373
        %2818 = vmatmul.bf16.gmra.mxu0 %v2767
        %v2819 = vpop.f32.mrf.mxu0
        %v2820 = vadd.f32 0.0, %v2819
        %v2821 = vpop.f32.mrf.mxu0
        %v2822 = vadd.f32 0.0, %v2821
        %2823 = vmatmul.bf16.gmra.mxu0 %v2770
        %v2824 = vpop.f32.mrf.mxu0
        %v2825 = vadd.f32 0.0, %v2824
        %v2826 = vpop.f32.mrf.mxu0
        %v2827 = vadd.f32 0.0, %v2826
        %2828 = vdwg.mxu0
        %2829 = vmatpush.bf16.msra.mxu0 0
        %2830 = vmatpush.bf16.msra.mxu0 0
        %2831 = vmatpush.bf16.msra.mxu0 %v2710
        %2832 = vmatpush.bf16.msra.mxu0 %v2694
        %2833 = vmatpush.bf16.msra.mxu0 %v2550
        %2834 = vmatpush.bf16.msra.mxu0 %v2534
        %2835 = vmatpush.bf16.msra.mxu0 %v2390
        %2836 = vmatpush.bf16.msra.mxu0 %v2374
        %2837 = vmatmul.bf16.gmra.mxu0 %v2767
        %v2838 = vpop.f32.mrf.mxu0
        %v2839 = vadd.f32 0.0, %v2838
        %v2840 = vpop.f32.mrf.mxu0
        %v2841 = vadd.f32 0.0, %v2840
        %2842 = vmatmul.bf16.gmra.mxu0 %v2770
        %v2843 = vpop.f32.mrf.mxu0
        %v2844 = vadd.f32 0.0, %v2843
        %v2845 = vpop.f32.mrf.mxu0
        %v2846 = vadd.f32 0.0, %v2845
        %2847 = vdwg.mxu0
        %2848 = vmatpush.bf16.msra.mxu0 0
        %2849 = vmatpush.bf16.msra.mxu0 0
        %2850 = vmatpush.bf16.msra.mxu0 %v2711
        %2851 = vmatpush.bf16.msra.mxu0 %v2695
        %2852 = vmatpush.bf16.msra.mxu0 %v2551
        %2853 = vmatpush.bf16.msra.mxu0 %v2535
        %2854 = vmatpush.bf16.msra.mxu0 %v2391
        %2855 = vmatpush.bf16.msra.mxu0 %v2375
        %2856 = vmatmul.bf16.gmra.mxu0 %v2767
        %v2857 = vpop.f32.mrf.mxu0
        %v2858 = vadd.f32 0.0, %v2857
        %v2859 = vpop.f32.mrf.mxu0
        %v2860 = vadd.f32 0.0, %v2859
        %2861 = vmatmul.bf16.gmra.mxu0 %v2770
        %v2862 = vpop.f32.mrf.mxu0
        %v2863 = vadd.f32 0.0, %v2862
        %v2864 = vpop.f32.mrf.mxu0
        %v2865 = vadd.f32 0.0, %v2864
        %2866 = vdwg.mxu0
        %2867 = vmatpush.bf16.msra.mxu0 0
        %2868 = vmatpush.bf16.msra.mxu0 0
        %2869 = vmatpush.bf16.msra.mxu0 %v2712
        %2870 = vmatpush.bf16.msra.mxu0 %v2696
        %2871 = vmatpush.bf16.msra.mxu0 %v2552
        %2872 = vmatpush.bf16.msra.mxu0 %v2536
        %2873 = vmatpush.bf16.msra.mxu0 %v2392
        %2874 = vmatpush.bf16.msra.mxu0 %v2376
        %2875 = vmatmul.bf16.gmra.mxu0 %v2767
        %v2876 = vpop.f32.mrf.mxu0
        %v2877 = vadd.f32 0.0, %v2876
        %v2878 = vpop.f32.mrf.mxu0
        %v2879 = vadd.f32 0.0, %v2878
        %2880 = vmatmul.bf16.gmra.mxu0 %v2770
        %v2881 = vpop.f32.mrf.mxu0
        %v2882 = vadd.f32 0.0, %v2881
        %v2883 = vpop.f32.mrf.mxu0
        %v2884 = vadd.f32 0.0, %v2883
        %2885 = vdwg.mxu0
        %2886 = vmatpush.bf16.msra.mxu0 0
        %2887 = vmatpush.bf16.msra.mxu0 0
        %2888 = vmatpush.bf16.msra.mxu0 %v2713
        %2889 = vmatpush.bf16.msra.mxu0 %v2697
        %2890 = vmatpush.bf16.msra.mxu0 %v2553
        %2891 = vmatpush.bf16.msra.mxu0 %v2537
        %2892 = vmatpush.bf16.msra.mxu0 %v2393
        %2893 = vmatpush.bf16.msra.mxu0 %v2377
        %2894 = vmatmul.bf16.gmra.mxu0 %v2767
        %v2895 = vpop.f32.mrf.mxu0
        %v2896 = vadd.f32 0.0, %v2895
        %v2897 = vpop.f32.mrf.mxu0
        %v2898 = vadd.f32 0.0, %v2897
        %2899 = vmatmul.bf16.gmra.mxu0 %v2770
        %v2900 = vpop.f32.mrf.mxu0
        %v2901 = vadd.f32 0.0, %v2900
        %v2902 = vpop.f32.mrf.mxu0
        %v2903 = vadd.f32 0.0, %v2902
        %2904 = vdwg.mxu0
        %2905 = vmatpush.bf16.msra.mxu0 0
        %2906 = vmatpush.bf16.msra.mxu0 0
        %2907 = vmatpush.bf16.msra.mxu0 %v2714
        %2908 = vmatpush.bf16.msra.mxu0 %v2698
        %2909 = vmatpush.bf16.msra.mxu0 %v2554
        %2910 = vmatpush.bf16.msra.mxu0 %v2538
        %2911 = vmatpush.bf16.msra.mxu0 %v2394
        %2912 = vmatpush.bf16.msra.mxu0 %v2378
        %2913 = vmatmul.bf16.gmra.mxu0 %v2767
        %v2914 = vpop.f32.mrf.mxu0
        %v2915 = vadd.f32 0.0, %v2914
        %v2916 = vpop.f32.mrf.mxu0
        %v2917 = vadd.f32 0.0, %v2916
        %2918 = vmatmul.bf16.gmra.mxu0 %v2770
        %v2919 = vpop.f32.mrf.mxu0
        %v2920 = vadd.f32 0.0, %v2919
        %v2921 = vpop.f32.mrf.mxu0
        %v2922 = vadd.f32 0.0, %v2921
        %2923 = vdwg.mxu0
        %2924 = vmatpush.bf16.msra.mxu0 0
        %2925 = vmatpush.bf16.msra.mxu0 0
        %2926 = vmatpush.bf16.msra.mxu0 %v2715
        %2927 = vmatpush.bf16.msra.mxu0 %v2699
        %2928 = vmatpush.bf16.msra.mxu0 %v2555
        %2929 = vmatpush.bf16.msra.mxu0 %v2539
        %2930 = vmatpush.bf16.msra.mxu0 %v2395
        %2931 = vmatpush.bf16.msra.mxu0 %v2379
        %2932 = vmatmul.bf16.gmra.mxu0 %v2767
        %v2933 = vpop.f32.mrf.mxu0
        %v2934 = vadd.f32 0.0, %v2933
        %v2935 = vpop.f32.mrf.mxu0
        %v2936 = vadd.f32 0.0, %v2935
        %2937 = vmatmul.bf16.gmra.mxu0 %v2770
        %v2938 = vpop.f32.mrf.mxu0
        %v2939 = vadd.f32 0.0, %v2938
        %v2940 = vpop.f32.mrf.mxu0
        %v2941 = vadd.f32 0.0, %v2940
        %2942 = vdwg.mxu0
        %2943 = vmatpush.bf16.msra.mxu0 0
        %2944 = vmatpush.bf16.msra.mxu0 0
        %2945 = vmatpush.bf16.msra.mxu0 %v2716
        %2946 = vmatpush.bf16.msra.mxu0 %v2700
        %2947 = vmatpush.bf16.msra.mxu0 %v2556
        %2948 = vmatpush.bf16.msra.mxu0 %v2540
        %2949 = vmatpush.bf16.msra.mxu0 %v2396
        %2950 = vmatpush.bf16.msra.mxu0 %v2380
        %2951 = vmatmul.bf16.gmra.mxu0 %v2767
        %v2952 = vpop.f32.mrf.mxu0
        %v2953 = vadd.f32 0.0, %v2952
        %v2954 = vpop.f32.mrf.mxu0
        %v2955 = vadd.f32 0.0, %v2954
        %2956 = vmatmul.bf16.gmra.mxu0 %v2770
        %v2957 = vpop.f32.mrf.mxu0
        %v2958 = vadd.f32 0.0, %v2957
        %v2959 = vpop.f32.mrf.mxu0
        %v2960 = vadd.f32 0.0, %v2959
        %2961 = vdwg.mxu0
        %2962 = vmatpush.bf16.msra.mxu0 0
        %2963 = vmatpush.bf16.msra.mxu0 0
        %2964 = vmatpush.bf16.msra.mxu0 %v2717
        %2965 = vmatpush.bf16.msra.mxu0 %v2701
        %2966 = vmatpush.bf16.msra.mxu0 %v2557
        %2967 = vmatpush.bf16.msra.mxu0 %v2541
        %2968 = vmatpush.bf16.msra.mxu0 %v2397
        %2969 = vmatpush.bf16.msra.mxu0 %v2381
        %2970 = vmatmul.bf16.gmra.mxu0 %v2767
        %v2971 = vpop.f32.mrf.mxu0
        %v2972 = vadd.f32 0.0, %v2971
        %v2973 = vpop.f32.mrf.mxu0
        %v2974 = vadd.f32 0.0, %v2973
        %2975 = vmatmul.bf16.gmra.mxu0 %v2770
        %v2976 = vpop.f32.mrf.mxu0
        %v2977 = vadd.f32 0.0, %v2976
        %v2978 = vpop.f32.mrf.mxu0
        %v2979 = vadd.f32 0.0, %v2978
        %2980 = vdwg.mxu0
        %2981 = vmatpush.bf16.msra.mxu0 0
        %2982 = vmatpush.bf16.msra.mxu0 0
        %2983 = vmatpush.bf16.msra.mxu0 %v2718
        %2984 = vmatpush.bf16.msra.mxu0 %v2702
        %2985 = vmatpush.bf16.msra.mxu0 %v2558
        %2986 = vmatpush.bf16.msra.mxu0 %v2542
        %2987 = vmatpush.bf16.msra.mxu0 %v2398
        %2988 = vmatpush.bf16.msra.mxu0 %v2382
        %2989 = vmatmul.bf16.gmra.mxu0 %v2767
        %v2990 = vpop.f32.mrf.mxu0
        %v2991 = vadd.f32 0.0, %v2990
        %v2992 = vpop.f32.mrf.mxu0
        %v2993 = vadd.f32 0.0, %v2992
        %2994 = vmatmul.bf16.gmra.mxu0 %v2770
        %v2995 = vpop.f32.mrf.mxu0
        %v2996 = vadd.f32 0.0, %v2995
        %v2997 = vpop.f32.mrf.mxu0
        %v2998 = vadd.f32 0.0, %v2997
        %2999 = vdwg.mxu0
        %3000 = vmatpush.bf16.msra.mxu0 0
        %3001 = vmatpush.bf16.msra.mxu0 0
        %3002 = vmatpush.bf16.msra.mxu0 %v2719
        %3003 = vmatpush.bf16.msra.mxu0 %v2703
        %3004 = vmatpush.bf16.msra.mxu0 %v2559
        %3005 = vmatpush.bf16.msra.mxu0 %v2543
        %3006 = vmatpush.bf16.msra.mxu0 %v2399
        %3007 = vmatpush.bf16.msra.mxu0 %v2383
        %3008 = vmatmul.bf16.gmra.mxu0 %v2767
        %v3009 = vpop.f32.mrf.mxu0
        %v3010 = vadd.f32 0.0, %v3009
        %v3011 = vpop.f32.mrf.mxu0
        %v3012 = vadd.f32 0.0, %v3011
        %3013 = vmatmul.bf16.gmra.mxu0 %v2770
        %v3014 = vpop.f32.mrf.mxu0
        %v3015 = vadd.f32 0.0, %v3014
        %v3016 = vpop.f32.mrf.mxu0
        %v3017 = vadd.f32 0.0, %v3016
        %3018 = vdwg.mxu0
        %3019 = vmatpush.bf16.msra.mxu0 0
        %3020 = vmatpush.bf16.msra.mxu0 0
        %3021 = vmatpush.bf16.msra.mxu0 %v2720
        %3022 = vmatpush.bf16.msra.mxu0 %v2704
        %3023 = vmatpush.bf16.msra.mxu0 %v2560
        %3024 = vmatpush.bf16.msra.mxu0 %v2544
        %3025 = vmatpush.bf16.msra.mxu0 %v2400
        %3026 = vmatpush.bf16.msra.mxu0 %v2384
        %3027 = vmatmul.bf16.gmra.mxu0 %v2767
        %v3028 = vpop.f32.mrf.mxu0
        %v3029 = vadd.f32 0.0, %v3028
        %v3030 = vpop.f32.mrf.mxu0
        %v3031 = vadd.f32 0.0, %v3030
        %3032 = vmatmul.bf16.gmra.mxu0 %v2770
        %v3033 = vpop.f32.mrf.mxu0
        %v3034 = vadd.f32 0.0, %v3033
        %v3035 = vpop.f32.mrf.mxu0
        %v3036 = vadd.f32 0.0, %v3035
        %3037 = vdwg.mxu0
        %3038 = vmatpush.bf16.msra.mxu0 0
        %3039 = vmatpush.bf16.msra.mxu0 0
        %3040 = vmatpush.bf16.msra.mxu0 %v2721
        %3041 = vmatpush.bf16.msra.mxu0 %v2705
        %3042 = vmatpush.bf16.msra.mxu0 %v2561
        %3043 = vmatpush.bf16.msra.mxu0 %v2545
        %3044 = vmatpush.bf16.msra.mxu0 %v2401
        %3045 = vmatpush.bf16.msra.mxu0 %v2385
        %3046 = vmatmul.bf16.gmra.mxu0 %v2767
        %v3047 = vpop.f32.mrf.mxu0
        %v3048 = vadd.f32 0.0, %v3047
        %v3049 = vpop.f32.mrf.mxu0
        %v3050 = vadd.f32 0.0, %v3049
        %3051 = vmatmul.bf16.gmra.mxu0 %v2770
        %v3052 = vpop.f32.mrf.mxu0
        %v3053 = vadd.f32 0.0, %v3052
        %v3054 = vpop.f32.mrf.mxu0
        %v3055 = vadd.f32 0.0, %v3054
        %3056 = vdwg.mxu0
        %3057 = vmatpush.bf16.msra.mxu0 0
        %3058 = vmatpush.bf16.msra.mxu0 0
        %3059 = vmatpush.bf16.msra.mxu0 %v2722
        %3060 = vmatpush.bf16.msra.mxu0 %v2706
        %3061 = vmatpush.bf16.msra.mxu0 %v2562
        %3062 = vmatpush.bf16.msra.mxu0 %v2546
        %3063 = vmatpush.bf16.msra.mxu0 %v2402
        %3064 = vmatpush.bf16.msra.mxu0 %v2386
        %3065 = vmatmul.bf16.gmra.mxu0 %v2767
        %v3066 = vpop.f32.mrf.mxu0
        %v3067 = vadd.f32 0.0, %v3066
        %v3068 = vpop.f32.mrf.mxu0
        %v3069 = vadd.f32 0.0, %v3068
        %3070 = vmatmul.bf16.gmra.mxu0 %v2770
        %v3071 = vpop.f32.mrf.mxu0
        %v3072 = vadd.f32 0.0, %v3071
        %v3073 = vpop.f32.mrf.mxu0
        %v3074 = vadd.f32 0.0, %v3073
        %3075 = vdwg.mxu0
        %v3076 = vmax.f32 %v2782, %v2801
        %3077 = vmax.xlane.f32.xlu0 %v3076
        %v3078 = vpop.xlane.xlu0 %3077
        %v3079 = vmax.f32 %v2784, %v2803
        %3080 = vmax.xlane.f32.xlu0 %v3079
        %v3081 = vpop.xlane.xlu0 %3080
        %v3082 = vmax.f32 %v2787, %v2806
        %3083 = vmax.xlane.f32.xlu0 %v3082
        %v3084 = vpop.xlane.xlu0 %3083
        %v3085 = vmax.f32 %v2789, %v2808
        %3086 = vmax.xlane.f32.xlu0 %v3085
        %v3087 = vpop.xlane.xlu0 %3086
        %v3088 = vmax.f32 %v2820, %v2839
        %3089 = vmax.xlane.f32.xlu0 %v3088
        %v3090 = vpop.xlane.xlu0 %3089
        %v3091 = vmax.f32 %v2822, %v2841
        %3092 = vmax.xlane.f32.xlu0 %v3091
        %v3093 = vpop.xlane.xlu0 %3092
        %v3094 = vmax.f32 %v2825, %v2844
        %3095 = vmax.xlane.f32.xlu0 %v3094
        %v3096 = vpop.xlane.xlu0 %3095
        %v3097 = vmax.f32 %v2827, %v2846
        %3098 = vmax.xlane.f32.xlu0 %v3097
        %v3099 = vpop.xlane.xlu0 %3098
        %v3100 = vmax.f32 %v2858, %v2877
        %3101 = vmax.xlane.f32.xlu0 %v3100
        %v3102 = vpop.xlane.xlu0 %3101
        %v3103 = vmax.f32 %v2860, %v2879
        %3104 = vmax.xlane.f32.xlu0 %v3103
        %v3105 = vpop.xlane.xlu0 %3104
        %v3106 = vmax.f32 %v2863, %v2882
        %3107 = vmax.xlane.f32.xlu0 %v3106
        %v3108 = vpop.xlane.xlu0 %3107
        %v3109 = vmax.f32 %v2865, %v2884
        %3110 = vmax.xlane.f32.xlu0 %v3109
        %v3111 = vpop.xlane.xlu0 %3110
        %v3112 = vmax.f32 %v2896, %v2915
        %3113 = vmax.xlane.f32.xlu0 %v3112
        %v3114 = vpop.xlane.xlu0 %3113
        %v3115 = vmax.f32 %v2898, %v2917
        %3116 = vmax.xlane.f32.xlu0 %v3115
        %v3117 = vpop.xlane.xlu0 %3116
        %v3118 = vmax.f32 %v2901, %v2920
        %3119 = vmax.xlane.f32.xlu0 %v3118
        %v3120 = vpop.xlane.xlu0 %3119
        %v3121 = vmax.f32 %v2903, %v2922
        %3122 = vmax.xlane.f32.xlu0 %v3121
        %v3123 = vpop.xlane.xlu0 %3122
        %v3124 = vmax.f32 %v2934, %v2953
        %3125 = vmax.xlane.f32.xlu0 %v3124
        %v3126 = vpop.xlane.xlu0 %3125
        %v3127 = vmax.f32 %v2936, %v2955
        %3128 = vmax.xlane.f32.xlu0 %v3127
        %v3129 = vpop.xlane.xlu0 %3128
        %v3130 = vmax.f32 %v2939, %v2958
        %3131 = vmax.xlane.f32.xlu0 %v3130
        %v3132 = vpop.xlane.xlu0 %3131
        %v3133 = vmax.f32 %v2941, %v2960
        %3134 = vmax.xlane.f32.xlu0 %v3133
        %v3135 = vpop.xlane.xlu0 %3134
        %v3136 = vmax.f32 %v2972, %v2991
        %3137 = vmax.xlane.f32.xlu0 %v3136
        %v3138 = vpop.xlane.xlu0 %3137
        %v3139 = vmax.f32 %v2974, %v2993
        %3140 = vmax.xlane.f32.xlu0 %v3139
        %v3141 = vpop.xlane.xlu0 %3140
        %v3142 = vmax.f32 %v2977, %v2996
        %3143 = vmax.xlane.f32.xlu0 %v3142
        %v3144 = vpop.xlane.xlu0 %3143
        %v3145 = vmax.f32 %v2979, %v2998
        %3146 = vmax.xlane.f32.xlu0 %v3145
        %v3147 = vpop.xlane.xlu0 %3146
        %v3148 = vmax.f32 %v3010, %v3029
        %3149 = vmax.xlane.f32.xlu0 %v3148
        %v3150 = vpop.xlane.xlu0 %3149
        %v3151 = vmax.f32 %v3012, %v3031
        %3152 = vmax.xlane.f32.xlu0 %v3151
        %v3153 = vpop.xlane.xlu0 %3152
        %v3154 = vmax.f32 %v3015, %v3034
        %3155 = vmax.xlane.f32.xlu0 %v3154
        %v3156 = vpop.xlane.xlu0 %3155
        %v3157 = vmax.f32 %v3017, %v3036
        %3158 = vmax.xlane.f32.xlu0 %v3157
        %v3159 = vpop.xlane.xlu0 %3158
        %v3160 = vmax.f32 %v3048, %v3067
        %3161 = vmax.xlane.f32.xlu0 %v3160
        %v3162 = vpop.xlane.xlu0 %3161
        %v3163 = vmax.f32 %v3050, %v3069
        %3164 = vmax.xlane.f32.xlu0 %v3163
        %v3165 = vpop.xlane.xlu0 %3164
        %v3166 = vmax.f32 %v3053, %v3072
        %3167 = vmax.xlane.f32.xlu0 %v3166
        %v3168 = vpop.xlane.xlu0 %3167
        %v3169 = vmax.f32 %v3055, %v3074
        %3170 = vmax.xlane.f32.xlu0 %v3169
        %v3171 = vpop.xlane.xlu0 %3170
        %vm3172 = vcmask 7168
        %v3173 = vsel %vm3172, %v3078, %v3090
        %v3174 = vsel %vm3172, %v3081, %v3093
        %v3175 = vsel %vm3172, %v3084, %v3096
        %v3176 = vsel %vm3172, %v3087, %v3099
        %vm3177 = vcmask 15360
        %v3178 = vsel %vm3177, %v3173, %v3102
        %v3179 = vsel %vm3177, %v3174, %v3105
        %v3180 = vsel %vm3177, %v3175, %v3108
        %v3181 = vsel %vm3177, %v3176, %v3111
        %vm3182 = vcmask 23552
        %v3183 = vsel %vm3182, %v3178, %v3114
        %v3184 = vsel %vm3182, %v3179, %v3117
        %v3185 = vsel %vm3182, %v3180, %v3120
        %v3186 = vsel %vm3182, %v3181, %v3123
        %vm3187 = vcmask 31744
        %v3188 = vsel %vm3187, %v3183, %v3126
        %v3189 = vsel %vm3187, %v3184, %v3129
        %v3190 = vsel %vm3187, %v3185, %v3132
        %v3191 = vsel %vm3187, %v3186, %v3135
        %vm3192 = vcmask 39936
        %v3193 = vsel %vm3192, %v3188, %v3138
        %v3194 = vsel %vm3192, %v3189, %v3141
        %v3195 = vsel %vm3192, %v3190, %v3144
        %v3196 = vsel %vm3192, %v3191, %v3147
        %vm3197 = vcmask 48128
        %v3198 = vsel %vm3197, %v3193, %v3150
        %v3199 = vsel %vm3197, %v3194, %v3153
        %v3200 = vsel %vm3197, %v3195, %v3156
        %v3201 = vsel %vm3197, %v3196, %v3159
        %vm3202 = vcmask 56320
        %v3203 = vsel %vm3202, %v3198, %v3162
        %v3204 = vsel %vm3202, %v3199, %v3165
        %v3205 = vsel %vm3202, %v3200, %v3168
        %v3206 = vsel %vm3202, %v3201, %v3171
        %3208 = vset.pattern.permute.xlu0 0
        %3209 = vperm.xlu0 %3208, %v389
        %v3210 = vpop.permute.xlu0 %3209
        %3213 = vset.pattern.permute.xlu0 0
        %3214 = vperm.xlu0 %3213, %v390
        %v3215 = vpop.permute.xlu0 %3214
        %3218 = vset.pattern.permute.xlu0 0
        %3219 = vperm.xlu0 %3218, %v391
        %v3220 = vpop.permute.xlu0 %3219
        %3223 = vset.pattern.permute.xlu0 0
        %3224 = vperm.xlu0 %3223, %v392
        %v3225 = vpop.permute.xlu0 %3224
        %v3227 = vmul.f32 %v989, %v3210
        %v3228 = vmul.f32 %v1018, %v3210
        %v3229 = vmul.f32 %v1047, %v3210
        %v3230 = vmul.f32 %v1076, %v3210
        %v3231 = vmul.f32 %v1105, %v3210
        %v3232 = vmul.f32 %v1134, %v3210
        %v3233 = vmul.f32 %v1163, %v3210
        %v3234 = vmul.f32 %v1192, %v3210
        %v3235 = vmul.f32 %v1221, %v3210
        %v3236 = vmul.f32 %v1250, %v3210
        %v3237 = vmul.f32 %v1279, %v3210
        %v3238 = vmul.f32 %v1308, %v3210
        %v3239 = vmul.f32 %v1337, %v3210
        %v3240 = vmul.f32 %v1366, %v3210
        %v3241 = vmul.f32 %v1395, %v3210
        %v3242 = vmul.f32 %v1424, %v3210
        %v3243 = vmul.f32 %v992, %v3215
        %v3244 = vmul.f32 %v1021, %v3215
        %v3245 = vmul.f32 %v1050, %v3215
        %v3246 = vmul.f32 %v1079, %v3215
        %v3247 = vmul.f32 %v1108, %v3215
        %v3248 = vmul.f32 %v1137, %v3215
        %v3249 = vmul.f32 %v1166, %v3215
        %v3250 = vmul.f32 %v1195, %v3215
        %v3251 = vmul.f32 %v1224, %v3215
        %v3252 = vmul.f32 %v1253, %v3215
        %v3253 = vmul.f32 %v1282, %v3215
        %v3254 = vmul.f32 %v1311, %v3215
        %v3255 = vmul.f32 %v1340, %v3215
        %v3256 = vmul.f32 %v1369, %v3215
        %v3257 = vmul.f32 %v1398, %v3215
        %v3258 = vmul.f32 %v1427, %v3215
        %v3259 = vmul.f32 %v995, %v3220
        %v3260 = vmul.f32 %v1024, %v3220
        %v3261 = vmul.f32 %v1053, %v3220
        %v3262 = vmul.f32 %v1082, %v3220
        %v3263 = vmul.f32 %v1111, %v3220
        %v3264 = vmul.f32 %v1140, %v3220
        %v3265 = vmul.f32 %v1169, %v3220
        %v3266 = vmul.f32 %v1198, %v3220
        %v3267 = vmul.f32 %v1227, %v3220
        %v3268 = vmul.f32 %v1256, %v3220
        %v3269 = vmul.f32 %v1285, %v3220
        %v3270 = vmul.f32 %v1314, %v3220
        %v3271 = vmul.f32 %v1343, %v3220
        %v3272 = vmul.f32 %v1372, %v3220
        %v3273 = vmul.f32 %v1401, %v3220
        %v3274 = vmul.f32 %v1430, %v3220
        %v3275 = vmul.f32 %v998, %v3225
        %v3276 = vmul.f32 %v1027, %v3225
        %v3277 = vmul.f32 %v1056, %v3225
        %v3278 = vmul.f32 %v1085, %v3225
        %v3279 = vmul.f32 %v1114, %v3225
        %v3280 = vmul.f32 %v1143, %v3225
        %v3281 = vmul.f32 %v1172, %v3225
        %v3282 = vmul.f32 %v1201, %v3225
        %v3283 = vmul.f32 %v1230, %v3225
        %v3284 = vmul.f32 %v1259, %v3225
        %v3285 = vmul.f32 %v1288, %v3225
        %v3286 = vmul.f32 %v1317, %v3225
        %v3287 = vmul.f32 %v1346, %v3225
        %v3288 = vmul.f32 %v1375, %v3225
        %v3289 = vmul.f32 %v1404, %v3225
        %v3290 = vmul.f32 %v1433, %v3225
        %3292 = vset.pattern.permute.xlu0 0
        %3293 = vperm.xlu0 %3292, %v401
        %v3294 = vpop.permute.xlu0 %3293
        %3297 = vset.pattern.permute.xlu0 0
        %3298 = vperm.xlu0 %3297, %v402
        %v3299 = vpop.permute.xlu0 %3298
        %3302 = vset.pattern.permute.xlu0 0
        %3303 = vperm.xlu0 %3302, %v403
        %v3304 = vpop.permute.xlu0 %3303
        %3307 = vset.pattern.permute.xlu0 0
        %3308 = vperm.xlu0 %3307, %v404
        %v3309 = vpop.permute.xlu0 %3308
        %v3311 = vadd.f32 %v3227, %v3294
        %v3312 = vadd.f32 %v3228, %v3294
        %v3313 = vadd.f32 %v3229, %v3294
        %v3314 = vadd.f32 %v3230, %v3294
        %v3315 = vadd.f32 %v3231, %v3294
        %v3316 = vadd.f32 %v3232, %v3294
        %v3317 = vadd.f32 %v3233, %v3294
        %v3318 = vadd.f32 %v3234, %v3294
        %v3319 = vadd.f32 %v3235, %v3294
        %v3320 = vadd.f32 %v3236, %v3294
        %v3321 = vadd.f32 %v3237, %v3294
        %v3322 = vadd.f32 %v3238, %v3294
        %v3323 = vadd.f32 %v3239, %v3294
        %v3324 = vadd.f32 %v3240, %v3294
        %v3325 = vadd.f32 %v3241, %v3294
        %v3326 = vadd.f32 %v3242, %v3294
        %v3327 = vadd.f32 %v3243, %v3299
        %v3328 = vadd.f32 %v3244, %v3299
        %v3329 = vadd.f32 %v3245, %v3299
        %v3330 = vadd.f32 %v3246, %v3299
        %v3331 = vadd.f32 %v3247, %v3299
        %v3332 = vadd.f32 %v3248, %v3299
        %v3333 = vadd.f32 %v3249, %v3299
        %v3334 = vadd.f32 %v3250, %v3299
        %v3335 = vadd.f32 %v3251, %v3299
        %v3336 = vadd.f32 %v3252, %v3299
        %v3337 = vadd.f32 %v3253, %v3299
        %v3338 = vadd.f32 %v3254, %v3299
        %v3339 = vadd.f32 %v3255, %v3299
        %v3340 = vadd.f32 %v3256, %v3299
        %v3341 = vadd.f32 %v3257, %v3299
        %v3342 = vadd.f32 %v3258, %v3299
        %v3343 = vadd.f32 %v3259, %v3304
        %v3344 = vadd.f32 %v3260, %v3304
        %v3345 = vadd.f32 %v3261, %v3304
        %v3346 = vadd.f32 %v3262, %v3304
        %v3347 = vadd.f32 %v3263, %v3304
        %v3348 = vadd.f32 %v3264, %v3304
        %v3349 = vadd.f32 %v3265, %v3304
        %v3350 = vadd.f32 %v3266, %v3304
        %v3351 = vadd.f32 %v3267, %v3304
        %v3352 = vadd.f32 %v3268, %v3304
        %v3353 = vadd.f32 %v3269, %v3304
        %v3354 = vadd.f32 %v3270, %v3304
        %v3355 = vadd.f32 %v3271, %v3304
        %v3356 = vadd.f32 %v3272, %v3304
        %v3357 = vadd.f32 %v3273, %v3304
        %v3358 = vadd.f32 %v3274, %v3304
        %v3359 = vadd.f32 %v3275, %v3309
        %v3360 = vadd.f32 %v3276, %v3309
        %v3361 = vadd.f32 %v3277, %v3309
        %v3362 = vadd.f32 %v3278, %v3309
        %v3363 = vadd.f32 %v3279, %v3309
        %v3364 = vadd.f32 %v3280, %v3309
        %v3365 = vadd.f32 %v3281, %v3309
        %v3366 = vadd.f32 %v3282, %v3309
        %v3367 = vadd.f32 %v3283, %v3309
        %v3368 = vadd.f32 %v3284, %v3309
        %v3369 = vadd.f32 %v3285, %v3309
        %v3370 = vadd.f32 %v3286, %v3309
        %v3371 = vadd.f32 %v3287, %v3309
        %v3372 = vadd.f32 %v3288, %v3309
        %v3373 = vadd.f32 %v3289, %v3309
        %v3374 = vadd.f32 %v3290, %v3309
        %v3375 = vmax.f32 %v3311, 0.0
        %v3376 = vmax.f32 %v3312, 0.0
        %v3377 = vmax.f32 %v3313, 0.0
        %v3378 = vmax.f32 %v3314, 0.0
        %v3379 = vmax.f32 %v3315, 0.0
        %v3380 = vmax.f32 %v3316, 0.0
        %v3381 = vmax.f32 %v3317, 0.0
        %v3382 = vmax.f32 %v3318, 0.0
        %v3383 = vmax.f32 %v3319, 0.0
        %v3384 = vmax.f32 %v3320, 0.0
        %v3385 = vmax.f32 %v3321, 0.0
        %v3386 = vmax.f32 %v3322, 0.0
        %v3387 = vmax.f32 %v3323, 0.0
        %v3388 = vmax.f32 %v3324, 0.0
        %v3389 = vmax.f32 %v3325, 0.0
        %v3390 = vmax.f32 %v3326, 0.0
        %v3391 = vmax.f32 %v3327, 0.0
        %v3392 = vmax.f32 %v3328, 0.0
        %v3393 = vmax.f32 %v3329, 0.0
        %v3394 = vmax.f32 %v3330, 0.0
        %v3395 = vmax.f32 %v3331, 0.0
        %v3396 = vmax.f32 %v3332, 0.0
        %v3397 = vmax.f32 %v3333, 0.0
        %v3398 = vmax.f32 %v3334, 0.0
        %v3399 = vmax.f32 %v3335, 0.0
        %v3400 = vmax.f32 %v3336, 0.0
        %v3401 = vmax.f32 %v3337, 0.0
        %v3402 = vmax.f32 %v3338, 0.0
        %v3403 = vmax.f32 %v3339, 0.0
        %v3404 = vmax.f32 %v3340, 0.0
        %v3405 = vmax.f32 %v3341, 0.0
        %v3406 = vmax.f32 %v3342, 0.0
        %v3407 = vmax.f32 %v3343, 0.0
        %v3408 = vmax.f32 %v3344, 0.0
        %v3409 = vmax.f32 %v3345, 0.0
        %v3410 = vmax.f32 %v3346, 0.0
        %v3411 = vmax.f32 %v3347, 0.0
        %v3412 = vmax.f32 %v3348, 0.0
        %v3413 = vmax.f32 %v3349, 0.0
        %v3414 = vmax.f32 %v3350, 0.0
        %v3415 = vmax.f32 %v3351, 0.0
        %v3416 = vmax.f32 %v3352, 0.0
        %v3417 = vmax.f32 %v3353, 0.0
        %v3418 = vmax.f32 %v3354, 0.0
        %v3419 = vmax.f32 %v3355, 0.0
        %v3420 = vmax.f32 %v3356, 0.0
        %v3421 = vmax.f32 %v3357, 0.0
        %v3422 = vmax.f32 %v3358, 0.0
        %v3423 = vmax.f32 %v3359, 0.0
        %v3424 = vmax.f32 %v3360, 0.0
        %v3425 = vmax.f32 %v3361, 0.0
        %v3426 = vmax.f32 %v3362, 0.0
        %v3427 = vmax.f32 %v3363, 0.0
        %v3428 = vmax.f32 %v3364, 0.0
        %v3429 = vmax.f32 %v3365, 0.0
        %v3430 = vmax.f32 %v3366, 0.0
        %v3431 = vmax.f32 %v3367, 0.0
        %v3432 = vmax.f32 %v3368, 0.0
        %v3433 = vmax.f32 %v3369, 0.0
        %v3434 = vmax.f32 %v3370, 0.0
        %v3435 = vmax.f32 %v3371, 0.0
        %v3436 = vmax.f32 %v3372, 0.0
        %v3437 = vmax.f32 %v3373, 0.0
        %v3438 = vmax.f32 %v3374, 0.0
        %3439 = vrot.lane.b32.xlu0 %v3375, 2
        %v3440 = vpop.permute.xlu0 %3439
        %3441 = vrot.lane.b32.xlu0 %v3391, 2
        %v3442 = vpop.permute.xlu0 %3441
        %3443 = vrot.lane.b32.xlu0 %v3407, 2
        %v3444 = vpop.permute.xlu0 %3443
        %3445 = vrot.lane.b32.xlu0 %v3423, 2
        %v3446 = vpop.permute.xlu0 %3445
        %3447 = vrot.lane.b32.xlu0 %v3376, 2
        %v3448 = vpop.permute.xlu0 %3447
        %3449 = vrot.lane.b32.xlu0 %v3392, 2
        %v3450 = vpop.permute.xlu0 %3449
        %3451 = vrot.lane.b32.xlu0 %v3408, 2
        %v3452 = vpop.permute.xlu0 %3451
        %3453 = vrot.lane.b32.xlu0 %v3424, 2
        %v3454 = vpop.permute.xlu0 %3453
        %3455 = vrot.lane.b32.xlu0 %v3377, 2
        %v3456 = vpop.permute.xlu0 %3455
        %3457 = vrot.lane.b32.xlu0 %v3393, 2
        %v3458 = vpop.permute.xlu0 %3457
        %3459 = vrot.lane.b32.xlu0 %v3409, 2
        %v3460 = vpop.permute.xlu0 %3459
        %3461 = vrot.lane.b32.xlu0 %v3425, 2
        %v3462 = vpop.permute.xlu0 %3461
        %3463 = vrot.lane.b32.xlu0 %v3378, 2
        %v3464 = vpop.permute.xlu0 %3463
        %3465 = vrot.lane.b32.xlu0 %v3394, 2
        %v3466 = vpop.permute.xlu0 %3465
        %3467 = vrot.lane.b32.xlu0 %v3410, 2
        %v3468 = vpop.permute.xlu0 %3467
        %3469 = vrot.lane.b32.xlu0 %v3426, 2
        %v3470 = vpop.permute.xlu0 %3469
        %3471 = vrot.lane.b32.xlu0 %v3379, 2
        %v3472 = vpop.permute.xlu0 %3471
        %3473 = vrot.lane.b32.xlu0 %v3395, 2
        %v3474 = vpop.permute.xlu0 %3473
        %3475 = vrot.lane.b32.xlu0 %v3411, 2
        %v3476 = vpop.permute.xlu0 %3475
        %3477 = vrot.lane.b32.xlu0 %v3427, 2
        %v3478 = vpop.permute.xlu0 %3477
        %3479 = vrot.lane.b32.xlu0 %v3380, 2
        %v3480 = vpop.permute.xlu0 %3479
        %3481 = vrot.lane.b32.xlu0 %v3396, 2
        %v3482 = vpop.permute.xlu0 %3481
        %3483 = vrot.lane.b32.xlu0 %v3412, 2
        %v3484 = vpop.permute.xlu0 %3483
        %3485 = vrot.lane.b32.xlu0 %v3428, 2
        %v3486 = vpop.permute.xlu0 %3485
        %3487 = vrot.lane.b32.xlu0 %v3381, 2
        %v3488 = vpop.permute.xlu0 %3487
        %3489 = vrot.lane.b32.xlu0 %v3397, 2
        %v3490 = vpop.permute.xlu0 %3489
        %3491 = vrot.lane.b32.xlu0 %v3413, 2
        %v3492 = vpop.permute.xlu0 %3491
        %3493 = vrot.lane.b32.xlu0 %v3429, 2
        %v3494 = vpop.permute.xlu0 %3493
        %3495 = vrot.lane.b32.xlu0 %v3382, 2
        %v3496 = vpop.permute.xlu0 %3495
        %3497 = vrot.lane.b32.xlu0 %v3398, 2
        %v3498 = vpop.permute.xlu0 %3497
        %3499 = vrot.lane.b32.xlu0 %v3414, 2
        %v3500 = vpop.permute.xlu0 %3499
        %3501 = vrot.lane.b32.xlu0 %v3430, 2
        %v3502 = vpop.permute.xlu0 %3501
        %3503 = vrot.lane.b32.xlu0 %v3383, 2
        %v3504 = vpop.permute.xlu0 %3503
        %3505 = vrot.lane.b32.xlu0 %v3399, 2
        %v3506 = vpop.permute.xlu0 %3505
        %3507 = vrot.lane.b32.xlu0 %v3415, 2
        %v3508 = vpop.permute.xlu0 %3507
        %3509 = vrot.lane.b32.xlu0 %v3431, 2
        %v3510 = vpop.permute.xlu0 %3509
        %3511 = vrot.lane.b32.xlu0 %v3384, 2
        %v3512 = vpop.permute.xlu0 %3511
        %3513 = vrot.lane.b32.xlu0 %v3400, 2
        %v3514 = vpop.permute.xlu0 %3513
        %3515 = vrot.lane.b32.xlu0 %v3416, 2
        %v3516 = vpop.permute.xlu0 %3515
        %3517 = vrot.lane.b32.xlu0 %v3432, 2
        %v3518 = vpop.permute.xlu0 %3517
        %3519 = vrot.lane.b32.xlu0 %v3385, 2
        %v3520 = vpop.permute.xlu0 %3519
        %3521 = vrot.lane.b32.xlu0 %v3401, 2
        %v3522 = vpop.permute.xlu0 %3521
        %3523 = vrot.lane.b32.xlu0 %v3417, 2
        %v3524 = vpop.permute.xlu0 %3523
        %3525 = vrot.lane.b32.xlu0 %v3433, 2
        %v3526 = vpop.permute.xlu0 %3525
        %3527 = vrot.lane.b32.xlu0 %v3386, 2
        %v3528 = vpop.permute.xlu0 %3527
        %3529 = vrot.lane.b32.xlu0 %v3402, 2
        %v3530 = vpop.permute.xlu0 %3529
        %3531 = vrot.lane.b32.xlu0 %v3418, 2
        %v3532 = vpop.permute.xlu0 %3531
        %3533 = vrot.lane.b32.xlu0 %v3434, 2
        %v3534 = vpop.permute.xlu0 %3533
        %3535 = vrot.lane.b32.xlu0 %v3387, 2
        %v3536 = vpop.permute.xlu0 %3535
        %3537 = vrot.lane.b32.xlu0 %v3403, 2
        %v3538 = vpop.permute.xlu0 %3537
        %3539 = vrot.lane.b32.xlu0 %v3419, 2
        %v3540 = vpop.permute.xlu0 %3539
        %3541 = vrot.lane.b32.xlu0 %v3435, 2
        %v3542 = vpop.permute.xlu0 %3541
        %3543 = vrot.lane.b32.xlu0 %v3388, 2
        %v3544 = vpop.permute.xlu0 %3543
        %3545 = vrot.lane.b32.xlu0 %v3404, 2
        %v3546 = vpop.permute.xlu0 %3545
        %3547 = vrot.lane.b32.xlu0 %v3420, 2
        %v3548 = vpop.permute.xlu0 %3547
        %3549 = vrot.lane.b32.xlu0 %v3436, 2
        %v3550 = vpop.permute.xlu0 %3549
        %3551 = vrot.lane.b32.xlu0 %v3389, 2
        %v3552 = vpop.permute.xlu0 %3551
        %3553 = vrot.lane.b32.xlu0 %v3405, 2
        %v3554 = vpop.permute.xlu0 %3553
        %3555 = vrot.lane.b32.xlu0 %v3421, 2
        %v3556 = vpop.permute.xlu0 %3555
        %3557 = vrot.lane.b32.xlu0 %v3437, 2
        %v3558 = vpop.permute.xlu0 %3557
        %3559 = vrot.lane.b32.xlu0 %v3390, 2
        %v3560 = vpop.permute.xlu0 %3559
        %3561 = vrot.lane.b32.xlu0 %v3406, 2
        %v3562 = vpop.permute.xlu0 %3561
        %3563 = vrot.lane.b32.xlu0 %v3422, 2
        %v3564 = vpop.permute.xlu0 %3563
        %3565 = vrot.lane.b32.xlu0 %v3438, 2
        %v3566 = vpop.permute.xlu0 %3565
        %vm3567 = vcmp.lt.s32.totalorder %v410, 2
        %v3568 = vsel %vm3567, %v3552, %v3560
        %v3569 = vsel %vm3567, %v3554, %v3562
        %v3570 = vsel %vm3567, %v3556, %v3564
        %v3571 = vsel %vm3567, %v3558, %v3566
        %v3572 = vsel %vm3567, %v3544, %v3552
        %v3573 = vsel %vm3567, %v3546, %v3554
        %v3574 = vsel %vm3567, %v3548, %v3556
        %v3575 = vsel %vm3567, %v3550, %v3558
        %v3576 = vsel %vm3567, %v3536, %v3544
        %v3577 = vsel %vm3567, %v3538, %v3546
        %v3578 = vsel %vm3567, %v3540, %v3548
        %v3579 = vsel %vm3567, %v3542, %v3550
        %v3580 = vsel %vm3567, %v3528, %v3536
        %v3581 = vsel %vm3567, %v3530, %v3538
        %v3582 = vsel %vm3567, %v3532, %v3540
        %v3583 = vsel %vm3567, %v3534, %v3542
        %v3584 = vsel %vm3567, %v3520, %v3528
        %v3585 = vsel %vm3567, %v3522, %v3530
        %v3586 = vsel %vm3567, %v3524, %v3532
        %v3587 = vsel %vm3567, %v3526, %v3534
        %v3588 = vsel %vm3567, %v3512, %v3520
        %v3589 = vsel %vm3567, %v3514, %v3522
        %v3590 = vsel %vm3567, %v3516, %v3524
        %v3591 = vsel %vm3567, %v3518, %v3526
        %v3592 = vsel %vm3567, %v3504, %v3512
        %v3593 = vsel %vm3567, %v3506, %v3514
        %v3594 = vsel %vm3567, %v3508, %v3516
        %v3595 = vsel %vm3567, %v3510, %v3518
        %v3596 = vsel %vm3567, %v3496, %v3504
        %v3597 = vsel %vm3567, %v3498, %v3506
        %v3598 = vsel %vm3567, %v3500, %v3508
        %v3599 = vsel %vm3567, %v3502, %v3510
        %v3600 = vsel %vm3567, %v3488, %v3496
        %v3601 = vsel %vm3567, %v3490, %v3498
        %v3602 = vsel %vm3567, %v3492, %v3500
        %v3603 = vsel %vm3567, %v3494, %v3502
        %v3604 = vsel %vm3567, %v3480, %v3488
        %v3605 = vsel %vm3567, %v3482, %v3490
        %v3606 = vsel %vm3567, %v3484, %v3492
        %v3607 = vsel %vm3567, %v3486, %v3494
        %v3608 = vsel %vm3567, %v3472, %v3480
        %v3609 = vsel %vm3567, %v3474, %v3482
        %v3610 = vsel %vm3567, %v3476, %v3484
        %v3611 = vsel %vm3567, %v3478, %v3486
        %v3612 = vsel %vm3567, %v3464, %v3472
        %v3613 = vsel %vm3567, %v3466, %v3474
        %v3614 = vsel %vm3567, %v3468, %v3476
        %v3615 = vsel %vm3567, %v3470, %v3478
        %v3616 = vsel %vm3567, %v3456, %v3464
        %v3617 = vsel %vm3567, %v3458, %v3466
        %v3618 = vsel %vm3567, %v3460, %v3468
        %v3619 = vsel %vm3567, %v3462, %v3470
        %v3620 = vsel %vm3567, %v3448, %v3456
        %v3621 = vsel %vm3567, %v3450, %v3458
        %v3622 = vsel %vm3567, %v3452, %v3460
        %v3623 = vsel %vm3567, %v3454, %v3462
        %v3624 = vsel %vm3567, %v3440, %v3448
        %v3625 = vsel %vm3567, %v3442, %v3450
        %v3626 = vsel %vm3567, %v3444, %v3452
        %v3627 = vsel %vm3567, %v3446, %v3454
        %v3628 = vsel %vm3567, %v3560, %v3440
        %v3629 = vsel %vm3567, %v3562, %v3442
        %v3630 = vsel %vm3567, %v3564, %v3444
        %v3631 = vsel %vm3567, %v3566, %v3446
        %vm3632 = vcmp.ge.s32.totalorder %v410, 2
        %vm3633 = vcmp.ge.s32.totalorder %v411, 2
        %v3634 = vsel %vm3632, 1, 0
        %v3635 = vsel %vm3633, 1, 0
        %v3636 = vperm.slane %v3634, 0
        %v3637 = vperm.slane %v3635, 0
        %vm3638 = vcmp.eq.s32.totalorder %v3636, 1
        %vm3639 = vcmp.eq.s32.totalorder %v3637, 1
        %v3640 = vsel %vm3638, %v3628, 0.0
        %v3641 = vsel %vm3639, %v3624, 0.0
        %v3642 = vsel %vm3638, %v3620, 0.0
        %v3643 = vsel %vm3639, %v3616, 0.0
        %v3644 = vsel %vm3638, %v3612, 0.0
        %v3645 = vsel %vm3639, %v3608, 0.0
        %v3646 = vsel %vm3638, %v3604, 0.0
        %v3647 = vsel %vm3639, %v3600, 0.0
        %v3648 = vsel %vm3638, %v3596, 0.0
        %v3649 = vsel %vm3639, %v3592, 0.0
        %v3650 = vsel %vm3638, %v3588, 0.0
        %v3651 = vsel %vm3639, %v3584, 0.0
        %v3652 = vsel %vm3638, %v3580, 0.0
        %v3653 = vsel %vm3639, %v3576, 0.0
        %v3654 = vsel %vm3638, %v3572, 0.0
        %v3655 = vsel %vm3639, %v3568, 0.0
        %v3656 = vsel %vm3638, %v3629, 0.0
        %v3657 = vsel %vm3639, %v3625, 0.0
        %v3658 = vsel %vm3638, %v3621, 0.0
        %v3659 = vsel %vm3639, %v3617, 0.0
        %v3660 = vsel %vm3638, %v3613, 0.0
        %v3661 = vsel %vm3639, %v3609, 0.0
        %v3662 = vsel %vm3638, %v3605, 0.0
        %v3663 = vsel %vm3639, %v3601, 0.0
        %v3664 = vsel %vm3638, %v3597, 0.0
        %v3665 = vsel %vm3639, %v3593, 0.0
        %v3666 = vsel %vm3638, %v3589, 0.0
        %v3667 = vsel %vm3639, %v3585, 0.0
        %v3668 = vsel %vm3638, %v3581, 0.0
        %v3669 = vsel %vm3639, %v3577, 0.0
        %v3670 = vsel %vm3638, %v3573, 0.0
        %v3671 = vsel %vm3639, %v3569, 0.0
        %v3672 = vsel %vm3638, %v3630, 0.0
        %v3673 = vsel %vm3639, %v3626, 0.0
        %v3674 = vsel %vm3638, %v3622, 0.0
        %v3675 = vsel %vm3639, %v3618, 0.0
        %v3676 = vsel %vm3638, %v3614, 0.0
        %v3677 = vsel %vm3639, %v3610, 0.0
        %v3678 = vsel %vm3638, %v3606, 0.0
        %v3679 = vsel %vm3639, %v3602, 0.0
        %v3680 = vsel %vm3638, %v3598, 0.0
        %v3681 = vsel %vm3639, %v3594, 0.0
        %v3682 = vsel %vm3638, %v3590, 0.0
        %v3683 = vsel %vm3639, %v3586, 0.0
        %v3684 = vsel %vm3638, %v3582, 0.0
        %v3685 = vsel %vm3639, %v3578, 0.0
        %v3686 = vsel %vm3638, %v3574, 0.0
        %v3687 = vsel %vm3639, %v3570, 0.0
        %v3688 = vsel %vm3638, %v3631, 0.0
        %v3689 = vsel %vm3639, %v3627, 0.0
        %v3690 = vsel %vm3638, %v3623, 0.0
        %v3691 = vsel %vm3639, %v3619, 0.0
        %v3692 = vsel %vm3638, %v3615, 0.0
        %v3693 = vsel %vm3639, %v3611, 0.0
        %v3694 = vsel %vm3638, %v3607, 0.0
        %v3695 = vsel %vm3639, %v3603, 0.0
        %v3696 = vsel %vm3638, %v3599, 0.0
        %v3697 = vsel %vm3639, %v3595, 0.0
        %v3698 = vsel %vm3638, %v3591, 0.0
        %v3699 = vsel %vm3639, %v3587, 0.0
        %v3700 = vsel %vm3638, %v3583, 0.0
        %v3701 = vsel %vm3639, %v3579, 0.0
        %v3702 = vsel %vm3638, %v3575, 0.0
        %v3703 = vsel %vm3639, %v3571, 0.0
        %v3704 = vpack.c.bf16 %v3641, %v3640
        %v3705 = vpack.c.bf16 %v3643, %v3642
        %v3706 = vpack.c.bf16 %v3645, %v3644
        %v3707 = vpack.c.bf16 %v3647, %v3646
        %v3708 = vpack.c.bf16 %v3649, %v3648
        %v3709 = vpack.c.bf16 %v3651, %v3650
        %v3710 = vpack.c.bf16 %v3653, %v3652
        %v3711 = vpack.c.bf16 %v3655, %v3654
        %v3712 = vpack.c.bf16 %v3657, %v3656
        %v3713 = vpack.c.bf16 %v3659, %v3658
        %v3714 = vpack.c.bf16 %v3661, %v3660
        %v3715 = vpack.c.bf16 %v3663, %v3662
        %v3716 = vpack.c.bf16 %v3665, %v3664
        %v3717 = vpack.c.bf16 %v3667, %v3666
        %v3718 = vpack.c.bf16 %v3669, %v3668
        %v3719 = vpack.c.bf16 %v3671, %v3670
        %v3720 = vpack.c.bf16 %v3673, %v3672
        %v3721 = vpack.c.bf16 %v3675, %v3674
        %v3722 = vpack.c.bf16 %v3677, %v3676
        %v3723 = vpack.c.bf16 %v3679, %v3678
        %v3724 = vpack.c.bf16 %v3681, %v3680
        %v3725 = vpack.c.bf16 %v3683, %v3682
        %v3726 = vpack.c.bf16 %v3685, %v3684
        %v3727 = vpack.c.bf16 %v3687, %v3686
        %v3728 = vpack.c.bf16 %v3689, %v3688
        %v3729 = vpack.c.bf16 %v3691, %v3690
        %v3730 = vpack.c.bf16 %v3693, %v3692
        %v3731 = vpack.c.bf16 %v3695, %v3694
        %v3732 = vpack.c.bf16 %v3697, %v3696
        %v3733 = vpack.c.bf16 %v3699, %v3698
        %v3734 = vpack.c.bf16 %v3701, %v3700
        %v3735 = vpack.c.bf16 %v3703, %v3702
        %3736 = vrot.lane.b32.xlu0 %v3375, 1
        %v3737 = vpop.permute.xlu0 %3736
        %3738 = vrot.lane.b32.xlu0 %v3391, 1
        %v3739 = vpop.permute.xlu0 %3738
        %3740 = vrot.lane.b32.xlu0 %v3407, 1
        %v3741 = vpop.permute.xlu0 %3740
        %3742 = vrot.lane.b32.xlu0 %v3423, 1
        %v3743 = vpop.permute.xlu0 %3742
        %3744 = vrot.lane.b32.xlu0 %v3376, 1
        %v3745 = vpop.permute.xlu0 %3744
        %3746 = vrot.lane.b32.xlu0 %v3392, 1
        %v3747 = vpop.permute.xlu0 %3746
        %3748 = vrot.lane.b32.xlu0 %v3408, 1
        %v3749 = vpop.permute.xlu0 %3748
        %3750 = vrot.lane.b32.xlu0 %v3424, 1
        %v3751 = vpop.permute.xlu0 %3750
        %3752 = vrot.lane.b32.xlu0 %v3377, 1
        %v3753 = vpop.permute.xlu0 %3752
        %3754 = vrot.lane.b32.xlu0 %v3393, 1
        %v3755 = vpop.permute.xlu0 %3754
        %3756 = vrot.lane.b32.xlu0 %v3409, 1
        %v3757 = vpop.permute.xlu0 %3756
        %3758 = vrot.lane.b32.xlu0 %v3425, 1
        %v3759 = vpop.permute.xlu0 %3758
        %3760 = vrot.lane.b32.xlu0 %v3378, 1
        %v3761 = vpop.permute.xlu0 %3760
        %3762 = vrot.lane.b32.xlu0 %v3394, 1
        %v3763 = vpop.permute.xlu0 %3762
        %3764 = vrot.lane.b32.xlu0 %v3410, 1
        %v3765 = vpop.permute.xlu0 %3764
        %3766 = vrot.lane.b32.xlu0 %v3426, 1
        %v3767 = vpop.permute.xlu0 %3766
        %3768 = vrot.lane.b32.xlu0 %v3379, 1
        %v3769 = vpop.permute.xlu0 %3768
        %3770 = vrot.lane.b32.xlu0 %v3395, 1
        %v3771 = vpop.permute.xlu0 %3770
        %3772 = vrot.lane.b32.xlu0 %v3411, 1
        %v3773 = vpop.permute.xlu0 %3772
        %3774 = vrot.lane.b32.xlu0 %v3427, 1
        %v3775 = vpop.permute.xlu0 %3774
        %3776 = vrot.lane.b32.xlu0 %v3380, 1
        %v3777 = vpop.permute.xlu0 %3776
        %3778 = vrot.lane.b32.xlu0 %v3396, 1
        %v3779 = vpop.permute.xlu0 %3778
        %3780 = vrot.lane.b32.xlu0 %v3412, 1
        %v3781 = vpop.permute.xlu0 %3780
        %3782 = vrot.lane.b32.xlu0 %v3428, 1
        %v3783 = vpop.permute.xlu0 %3782
        %3784 = vrot.lane.b32.xlu0 %v3381, 1
        %v3785 = vpop.permute.xlu0 %3784
        %3786 = vrot.lane.b32.xlu0 %v3397, 1
        %v3787 = vpop.permute.xlu0 %3786
        %3788 = vrot.lane.b32.xlu0 %v3413, 1
        %v3789 = vpop.permute.xlu0 %3788
        %3790 = vrot.lane.b32.xlu0 %v3429, 1
        %v3791 = vpop.permute.xlu0 %3790
        %3792 = vrot.lane.b32.xlu0 %v3382, 1
        %v3793 = vpop.permute.xlu0 %3792
        %3794 = vrot.lane.b32.xlu0 %v3398, 1
        %v3795 = vpop.permute.xlu0 %3794
        %3796 = vrot.lane.b32.xlu0 %v3414, 1
        %v3797 = vpop.permute.xlu0 %3796
        %3798 = vrot.lane.b32.xlu0 %v3430, 1
        %v3799 = vpop.permute.xlu0 %3798
        %3800 = vrot.lane.b32.xlu0 %v3383, 1
        %v3801 = vpop.permute.xlu0 %3800
        %3802 = vrot.lane.b32.xlu0 %v3399, 1
        %v3803 = vpop.permute.xlu0 %3802
        %3804 = vrot.lane.b32.xlu0 %v3415, 1
        %v3805 = vpop.permute.xlu0 %3804
        %3806 = vrot.lane.b32.xlu0 %v3431, 1
        %v3807 = vpop.permute.xlu0 %3806
        %3808 = vrot.lane.b32.xlu0 %v3384, 1
        %v3809 = vpop.permute.xlu0 %3808
        %3810 = vrot.lane.b32.xlu0 %v3400, 1
        %v3811 = vpop.permute.xlu0 %3810
        %3812 = vrot.lane.b32.xlu0 %v3416, 1
        %v3813 = vpop.permute.xlu0 %3812
        %3814 = vrot.lane.b32.xlu0 %v3432, 1
        %v3815 = vpop.permute.xlu0 %3814
        %3816 = vrot.lane.b32.xlu0 %v3385, 1
        %v3817 = vpop.permute.xlu0 %3816
        %3818 = vrot.lane.b32.xlu0 %v3401, 1
        %v3819 = vpop.permute.xlu0 %3818
        %3820 = vrot.lane.b32.xlu0 %v3417, 1
        %v3821 = vpop.permute.xlu0 %3820
        %3822 = vrot.lane.b32.xlu0 %v3433, 1
        %v3823 = vpop.permute.xlu0 %3822
        %3824 = vrot.lane.b32.xlu0 %v3386, 1
        %v3825 = vpop.permute.xlu0 %3824
        %3826 = vrot.lane.b32.xlu0 %v3402, 1
        %v3827 = vpop.permute.xlu0 %3826
        %3828 = vrot.lane.b32.xlu0 %v3418, 1
        %v3829 = vpop.permute.xlu0 %3828
        %3830 = vrot.lane.b32.xlu0 %v3434, 1
        %v3831 = vpop.permute.xlu0 %3830
        %3832 = vrot.lane.b32.xlu0 %v3387, 1
        %v3833 = vpop.permute.xlu0 %3832
        %3834 = vrot.lane.b32.xlu0 %v3403, 1
        %v3835 = vpop.permute.xlu0 %3834
        %3836 = vrot.lane.b32.xlu0 %v3419, 1
        %v3837 = vpop.permute.xlu0 %3836
        %3838 = vrot.lane.b32.xlu0 %v3435, 1
        %v3839 = vpop.permute.xlu0 %3838
        %3840 = vrot.lane.b32.xlu0 %v3388, 1
        %v3841 = vpop.permute.xlu0 %3840
        %3842 = vrot.lane.b32.xlu0 %v3404, 1
        %v3843 = vpop.permute.xlu0 %3842
        %3844 = vrot.lane.b32.xlu0 %v3420, 1
        %v3845 = vpop.permute.xlu0 %3844
        %3846 = vrot.lane.b32.xlu0 %v3436, 1
        %v3847 = vpop.permute.xlu0 %3846
        %3848 = vrot.lane.b32.xlu0 %v3389, 1
        %v3849 = vpop.permute.xlu0 %3848
        %3850 = vrot.lane.b32.xlu0 %v3405, 1
        %v3851 = vpop.permute.xlu0 %3850
        %3852 = vrot.lane.b32.xlu0 %v3421, 1
        %v3853 = vpop.permute.xlu0 %3852
        %3854 = vrot.lane.b32.xlu0 %v3437, 1
        %v3855 = vpop.permute.xlu0 %3854
        %3856 = vrot.lane.b32.xlu0 %v3390, 1
        %v3857 = vpop.permute.xlu0 %3856
        %3858 = vrot.lane.b32.xlu0 %v3406, 1
        %v3859 = vpop.permute.xlu0 %3858
        %3860 = vrot.lane.b32.xlu0 %v3422, 1
        %v3861 = vpop.permute.xlu0 %3860
        %3862 = vrot.lane.b32.xlu0 %v3438, 1
        %v3863 = vpop.permute.xlu0 %3862
        %v3864 = vsel %vm844, %v3849, %v3857
        %v3865 = vsel %vm844, %v3851, %v3859
        %v3866 = vsel %vm844, %v3853, %v3861
        %v3867 = vsel %vm844, %v3855, %v3863
        %v3868 = vsel %vm844, %v3841, %v3849
        %v3869 = vsel %vm844, %v3843, %v3851
        %v3870 = vsel %vm844, %v3845, %v3853
        %v3871 = vsel %vm844, %v3847, %v3855
        %v3872 = vsel %vm844, %v3833, %v3841
        %v3873 = vsel %vm844, %v3835, %v3843
        %v3874 = vsel %vm844, %v3837, %v3845
        %v3875 = vsel %vm844, %v3839, %v3847
        %v3876 = vsel %vm844, %v3825, %v3833
        %v3877 = vsel %vm844, %v3827, %v3835
        %v3878 = vsel %vm844, %v3829, %v3837
        %v3879 = vsel %vm844, %v3831, %v3839
        %v3880 = vsel %vm844, %v3817, %v3825
        %v3881 = vsel %vm844, %v3819, %v3827
        %v3882 = vsel %vm844, %v3821, %v3829
        %v3883 = vsel %vm844, %v3823, %v3831
        %v3884 = vsel %vm844, %v3809, %v3817
        %v3885 = vsel %vm844, %v3811, %v3819
        %v3886 = vsel %vm844, %v3813, %v3821
        %v3887 = vsel %vm844, %v3815, %v3823
        %v3888 = vsel %vm844, %v3801, %v3809
        %v3889 = vsel %vm844, %v3803, %v3811
        %v3890 = vsel %vm844, %v3805, %v3813
        %v3891 = vsel %vm844, %v3807, %v3815
        %v3892 = vsel %vm844, %v3793, %v3801
        %v3893 = vsel %vm844, %v3795, %v3803
        %v3894 = vsel %vm844, %v3797, %v3805
        %v3895 = vsel %vm844, %v3799, %v3807
        %v3896 = vsel %vm844, %v3785, %v3793
        %v3897 = vsel %vm844, %v3787, %v3795
        %v3898 = vsel %vm844, %v3789, %v3797
        %v3899 = vsel %vm844, %v3791, %v3799
        %v3900 = vsel %vm844, %v3777, %v3785
        %v3901 = vsel %vm844, %v3779, %v3787
        %v3902 = vsel %vm844, %v3781, %v3789
        %v3903 = vsel %vm844, %v3783, %v3791
        %v3904 = vsel %vm844, %v3769, %v3777
        %v3905 = vsel %vm844, %v3771, %v3779
        %v3906 = vsel %vm844, %v3773, %v3781
        %v3907 = vsel %vm844, %v3775, %v3783
        %v3908 = vsel %vm844, %v3761, %v3769
        %v3909 = vsel %vm844, %v3763, %v3771
        %v3910 = vsel %vm844, %v3765, %v3773
        %v3911 = vsel %vm844, %v3767, %v3775
        %v3912 = vsel %vm844, %v3753, %v3761
        %v3913 = vsel %vm844, %v3755, %v3763
        %v3914 = vsel %vm844, %v3757, %v3765
        %v3915 = vsel %vm844, %v3759, %v3767
        %v3916 = vsel %vm844, %v3745, %v3753
        %v3917 = vsel %vm844, %v3747, %v3755
        %v3918 = vsel %vm844, %v3749, %v3757
        %v3919 = vsel %vm844, %v3751, %v3759
        %v3920 = vsel %vm844, %v3737, %v3745
        %v3921 = vsel %vm844, %v3739, %v3747
        %v3922 = vsel %vm844, %v3741, %v3749
        %v3923 = vsel %vm844, %v3743, %v3751
        %v3924 = vsel %vm844, %v3857, %v3737
        %v3925 = vsel %vm844, %v3859, %v3739
        %v3926 = vsel %vm844, %v3861, %v3741
        %v3927 = vsel %vm844, %v3863, %v3743
        %v3928 = vsel %vm867, %v3924, 0.0
        %v3929 = vsel %vm868, %v3920, 0.0
        %v3930 = vsel %vm867, %v3916, 0.0
        %v3931 = vsel %vm868, %v3912, 0.0
        %v3932 = vsel %vm867, %v3908, 0.0
        %v3933 = vsel %vm868, %v3904, 0.0
        %v3934 = vsel %vm867, %v3900, 0.0
        %v3935 = vsel %vm868, %v3896, 0.0
        %v3936 = vsel %vm867, %v3892, 0.0
        %v3937 = vsel %vm868, %v3888, 0.0
        %v3938 = vsel %vm867, %v3884, 0.0
        %v3939 = vsel %vm868, %v3880, 0.0
        %v3940 = vsel %vm867, %v3876, 0.0
        %v3941 = vsel %vm868, %v3872, 0.0
        %v3942 = vsel %vm867, %v3868, 0.0
        %v3943 = vsel %vm868, %v3864, 0.0
        %v3944 = vsel %vm867, %v3925, 0.0
        %v3945 = vsel %vm868, %v3921, 0.0
        %v3946 = vsel %vm867, %v3917, 0.0
        %v3947 = vsel %vm868, %v3913, 0.0
        %v3948 = vsel %vm867, %v3909, 0.0
        %v3949 = vsel %vm868, %v3905, 0.0
        %v3950 = vsel %vm867, %v3901, 0.0
        %v3951 = vsel %vm868, %v3897, 0.0
        %v3952 = vsel %vm867, %v3893, 0.0
        %v3953 = vsel %vm868, %v3889, 0.0
        %v3954 = vsel %vm867, %v3885, 0.0
        %v3955 = vsel %vm868, %v3881, 0.0
        %v3956 = vsel %vm867, %v3877, 0.0
        %v3957 = vsel %vm868, %v3873, 0.0
        %v3958 = vsel %vm867, %v3869, 0.0
        %v3959 = vsel %vm868, %v3865, 0.0
        %v3960 = vsel %vm867, %v3926, 0.0
        %v3961 = vsel %vm868, %v3922, 0.0
        %v3962 = vsel %vm867, %v3918, 0.0
        %v3963 = vsel %vm868, %v3914, 0.0
        %v3964 = vsel %vm867, %v3910, 0.0
        %v3965 = vsel %vm868, %v3906, 0.0
        %v3966 = vsel %vm867, %v3902, 0.0
        %v3967 = vsel %vm868, %v3898, 0.0
        %v3968 = vsel %vm867, %v3894, 0.0
        %v3969 = vsel %vm868, %v3890, 0.0
        %v3970 = vsel %vm867, %v3886, 0.0
        %v3971 = vsel %vm868, %v3882, 0.0
        %v3972 = vsel %vm867, %v3878, 0.0
        %v3973 = vsel %vm868, %v3874, 0.0
        %v3974 = vsel %vm867, %v3870, 0.0
        %v3975 = vsel %vm868, %v3866, 0.0
        %v3976 = vsel %vm867, %v3927, 0.0
        %v3977 = vsel %vm868, %v3923, 0.0
        %v3978 = vsel %vm867, %v3919, 0.0
        %v3979 = vsel %vm868, %v3915, 0.0
        %v3980 = vsel %vm867, %v3911, 0.0
        %v3981 = vsel %vm868, %v3907, 0.0
        %v3982 = vsel %vm867, %v3903, 0.0
        %v3983 = vsel %vm868, %v3899, 0.0
        %v3984 = vsel %vm867, %v3895, 0.0
        %v3985 = vsel %vm868, %v3891, 0.0
        %v3986 = vsel %vm867, %v3887, 0.0
        %v3987 = vsel %vm868, %v3883, 0.0
        %v3988 = vsel %vm867, %v3879, 0.0
        %v3989 = vsel %vm868, %v3875, 0.0
        %v3990 = vsel %vm867, %v3871, 0.0
        %v3991 = vsel %vm868, %v3867, 0.0
        %v3992 = vpack.c.bf16 %v3929, %v3928
        %v3993 = vpack.c.bf16 %v3931, %v3930
        %v3994 = vpack.c.bf16 %v3933, %v3932
        %v3995 = vpack.c.bf16 %v3935, %v3934
        %v3996 = vpack.c.bf16 %v3937, %v3936
        %v3997 = vpack.c.bf16 %v3939, %v3938
        %v3998 = vpack.c.bf16 %v3941, %v3940
        %v3999 = vpack.c.bf16 %v3943, %v3942
        %v4000 = vpack.c.bf16 %v3945, %v3944
        %v4001 = vpack.c.bf16 %v3947, %v3946
        %v4002 = vpack.c.bf16 %v3949, %v3948
        %v4003 = vpack.c.bf16 %v3951, %v3950
        %v4004 = vpack.c.bf16 %v3953, %v3952
        %v4005 = vpack.c.bf16 %v3955, %v3954
        %v4006 = vpack.c.bf16 %v3957, %v3956
        %v4007 = vpack.c.bf16 %v3959, %v3958
        %v4008 = vpack.c.bf16 %v3961, %v3960
        %v4009 = vpack.c.bf16 %v3963, %v3962
        %v4010 = vpack.c.bf16 %v3965, %v3964
        %v4011 = vpack.c.bf16 %v3967, %v3966
        %v4012 = vpack.c.bf16 %v3969, %v3968
        %v4013 = vpack.c.bf16 %v3971, %v3970
        %v4014 = vpack.c.bf16 %v3973, %v3972
        %v4015 = vpack.c.bf16 %v3975, %v3974
        %v4016 = vpack.c.bf16 %v3977, %v3976
        %v4017 = vpack.c.bf16 %v3979, %v3978
        %v4018 = vpack.c.bf16 %v3981, %v3980
        %v4019 = vpack.c.bf16 %v3983, %v3982
        %v4020 = vpack.c.bf16 %v3985, %v3984
        %v4021 = vpack.c.bf16 %v3987, %v3986
        %v4022 = vpack.c.bf16 %v3989, %v3988
        %v4023 = vpack.c.bf16 %v3991, %v3990
        %v4024 = vpack.c.bf16 %v3376, %v3375
        %v4025 = vpack.c.bf16 %v3378, %v3377
        %v4026 = vpack.c.bf16 %v3380, %v3379
        %v4027 = vpack.c.bf16 %v3382, %v3381
        %v4028 = vpack.c.bf16 %v3384, %v3383
        %v4029 = vpack.c.bf16 %v3386, %v3385
        %v4030 = vpack.c.bf16 %v3388, %v3387
        %v4031 = vpack.c.bf16 %v3390, %v3389
        %v4032 = vpack.c.bf16 %v3392, %v3391
        %v4033 = vpack.c.bf16 %v3394, %v3393
        %v4034 = vpack.c.bf16 %v3396, %v3395
        %v4035 = vpack.c.bf16 %v3398, %v3397
        %v4036 = vpack.c.bf16 %v3400, %v3399
        %v4037 = vpack.c.bf16 %v3402, %v3401
        %v4038 = vpack.c.bf16 %v3404, %v3403
        %v4039 = vpack.c.bf16 %v3406, %v3405
        %v4040 = vpack.c.bf16 %v3408, %v3407
        %v4041 = vpack.c.bf16 %v3410, %v3409
        %v4042 = vpack.c.bf16 %v3412, %v3411
        %v4043 = vpack.c.bf16 %v3414, %v3413
        %v4044 = vpack.c.bf16 %v3416, %v3415
        %v4045 = vpack.c.bf16 %v3418, %v3417
        %v4046 = vpack.c.bf16 %v3420, %v3419
        %v4047 = vpack.c.bf16 %v3422, %v3421
        %v4048 = vpack.c.bf16 %v3424, %v3423
        %v4049 = vpack.c.bf16 %v3426, %v3425
        %v4050 = vpack.c.bf16 %v3428, %v3427
        %v4051 = vpack.c.bf16 %v3430, %v3429
        %v4052 = vpack.c.bf16 %v3432, %v3431
        %v4053 = vpack.c.bf16 %v3434, %v3433
        %v4054 = vpack.c.bf16 %v3436, %v3435
        %v4055 = vpack.c.bf16 %v3438, %v3437
        %4056 = vrot.lane.b32.xlu0 %v3375, 127
        %v4057 = vpop.permute.xlu0 %4056
        %4058 = vrot.lane.b32.xlu0 %v3391, 127
        %v4059 = vpop.permute.xlu0 %4058
        %4060 = vrot.lane.b32.xlu0 %v3407, 127
        %v4061 = vpop.permute.xlu0 %4060
        %4062 = vrot.lane.b32.xlu0 %v3423, 127
        %v4063 = vpop.permute.xlu0 %4062
        %4064 = vrot.lane.b32.xlu0 %v3376, 127
        %v4065 = vpop.permute.xlu0 %4064
        %4066 = vrot.lane.b32.xlu0 %v3392, 127
        %v4067 = vpop.permute.xlu0 %4066
        %4068 = vrot.lane.b32.xlu0 %v3408, 127
        %v4069 = vpop.permute.xlu0 %4068
        %4070 = vrot.lane.b32.xlu0 %v3424, 127
        %v4071 = vpop.permute.xlu0 %4070
        %4072 = vrot.lane.b32.xlu0 %v3377, 127
        %v4073 = vpop.permute.xlu0 %4072
        %4074 = vrot.lane.b32.xlu0 %v3393, 127
        %v4075 = vpop.permute.xlu0 %4074
        %4076 = vrot.lane.b32.xlu0 %v3409, 127
        %v4077 = vpop.permute.xlu0 %4076
        %4078 = vrot.lane.b32.xlu0 %v3425, 127
        %v4079 = vpop.permute.xlu0 %4078
        %4080 = vrot.lane.b32.xlu0 %v3378, 127
        %v4081 = vpop.permute.xlu0 %4080
        %4082 = vrot.lane.b32.xlu0 %v3394, 127
        %v4083 = vpop.permute.xlu0 %4082
        %4084 = vrot.lane.b32.xlu0 %v3410, 127
        %v4085 = vpop.permute.xlu0 %4084
        %4086 = vrot.lane.b32.xlu0 %v3426, 127
        %v4087 = vpop.permute.xlu0 %4086
        %4088 = vrot.lane.b32.xlu0 %v3379, 127
        %v4089 = vpop.permute.xlu0 %4088
        %4090 = vrot.lane.b32.xlu0 %v3395, 127
        %v4091 = vpop.permute.xlu0 %4090
        %4092 = vrot.lane.b32.xlu0 %v3411, 127
        %v4093 = vpop.permute.xlu0 %4092
        %4094 = vrot.lane.b32.xlu0 %v3427, 127
        %v4095 = vpop.permute.xlu0 %4094
        %4096 = vrot.lane.b32.xlu0 %v3380, 127
        %v4097 = vpop.permute.xlu0 %4096
        %4098 = vrot.lane.b32.xlu0 %v3396, 127
        %v4099 = vpop.permute.xlu0 %4098
        %4100 = vrot.lane.b32.xlu0 %v3412, 127
        %v4101 = vpop.permute.xlu0 %4100
        %4102 = vrot.lane.b32.xlu0 %v3428, 127
        %v4103 = vpop.permute.xlu0 %4102
        %4104 = vrot.lane.b32.xlu0 %v3381, 127
        %v4105 = vpop.permute.xlu0 %4104
        %4106 = vrot.lane.b32.xlu0 %v3397, 127
        %v4107 = vpop.permute.xlu0 %4106
        %4108 = vrot.lane.b32.xlu0 %v3413, 127
        %v4109 = vpop.permute.xlu0 %4108
        %4110 = vrot.lane.b32.xlu0 %v3429, 127
        %v4111 = vpop.permute.xlu0 %4110
        %4112 = vrot.lane.b32.xlu0 %v3382, 127
        %v4113 = vpop.permute.xlu0 %4112
        %4114 = vrot.lane.b32.xlu0 %v3398, 127
        %v4115 = vpop.permute.xlu0 %4114
        %4116 = vrot.lane.b32.xlu0 %v3414, 127
        %v4117 = vpop.permute.xlu0 %4116
        %4118 = vrot.lane.b32.xlu0 %v3430, 127
        %v4119 = vpop.permute.xlu0 %4118
        %4120 = vrot.lane.b32.xlu0 %v3383, 127
        %v4121 = vpop.permute.xlu0 %4120
        %4122 = vrot.lane.b32.xlu0 %v3399, 127
        %v4123 = vpop.permute.xlu0 %4122
        %4124 = vrot.lane.b32.xlu0 %v3415, 127
        %v4125 = vpop.permute.xlu0 %4124
        %4126 = vrot.lane.b32.xlu0 %v3431, 127
        %v4127 = vpop.permute.xlu0 %4126
        %4128 = vrot.lane.b32.xlu0 %v3384, 127
        %v4129 = vpop.permute.xlu0 %4128
        %4130 = vrot.lane.b32.xlu0 %v3400, 127
        %v4131 = vpop.permute.xlu0 %4130
        %4132 = vrot.lane.b32.xlu0 %v3416, 127
        %v4133 = vpop.permute.xlu0 %4132
        %4134 = vrot.lane.b32.xlu0 %v3432, 127
        %v4135 = vpop.permute.xlu0 %4134
        %4136 = vrot.lane.b32.xlu0 %v3385, 127
        %v4137 = vpop.permute.xlu0 %4136
        %4138 = vrot.lane.b32.xlu0 %v3401, 127
        %v4139 = vpop.permute.xlu0 %4138
        %4140 = vrot.lane.b32.xlu0 %v3417, 127
        %v4141 = vpop.permute.xlu0 %4140
        %4142 = vrot.lane.b32.xlu0 %v3433, 127
        %v4143 = vpop.permute.xlu0 %4142
        %4144 = vrot.lane.b32.xlu0 %v3386, 127
        %v4145 = vpop.permute.xlu0 %4144
        %4146 = vrot.lane.b32.xlu0 %v3402, 127
        %v4147 = vpop.permute.xlu0 %4146
        %4148 = vrot.lane.b32.xlu0 %v3418, 127
        %v4149 = vpop.permute.xlu0 %4148
        %4150 = vrot.lane.b32.xlu0 %v3434, 127
        %v4151 = vpop.permute.xlu0 %4150
        %4152 = vrot.lane.b32.xlu0 %v3387, 127
        %v4153 = vpop.permute.xlu0 %4152
        %4154 = vrot.lane.b32.xlu0 %v3403, 127
        %v4155 = vpop.permute.xlu0 %4154
        %4156 = vrot.lane.b32.xlu0 %v3419, 127
        %v4157 = vpop.permute.xlu0 %4156
        %4158 = vrot.lane.b32.xlu0 %v3435, 127
        %v4159 = vpop.permute.xlu0 %4158
        %4160 = vrot.lane.b32.xlu0 %v3388, 127
        %v4161 = vpop.permute.xlu0 %4160
        %4162 = vrot.lane.b32.xlu0 %v3404, 127
        %v4163 = vpop.permute.xlu0 %4162
        %4164 = vrot.lane.b32.xlu0 %v3420, 127
        %v4165 = vpop.permute.xlu0 %4164
        %4166 = vrot.lane.b32.xlu0 %v3436, 127
        %v4167 = vpop.permute.xlu0 %4166
        %4168 = vrot.lane.b32.xlu0 %v3389, 127
        %v4169 = vpop.permute.xlu0 %4168
        %4170 = vrot.lane.b32.xlu0 %v3405, 127
        %v4171 = vpop.permute.xlu0 %4170
        %4172 = vrot.lane.b32.xlu0 %v3421, 127
        %v4173 = vpop.permute.xlu0 %4172
        %4174 = vrot.lane.b32.xlu0 %v3437, 127
        %v4175 = vpop.permute.xlu0 %4174
        %4176 = vrot.lane.b32.xlu0 %v3390, 127
        %v4177 = vpop.permute.xlu0 %4176
        %4178 = vrot.lane.b32.xlu0 %v3406, 127
        %v4179 = vpop.permute.xlu0 %4178
        %4180 = vrot.lane.b32.xlu0 %v3422, 127
        %v4181 = vpop.permute.xlu0 %4180
        %4182 = vrot.lane.b32.xlu0 %v3438, 127
        %v4183 = vpop.permute.xlu0 %4182
        %v4184 = vsel %vm917, %v4169, %v4177
        %v4185 = vsel %vm917, %v4171, %v4179
        %v4186 = vsel %vm917, %v4173, %v4181
        %v4187 = vsel %vm917, %v4175, %v4183
        %v4188 = vsel %vm917, %v4161, %v4169
        %v4189 = vsel %vm917, %v4163, %v4171
        %v4190 = vsel %vm917, %v4165, %v4173
        %v4191 = vsel %vm917, %v4167, %v4175
        %v4192 = vsel %vm917, %v4153, %v4161
        %v4193 = vsel %vm917, %v4155, %v4163
        %v4194 = vsel %vm917, %v4157, %v4165
        %v4195 = vsel %vm917, %v4159, %v4167
        %v4196 = vsel %vm917, %v4145, %v4153
        %v4197 = vsel %vm917, %v4147, %v4155
        %v4198 = vsel %vm917, %v4149, %v4157
        %v4199 = vsel %vm917, %v4151, %v4159
        %v4200 = vsel %vm917, %v4137, %v4145
        %v4201 = vsel %vm917, %v4139, %v4147
        %v4202 = vsel %vm917, %v4141, %v4149
        %v4203 = vsel %vm917, %v4143, %v4151
        %v4204 = vsel %vm917, %v4129, %v4137
        %v4205 = vsel %vm917, %v4131, %v4139
        %v4206 = vsel %vm917, %v4133, %v4141
        %v4207 = vsel %vm917, %v4135, %v4143
        %v4208 = vsel %vm917, %v4121, %v4129
        %v4209 = vsel %vm917, %v4123, %v4131
        %v4210 = vsel %vm917, %v4125, %v4133
        %v4211 = vsel %vm917, %v4127, %v4135
        %v4212 = vsel %vm917, %v4113, %v4121
        %v4213 = vsel %vm917, %v4115, %v4123
        %v4214 = vsel %vm917, %v4117, %v4125
        %v4215 = vsel %vm917, %v4119, %v4127
        %v4216 = vsel %vm917, %v4105, %v4113
        %v4217 = vsel %vm917, %v4107, %v4115
        %v4218 = vsel %vm917, %v4109, %v4117
        %v4219 = vsel %vm917, %v4111, %v4119
        %v4220 = vsel %vm917, %v4097, %v4105
        %v4221 = vsel %vm917, %v4099, %v4107
        %v4222 = vsel %vm917, %v4101, %v4109
        %v4223 = vsel %vm917, %v4103, %v4111
        %v4224 = vsel %vm917, %v4089, %v4097
        %v4225 = vsel %vm917, %v4091, %v4099
        %v4226 = vsel %vm917, %v4093, %v4101
        %v4227 = vsel %vm917, %v4095, %v4103
        %v4228 = vsel %vm917, %v4081, %v4089
        %v4229 = vsel %vm917, %v4083, %v4091
        %v4230 = vsel %vm917, %v4085, %v4093
        %v4231 = vsel %vm917, %v4087, %v4095
        %v4232 = vsel %vm917, %v4073, %v4081
        %v4233 = vsel %vm917, %v4075, %v4083
        %v4234 = vsel %vm917, %v4077, %v4085
        %v4235 = vsel %vm917, %v4079, %v4087
        %v4236 = vsel %vm917, %v4065, %v4073
        %v4237 = vsel %vm917, %v4067, %v4075
        %v4238 = vsel %vm917, %v4069, %v4077
        %v4239 = vsel %vm917, %v4071, %v4079
        %v4240 = vsel %vm917, %v4057, %v4065
        %v4241 = vsel %vm917, %v4059, %v4067
        %v4242 = vsel %vm917, %v4061, %v4069
        %v4243 = vsel %vm917, %v4063, %v4071
        %v4244 = vsel %vm917, %v4177, %v4057
        %v4245 = vsel %vm917, %v4179, %v4059
        %v4246 = vsel %vm917, %v4181, %v4061
        %v4247 = vsel %vm917, %v4183, %v4063
        %v4248 = vsel %vm940, %v4240, 0.0
        %v4249 = vsel %vm941, %v4236, 0.0
        %v4250 = vsel %vm940, %v4232, 0.0
        %v4251 = vsel %vm941, %v4228, 0.0
        %v4252 = vsel %vm940, %v4224, 0.0
        %v4253 = vsel %vm941, %v4220, 0.0
        %v4254 = vsel %vm940, %v4216, 0.0
        %v4255 = vsel %vm941, %v4212, 0.0
        %v4256 = vsel %vm940, %v4208, 0.0
        %v4257 = vsel %vm941, %v4204, 0.0
        %v4258 = vsel %vm940, %v4200, 0.0
        %v4259 = vsel %vm941, %v4196, 0.0
        %v4260 = vsel %vm940, %v4192, 0.0
        %v4261 = vsel %vm941, %v4188, 0.0
        %v4262 = vsel %vm940, %v4184, 0.0
        %v4263 = vsel %vm941, %v4244, 0.0
        %v4264 = vsel %vm940, %v4241, 0.0
        %v4265 = vsel %vm941, %v4237, 0.0
        %v4266 = vsel %vm940, %v4233, 0.0
        %v4267 = vsel %vm941, %v4229, 0.0
        %v4268 = vsel %vm940, %v4225, 0.0
        %v4269 = vsel %vm941, %v4221, 0.0
        %v4270 = vsel %vm940, %v4217, 0.0
        %v4271 = vsel %vm941, %v4213, 0.0
        %v4272 = vsel %vm940, %v4209, 0.0
        %v4273 = vsel %vm941, %v4205, 0.0
        %v4274 = vsel %vm940, %v4201, 0.0
        %v4275 = vsel %vm941, %v4197, 0.0
        %v4276 = vsel %vm940, %v4193, 0.0
        %v4277 = vsel %vm941, %v4189, 0.0
        %v4278 = vsel %vm940, %v4185, 0.0
        %v4279 = vsel %vm941, %v4245, 0.0
        %v4280 = vsel %vm940, %v4242, 0.0
        %v4281 = vsel %vm941, %v4238, 0.0
        %v4282 = vsel %vm940, %v4234, 0.0
        %v4283 = vsel %vm941, %v4230, 0.0
        %v4284 = vsel %vm940, %v4226, 0.0
        %v4285 = vsel %vm941, %v4222, 0.0
        %v4286 = vsel %vm940, %v4218, 0.0
        %v4287 = vsel %vm941, %v4214, 0.0
        %v4288 = vsel %vm940, %v4210, 0.0
        %v4289 = vsel %vm941, %v4206, 0.0
        %v4290 = vsel %vm940, %v4202, 0.0
        %v4291 = vsel %vm941, %v4198, 0.0
        %v4292 = vsel %vm940, %v4194, 0.0
        %v4293 = vsel %vm941, %v4190, 0.0
        %v4294 = vsel %vm940, %v4186, 0.0
        %v4295 = vsel %vm941, %v4246, 0.0
        %v4296 = vsel %vm940, %v4243, 0.0
        %v4297 = vsel %vm941, %v4239, 0.0
        %v4298 = vsel %vm940, %v4235, 0.0
        %v4299 = vsel %vm941, %v4231, 0.0
        %v4300 = vsel %vm940, %v4227, 0.0
        %v4301 = vsel %vm941, %v4223, 0.0
        %v4302 = vsel %vm940, %v4219, 0.0
        %v4303 = vsel %vm941, %v4215, 0.0
        %v4304 = vsel %vm940, %v4211, 0.0
        %v4305 = vsel %vm941, %v4207, 0.0
        %v4306 = vsel %vm940, %v4203, 0.0
        %v4307 = vsel %vm941, %v4199, 0.0
        %v4308 = vsel %vm940, %v4195, 0.0
        %v4309 = vsel %vm941, %v4191, 0.0
        %v4310 = vsel %vm940, %v4187, 0.0
        %v4311 = vsel %vm941, %v4247, 0.0
        %v4312 = vpack.c.bf16 %v4249, %v4248
        %v4313 = vpack.c.bf16 %v4251, %v4250
        %v4314 = vpack.c.bf16 %v4253, %v4252
        %v4315 = vpack.c.bf16 %v4255, %v4254
        %v4316 = vpack.c.bf16 %v4257, %v4256
        %v4317 = vpack.c.bf16 %v4259, %v4258
        %v4318 = vpack.c.bf16 %v4261, %v4260
        %v4319 = vpack.c.bf16 %v4263, %v4262
        %v4320 = vpack.c.bf16 %v4265, %v4264
        %v4321 = vpack.c.bf16 %v4267, %v4266
        %v4322 = vpack.c.bf16 %v4269, %v4268
        %v4323 = vpack.c.bf16 %v4271, %v4270
        %v4324 = vpack.c.bf16 %v4273, %v4272
        %v4325 = vpack.c.bf16 %v4275, %v4274
        %v4326 = vpack.c.bf16 %v4277, %v4276
        %v4327 = vpack.c.bf16 %v4279, %v4278
        %v4328 = vpack.c.bf16 %v4281, %v4280
        %v4329 = vpack.c.bf16 %v4283, %v4282
        %v4330 = vpack.c.bf16 %v4285, %v4284
        %v4331 = vpack.c.bf16 %v4287, %v4286
        %v4332 = vpack.c.bf16 %v4289, %v4288
        %v4333 = vpack.c.bf16 %v4291, %v4290
        %v4334 = vpack.c.bf16 %v4293, %v4292
        %v4335 = vpack.c.bf16 %v4295, %v4294
        %v4336 = vpack.c.bf16 %v4297, %v4296
        %v4337 = vpack.c.bf16 %v4299, %v4298
        %v4338 = vpack.c.bf16 %v4301, %v4300
        %v4339 = vpack.c.bf16 %v4303, %v4302
        %v4340 = vpack.c.bf16 %v4305, %v4304
        %v4341 = vpack.c.bf16 %v4307, %v4306
        %v4342 = vpack.c.bf16 %v4309, %v4308
        %v4343 = vpack.c.bf16 %v4311, %v4310
        %4344 = vrot.lane.b32.xlu0 %v3375, 126
        %v4345 = vpop.permute.xlu0 %4344
        %4346 = vrot.lane.b32.xlu0 %v3391, 126
        %v4347 = vpop.permute.xlu0 %4346
        %4348 = vrot.lane.b32.xlu0 %v3407, 126
        %v4349 = vpop.permute.xlu0 %4348
        %4350 = vrot.lane.b32.xlu0 %v3423, 126
        %v4351 = vpop.permute.xlu0 %4350
        %4352 = vrot.lane.b32.xlu0 %v3376, 126
        %v4353 = vpop.permute.xlu0 %4352
        %4354 = vrot.lane.b32.xlu0 %v3392, 126
        %v4355 = vpop.permute.xlu0 %4354
        %4356 = vrot.lane.b32.xlu0 %v3408, 126
        %v4357 = vpop.permute.xlu0 %4356
        %4358 = vrot.lane.b32.xlu0 %v3424, 126
        %v4359 = vpop.permute.xlu0 %4358
        %4360 = vrot.lane.b32.xlu0 %v3377, 126
        %v4361 = vpop.permute.xlu0 %4360
        %4362 = vrot.lane.b32.xlu0 %v3393, 126
        %v4363 = vpop.permute.xlu0 %4362
        %4364 = vrot.lane.b32.xlu0 %v3409, 126
        %v4365 = vpop.permute.xlu0 %4364
        %4366 = vrot.lane.b32.xlu0 %v3425, 126
        %v4367 = vpop.permute.xlu0 %4366
        %4368 = vrot.lane.b32.xlu0 %v3378, 126
        %v4369 = vpop.permute.xlu0 %4368
        %4370 = vrot.lane.b32.xlu0 %v3394, 126
        %v4371 = vpop.permute.xlu0 %4370
        %4372 = vrot.lane.b32.xlu0 %v3410, 126
        %v4373 = vpop.permute.xlu0 %4372
        %4374 = vrot.lane.b32.xlu0 %v3426, 126
        %v4375 = vpop.permute.xlu0 %4374
        %4376 = vrot.lane.b32.xlu0 %v3379, 126
        %v4377 = vpop.permute.xlu0 %4376
        %4378 = vrot.lane.b32.xlu0 %v3395, 126
        %v4379 = vpop.permute.xlu0 %4378
        %4380 = vrot.lane.b32.xlu0 %v3411, 126
        %v4381 = vpop.permute.xlu0 %4380
        %4382 = vrot.lane.b32.xlu0 %v3427, 126
        %v4383 = vpop.permute.xlu0 %4382
        %4384 = vrot.lane.b32.xlu0 %v3380, 126
        %v4385 = vpop.permute.xlu0 %4384
        %4386 = vrot.lane.b32.xlu0 %v3396, 126
        %v4387 = vpop.permute.xlu0 %4386
        %4388 = vrot.lane.b32.xlu0 %v3412, 126
        %v4389 = vpop.permute.xlu0 %4388
        %4390 = vrot.lane.b32.xlu0 %v3428, 126
        %v4391 = vpop.permute.xlu0 %4390
        %4392 = vrot.lane.b32.xlu0 %v3381, 126
        %v4393 = vpop.permute.xlu0 %4392
        %4394 = vrot.lane.b32.xlu0 %v3397, 126
        %v4395 = vpop.permute.xlu0 %4394
        %4396 = vrot.lane.b32.xlu0 %v3413, 126
        %v4397 = vpop.permute.xlu0 %4396
        %4398 = vrot.lane.b32.xlu0 %v3429, 126
        %v4399 = vpop.permute.xlu0 %4398
        %4400 = vrot.lane.b32.xlu0 %v3382, 126
        %v4401 = vpop.permute.xlu0 %4400
        %4402 = vrot.lane.b32.xlu0 %v3398, 126
        %v4403 = vpop.permute.xlu0 %4402
        %4404 = vrot.lane.b32.xlu0 %v3414, 126
        %v4405 = vpop.permute.xlu0 %4404
        %4406 = vrot.lane.b32.xlu0 %v3430, 126
        %v4407 = vpop.permute.xlu0 %4406
        %4408 = vrot.lane.b32.xlu0 %v3383, 126
        %v4409 = vpop.permute.xlu0 %4408
        %4410 = vrot.lane.b32.xlu0 %v3399, 126
        %v4411 = vpop.permute.xlu0 %4410
        %4412 = vrot.lane.b32.xlu0 %v3415, 126
        %v4413 = vpop.permute.xlu0 %4412
        %4414 = vrot.lane.b32.xlu0 %v3431, 126
        %v4415 = vpop.permute.xlu0 %4414
        %4416 = vrot.lane.b32.xlu0 %v3384, 126
        %v4417 = vpop.permute.xlu0 %4416
        %4418 = vrot.lane.b32.xlu0 %v3400, 126
        %v4419 = vpop.permute.xlu0 %4418
        %4420 = vrot.lane.b32.xlu0 %v3416, 126
        %v4421 = vpop.permute.xlu0 %4420
        %4422 = vrot.lane.b32.xlu0 %v3432, 126
        %v4423 = vpop.permute.xlu0 %4422
        %4424 = vrot.lane.b32.xlu0 %v3385, 126
        %v4425 = vpop.permute.xlu0 %4424
        %4426 = vrot.lane.b32.xlu0 %v3401, 126
        %v4427 = vpop.permute.xlu0 %4426
        %4428 = vrot.lane.b32.xlu0 %v3417, 126
        %v4429 = vpop.permute.xlu0 %4428
        %4430 = vrot.lane.b32.xlu0 %v3433, 126
        %v4431 = vpop.permute.xlu0 %4430
        %4432 = vrot.lane.b32.xlu0 %v3386, 126
        %v4433 = vpop.permute.xlu0 %4432
        %4434 = vrot.lane.b32.xlu0 %v3402, 126
        %v4435 = vpop.permute.xlu0 %4434
        %4436 = vrot.lane.b32.xlu0 %v3418, 126
        %v4437 = vpop.permute.xlu0 %4436
        %4438 = vrot.lane.b32.xlu0 %v3434, 126
        %v4439 = vpop.permute.xlu0 %4438
        %4440 = vrot.lane.b32.xlu0 %v3387, 126
        %v4441 = vpop.permute.xlu0 %4440
        %4442 = vrot.lane.b32.xlu0 %v3403, 126
        %v4443 = vpop.permute.xlu0 %4442
        %4444 = vrot.lane.b32.xlu0 %v3419, 126
        %v4445 = vpop.permute.xlu0 %4444
        %4446 = vrot.lane.b32.xlu0 %v3435, 126
        %v4447 = vpop.permute.xlu0 %4446
        %4448 = vrot.lane.b32.xlu0 %v3388, 126
        %v4449 = vpop.permute.xlu0 %4448
        %4450 = vrot.lane.b32.xlu0 %v3404, 126
        %v4451 = vpop.permute.xlu0 %4450
        %4452 = vrot.lane.b32.xlu0 %v3420, 126
        %v4453 = vpop.permute.xlu0 %4452
        %4454 = vrot.lane.b32.xlu0 %v3436, 126
        %v4455 = vpop.permute.xlu0 %4454
        %4456 = vrot.lane.b32.xlu0 %v3389, 126
        %v4457 = vpop.permute.xlu0 %4456
        %4458 = vrot.lane.b32.xlu0 %v3405, 126
        %v4459 = vpop.permute.xlu0 %4458
        %4460 = vrot.lane.b32.xlu0 %v3421, 126
        %v4461 = vpop.permute.xlu0 %4460
        %4462 = vrot.lane.b32.xlu0 %v3437, 126
        %v4463 = vpop.permute.xlu0 %4462
        %4464 = vrot.lane.b32.xlu0 %v3390, 126
        %v4465 = vpop.permute.xlu0 %4464
        %4466 = vrot.lane.b32.xlu0 %v3406, 126
        %v4467 = vpop.permute.xlu0 %4466
        %4468 = vrot.lane.b32.xlu0 %v3422, 126
        %v4469 = vpop.permute.xlu0 %4468
        %4470 = vrot.lane.b32.xlu0 %v3438, 126
        %v4471 = vpop.permute.xlu0 %4470
        %vm4472 = vcmp.lt.s32.totalorder %v410, 126
        %v4473 = vsel %vm4472, %v4457, %v4465
        %v4474 = vsel %vm4472, %v4459, %v4467
        %v4475 = vsel %vm4472, %v4461, %v4469
        %v4476 = vsel %vm4472, %v4463, %v4471
        %v4477 = vsel %vm4472, %v4449, %v4457
        %v4478 = vsel %vm4472, %v4451, %v4459
        %v4479 = vsel %vm4472, %v4453, %v4461
        %v4480 = vsel %vm4472, %v4455, %v4463
        %v4481 = vsel %vm4472, %v4441, %v4449
        %v4482 = vsel %vm4472, %v4443, %v4451
        %v4483 = vsel %vm4472, %v4445, %v4453
        %v4484 = vsel %vm4472, %v4447, %v4455
        %v4485 = vsel %vm4472, %v4433, %v4441
        %v4486 = vsel %vm4472, %v4435, %v4443
        %v4487 = vsel %vm4472, %v4437, %v4445
        %v4488 = vsel %vm4472, %v4439, %v4447
        %v4489 = vsel %vm4472, %v4425, %v4433
        %v4490 = vsel %vm4472, %v4427, %v4435
        %v4491 = vsel %vm4472, %v4429, %v4437
        %v4492 = vsel %vm4472, %v4431, %v4439
        %v4493 = vsel %vm4472, %v4417, %v4425
        %v4494 = vsel %vm4472, %v4419, %v4427
        %v4495 = vsel %vm4472, %v4421, %v4429
        %v4496 = vsel %vm4472, %v4423, %v4431
        %v4497 = vsel %vm4472, %v4409, %v4417
        %v4498 = vsel %vm4472, %v4411, %v4419
        %v4499 = vsel %vm4472, %v4413, %v4421
        %v4500 = vsel %vm4472, %v4415, %v4423
        %v4501 = vsel %vm4472, %v4401, %v4409
        %v4502 = vsel %vm4472, %v4403, %v4411
        %v4503 = vsel %vm4472, %v4405, %v4413
        %v4504 = vsel %vm4472, %v4407, %v4415
        %v4505 = vsel %vm4472, %v4393, %v4401
        %v4506 = vsel %vm4472, %v4395, %v4403
        %v4507 = vsel %vm4472, %v4397, %v4405
        %v4508 = vsel %vm4472, %v4399, %v4407
        %v4509 = vsel %vm4472, %v4385, %v4393
        %v4510 = vsel %vm4472, %v4387, %v4395
        %v4511 = vsel %vm4472, %v4389, %v4397
        %v4512 = vsel %vm4472, %v4391, %v4399
        %v4513 = vsel %vm4472, %v4377, %v4385
        %v4514 = vsel %vm4472, %v4379, %v4387
        %v4515 = vsel %vm4472, %v4381, %v4389
        %v4516 = vsel %vm4472, %v4383, %v4391
        %v4517 = vsel %vm4472, %v4369, %v4377
        %v4518 = vsel %vm4472, %v4371, %v4379
        %v4519 = vsel %vm4472, %v4373, %v4381
        %v4520 = vsel %vm4472, %v4375, %v4383
        %v4521 = vsel %vm4472, %v4361, %v4369
        %v4522 = vsel %vm4472, %v4363, %v4371
        %v4523 = vsel %vm4472, %v4365, %v4373
        %v4524 = vsel %vm4472, %v4367, %v4375
        %v4525 = vsel %vm4472, %v4353, %v4361
        %v4526 = vsel %vm4472, %v4355, %v4363
        %v4527 = vsel %vm4472, %v4357, %v4365
        %v4528 = vsel %vm4472, %v4359, %v4367
        %v4529 = vsel %vm4472, %v4345, %v4353
        %v4530 = vsel %vm4472, %v4347, %v4355
        %v4531 = vsel %vm4472, %v4349, %v4357
        %v4532 = vsel %vm4472, %v4351, %v4359
        %v4533 = vsel %vm4472, %v4465, %v4345
        %v4534 = vsel %vm4472, %v4467, %v4347
        %v4535 = vsel %vm4472, %v4469, %v4349
        %v4536 = vsel %vm4472, %v4471, %v4351
        %vm4537 = vcmp.lt.s32.totalorder %v410, 254
        %vm4538 = vcmp.lt.s32.totalorder %v411, 254
        %v4539 = vsel %vm4537, 1, 0
        %v4540 = vsel %vm4538, 1, 0
        %v4541 = vperm.slane %v4539, 0
        %v4542 = vperm.slane %v4540, 0
        %vm4543 = vcmp.eq.s32.totalorder %v4541, 1
        %vm4544 = vcmp.eq.s32.totalorder %v4542, 1
        %v4545 = vsel %vm4543, %v4529, 0.0
        %v4546 = vsel %vm4544, %v4525, 0.0
        %v4547 = vsel %vm4543, %v4521, 0.0
        %v4548 = vsel %vm4544, %v4517, 0.0
        %v4549 = vsel %vm4543, %v4513, 0.0
        %v4550 = vsel %vm4544, %v4509, 0.0
        %v4551 = vsel %vm4543, %v4505, 0.0
        %v4552 = vsel %vm4544, %v4501, 0.0
        %v4553 = vsel %vm4543, %v4497, 0.0
        %v4554 = vsel %vm4544, %v4493, 0.0
        %v4555 = vsel %vm4543, %v4489, 0.0
        %v4556 = vsel %vm4544, %v4485, 0.0
        %v4557 = vsel %vm4543, %v4481, 0.0
        %v4558 = vsel %vm4544, %v4477, 0.0
        %v4559 = vsel %vm4543, %v4473, 0.0
        %v4560 = vsel %vm4544, %v4533, 0.0
        %v4561 = vsel %vm4543, %v4530, 0.0
        %v4562 = vsel %vm4544, %v4526, 0.0
        %v4563 = vsel %vm4543, %v4522, 0.0
        %v4564 = vsel %vm4544, %v4518, 0.0
        %v4565 = vsel %vm4543, %v4514, 0.0
        %v4566 = vsel %vm4544, %v4510, 0.0
        %v4567 = vsel %vm4543, %v4506, 0.0
        %v4568 = vsel %vm4544, %v4502, 0.0
        %v4569 = vsel %vm4543, %v4498, 0.0
        %v4570 = vsel %vm4544, %v4494, 0.0
        %v4571 = vsel %vm4543, %v4490, 0.0
        %v4572 = vsel %vm4544, %v4486, 0.0
        %v4573 = vsel %vm4543, %v4482, 0.0
        %v4574 = vsel %vm4544, %v4478, 0.0
        %v4575 = vsel %vm4543, %v4474, 0.0
        %v4576 = vsel %vm4544, %v4534, 0.0
        %v4577 = vsel %vm4543, %v4531, 0.0
        %v4578 = vsel %vm4544, %v4527, 0.0
        %v4579 = vsel %vm4543, %v4523, 0.0
        %v4580 = vsel %vm4544, %v4519, 0.0
        %v4581 = vsel %vm4543, %v4515, 0.0
        %v4582 = vsel %vm4544, %v4511, 0.0
        %v4583 = vsel %vm4543, %v4507, 0.0
        %v4584 = vsel %vm4544, %v4503, 0.0
        %v4585 = vsel %vm4543, %v4499, 0.0
        %v4586 = vsel %vm4544, %v4495, 0.0
        %v4587 = vsel %vm4543, %v4491, 0.0
        %v4588 = vsel %vm4544, %v4487, 0.0
        %v4589 = vsel %vm4543, %v4483, 0.0
        %v4590 = vsel %vm4544, %v4479, 0.0
        %v4591 = vsel %vm4543, %v4475, 0.0
        %v4592 = vsel %vm4544, %v4535, 0.0
        %v4593 = vsel %vm4543, %v4532, 0.0
        %v4594 = vsel %vm4544, %v4528, 0.0
        %v4595 = vsel %vm4543, %v4524, 0.0
        %v4596 = vsel %vm4544, %v4520, 0.0
        %v4597 = vsel %vm4543, %v4516, 0.0
        %v4598 = vsel %vm4544, %v4512, 0.0
        %v4599 = vsel %vm4543, %v4508, 0.0
        %v4600 = vsel %vm4544, %v4504, 0.0
        %v4601 = vsel %vm4543, %v4500, 0.0
        %v4602 = vsel %vm4544, %v4496, 0.0
        %v4603 = vsel %vm4543, %v4492, 0.0
        %v4604 = vsel %vm4544, %v4488, 0.0
        %v4605 = vsel %vm4543, %v4484, 0.0
        %v4606 = vsel %vm4544, %v4480, 0.0
        %v4607 = vsel %vm4543, %v4476, 0.0
        %v4608 = vsel %vm4544, %v4536, 0.0
        %v4609 = vpack.c.bf16 %v4546, %v4545
        %v4610 = vpack.c.bf16 %v4548, %v4547
        %v4611 = vpack.c.bf16 %v4550, %v4549
        %v4612 = vpack.c.bf16 %v4552, %v4551
        %v4613 = vpack.c.bf16 %v4554, %v4553
        %v4614 = vpack.c.bf16 %v4556, %v4555
        %v4615 = vpack.c.bf16 %v4558, %v4557
        %v4616 = vpack.c.bf16 %v4560, %v4559
        %v4617 = vpack.c.bf16 %v4562, %v4561
        %v4618 = vpack.c.bf16 %v4564, %v4563
        %v4619 = vpack.c.bf16 %v4566, %v4565
        %v4620 = vpack.c.bf16 %v4568, %v4567
        %v4621 = vpack.c.bf16 %v4570, %v4569
        %v4622 = vpack.c.bf16 %v4572, %v4571
        %v4623 = vpack.c.bf16 %v4574, %v4573
        %v4624 = vpack.c.bf16 %v4576, %v4575
        %v4625 = vpack.c.bf16 %v4578, %v4577
        %v4626 = vpack.c.bf16 %v4580, %v4579
        %v4627 = vpack.c.bf16 %v4582, %v4581
        %v4628 = vpack.c.bf16 %v4584, %v4583
        %v4629 = vpack.c.bf16 %v4586, %v4585
        %v4630 = vpack.c.bf16 %v4588, %v4587
        %v4631 = vpack.c.bf16 %v4590, %v4589
        %v4632 = vpack.c.bf16 %v4592, %v4591
        %v4633 = vpack.c.bf16 %v4594, %v4593
        %v4634 = vpack.c.bf16 %v4596, %v4595
        %v4635 = vpack.c.bf16 %v4598, %v4597
        %v4636 = vpack.c.bf16 %v4600, %v4599
        %v4637 = vpack.c.bf16 %v4602, %v4601
        %v4638 = vpack.c.bf16 %v4604, %v4603
        %v4639 = vpack.c.bf16 %v4606, %v4605
        %v4640 = vpack.c.bf16 %v4608, %v4607
        %v4673 = vunpack.c.l.b16 %v3704
        %v4674 = vunpack.c.h.b16 %v3704
        %v4675 = vunpack.c.l.b16 %v3705
        %v4676 = vunpack.c.h.b16 %v3705
        %v4677 = vunpack.c.l.b16 %v3706
        %v4678 = vunpack.c.h.b16 %v3706
        %v4679 = vunpack.c.l.b16 %v3707
        %v4680 = vunpack.c.h.b16 %v3707
        %v4681 = vunpack.c.l.b16 %v3708
        %v4682 = vunpack.c.h.b16 %v3708
        %v4683 = vunpack.c.l.b16 %v3709
        %v4684 = vunpack.c.h.b16 %v3709
        %v4685 = vunpack.c.l.b16 %v3710
        %v4686 = vunpack.c.h.b16 %v3710
        %v4687 = vunpack.c.l.b16 %v3711
        %v4688 = vunpack.c.h.b16 %v3711
        %v4689 = vunpack.c.l.b16 %v3712
        %v4690 = vunpack.c.h.b16 %v3712
        %v4691 = vunpack.c.l.b16 %v3713
        %v4692 = vunpack.c.h.b16 %v3713
        %v4693 = vunpack.c.l.b16 %v3714
        %v4694 = vunpack.c.h.b16 %v3714
        %v4695 = vunpack.c.l.b16 %v3715
        %v4696 = vunpack.c.h.b16 %v3715
        %v4697 = vunpack.c.l.b16 %v3716
        %v4698 = vunpack.c.h.b16 %v3716
        %v4699 = vunpack.c.l.b16 %v3717
        %v4700 = vunpack.c.h.b16 %v3717
        %v4701 = vunpack.c.l.b16 %v3718
        %v4702 = vunpack.c.h.b16 %v3718
        %v4703 = vunpack.c.l.b16 %v3719
        %v4704 = vunpack.c.h.b16 %v3719
        %v4705 = vunpack.c.l.b16 %v3720
        %v4706 = vunpack.c.h.b16 %v3720
        %v4707 = vunpack.c.l.b16 %v3721
        %v4708 = vunpack.c.h.b16 %v3721
        %v4709 = vunpack.c.l.b16 %v3722
        %v4710 = vunpack.c.h.b16 %v3722
        %v4711 = vunpack.c.l.b16 %v3723
        %v4712 = vunpack.c.h.b16 %v3723
        %v4713 = vunpack.c.l.b16 %v3724
        %v4714 = vunpack.c.h.b16 %v3724
        %v4715 = vunpack.c.l.b16 %v3725
        %v4716 = vunpack.c.h.b16 %v3725
        %v4717 = vunpack.c.l.b16 %v3726
        %v4718 = vunpack.c.h.b16 %v3726
        %v4719 = vunpack.c.l.b16 %v3727
        %v4720 = vunpack.c.h.b16 %v3727
        %v4721 = vunpack.c.l.b16 %v3728
        %v4722 = vunpack.c.h.b16 %v3728
        %v4723 = vunpack.c.l.b16 %v3729
        %v4724 = vunpack.c.h.b16 %v3729
        %v4725 = vunpack.c.l.b16 %v3730
        %v4726 = vunpack.c.h.b16 %v3730
        %v4727 = vunpack.c.l.b16 %v3731
        %v4728 = vunpack.c.h.b16 %v3731
        %v4729 = vunpack.c.l.b16 %v3732
        %v4730 = vunpack.c.h.b16 %v3732
        %v4731 = vunpack.c.l.b16 %v3733
        %v4732 = vunpack.c.h.b16 %v3733
        %v4733 = vunpack.c.l.b16 %v3734
        %v4734 = vunpack.c.h.b16 %v3734
        %v4735 = vunpack.c.l.b16 %v3735
        %v4736 = vunpack.c.h.b16 %v3735
        %v4737 = vpack.c.b16 %v4689, %v4673
        %v4738 = vpack.c.b16 %v4690, %v4674
        %v4739 = vpack.c.b16 %v4691, %v4675
        %v4740 = vpack.c.b16 %v4692, %v4676
        %v4741 = vpack.c.b16 %v4693, %v4677
        %v4742 = vpack.c.b16 %v4694, %v4678
        %v4743 = vpack.c.b16 %v4695, %v4679
        %v4744 = vpack.c.b16 %v4696, %v4680
        %v4745 = vpack.c.b16 %v4697, %v4681
        %v4746 = vpack.c.b16 %v4698, %v4682
        %v4747 = vpack.c.b16 %v4699, %v4683
        %v4748 = vpack.c.b16 %v4700, %v4684
        %v4749 = vpack.c.b16 %v4701, %v4685
        %v4750 = vpack.c.b16 %v4702, %v4686
        %v4751 = vpack.c.b16 %v4703, %v4687
        %v4752 = vpack.c.b16 %v4704, %v4688
        %v4753 = vpack.c.b16 %v4721, %v4705
        %v4754 = vpack.c.b16 %v4722, %v4706
        %v4755 = vpack.c.b16 %v4723, %v4707
        %v4756 = vpack.c.b16 %v4724, %v4708
        %v4757 = vpack.c.b16 %v4725, %v4709
        %v4758 = vpack.c.b16 %v4726, %v4710
        %v4759 = vpack.c.b16 %v4727, %v4711
        %v4760 = vpack.c.b16 %v4728, %v4712
        %v4761 = vpack.c.b16 %v4729, %v4713
        %v4762 = vpack.c.b16 %v4730, %v4714
        %v4763 = vpack.c.b16 %v4731, %v4715
        %v4764 = vpack.c.b16 %v4732, %v4716
        %v4765 = vpack.c.b16 %v4733, %v4717
        %v4766 = vpack.c.b16 %v4734, %v4718
        %v4767 = vpack.c.b16 %v4735, %v4719
        %v4768 = vpack.c.b16 %v4736, %v4720
        %v4833 = vunpack.c.l.b16 %v3992
        %v4834 = vunpack.c.h.b16 %v3992
        %v4835 = vunpack.c.l.b16 %v3993
        %v4836 = vunpack.c.h.b16 %v3993
        %v4837 = vunpack.c.l.b16 %v3994
        %v4838 = vunpack.c.h.b16 %v3994
        %v4839 = vunpack.c.l.b16 %v3995
        %v4840 = vunpack.c.h.b16 %v3995
        %v4841 = vunpack.c.l.b16 %v3996
        %v4842 = vunpack.c.h.b16 %v3996
        %v4843 = vunpack.c.l.b16 %v3997
        %v4844 = vunpack.c.h.b16 %v3997
        %v4845 = vunpack.c.l.b16 %v3998
        %v4846 = vunpack.c.h.b16 %v3998
        %v4847 = vunpack.c.l.b16 %v3999
        %v4848 = vunpack.c.h.b16 %v3999
        %v4849 = vunpack.c.l.b16 %v4000
        %v4850 = vunpack.c.h.b16 %v4000
        %v4851 = vunpack.c.l.b16 %v4001
        %v4852 = vunpack.c.h.b16 %v4001
        %v4853 = vunpack.c.l.b16 %v4002
        %v4854 = vunpack.c.h.b16 %v4002
        %v4855 = vunpack.c.l.b16 %v4003
        %v4856 = vunpack.c.h.b16 %v4003
        %v4857 = vunpack.c.l.b16 %v4004
        %v4858 = vunpack.c.h.b16 %v4004
        %v4859 = vunpack.c.l.b16 %v4005
        %v4860 = vunpack.c.h.b16 %v4005
        %v4861 = vunpack.c.l.b16 %v4006
        %v4862 = vunpack.c.h.b16 %v4006
        %v4863 = vunpack.c.l.b16 %v4007
        %v4864 = vunpack.c.h.b16 %v4007
        %v4865 = vunpack.c.l.b16 %v4008
        %v4866 = vunpack.c.h.b16 %v4008
        %v4867 = vunpack.c.l.b16 %v4009
        %v4868 = vunpack.c.h.b16 %v4009
        %v4869 = vunpack.c.l.b16 %v4010
        %v4870 = vunpack.c.h.b16 %v4010
        %v4871 = vunpack.c.l.b16 %v4011
        %v4872 = vunpack.c.h.b16 %v4011
        %v4873 = vunpack.c.l.b16 %v4012
        %v4874 = vunpack.c.h.b16 %v4012
        %v4875 = vunpack.c.l.b16 %v4013
        %v4876 = vunpack.c.h.b16 %v4013
        %v4877 = vunpack.c.l.b16 %v4014
        %v4878 = vunpack.c.h.b16 %v4014
        %v4879 = vunpack.c.l.b16 %v4015
        %v4880 = vunpack.c.h.b16 %v4015
        %v4881 = vunpack.c.l.b16 %v4016
        %v4882 = vunpack.c.h.b16 %v4016
        %v4883 = vunpack.c.l.b16 %v4017
        %v4884 = vunpack.c.h.b16 %v4017
        %v4885 = vunpack.c.l.b16 %v4018
        %v4886 = vunpack.c.h.b16 %v4018
        %v4887 = vunpack.c.l.b16 %v4019
        %v4888 = vunpack.c.h.b16 %v4019
        %v4889 = vunpack.c.l.b16 %v4020
        %v4890 = vunpack.c.h.b16 %v4020
        %v4891 = vunpack.c.l.b16 %v4021
        %v4892 = vunpack.c.h.b16 %v4021
        %v4893 = vunpack.c.l.b16 %v4022
        %v4894 = vunpack.c.h.b16 %v4022
        %v4895 = vunpack.c.l.b16 %v4023
        %v4896 = vunpack.c.h.b16 %v4023
        %v4897 = vpack.c.b16 %v4849, %v4833
        %v4898 = vpack.c.b16 %v4850, %v4834
        %v4899 = vpack.c.b16 %v4851, %v4835
        %v4900 = vpack.c.b16 %v4852, %v4836
        %v4901 = vpack.c.b16 %v4853, %v4837
        %v4902 = vpack.c.b16 %v4854, %v4838
        %v4903 = vpack.c.b16 %v4855, %v4839
        %v4904 = vpack.c.b16 %v4856, %v4840
        %v4905 = vpack.c.b16 %v4857, %v4841
        %v4906 = vpack.c.b16 %v4858, %v4842
        %v4907 = vpack.c.b16 %v4859, %v4843
        %v4908 = vpack.c.b16 %v4860, %v4844
        %v4909 = vpack.c.b16 %v4861, %v4845
        %v4910 = vpack.c.b16 %v4862, %v4846
        %v4911 = vpack.c.b16 %v4863, %v4847
        %v4912 = vpack.c.b16 %v4864, %v4848
        %v4913 = vpack.c.b16 %v4881, %v4865
        %v4914 = vpack.c.b16 %v4882, %v4866
        %v4915 = vpack.c.b16 %v4883, %v4867
        %v4916 = vpack.c.b16 %v4884, %v4868
        %v4917 = vpack.c.b16 %v4885, %v4869
        %v4918 = vpack.c.b16 %v4886, %v4870
        %v4919 = vpack.c.b16 %v4887, %v4871
        %v4920 = vpack.c.b16 %v4888, %v4872
        %v4921 = vpack.c.b16 %v4889, %v4873
        %v4922 = vpack.c.b16 %v4890, %v4874
        %v4923 = vpack.c.b16 %v4891, %v4875
        %v4924 = vpack.c.b16 %v4892, %v4876
        %v4925 = vpack.c.b16 %v4893, %v4877
        %v4926 = vpack.c.b16 %v4894, %v4878
        %v4927 = vpack.c.b16 %v4895, %v4879
        %v4928 = vpack.c.b16 %v4896, %v4880
        %v4993 = vunpack.c.l.b16 %v4024
        %v4994 = vunpack.c.h.b16 %v4024
        %v4995 = vunpack.c.l.b16 %v4025
        %v4996 = vunpack.c.h.b16 %v4025
        %v4997 = vunpack.c.l.b16 %v4026
        %v4998 = vunpack.c.h.b16 %v4026
        %v4999 = vunpack.c.l.b16 %v4027
        %v5000 = vunpack.c.h.b16 %v4027
        %v5001 = vunpack.c.l.b16 %v4028
        %v5002 = vunpack.c.h.b16 %v4028
        %v5003 = vunpack.c.l.b16 %v4029
        %v5004 = vunpack.c.h.b16 %v4029
        %v5005 = vunpack.c.l.b16 %v4030
        %v5006 = vunpack.c.h.b16 %v4030
        %v5007 = vunpack.c.l.b16 %v4031
        %v5008 = vunpack.c.h.b16 %v4031
        %v5009 = vunpack.c.l.b16 %v4032
        %v5010 = vunpack.c.h.b16 %v4032
        %v5011 = vunpack.c.l.b16 %v4033
        %v5012 = vunpack.c.h.b16 %v4033
        %v5013 = vunpack.c.l.b16 %v4034
        %v5014 = vunpack.c.h.b16 %v4034
        %v5015 = vunpack.c.l.b16 %v4035
        %v5016 = vunpack.c.h.b16 %v4035
        %v5017 = vunpack.c.l.b16 %v4036
        %v5018 = vunpack.c.h.b16 %v4036
        %v5019 = vunpack.c.l.b16 %v4037
        %v5020 = vunpack.c.h.b16 %v4037
        %v5021 = vunpack.c.l.b16 %v4038
        %v5022 = vunpack.c.h.b16 %v4038
        %v5023 = vunpack.c.l.b16 %v4039
        %v5024 = vunpack.c.h.b16 %v4039
        %v5025 = vunpack.c.l.b16 %v4040
        %v5026 = vunpack.c.h.b16 %v4040
        %v5027 = vunpack.c.l.b16 %v4041
        %v5028 = vunpack.c.h.b16 %v4041
        %v5029 = vunpack.c.l.b16 %v4042
        %v5030 = vunpack.c.h.b16 %v4042
        %v5031 = vunpack.c.l.b16 %v4043
        %v5032 = vunpack.c.h.b16 %v4043
        %v5033 = vunpack.c.l.b16 %v4044
        %v5034 = vunpack.c.h.b16 %v4044
        %v5035 = vunpack.c.l.b16 %v4045
        %v5036 = vunpack.c.h.b16 %v4045
        %v5037 = vunpack.c.l.b16 %v4046
        %v5038 = vunpack.c.h.b16 %v4046
        %v5039 = vunpack.c.l.b16 %v4047
        %v5040 = vunpack.c.h.b16 %v4047
        %v5041 = vunpack.c.l.b16 %v4048
        %v5042 = vunpack.c.h.b16 %v4048
        %v5043 = vunpack.c.l.b16 %v4049
        %v5044 = vunpack.c.h.b16 %v4049
        %v5045 = vunpack.c.l.b16 %v4050
        %v5046 = vunpack.c.h.b16 %v4050
        %v5047 = vunpack.c.l.b16 %v4051
        %v5048 = vunpack.c.h.b16 %v4051
        %v5049 = vunpack.c.l.b16 %v4052
        %v5050 = vunpack.c.h.b16 %v4052
        %v5051 = vunpack.c.l.b16 %v4053
        %v5052 = vunpack.c.h.b16 %v4053
        %v5053 = vunpack.c.l.b16 %v4054
        %v5054 = vunpack.c.h.b16 %v4054
        %v5055 = vunpack.c.l.b16 %v4055
        %v5056 = vunpack.c.h.b16 %v4055
        %v5057 = vpack.c.b16 %v5009, %v4993
        %v5058 = vpack.c.b16 %v5010, %v4994
        %v5059 = vpack.c.b16 %v5011, %v4995
        %v5060 = vpack.c.b16 %v5012, %v4996
        %v5061 = vpack.c.b16 %v5013, %v4997
        %v5062 = vpack.c.b16 %v5014, %v4998
        %v5063 = vpack.c.b16 %v5015, %v4999
        %v5064 = vpack.c.b16 %v5016, %v5000
        %v5065 = vpack.c.b16 %v5017, %v5001
        %v5066 = vpack.c.b16 %v5018, %v5002
        %v5067 = vpack.c.b16 %v5019, %v5003
        %v5068 = vpack.c.b16 %v5020, %v5004
        %v5069 = vpack.c.b16 %v5021, %v5005
        %v5070 = vpack.c.b16 %v5022, %v5006
        %v5071 = vpack.c.b16 %v5023, %v5007
        %v5072 = vpack.c.b16 %v5024, %v5008
        %v5073 = vpack.c.b16 %v5041, %v5025
        %v5074 = vpack.c.b16 %v5042, %v5026
        %v5075 = vpack.c.b16 %v5043, %v5027
        %v5076 = vpack.c.b16 %v5044, %v5028
        %v5077 = vpack.c.b16 %v5045, %v5029
        %v5078 = vpack.c.b16 %v5046, %v5030
        %v5079 = vpack.c.b16 %v5047, %v5031
        %v5080 = vpack.c.b16 %v5048, %v5032
        %v5081 = vpack.c.b16 %v5049, %v5033
        %v5082 = vpack.c.b16 %v5050, %v5034
        %v5083 = vpack.c.b16 %v5051, %v5035
        %v5084 = vpack.c.b16 %v5052, %v5036
        %v5085 = vpack.c.b16 %v5053, %v5037
        %v5086 = vpack.c.b16 %v5054, %v5038
        %v5087 = vpack.c.b16 %v5055, %v5039
        %v5088 = vpack.c.b16 %v5056, %v5040
        %v5153 = vunpack.c.l.b16 %v4312
        %v5154 = vunpack.c.h.b16 %v4312
        %v5155 = vunpack.c.l.b16 %v4313
        %v5156 = vunpack.c.h.b16 %v4313
        %v5157 = vunpack.c.l.b16 %v4314
        %v5158 = vunpack.c.h.b16 %v4314
        %v5159 = vunpack.c.l.b16 %v4315
        %v5160 = vunpack.c.h.b16 %v4315
        %v5161 = vunpack.c.l.b16 %v4316
        %v5162 = vunpack.c.h.b16 %v4316
        %v5163 = vunpack.c.l.b16 %v4317
        %v5164 = vunpack.c.h.b16 %v4317
        %v5165 = vunpack.c.l.b16 %v4318
        %v5166 = vunpack.c.h.b16 %v4318
        %v5167 = vunpack.c.l.b16 %v4319
        %v5168 = vunpack.c.h.b16 %v4319
        %v5169 = vunpack.c.l.b16 %v4320
        %v5170 = vunpack.c.h.b16 %v4320
        %v5171 = vunpack.c.l.b16 %v4321
        %v5172 = vunpack.c.h.b16 %v4321
        %v5173 = vunpack.c.l.b16 %v4322
        %v5174 = vunpack.c.h.b16 %v4322
        %v5175 = vunpack.c.l.b16 %v4323
        %v5176 = vunpack.c.h.b16 %v4323
        %v5177 = vunpack.c.l.b16 %v4324
        %v5178 = vunpack.c.h.b16 %v4324
        %v5179 = vunpack.c.l.b16 %v4325
        %v5180 = vunpack.c.h.b16 %v4325
        %v5181 = vunpack.c.l.b16 %v4326
        %v5182 = vunpack.c.h.b16 %v4326
        %v5183 = vunpack.c.l.b16 %v4327
        %v5184 = vunpack.c.h.b16 %v4327
        %v5185 = vunpack.c.l.b16 %v4328
        %v5186 = vunpack.c.h.b16 %v4328
        %v5187 = vunpack.c.l.b16 %v4329
        %v5188 = vunpack.c.h.b16 %v4329
        %v5189 = vunpack.c.l.b16 %v4330
        %v5190 = vunpack.c.h.b16 %v4330
        %v5191 = vunpack.c.l.b16 %v4331
        %v5192 = vunpack.c.h.b16 %v4331
        %v5193 = vunpack.c.l.b16 %v4332
        %v5194 = vunpack.c.h.b16 %v4332
        %v5195 = vunpack.c.l.b16 %v4333
        %v5196 = vunpack.c.h.b16 %v4333
        %v5197 = vunpack.c.l.b16 %v4334
        %v5198 = vunpack.c.h.b16 %v4334
        %v5199 = vunpack.c.l.b16 %v4335
        %v5200 = vunpack.c.h.b16 %v4335
        %v5201 = vunpack.c.l.b16 %v4336
        %v5202 = vunpack.c.h.b16 %v4336
        %v5203 = vunpack.c.l.b16 %v4337
        %v5204 = vunpack.c.h.b16 %v4337
        %v5205 = vunpack.c.l.b16 %v4338
        %v5206 = vunpack.c.h.b16 %v4338
        %v5207 = vunpack.c.l.b16 %v4339
        %v5208 = vunpack.c.h.b16 %v4339
        %v5209 = vunpack.c.l.b16 %v4340
        %v5210 = vunpack.c.h.b16 %v4340
        %v5211 = vunpack.c.l.b16 %v4341
        %v5212 = vunpack.c.h.b16 %v4341
        %v5213 = vunpack.c.l.b16 %v4342
        %v5214 = vunpack.c.h.b16 %v4342
        %v5215 = vunpack.c.l.b16 %v4343
        %v5216 = vunpack.c.h.b16 %v4343
        %v5217 = vpack.c.b16 %v5169, %v5153
        %v5218 = vpack.c.b16 %v5170, %v5154
        %v5219 = vpack.c.b16 %v5171, %v5155
        %v5220 = vpack.c.b16 %v5172, %v5156
        %v5221 = vpack.c.b16 %v5173, %v5157
        %v5222 = vpack.c.b16 %v5174, %v5158
        %v5223 = vpack.c.b16 %v5175, %v5159
        %v5224 = vpack.c.b16 %v5176, %v5160
        %v5225 = vpack.c.b16 %v5177, %v5161
        %v5226 = vpack.c.b16 %v5178, %v5162
        %v5227 = vpack.c.b16 %v5179, %v5163
        %v5228 = vpack.c.b16 %v5180, %v5164
        %v5229 = vpack.c.b16 %v5181, %v5165
        %v5230 = vpack.c.b16 %v5182, %v5166
        %v5231 = vpack.c.b16 %v5183, %v5167
        %v5232 = vpack.c.b16 %v5184, %v5168
        %v5233 = vpack.c.b16 %v5201, %v5185
        %v5234 = vpack.c.b16 %v5202, %v5186
        %v5235 = vpack.c.b16 %v5203, %v5187
        %v5236 = vpack.c.b16 %v5204, %v5188
        %v5237 = vpack.c.b16 %v5205, %v5189
        %v5238 = vpack.c.b16 %v5206, %v5190
        %v5239 = vpack.c.b16 %v5207, %v5191
        %v5240 = vpack.c.b16 %v5208, %v5192
        %v5241 = vpack.c.b16 %v5209, %v5193
        %v5242 = vpack.c.b16 %v5210, %v5194
        %v5243 = vpack.c.b16 %v5211, %v5195
        %v5244 = vpack.c.b16 %v5212, %v5196
        %v5245 = vpack.c.b16 %v5213, %v5197
        %v5246 = vpack.c.b16 %v5214, %v5198
        %v5247 = vpack.c.b16 %v5215, %v5199
        %v5248 = vpack.c.b16 %v5216, %v5200
        %v5313 = vunpack.c.l.b16 %v4609
        %v5314 = vunpack.c.h.b16 %v4609
        %v5315 = vunpack.c.l.b16 %v4610
        %v5316 = vunpack.c.h.b16 %v4610
        %v5317 = vunpack.c.l.b16 %v4611
        %v5318 = vunpack.c.h.b16 %v4611
        %v5319 = vunpack.c.l.b16 %v4612
        %v5320 = vunpack.c.h.b16 %v4612
        %v5321 = vunpack.c.l.b16 %v4613
        %v5322 = vunpack.c.h.b16 %v4613
        %v5323 = vunpack.c.l.b16 %v4614
        %v5324 = vunpack.c.h.b16 %v4614
        %v5325 = vunpack.c.l.b16 %v4615
        %v5326 = vunpack.c.h.b16 %v4615
        %v5327 = vunpack.c.l.b16 %v4616
        %v5328 = vunpack.c.h.b16 %v4616
        %v5329 = vunpack.c.l.b16 %v4617
        %v5330 = vunpack.c.h.b16 %v4617
        %v5331 = vunpack.c.l.b16 %v4618
        %v5332 = vunpack.c.h.b16 %v4618
        %v5333 = vunpack.c.l.b16 %v4619
        %v5334 = vunpack.c.h.b16 %v4619
        %v5335 = vunpack.c.l.b16 %v4620
        %v5336 = vunpack.c.h.b16 %v4620
        %v5337 = vunpack.c.l.b16 %v4621
        %v5338 = vunpack.c.h.b16 %v4621
        %v5339 = vunpack.c.l.b16 %v4622
        %v5340 = vunpack.c.h.b16 %v4622
        %v5341 = vunpack.c.l.b16 %v4623
        %v5342 = vunpack.c.h.b16 %v4623
        %v5343 = vunpack.c.l.b16 %v4624
        %v5344 = vunpack.c.h.b16 %v4624
        %v5345 = vunpack.c.l.b16 %v4625
        %v5346 = vunpack.c.h.b16 %v4625
        %v5347 = vunpack.c.l.b16 %v4626
        %v5348 = vunpack.c.h.b16 %v4626
        %v5349 = vunpack.c.l.b16 %v4627
        %v5350 = vunpack.c.h.b16 %v4627
        %v5351 = vunpack.c.l.b16 %v4628
        %v5352 = vunpack.c.h.b16 %v4628
        %v5353 = vunpack.c.l.b16 %v4629
        %v5354 = vunpack.c.h.b16 %v4629
        %v5355 = vunpack.c.l.b16 %v4630
        %v5356 = vunpack.c.h.b16 %v4630
        %v5357 = vunpack.c.l.b16 %v4631
        %v5358 = vunpack.c.h.b16 %v4631
        %v5359 = vunpack.c.l.b16 %v4632
        %v5360 = vunpack.c.h.b16 %v4632
        %v5361 = vunpack.c.l.b16 %v4633
        %v5362 = vunpack.c.h.b16 %v4633
        %v5363 = vunpack.c.l.b16 %v4634
        %v5364 = vunpack.c.h.b16 %v4634
        %v5365 = vunpack.c.l.b16 %v4635
        %v5366 = vunpack.c.h.b16 %v4635
        %v5367 = vunpack.c.l.b16 %v4636
        %v5368 = vunpack.c.h.b16 %v4636
        %v5369 = vunpack.c.l.b16 %v4637
        %v5370 = vunpack.c.h.b16 %v4637
        %v5371 = vunpack.c.l.b16 %v4638
        %v5372 = vunpack.c.h.b16 %v4638
        %v5373 = vunpack.c.l.b16 %v4639
        %v5374 = vunpack.c.h.b16 %v4639
        %v5375 = vunpack.c.l.b16 %v4640
        %v5376 = vunpack.c.h.b16 %v4640
        %v5377 = vpack.c.b16 %v5329, %v5313
        %v5378 = vpack.c.b16 %v5330, %v5314
        %v5379 = vpack.c.b16 %v5331, %v5315
        %v5380 = vpack.c.b16 %v5332, %v5316
        %v5381 = vpack.c.b16 %v5333, %v5317
        %v5382 = vpack.c.b16 %v5334, %v5318
        %v5383 = vpack.c.b16 %v5335, %v5319
        %v5384 = vpack.c.b16 %v5336, %v5320
        %v5385 = vpack.c.b16 %v5337, %v5321
        %v5386 = vpack.c.b16 %v5338, %v5322
        %v5387 = vpack.c.b16 %v5339, %v5323
        %v5388 = vpack.c.b16 %v5340, %v5324
        %v5389 = vpack.c.b16 %v5341, %v5325
        %v5390 = vpack.c.b16 %v5342, %v5326
        %v5391 = vpack.c.b16 %v5343, %v5327
        %v5392 = vpack.c.b16 %v5344, %v5328
        %v5393 = vpack.c.b16 %v5361, %v5345
        %v5394 = vpack.c.b16 %v5362, %v5346
        %v5395 = vpack.c.b16 %v5363, %v5347
        %v5396 = vpack.c.b16 %v5364, %v5348
        %v5397 = vpack.c.b16 %v5365, %v5349
        %v5398 = vpack.c.b16 %v5366, %v5350
        %v5399 = vpack.c.b16 %v5367, %v5351
        %v5400 = vpack.c.b16 %v5368, %v5352
        %v5401 = vpack.c.b16 %v5369, %v5353
        %v5402 = vpack.c.b16 %v5370, %v5354
        %v5403 = vpack.c.b16 %v5371, %v5355
        %v5404 = vpack.c.b16 %v5372, %v5356
        %v5405 = vpack.c.b16 %v5373, %v5357
        %v5406 = vpack.c.b16 %v5374, %v5358
        %v5407 = vpack.c.b16 %v5375, %v5359
        %v5408 = vpack.c.b16 %v5376, %v5360
        %v5445 = vunpack.c.l.b16 %v377
        %v5446 = vunpack.c.h.b16 %v377
        %v5447 = vunpack.c.l.b16 %v378
        %v5448 = vunpack.c.h.b16 %v378
        %v5449 = vunpack.c.l.b16 %v379
        %v5450 = vunpack.c.h.b16 %v379
        %v5451 = vunpack.c.l.b16 %v380
        %v5452 = vunpack.c.h.b16 %v380
        %v5453 = vpack.c.b16 %v5447, %v5445
        %v5454 = vpack.c.b16 %v5448, %v5446
        %v5455 = vpack.c.b16 %v5451, %v5449
        %v5456 = vpack.c.b16 %v5452, %v5450
        %vm5459 = vcmask 261120
        %v5461 = vsel %vm5459, %v5454, 0
        %v5464 = vsel %vm5459, %v5456, 0
        %5466 = vmatpush.bf16.msra.mxu0 %v5233
        %5467 = vmatpush.bf16.msra.mxu0 %v5217
        %5468 = vmatpush.bf16.msra.mxu0 %v5073
        %5469 = vmatpush.bf16.msra.mxu0 %v5057
        %5470 = vmatpush.bf16.msra.mxu0 %v4913
        %5471 = vmatpush.bf16.msra.mxu0 %v4897
        %5472 = vmatpush.bf16.msra.mxu0 %v4753
        %5473 = vmatpush.bf16.msra.mxu0 %v4737
        %5474 = vmatmul.bf16.gmra.mxu0 %v5453
        %v5475 = vpop.f32.mrf.mxu0
        %v5476 = vadd.f32 0.0, %v5475
        %v5477 = vpop.f32.mrf.mxu0
        %v5478 = vadd.f32 0.0, %v5477
        %5479 = vmatmul.bf16.gmra.mxu0 %v5455
        %v5480 = vpop.f32.mrf.mxu0
        %v5481 = vadd.f32 0.0, %v5480
        %v5482 = vpop.f32.mrf.mxu0
        %v5483 = vadd.f32 0.0, %v5482
        %5484 = vdwg.mxu0
        %5485 = vmatpush.bf16.msra.mxu0 0
        %5486 = vmatpush.bf16.msra.mxu0 0
        %5487 = vmatpush.bf16.msra.mxu0 0
        %5488 = vmatpush.bf16.msra.mxu0 0
        %5489 = vmatpush.bf16.msra.mxu0 0
        %5490 = vmatpush.bf16.msra.mxu0 0
        %5491 = vmatpush.bf16.msra.mxu0 %v5393
        %5492 = vmatpush.bf16.msra.mxu0 %v5377
        %5493 = vmatmul.bf16.gmra.mxu0 %v5461
        %v5494 = vpop.f32.mrf.mxu0
        %v5495 = vadd.f32 %v5476, %v5494
        %v5496 = vpop.f32.mrf.mxu0
        %v5497 = vadd.f32 %v5478, %v5496
        %5498 = vmatmul.bf16.gmra.mxu0 %v5464
        %v5499 = vpop.f32.mrf.mxu0
        %v5500 = vadd.f32 %v5481, %v5499
        %v5501 = vpop.f32.mrf.mxu0
        %v5502 = vadd.f32 %v5483, %v5501
        %5503 = vdwg.mxu0
        %5504 = vmatpush.bf16.msra.mxu0 %v5234
        %5505 = vmatpush.bf16.msra.mxu0 %v5218
        %5506 = vmatpush.bf16.msra.mxu0 %v5074
        %5507 = vmatpush.bf16.msra.mxu0 %v5058
        %5508 = vmatpush.bf16.msra.mxu0 %v4914
        %5509 = vmatpush.bf16.msra.mxu0 %v4898
        %5510 = vmatpush.bf16.msra.mxu0 %v4754
        %5511 = vmatpush.bf16.msra.mxu0 %v4738
        %5512 = vmatmul.bf16.gmra.mxu0 %v5453
        %v5513 = vpop.f32.mrf.mxu0
        %v5514 = vadd.f32 0.0, %v5513
        %v5515 = vpop.f32.mrf.mxu0
        %v5516 = vadd.f32 0.0, %v5515
        %5517 = vmatmul.bf16.gmra.mxu0 %v5455
        %v5518 = vpop.f32.mrf.mxu0
        %v5519 = vadd.f32 0.0, %v5518
        %v5520 = vpop.f32.mrf.mxu0
        %v5521 = vadd.f32 0.0, %v5520
        %5522 = vdwg.mxu0
        %5523 = vmatpush.bf16.msra.mxu0 0
        %5524 = vmatpush.bf16.msra.mxu0 0
        %5525 = vmatpush.bf16.msra.mxu0 0
        %5526 = vmatpush.bf16.msra.mxu0 0
        %5527 = vmatpush.bf16.msra.mxu0 0
        %5528 = vmatpush.bf16.msra.mxu0 0
        %5529 = vmatpush.bf16.msra.mxu0 %v5394
        %5530 = vmatpush.bf16.msra.mxu0 %v5378
        %5531 = vmatmul.bf16.gmra.mxu0 %v5461
        %v5532 = vpop.f32.mrf.mxu0
        %v5533 = vadd.f32 %v5514, %v5532
        %v5534 = vpop.f32.mrf.mxu0
        %v5535 = vadd.f32 %v5516, %v5534
        %5536 = vmatmul.bf16.gmra.mxu0 %v5464
        %v5537 = vpop.f32.mrf.mxu0
        %v5538 = vadd.f32 %v5519, %v5537
        %v5539 = vpop.f32.mrf.mxu0
        %v5540 = vadd.f32 %v5521, %v5539
        %5541 = vdwg.mxu0
        %5542 = vmatpush.bf16.msra.mxu0 %v5235
        %5543 = vmatpush.bf16.msra.mxu0 %v5219
        %5544 = vmatpush.bf16.msra.mxu0 %v5075
        %5545 = vmatpush.bf16.msra.mxu0 %v5059
        %5546 = vmatpush.bf16.msra.mxu0 %v4915
        %5547 = vmatpush.bf16.msra.mxu0 %v4899
        %5548 = vmatpush.bf16.msra.mxu0 %v4755
        %5549 = vmatpush.bf16.msra.mxu0 %v4739
        %5550 = vmatmul.bf16.gmra.mxu0 %v5453
        %v5551 = vpop.f32.mrf.mxu0
        %v5552 = vadd.f32 0.0, %v5551
        %v5553 = vpop.f32.mrf.mxu0
        %v5554 = vadd.f32 0.0, %v5553
        %5555 = vmatmul.bf16.gmra.mxu0 %v5455
        %v5556 = vpop.f32.mrf.mxu0
        %v5557 = vadd.f32 0.0, %v5556
        %v5558 = vpop.f32.mrf.mxu0
        %v5559 = vadd.f32 0.0, %v5558
        %5560 = vdwg.mxu0
        %5561 = vmatpush.bf16.msra.mxu0 0
        %5562 = vmatpush.bf16.msra.mxu0 0
        %5563 = vmatpush.bf16.msra.mxu0 0
        %5564 = vmatpush.bf16.msra.mxu0 0
        %5565 = vmatpush.bf16.msra.mxu0 0
        %5566 = vmatpush.bf16.msra.mxu0 0
        %5567 = vmatpush.bf16.msra.mxu0 %v5395
        %5568 = vmatpush.bf16.msra.mxu0 %v5379
        %5569 = vmatmul.bf16.gmra.mxu0 %v5461
        %v5570 = vpop.f32.mrf.mxu0
        %v5571 = vadd.f32 %v5552, %v5570
        %v5572 = vpop.f32.mrf.mxu0
        %v5573 = vadd.f32 %v5554, %v5572
        %5574 = vmatmul.bf16.gmra.mxu0 %v5464
        %v5575 = vpop.f32.mrf.mxu0
        %v5576 = vadd.f32 %v5557, %v5575
        %v5577 = vpop.f32.mrf.mxu0
        %v5578 = vadd.f32 %v5559, %v5577
        %5579 = vdwg.mxu0
        %5580 = vmatpush.bf16.msra.mxu0 %v5236
        %5581 = vmatpush.bf16.msra.mxu0 %v5220
        %5582 = vmatpush.bf16.msra.mxu0 %v5076
        %5583 = vmatpush.bf16.msra.mxu0 %v5060
        %5584 = vmatpush.bf16.msra.mxu0 %v4916
        %5585 = vmatpush.bf16.msra.mxu0 %v4900
        %5586 = vmatpush.bf16.msra.mxu0 %v4756
        %5587 = vmatpush.bf16.msra.mxu0 %v4740
        %5588 = vmatmul.bf16.gmra.mxu0 %v5453
        %v5589 = vpop.f32.mrf.mxu0
        %v5590 = vadd.f32 0.0, %v5589
        %v5591 = vpop.f32.mrf.mxu0
        %v5592 = vadd.f32 0.0, %v5591
        %5593 = vmatmul.bf16.gmra.mxu0 %v5455
        %v5594 = vpop.f32.mrf.mxu0
        %v5595 = vadd.f32 0.0, %v5594
        %v5596 = vpop.f32.mrf.mxu0
        %v5597 = vadd.f32 0.0, %v5596
        %5598 = vdwg.mxu0
        %5599 = vmatpush.bf16.msra.mxu0 0
        %5600 = vmatpush.bf16.msra.mxu0 0
        %5601 = vmatpush.bf16.msra.mxu0 0
        %5602 = vmatpush.bf16.msra.mxu0 0
        %5603 = vmatpush.bf16.msra.mxu0 0
        %5604 = vmatpush.bf16.msra.mxu0 0
        %5605 = vmatpush.bf16.msra.mxu0 %v5396
        %5606 = vmatpush.bf16.msra.mxu0 %v5380
        %5607 = vmatmul.bf16.gmra.mxu0 %v5461
        %v5608 = vpop.f32.mrf.mxu0
        %v5609 = vadd.f32 %v5590, %v5608
        %v5610 = vpop.f32.mrf.mxu0
        %v5611 = vadd.f32 %v5592, %v5610
        %5612 = vmatmul.bf16.gmra.mxu0 %v5464
        %v5613 = vpop.f32.mrf.mxu0
        %v5614 = vadd.f32 %v5595, %v5613
        %v5615 = vpop.f32.mrf.mxu0
        %v5616 = vadd.f32 %v5597, %v5615
        %5617 = vdwg.mxu0
        %5618 = vmatpush.bf16.msra.mxu0 %v5237
        %5619 = vmatpush.bf16.msra.mxu0 %v5221
        %5620 = vmatpush.bf16.msra.mxu0 %v5077
        %5621 = vmatpush.bf16.msra.mxu0 %v5061
        %5622 = vmatpush.bf16.msra.mxu0 %v4917
        %5623 = vmatpush.bf16.msra.mxu0 %v4901
        %5624 = vmatpush.bf16.msra.mxu0 %v4757
        %5625 = vmatpush.bf16.msra.mxu0 %v4741
        %5626 = vmatmul.bf16.gmra.mxu0 %v5453
        %v5627 = vpop.f32.mrf.mxu0
        %v5628 = vadd.f32 0.0, %v5627
        %v5629 = vpop.f32.mrf.mxu0
        %v5630 = vadd.f32 0.0, %v5629
        %5631 = vmatmul.bf16.gmra.mxu0 %v5455
        %v5632 = vpop.f32.mrf.mxu0
        %v5633 = vadd.f32 0.0, %v5632
        %v5634 = vpop.f32.mrf.mxu0
        %v5635 = vadd.f32 0.0, %v5634
        %5636 = vdwg.mxu0
        %5637 = vmatpush.bf16.msra.mxu0 0
        %5638 = vmatpush.bf16.msra.mxu0 0
        %5639 = vmatpush.bf16.msra.mxu0 0
        %5640 = vmatpush.bf16.msra.mxu0 0
        %5641 = vmatpush.bf16.msra.mxu0 0
        %5642 = vmatpush.bf16.msra.mxu0 0
        %5643 = vmatpush.bf16.msra.mxu0 %v5397
        %5644 = vmatpush.bf16.msra.mxu0 %v5381
        %5645 = vmatmul.bf16.gmra.mxu0 %v5461
        %v5646 = vpop.f32.mrf.mxu0
        %v5647 = vadd.f32 %v5628, %v5646
        %v5648 = vpop.f32.mrf.mxu0
        %v5649 = vadd.f32 %v5630, %v5648
        %5650 = vmatmul.bf16.gmra.mxu0 %v5464
        %v5651 = vpop.f32.mrf.mxu0
        %v5652 = vadd.f32 %v5633, %v5651
        %v5653 = vpop.f32.mrf.mxu0
        %v5654 = vadd.f32 %v5635, %v5653
        %5655 = vdwg.mxu0
        %5656 = vmatpush.bf16.msra.mxu0 %v5238
        %5657 = vmatpush.bf16.msra.mxu0 %v5222
        %5658 = vmatpush.bf16.msra.mxu0 %v5078
        %5659 = vmatpush.bf16.msra.mxu0 %v5062
        %5660 = vmatpush.bf16.msra.mxu0 %v4918
        %5661 = vmatpush.bf16.msra.mxu0 %v4902
        %5662 = vmatpush.bf16.msra.mxu0 %v4758
        %5663 = vmatpush.bf16.msra.mxu0 %v4742
        %5664 = vmatmul.bf16.gmra.mxu0 %v5453
        %v5665 = vpop.f32.mrf.mxu0
        %v5666 = vadd.f32 0.0, %v5665
        %v5667 = vpop.f32.mrf.mxu0
        %v5668 = vadd.f32 0.0, %v5667
        %5669 = vmatmul.bf16.gmra.mxu0 %v5455
        %v5670 = vpop.f32.mrf.mxu0
        %v5671 = vadd.f32 0.0, %v5670
        %v5672 = vpop.f32.mrf.mxu0
        %v5673 = vadd.f32 0.0, %v5672
        %5674 = vdwg.mxu0
        %5675 = vmatpush.bf16.msra.mxu0 0
        %5676 = vmatpush.bf16.msra.mxu0 0
        %5677 = vmatpush.bf16.msra.mxu0 0
        %5678 = vmatpush.bf16.msra.mxu0 0
        %5679 = vmatpush.bf16.msra.mxu0 0
        %5680 = vmatpush.bf16.msra.mxu0 0
        %5681 = vmatpush.bf16.msra.mxu0 %v5398
        %5682 = vmatpush.bf16.msra.mxu0 %v5382
        %5683 = vmatmul.bf16.gmra.mxu0 %v5461
        %v5684 = vpop.f32.mrf.mxu0
        %v5685 = vadd.f32 %v5666, %v5684
        %v5686 = vpop.f32.mrf.mxu0
        %v5687 = vadd.f32 %v5668, %v5686
        %5688 = vmatmul.bf16.gmra.mxu0 %v5464
        %v5689 = vpop.f32.mrf.mxu0
        %v5690 = vadd.f32 %v5671, %v5689
        %v5691 = vpop.f32.mrf.mxu0
        %v5692 = vadd.f32 %v5673, %v5691
        %5693 = vdwg.mxu0
        %5694 = vmatpush.bf16.msra.mxu0 %v5239
        %5695 = vmatpush.bf16.msra.mxu0 %v5223
        %5696 = vmatpush.bf16.msra.mxu0 %v5079
        %5697 = vmatpush.bf16.msra.mxu0 %v5063
        %5698 = vmatpush.bf16.msra.mxu0 %v4919
        %5699 = vmatpush.bf16.msra.mxu0 %v4903
        %5700 = vmatpush.bf16.msra.mxu0 %v4759
        %5701 = vmatpush.bf16.msra.mxu0 %v4743
        %5702 = vmatmul.bf16.gmra.mxu0 %v5453
        %v5703 = vpop.f32.mrf.mxu0
        %v5704 = vadd.f32 0.0, %v5703
        %v5705 = vpop.f32.mrf.mxu0
        %v5706 = vadd.f32 0.0, %v5705
        %5707 = vmatmul.bf16.gmra.mxu0 %v5455
        %v5708 = vpop.f32.mrf.mxu0
        %v5709 = vadd.f32 0.0, %v5708
        %v5710 = vpop.f32.mrf.mxu0
        %v5711 = vadd.f32 0.0, %v5710
        %5712 = vdwg.mxu0
        %5713 = vmatpush.bf16.msra.mxu0 0
        %5714 = vmatpush.bf16.msra.mxu0 0
        %5715 = vmatpush.bf16.msra.mxu0 0
        %5716 = vmatpush.bf16.msra.mxu0 0
        %5717 = vmatpush.bf16.msra.mxu0 0
        %5718 = vmatpush.bf16.msra.mxu0 0
        %5719 = vmatpush.bf16.msra.mxu0 %v5399
        %5720 = vmatpush.bf16.msra.mxu0 %v5383
        %5721 = vmatmul.bf16.gmra.mxu0 %v5461
        %v5722 = vpop.f32.mrf.mxu0
        %v5723 = vadd.f32 %v5704, %v5722
        %v5724 = vpop.f32.mrf.mxu0
        %v5725 = vadd.f32 %v5706, %v5724
        %5726 = vmatmul.bf16.gmra.mxu0 %v5464
        %v5727 = vpop.f32.mrf.mxu0
        %v5728 = vadd.f32 %v5709, %v5727
        %v5729 = vpop.f32.mrf.mxu0
        %v5730 = vadd.f32 %v5711, %v5729
        %5731 = vdwg.mxu0
        %5732 = vmatpush.bf16.msra.mxu0 %v5240
        %5733 = vmatpush.bf16.msra.mxu0 %v5224
        %5734 = vmatpush.bf16.msra.mxu0 %v5080
        %5735 = vmatpush.bf16.msra.mxu0 %v5064
        %5736 = vmatpush.bf16.msra.mxu0 %v4920
        %5737 = vmatpush.bf16.msra.mxu0 %v4904
        %5738 = vmatpush.bf16.msra.mxu0 %v4760
        %5739 = vmatpush.bf16.msra.mxu0 %v4744
        %5740 = vmatmul.bf16.gmra.mxu0 %v5453
        %v5741 = vpop.f32.mrf.mxu0
        %v5742 = vadd.f32 0.0, %v5741
        %v5743 = vpop.f32.mrf.mxu0
        %v5744 = vadd.f32 0.0, %v5743
        %5745 = vmatmul.bf16.gmra.mxu0 %v5455
        %v5746 = vpop.f32.mrf.mxu0
        %v5747 = vadd.f32 0.0, %v5746
        %v5748 = vpop.f32.mrf.mxu0
        %v5749 = vadd.f32 0.0, %v5748
        %5750 = vdwg.mxu0
        %5751 = vmatpush.bf16.msra.mxu0 0
        %5752 = vmatpush.bf16.msra.mxu0 0
        %5753 = vmatpush.bf16.msra.mxu0 0
        %5754 = vmatpush.bf16.msra.mxu0 0
        %5755 = vmatpush.bf16.msra.mxu0 0
        %5756 = vmatpush.bf16.msra.mxu0 0
        %5757 = vmatpush.bf16.msra.mxu0 %v5400
        %5758 = vmatpush.bf16.msra.mxu0 %v5384
        %5759 = vmatmul.bf16.gmra.mxu0 %v5461
        %v5760 = vpop.f32.mrf.mxu0
        %v5761 = vadd.f32 %v5742, %v5760
        %v5762 = vpop.f32.mrf.mxu0
        %v5763 = vadd.f32 %v5744, %v5762
        %5764 = vmatmul.bf16.gmra.mxu0 %v5464
        %v5765 = vpop.f32.mrf.mxu0
        %v5766 = vadd.f32 %v5747, %v5765
        %v5767 = vpop.f32.mrf.mxu0
        %v5768 = vadd.f32 %v5749, %v5767
        %5769 = vdwg.mxu0
        %5770 = vmatpush.bf16.msra.mxu0 %v5241
        %5771 = vmatpush.bf16.msra.mxu0 %v5225
        %5772 = vmatpush.bf16.msra.mxu0 %v5081
        %5773 = vmatpush.bf16.msra.mxu0 %v5065
        %5774 = vmatpush.bf16.msra.mxu0 %v4921
        %5775 = vmatpush.bf16.msra.mxu0 %v4905
        %5776 = vmatpush.bf16.msra.mxu0 %v4761
        %5777 = vmatpush.bf16.msra.mxu0 %v4745
        %5778 = vmatmul.bf16.gmra.mxu0 %v5453
        %v5779 = vpop.f32.mrf.mxu0
        %v5780 = vadd.f32 0.0, %v5779
        %v5781 = vpop.f32.mrf.mxu0
        %v5782 = vadd.f32 0.0, %v5781
        %5783 = vmatmul.bf16.gmra.mxu0 %v5455
        %v5784 = vpop.f32.mrf.mxu0
        %v5785 = vadd.f32 0.0, %v5784
        %v5786 = vpop.f32.mrf.mxu0
        %v5787 = vadd.f32 0.0, %v5786
        %5788 = vdwg.mxu0
        %5789 = vmatpush.bf16.msra.mxu0 0
        %5790 = vmatpush.bf16.msra.mxu0 0
        %5791 = vmatpush.bf16.msra.mxu0 0
        %5792 = vmatpush.bf16.msra.mxu0 0
        %5793 = vmatpush.bf16.msra.mxu0 0
        %5794 = vmatpush.bf16.msra.mxu0 0
        %5795 = vmatpush.bf16.msra.mxu0 %v5401
        %5796 = vmatpush.bf16.msra.mxu0 %v5385
        %5797 = vmatmul.bf16.gmra.mxu0 %v5461
        %v5798 = vpop.f32.mrf.mxu0
        %v5799 = vadd.f32 %v5780, %v5798
        %v5800 = vpop.f32.mrf.mxu0
        %v5801 = vadd.f32 %v5782, %v5800
        %5802 = vmatmul.bf16.gmra.mxu0 %v5464
        %v5803 = vpop.f32.mrf.mxu0
        %v5804 = vadd.f32 %v5785, %v5803
        %v5805 = vpop.f32.mrf.mxu0
        %v5806 = vadd.f32 %v5787, %v5805
        %5807 = vdwg.mxu0
        %5808 = vmatpush.bf16.msra.mxu0 %v5242
        %5809 = vmatpush.bf16.msra.mxu0 %v5226
        %5810 = vmatpush.bf16.msra.mxu0 %v5082
        %5811 = vmatpush.bf16.msra.mxu0 %v5066
        %5812 = vmatpush.bf16.msra.mxu0 %v4922
        %5813 = vmatpush.bf16.msra.mxu0 %v4906
        %5814 = vmatpush.bf16.msra.mxu0 %v4762
        %5815 = vmatpush.bf16.msra.mxu0 %v4746
        %5816 = vmatmul.bf16.gmra.mxu0 %v5453
        %v5817 = vpop.f32.mrf.mxu0
        %v5818 = vadd.f32 0.0, %v5817
        %v5819 = vpop.f32.mrf.mxu0
        %v5820 = vadd.f32 0.0, %v5819
        %5821 = vmatmul.bf16.gmra.mxu0 %v5455
        %v5822 = vpop.f32.mrf.mxu0
        %v5823 = vadd.f32 0.0, %v5822
        %v5824 = vpop.f32.mrf.mxu0
        %v5825 = vadd.f32 0.0, %v5824
        %5826 = vdwg.mxu0
        %5827 = vmatpush.bf16.msra.mxu0 0
        %5828 = vmatpush.bf16.msra.mxu0 0
        %5829 = vmatpush.bf16.msra.mxu0 0
        %5830 = vmatpush.bf16.msra.mxu0 0
        %5831 = vmatpush.bf16.msra.mxu0 0
        %5832 = vmatpush.bf16.msra.mxu0 0
        %5833 = vmatpush.bf16.msra.mxu0 %v5402
        %5834 = vmatpush.bf16.msra.mxu0 %v5386
        %5835 = vmatmul.bf16.gmra.mxu0 %v5461
        %v5836 = vpop.f32.mrf.mxu0
        %v5837 = vadd.f32 %v5818, %v5836
        %v5838 = vpop.f32.mrf.mxu0
        %v5839 = vadd.f32 %v5820, %v5838
        %5840 = vmatmul.bf16.gmra.mxu0 %v5464
        %v5841 = vpop.f32.mrf.mxu0
        %v5842 = vadd.f32 %v5823, %v5841
        %v5843 = vpop.f32.mrf.mxu0
        %v5844 = vadd.f32 %v5825, %v5843
        %5845 = vdwg.mxu0
        %5846 = vmatpush.bf16.msra.mxu0 %v5243
        %5847 = vmatpush.bf16.msra.mxu0 %v5227
        %5848 = vmatpush.bf16.msra.mxu0 %v5083
        %5849 = vmatpush.bf16.msra.mxu0 %v5067
        %5850 = vmatpush.bf16.msra.mxu0 %v4923
        %5851 = vmatpush.bf16.msra.mxu0 %v4907
        %5852 = vmatpush.bf16.msra.mxu0 %v4763
        %5853 = vmatpush.bf16.msra.mxu0 %v4747
        %5854 = vmatmul.bf16.gmra.mxu0 %v5453
        %v5855 = vpop.f32.mrf.mxu0
        %v5856 = vadd.f32 0.0, %v5855
        %v5857 = vpop.f32.mrf.mxu0
        %v5858 = vadd.f32 0.0, %v5857
        %5859 = vmatmul.bf16.gmra.mxu0 %v5455
        %v5860 = vpop.f32.mrf.mxu0
        %v5861 = vadd.f32 0.0, %v5860
        %v5862 = vpop.f32.mrf.mxu0
        %v5863 = vadd.f32 0.0, %v5862
        %5864 = vdwg.mxu0
        %5865 = vmatpush.bf16.msra.mxu0 0
        %5866 = vmatpush.bf16.msra.mxu0 0
        %5867 = vmatpush.bf16.msra.mxu0 0
        %5868 = vmatpush.bf16.msra.mxu0 0
        %5869 = vmatpush.bf16.msra.mxu0 0
        %5870 = vmatpush.bf16.msra.mxu0 0
        %5871 = vmatpush.bf16.msra.mxu0 %v5403
        %5872 = vmatpush.bf16.msra.mxu0 %v5387
        %5873 = vmatmul.bf16.gmra.mxu0 %v5461
        %v5874 = vpop.f32.mrf.mxu0
        %v5875 = vadd.f32 %v5856, %v5874
        %v5876 = vpop.f32.mrf.mxu0
        %v5877 = vadd.f32 %v5858, %v5876
        %5878 = vmatmul.bf16.gmra.mxu0 %v5464
        %v5879 = vpop.f32.mrf.mxu0
        %v5880 = vadd.f32 %v5861, %v5879
        %v5881 = vpop.f32.mrf.mxu0
        %v5882 = vadd.f32 %v5863, %v5881
        %5883 = vdwg.mxu0
        %5884 = vmatpush.bf16.msra.mxu0 %v5244
        %5885 = vmatpush.bf16.msra.mxu0 %v5228
        %5886 = vmatpush.bf16.msra.mxu0 %v5084
        %5887 = vmatpush.bf16.msra.mxu0 %v5068
        %5888 = vmatpush.bf16.msra.mxu0 %v4924
        %5889 = vmatpush.bf16.msra.mxu0 %v4908
        %5890 = vmatpush.bf16.msra.mxu0 %v4764
        %5891 = vmatpush.bf16.msra.mxu0 %v4748
        %5892 = vmatmul.bf16.gmra.mxu0 %v5453
        %v5893 = vpop.f32.mrf.mxu0
        %v5894 = vadd.f32 0.0, %v5893
        %v5895 = vpop.f32.mrf.mxu0
        %v5896 = vadd.f32 0.0, %v5895
        %5897 = vmatmul.bf16.gmra.mxu0 %v5455
        %v5898 = vpop.f32.mrf.mxu0
        %v5899 = vadd.f32 0.0, %v5898
        %v5900 = vpop.f32.mrf.mxu0
        %v5901 = vadd.f32 0.0, %v5900
        %5902 = vdwg.mxu0
        %5903 = vmatpush.bf16.msra.mxu0 0
        %5904 = vmatpush.bf16.msra.mxu0 0
        %5905 = vmatpush.bf16.msra.mxu0 0
        %5906 = vmatpush.bf16.msra.mxu0 0
        %5907 = vmatpush.bf16.msra.mxu0 0
        %5908 = vmatpush.bf16.msra.mxu0 0
        %5909 = vmatpush.bf16.msra.mxu0 %v5404
        %5910 = vmatpush.bf16.msra.mxu0 %v5388
        %5911 = vmatmul.bf16.gmra.mxu0 %v5461
        %v5912 = vpop.f32.mrf.mxu0
        %v5913 = vadd.f32 %v5894, %v5912
        %v5914 = vpop.f32.mrf.mxu0
        %v5915 = vadd.f32 %v5896, %v5914
        %5916 = vmatmul.bf16.gmra.mxu0 %v5464
        %v5917 = vpop.f32.mrf.mxu0
        %v5918 = vadd.f32 %v5899, %v5917
        %v5919 = vpop.f32.mrf.mxu0
        %v5920 = vadd.f32 %v5901, %v5919
        %5921 = vdwg.mxu0
        %5922 = vmatpush.bf16.msra.mxu0 %v5245
        %5923 = vmatpush.bf16.msra.mxu0 %v5229
        %5924 = vmatpush.bf16.msra.mxu0 %v5085
        %5925 = vmatpush.bf16.msra.mxu0 %v5069
        %5926 = vmatpush.bf16.msra.mxu0 %v4925
        %5927 = vmatpush.bf16.msra.mxu0 %v4909
        %5928 = vmatpush.bf16.msra.mxu0 %v4765
        %5929 = vmatpush.bf16.msra.mxu0 %v4749
        %5930 = vmatmul.bf16.gmra.mxu0 %v5453
        %v5931 = vpop.f32.mrf.mxu0
        %v5932 = vadd.f32 0.0, %v5931
        %v5933 = vpop.f32.mrf.mxu0
        %v5934 = vadd.f32 0.0, %v5933
        %5935 = vmatmul.bf16.gmra.mxu0 %v5455
        %v5936 = vpop.f32.mrf.mxu0
        %v5937 = vadd.f32 0.0, %v5936
        %v5938 = vpop.f32.mrf.mxu0
        %v5939 = vadd.f32 0.0, %v5938
        %5940 = vdwg.mxu0
        %5941 = vmatpush.bf16.msra.mxu0 0
        %5942 = vmatpush.bf16.msra.mxu0 0
        %5943 = vmatpush.bf16.msra.mxu0 0
        %5944 = vmatpush.bf16.msra.mxu0 0
        %5945 = vmatpush.bf16.msra.mxu0 0
        %5946 = vmatpush.bf16.msra.mxu0 0
        %5947 = vmatpush.bf16.msra.mxu0 %v5405
        %5948 = vmatpush.bf16.msra.mxu0 %v5389
        %5949 = vmatmul.bf16.gmra.mxu0 %v5461
        %v5950 = vpop.f32.mrf.mxu0
        %v5951 = vadd.f32 %v5932, %v5950
        %v5952 = vpop.f32.mrf.mxu0
        %v5953 = vadd.f32 %v5934, %v5952
        %5954 = vmatmul.bf16.gmra.mxu0 %v5464
        %v5955 = vpop.f32.mrf.mxu0
        %v5956 = vadd.f32 %v5937, %v5955
        %v5957 = vpop.f32.mrf.mxu0
        %v5958 = vadd.f32 %v5939, %v5957
        %5959 = vdwg.mxu0
        %5960 = vmatpush.bf16.msra.mxu0 %v5246
        %5961 = vmatpush.bf16.msra.mxu0 %v5230
        %5962 = vmatpush.bf16.msra.mxu0 %v5086
        %5963 = vmatpush.bf16.msra.mxu0 %v5070
        %5964 = vmatpush.bf16.msra.mxu0 %v4926
        %5965 = vmatpush.bf16.msra.mxu0 %v4910
        %5966 = vmatpush.bf16.msra.mxu0 %v4766
        %5967 = vmatpush.bf16.msra.mxu0 %v4750
        %5968 = vmatmul.bf16.gmra.mxu0 %v5453
        %v5969 = vpop.f32.mrf.mxu0
        %v5970 = vadd.f32 0.0, %v5969
        %v5971 = vpop.f32.mrf.mxu0
        %v5972 = vadd.f32 0.0, %v5971
        %5973 = vmatmul.bf16.gmra.mxu0 %v5455
        %v5974 = vpop.f32.mrf.mxu0
        %v5975 = vadd.f32 0.0, %v5974
        %v5976 = vpop.f32.mrf.mxu0
        %v5977 = vadd.f32 0.0, %v5976
        %5978 = vdwg.mxu0
        %5979 = vmatpush.bf16.msra.mxu0 0
        %5980 = vmatpush.bf16.msra.mxu0 0
        %5981 = vmatpush.bf16.msra.mxu0 0
        %5982 = vmatpush.bf16.msra.mxu0 0
        %5983 = vmatpush.bf16.msra.mxu0 0
        %5984 = vmatpush.bf16.msra.mxu0 0
        %5985 = vmatpush.bf16.msra.mxu0 %v5406
        %5986 = vmatpush.bf16.msra.mxu0 %v5390
        %5987 = vmatmul.bf16.gmra.mxu0 %v5461
        %v5988 = vpop.f32.mrf.mxu0
        %v5989 = vadd.f32 %v5970, %v5988
        %v5990 = vpop.f32.mrf.mxu0
        %v5991 = vadd.f32 %v5972, %v5990
        %5992 = vmatmul.bf16.gmra.mxu0 %v5464
        %v5993 = vpop.f32.mrf.mxu0
        %v5994 = vadd.f32 %v5975, %v5993
        %v5995 = vpop.f32.mrf.mxu0
        %v5996 = vadd.f32 %v5977, %v5995
        %5997 = vdwg.mxu0
        %5998 = vmatpush.bf16.msra.mxu0 %v5247
        %5999 = vmatpush.bf16.msra.mxu0 %v5231
        %6000 = vmatpush.bf16.msra.mxu0 %v5087
        %6001 = vmatpush.bf16.msra.mxu0 %v5071
        %6002 = vmatpush.bf16.msra.mxu0 %v4927
        %6003 = vmatpush.bf16.msra.mxu0 %v4911
        %6004 = vmatpush.bf16.msra.mxu0 %v4767
        %6005 = vmatpush.bf16.msra.mxu0 %v4751
        %6006 = vmatmul.bf16.gmra.mxu0 %v5453
        %v6007 = vpop.f32.mrf.mxu0
        %v6008 = vadd.f32 0.0, %v6007
        %v6009 = vpop.f32.mrf.mxu0
        %v6010 = vadd.f32 0.0, %v6009
        %6011 = vmatmul.bf16.gmra.mxu0 %v5455
        %v6012 = vpop.f32.mrf.mxu0
        %v6013 = vadd.f32 0.0, %v6012
        %v6014 = vpop.f32.mrf.mxu0
        %v6015 = vadd.f32 0.0, %v6014
        %6016 = vdwg.mxu0
        %6017 = vmatpush.bf16.msra.mxu0 0
        %6018 = vmatpush.bf16.msra.mxu0 0
        %6019 = vmatpush.bf16.msra.mxu0 0
        %6020 = vmatpush.bf16.msra.mxu0 0
        %6021 = vmatpush.bf16.msra.mxu0 0
        %6022 = vmatpush.bf16.msra.mxu0 0
        %6023 = vmatpush.bf16.msra.mxu0 %v5407
        %6024 = vmatpush.bf16.msra.mxu0 %v5391
        %6025 = vmatmul.bf16.gmra.mxu0 %v5461
        %v6026 = vpop.f32.mrf.mxu0
        %v6027 = vadd.f32 %v6008, %v6026
        %v6028 = vpop.f32.mrf.mxu0
        %v6029 = vadd.f32 %v6010, %v6028
        %6030 = vmatmul.bf16.gmra.mxu0 %v5464
        %v6031 = vpop.f32.mrf.mxu0
        %v6032 = vadd.f32 %v6013, %v6031
        %v6033 = vpop.f32.mrf.mxu0
        %v6034 = vadd.f32 %v6015, %v6033
        %6035 = vdwg.mxu0
        %6036 = vmatpush.bf16.msra.mxu0 %v5248
        %6037 = vmatpush.bf16.msra.mxu0 %v5232
        %6038 = vmatpush.bf16.msra.mxu0 %v5088
        %6039 = vmatpush.bf16.msra.mxu0 %v5072
        %6040 = vmatpush.bf16.msra.mxu0 %v4928
        %6041 = vmatpush.bf16.msra.mxu0 %v4912
        %6042 = vmatpush.bf16.msra.mxu0 %v4768
        %6043 = vmatpush.bf16.msra.mxu0 %v4752
        %6044 = vmatmul.bf16.gmra.mxu0 %v5453
        %v6045 = vpop.f32.mrf.mxu0
        %v6046 = vadd.f32 0.0, %v6045
        %v6047 = vpop.f32.mrf.mxu0
        %v6048 = vadd.f32 0.0, %v6047
        %6049 = vmatmul.bf16.gmra.mxu0 %v5455
        %v6050 = vpop.f32.mrf.mxu0
        %v6051 = vadd.f32 0.0, %v6050
        %v6052 = vpop.f32.mrf.mxu0
        %v6053 = vadd.f32 0.0, %v6052
        %6054 = vdwg.mxu0
        %6055 = vmatpush.bf16.msra.mxu0 0
        %6056 = vmatpush.bf16.msra.mxu0 0
        %6057 = vmatpush.bf16.msra.mxu0 0
        %6058 = vmatpush.bf16.msra.mxu0 0
        %6059 = vmatpush.bf16.msra.mxu0 0
        %6060 = vmatpush.bf16.msra.mxu0 0
        %6061 = vmatpush.bf16.msra.mxu0 %v5408
        %6062 = vmatpush.bf16.msra.mxu0 %v5392
        %6063 = vmatmul.bf16.gmra.mxu0 %v5461
        %v6064 = vpop.f32.mrf.mxu0
        %v6065 = vadd.f32 %v6046, %v6064
        %v6066 = vpop.f32.mrf.mxu0
        %v6067 = vadd.f32 %v6048, %v6066
        %6068 = vmatmul.bf16.gmra.mxu0 %v5464
        %v6069 = vpop.f32.mrf.mxu0
        %v6070 = vadd.f32 %v6051, %v6069
        %v6071 = vpop.f32.mrf.mxu0
        %v6072 = vadd.f32 %v6053, %v6071
        %6073 = vdwg.mxu0
        %v6074 = vmax.f32 %v5495, %v5533
        %6075 = vmax.xlane.f32.xlu0 %v6074
        %v6076 = vpop.xlane.xlu0 %6075
        %v6077 = vmax.f32 %v5497, %v5535
        %6078 = vmax.xlane.f32.xlu0 %v6077
        %v6079 = vpop.xlane.xlu0 %6078
        %v6080 = vmax.f32 %v5500, %v5538
        %6081 = vmax.xlane.f32.xlu0 %v6080
        %v6082 = vpop.xlane.xlu0 %6081
        %v6083 = vmax.f32 %v5502, %v5540
        %6084 = vmax.xlane.f32.xlu0 %v6083
        %v6085 = vpop.xlane.xlu0 %6084
        %v6086 = vmax.f32 %v5571, %v5609
        %6087 = vmax.xlane.f32.xlu0 %v6086
        %v6088 = vpop.xlane.xlu0 %6087
        %v6089 = vmax.f32 %v5573, %v5611
        %6090 = vmax.xlane.f32.xlu0 %v6089
        %v6091 = vpop.xlane.xlu0 %6090
        %v6092 = vmax.f32 %v5576, %v5614
        %6093 = vmax.xlane.f32.xlu0 %v6092
        %v6094 = vpop.xlane.xlu0 %6093
        %v6095 = vmax.f32 %v5578, %v5616
        %6096 = vmax.xlane.f32.xlu0 %v6095
        %v6097 = vpop.xlane.xlu0 %6096
        %v6098 = vmax.f32 %v5647, %v5685
        %6099 = vmax.xlane.f32.xlu0 %v6098
        %v6100 = vpop.xlane.xlu0 %6099
        %v6101 = vmax.f32 %v5649, %v5687
        %6102 = vmax.xlane.f32.xlu0 %v6101
        %v6103 = vpop.xlane.xlu0 %6102
        %v6104 = vmax.f32 %v5652, %v5690
        %6105 = vmax.xlane.f32.xlu0 %v6104
        %v6106 = vpop.xlane.xlu0 %6105
        %v6107 = vmax.f32 %v5654, %v5692
        %6108 = vmax.xlane.f32.xlu0 %v6107
        %v6109 = vpop.xlane.xlu0 %6108
        %v6110 = vmax.f32 %v5723, %v5761
        %6111 = vmax.xlane.f32.xlu0 %v6110
        %v6112 = vpop.xlane.xlu0 %6111
        %v6113 = vmax.f32 %v5725, %v5763
        %6114 = vmax.xlane.f32.xlu0 %v6113
        %v6115 = vpop.xlane.xlu0 %6114
        %v6116 = vmax.f32 %v5728, %v5766
        %6117 = vmax.xlane.f32.xlu0 %v6116
        %v6118 = vpop.xlane.xlu0 %6117
        %v6119 = vmax.f32 %v5730, %v5768
        %6120 = vmax.xlane.f32.xlu0 %v6119
        %v6121 = vpop.xlane.xlu0 %6120
        %v6122 = vmax.f32 %v5799, %v5837
        %6123 = vmax.xlane.f32.xlu0 %v6122
        %v6124 = vpop.xlane.xlu0 %6123
        %v6125 = vmax.f32 %v5801, %v5839
        %6126 = vmax.xlane.f32.xlu0 %v6125
        %v6127 = vpop.xlane.xlu0 %6126
        %v6128 = vmax.f32 %v5804, %v5842
        %6129 = vmax.xlane.f32.xlu0 %v6128
        %v6130 = vpop.xlane.xlu0 %6129
        %v6131 = vmax.f32 %v5806, %v5844
        %6132 = vmax.xlane.f32.xlu0 %v6131
        %v6133 = vpop.xlane.xlu0 %6132
        %v6134 = vmax.f32 %v5875, %v5913
        %6135 = vmax.xlane.f32.xlu0 %v6134
        %v6136 = vpop.xlane.xlu0 %6135
        %v6137 = vmax.f32 %v5877, %v5915
        %6138 = vmax.xlane.f32.xlu0 %v6137
        %v6139 = vpop.xlane.xlu0 %6138
        %v6140 = vmax.f32 %v5880, %v5918
        %6141 = vmax.xlane.f32.xlu0 %v6140
        %v6142 = vpop.xlane.xlu0 %6141
        %v6143 = vmax.f32 %v5882, %v5920
        %6144 = vmax.xlane.f32.xlu0 %v6143
        %v6145 = vpop.xlane.xlu0 %6144
        %v6146 = vmax.f32 %v5951, %v5989
        %6147 = vmax.xlane.f32.xlu0 %v6146
        %v6148 = vpop.xlane.xlu0 %6147
        %v6149 = vmax.f32 %v5953, %v5991
        %6150 = vmax.xlane.f32.xlu0 %v6149
        %v6151 = vpop.xlane.xlu0 %6150
        %v6152 = vmax.f32 %v5956, %v5994
        %6153 = vmax.xlane.f32.xlu0 %v6152
        %v6154 = vpop.xlane.xlu0 %6153
        %v6155 = vmax.f32 %v5958, %v5996
        %6156 = vmax.xlane.f32.xlu0 %v6155
        %v6157 = vpop.xlane.xlu0 %6156
        %v6158 = vmax.f32 %v6027, %v6065
        %6159 = vmax.xlane.f32.xlu0 %v6158
        %v6160 = vpop.xlane.xlu0 %6159
        %v6161 = vmax.f32 %v6029, %v6067
        %6162 = vmax.xlane.f32.xlu0 %v6161
        %v6163 = vpop.xlane.xlu0 %6162
        %v6164 = vmax.f32 %v6032, %v6070
        %6165 = vmax.xlane.f32.xlu0 %v6164
        %v6166 = vpop.xlane.xlu0 %6165
        %v6167 = vmax.f32 %v6034, %v6072
        %6168 = vmax.xlane.f32.xlu0 %v6167
        %v6169 = vpop.xlane.xlu0 %6168
        %v6170 = vsel %vm3172, %v6076, %v6088
        %v6171 = vsel %vm3172, %v6079, %v6091
        %v6172 = vsel %vm3172, %v6082, %v6094
        %v6173 = vsel %vm3172, %v6085, %v6097
        %v6174 = vsel %vm3177, %v6170, %v6100
        %v6175 = vsel %vm3177, %v6171, %v6103
        %v6176 = vsel %vm3177, %v6172, %v6106
        %v6177 = vsel %vm3177, %v6173, %v6109
        %v6178 = vsel %vm3182, %v6174, %v6112
        %v6179 = vsel %vm3182, %v6175, %v6115
        %v6180 = vsel %vm3182, %v6176, %v6118
        %v6181 = vsel %vm3182, %v6177, %v6121
        %v6182 = vsel %vm3187, %v6178, %v6124
        %v6183 = vsel %vm3187, %v6179, %v6127
        %v6184 = vsel %vm3187, %v6180, %v6130
        %v6185 = vsel %vm3187, %v6181, %v6133
        %v6186 = vsel %vm3192, %v6182, %v6136
        %v6187 = vsel %vm3192, %v6183, %v6139
        %v6188 = vsel %vm3192, %v6184, %v6142
        %v6189 = vsel %vm3192, %v6185, %v6145
        %v6190 = vsel %vm3197, %v6186, %v6148
        %v6191 = vsel %vm3197, %v6187, %v6151
        %v6192 = vsel %vm3197, %v6188, %v6154
        %v6193 = vsel %vm3197, %v6189, %v6157
        %v6194 = vsel %vm3202, %v6190, %v6160
        %v6195 = vsel %vm3202, %v6191, %v6163
        %v6196 = vsel %vm3202, %v6192, %v6166
        %v6197 = vsel %vm3202, %v6193, %v6169
        %6199 = vset.pattern.permute.xlu0 0
        %6200 = vperm.xlu0 %6199, %v393
        %v6201 = vpop.permute.xlu0 %6200
        %6204 = vset.pattern.permute.xlu0 0
        %6205 = vperm.xlu0 %6204, %v394
        %v6206 = vpop.permute.xlu0 %6205
        %6209 = vset.pattern.permute.xlu0 0
        %6210 = vperm.xlu0 %6209, %v395
        %v6211 = vpop.permute.xlu0 %6210
        %6214 = vset.pattern.permute.xlu0 0
        %6215 = vperm.xlu0 %6214, %v396
        %v6216 = vpop.permute.xlu0 %6215
        %v6218 = vmul.f32 %v989, %v6201
        %v6219 = vmul.f32 %v1018, %v6201
        %v6220 = vmul.f32 %v1047, %v6201
        %v6221 = vmul.f32 %v1076, %v6201
        %v6222 = vmul.f32 %v1105, %v6201
        %v6223 = vmul.f32 %v1134, %v6201
        %v6224 = vmul.f32 %v1163, %v6201
        %v6225 = vmul.f32 %v1192, %v6201
        %v6226 = vmul.f32 %v1221, %v6201
        %v6227 = vmul.f32 %v1250, %v6201
        %v6228 = vmul.f32 %v1279, %v6201
        %v6229 = vmul.f32 %v1308, %v6201
        %v6230 = vmul.f32 %v1337, %v6201
        %v6231 = vmul.f32 %v1366, %v6201
        %v6232 = vmul.f32 %v1395, %v6201
        %v6233 = vmul.f32 %v1424, %v6201
        %v6234 = vmul.f32 %v992, %v6206
        %v6235 = vmul.f32 %v1021, %v6206
        %v6236 = vmul.f32 %v1050, %v6206
        %v6237 = vmul.f32 %v1079, %v6206
        %v6238 = vmul.f32 %v1108, %v6206
        %v6239 = vmul.f32 %v1137, %v6206
        %v6240 = vmul.f32 %v1166, %v6206
        %v6241 = vmul.f32 %v1195, %v6206
        %v6242 = vmul.f32 %v1224, %v6206
        %v6243 = vmul.f32 %v1253, %v6206
        %v6244 = vmul.f32 %v1282, %v6206
        %v6245 = vmul.f32 %v1311, %v6206
        %v6246 = vmul.f32 %v1340, %v6206
        %v6247 = vmul.f32 %v1369, %v6206
        %v6248 = vmul.f32 %v1398, %v6206
        %v6249 = vmul.f32 %v1427, %v6206
        %v6250 = vmul.f32 %v995, %v6211
        %v6251 = vmul.f32 %v1024, %v6211
        %v6252 = vmul.f32 %v1053, %v6211
        %v6253 = vmul.f32 %v1082, %v6211
        %v6254 = vmul.f32 %v1111, %v6211
        %v6255 = vmul.f32 %v1140, %v6211
        %v6256 = vmul.f32 %v1169, %v6211
        %v6257 = vmul.f32 %v1198, %v6211
        %v6258 = vmul.f32 %v1227, %v6211
        %v6259 = vmul.f32 %v1256, %v6211
        %v6260 = vmul.f32 %v1285, %v6211
        %v6261 = vmul.f32 %v1314, %v6211
        %v6262 = vmul.f32 %v1343, %v6211
        %v6263 = vmul.f32 %v1372, %v6211
        %v6264 = vmul.f32 %v1401, %v6211
        %v6265 = vmul.f32 %v1430, %v6211
        %v6266 = vmul.f32 %v998, %v6216
        %v6267 = vmul.f32 %v1027, %v6216
        %v6268 = vmul.f32 %v1056, %v6216
        %v6269 = vmul.f32 %v1085, %v6216
        %v6270 = vmul.f32 %v1114, %v6216
        %v6271 = vmul.f32 %v1143, %v6216
        %v6272 = vmul.f32 %v1172, %v6216
        %v6273 = vmul.f32 %v1201, %v6216
        %v6274 = vmul.f32 %v1230, %v6216
        %v6275 = vmul.f32 %v1259, %v6216
        %v6276 = vmul.f32 %v1288, %v6216
        %v6277 = vmul.f32 %v1317, %v6216
        %v6278 = vmul.f32 %v1346, %v6216
        %v6279 = vmul.f32 %v1375, %v6216
        %v6280 = vmul.f32 %v1404, %v6216
        %v6281 = vmul.f32 %v1433, %v6216
        %6283 = vset.pattern.permute.xlu0 0
        %6284 = vperm.xlu0 %6283, %v405
        %v6285 = vpop.permute.xlu0 %6284
        %6288 = vset.pattern.permute.xlu0 0
        %6289 = vperm.xlu0 %6288, %v406
        %v6290 = vpop.permute.xlu0 %6289
        %6293 = vset.pattern.permute.xlu0 0
        %6294 = vperm.xlu0 %6293, %v407
        %v6295 = vpop.permute.xlu0 %6294
        %6298 = vset.pattern.permute.xlu0 0
        %6299 = vperm.xlu0 %6298, %v408
        %v6300 = vpop.permute.xlu0 %6299
        %v6302 = vadd.f32 %v6218, %v6285
        %v6303 = vadd.f32 %v6219, %v6285
        %v6304 = vadd.f32 %v6220, %v6285
        %v6305 = vadd.f32 %v6221, %v6285
        %v6306 = vadd.f32 %v6222, %v6285
        %v6307 = vadd.f32 %v6223, %v6285
        %v6308 = vadd.f32 %v6224, %v6285
        %v6309 = vadd.f32 %v6225, %v6285
        %v6310 = vadd.f32 %v6226, %v6285
        %v6311 = vadd.f32 %v6227, %v6285
        %v6312 = vadd.f32 %v6228, %v6285
        %v6313 = vadd.f32 %v6229, %v6285
        %v6314 = vadd.f32 %v6230, %v6285
        %v6315 = vadd.f32 %v6231, %v6285
        %v6316 = vadd.f32 %v6232, %v6285
        %v6317 = vadd.f32 %v6233, %v6285
        %v6318 = vadd.f32 %v6234, %v6290
        %v6319 = vadd.f32 %v6235, %v6290
        %v6320 = vadd.f32 %v6236, %v6290
        %v6321 = vadd.f32 %v6237, %v6290
        %v6322 = vadd.f32 %v6238, %v6290
        %v6323 = vadd.f32 %v6239, %v6290
        %v6324 = vadd.f32 %v6240, %v6290
        %v6325 = vadd.f32 %v6241, %v6290
        %v6326 = vadd.f32 %v6242, %v6290
        %v6327 = vadd.f32 %v6243, %v6290
        %v6328 = vadd.f32 %v6244, %v6290
        %v6329 = vadd.f32 %v6245, %v6290
        %v6330 = vadd.f32 %v6246, %v6290
        %v6331 = vadd.f32 %v6247, %v6290
        %v6332 = vadd.f32 %v6248, %v6290
        %v6333 = vadd.f32 %v6249, %v6290
        %v6334 = vadd.f32 %v6250, %v6295
        %v6335 = vadd.f32 %v6251, %v6295
        %v6336 = vadd.f32 %v6252, %v6295
        %v6337 = vadd.f32 %v6253, %v6295
        %v6338 = vadd.f32 %v6254, %v6295
        %v6339 = vadd.f32 %v6255, %v6295
        %v6340 = vadd.f32 %v6256, %v6295
        %v6341 = vadd.f32 %v6257, %v6295
        %v6342 = vadd.f32 %v6258, %v6295
        %v6343 = vadd.f32 %v6259, %v6295
        %v6344 = vadd.f32 %v6260, %v6295
        %v6345 = vadd.f32 %v6261, %v6295
        %v6346 = vadd.f32 %v6262, %v6295
        %v6347 = vadd.f32 %v6263, %v6295
        %v6348 = vadd.f32 %v6264, %v6295
        %v6349 = vadd.f32 %v6265, %v6295
        %v6350 = vadd.f32 %v6266, %v6300
        %v6351 = vadd.f32 %v6267, %v6300
        %v6352 = vadd.f32 %v6268, %v6300
        %v6353 = vadd.f32 %v6269, %v6300
        %v6354 = vadd.f32 %v6270, %v6300
        %v6355 = vadd.f32 %v6271, %v6300
        %v6356 = vadd.f32 %v6272, %v6300
        %v6357 = vadd.f32 %v6273, %v6300
        %v6358 = vadd.f32 %v6274, %v6300
        %v6359 = vadd.f32 %v6275, %v6300
        %v6360 = vadd.f32 %v6276, %v6300
        %v6361 = vadd.f32 %v6277, %v6300
        %v6362 = vadd.f32 %v6278, %v6300
        %v6363 = vadd.f32 %v6279, %v6300
        %v6364 = vadd.f32 %v6280, %v6300
        %v6365 = vadd.f32 %v6281, %v6300
        %v6366 = vmax.f32 %v6302, 0.0
        %v6367 = vmax.f32 %v6303, 0.0
        %v6368 = vmax.f32 %v6304, 0.0
        %v6369 = vmax.f32 %v6305, 0.0
        %v6370 = vmax.f32 %v6306, 0.0
        %v6371 = vmax.f32 %v6307, 0.0
        %v6372 = vmax.f32 %v6308, 0.0
        %v6373 = vmax.f32 %v6309, 0.0
        %v6374 = vmax.f32 %v6310, 0.0
        %v6375 = vmax.f32 %v6311, 0.0
        %v6376 = vmax.f32 %v6312, 0.0
        %v6377 = vmax.f32 %v6313, 0.0
        %v6378 = vmax.f32 %v6314, 0.0
        %v6379 = vmax.f32 %v6315, 0.0
        %v6380 = vmax.f32 %v6316, 0.0
        %v6381 = vmax.f32 %v6317, 0.0
        %v6382 = vmax.f32 %v6318, 0.0
        %v6383 = vmax.f32 %v6319, 0.0
        %v6384 = vmax.f32 %v6320, 0.0
        %v6385 = vmax.f32 %v6321, 0.0
        %v6386 = vmax.f32 %v6322, 0.0
        %v6387 = vmax.f32 %v6323, 0.0
        %v6388 = vmax.f32 %v6324, 0.0
        %v6389 = vmax.f32 %v6325, 0.0
        %v6390 = vmax.f32 %v6326, 0.0
        %v6391 = vmax.f32 %v6327, 0.0
        %v6392 = vmax.f32 %v6328, 0.0
        %v6393 = vmax.f32 %v6329, 0.0
        %v6394 = vmax.f32 %v6330, 0.0
        %v6395 = vmax.f32 %v6331, 0.0
        %v6396 = vmax.f32 %v6332, 0.0
        %v6397 = vmax.f32 %v6333, 0.0
        %v6398 = vmax.f32 %v6334, 0.0
        %v6399 = vmax.f32 %v6335, 0.0
        %v6400 = vmax.f32 %v6336, 0.0
        %v6401 = vmax.f32 %v6337, 0.0
        %v6402 = vmax.f32 %v6338, 0.0
        %v6403 = vmax.f32 %v6339, 0.0
        %v6404 = vmax.f32 %v6340, 0.0
        %v6405 = vmax.f32 %v6341, 0.0
        %v6406 = vmax.f32 %v6342, 0.0
        %v6407 = vmax.f32 %v6343, 0.0
        %v6408 = vmax.f32 %v6344, 0.0
        %v6409 = vmax.f32 %v6345, 0.0
        %v6410 = vmax.f32 %v6346, 0.0
        %v6411 = vmax.f32 %v6347, 0.0
        %v6412 = vmax.f32 %v6348, 0.0
        %v6413 = vmax.f32 %v6349, 0.0
        %v6414 = vmax.f32 %v6350, 0.0
        %v6415 = vmax.f32 %v6351, 0.0
        %v6416 = vmax.f32 %v6352, 0.0
        %v6417 = vmax.f32 %v6353, 0.0
        %v6418 = vmax.f32 %v6354, 0.0
        %v6419 = vmax.f32 %v6355, 0.0
        %v6420 = vmax.f32 %v6356, 0.0
        %v6421 = vmax.f32 %v6357, 0.0
        %v6422 = vmax.f32 %v6358, 0.0
        %v6423 = vmax.f32 %v6359, 0.0
        %v6424 = vmax.f32 %v6360, 0.0
        %v6425 = vmax.f32 %v6361, 0.0
        %v6426 = vmax.f32 %v6362, 0.0
        %v6427 = vmax.f32 %v6363, 0.0
        %v6428 = vmax.f32 %v6364, 0.0
        %v6429 = vmax.f32 %v6365, 0.0
        %6430 = vrot.lane.b32.xlu0 %v6366, 3
        %v6431 = vpop.permute.xlu0 %6430
        %6432 = vrot.lane.b32.xlu0 %v6382, 3
        %v6433 = vpop.permute.xlu0 %6432
        %6434 = vrot.lane.b32.xlu0 %v6398, 3
        %v6435 = vpop.permute.xlu0 %6434
        %6436 = vrot.lane.b32.xlu0 %v6414, 3
        %v6437 = vpop.permute.xlu0 %6436
        %6438 = vrot.lane.b32.xlu0 %v6367, 3
        %v6439 = vpop.permute.xlu0 %6438
        %6440 = vrot.lane.b32.xlu0 %v6383, 3
        %v6441 = vpop.permute.xlu0 %6440
        %6442 = vrot.lane.b32.xlu0 %v6399, 3
        %v6443 = vpop.permute.xlu0 %6442
        %6444 = vrot.lane.b32.xlu0 %v6415, 3
        %v6445 = vpop.permute.xlu0 %6444
        %6446 = vrot.lane.b32.xlu0 %v6368, 3
        %v6447 = vpop.permute.xlu0 %6446
        %6448 = vrot.lane.b32.xlu0 %v6384, 3
        %v6449 = vpop.permute.xlu0 %6448
        %6450 = vrot.lane.b32.xlu0 %v6400, 3
        %v6451 = vpop.permute.xlu0 %6450
        %6452 = vrot.lane.b32.xlu0 %v6416, 3
        %v6453 = vpop.permute.xlu0 %6452
        %6454 = vrot.lane.b32.xlu0 %v6369, 3
        %v6455 = vpop.permute.xlu0 %6454
        %6456 = vrot.lane.b32.xlu0 %v6385, 3
        %v6457 = vpop.permute.xlu0 %6456
        %6458 = vrot.lane.b32.xlu0 %v6401, 3
        %v6459 = vpop.permute.xlu0 %6458
        %6460 = vrot.lane.b32.xlu0 %v6417, 3
        %v6461 = vpop.permute.xlu0 %6460
        %6462 = vrot.lane.b32.xlu0 %v6370, 3
        %v6463 = vpop.permute.xlu0 %6462
        %6464 = vrot.lane.b32.xlu0 %v6386, 3
        %v6465 = vpop.permute.xlu0 %6464
        %6466 = vrot.lane.b32.xlu0 %v6402, 3
        %v6467 = vpop.permute.xlu0 %6466
        %6468 = vrot.lane.b32.xlu0 %v6418, 3
        %v6469 = vpop.permute.xlu0 %6468
        %6470 = vrot.lane.b32.xlu0 %v6371, 3
        %v6471 = vpop.permute.xlu0 %6470
        %6472 = vrot.lane.b32.xlu0 %v6387, 3
        %v6473 = vpop.permute.xlu0 %6472
        %6474 = vrot.lane.b32.xlu0 %v6403, 3
        %v6475 = vpop.permute.xlu0 %6474
        %6476 = vrot.lane.b32.xlu0 %v6419, 3
        %v6477 = vpop.permute.xlu0 %6476
        %6478 = vrot.lane.b32.xlu0 %v6372, 3
        %v6479 = vpop.permute.xlu0 %6478
        %6480 = vrot.lane.b32.xlu0 %v6388, 3
        %v6481 = vpop.permute.xlu0 %6480
        %6482 = vrot.lane.b32.xlu0 %v6404, 3
        %v6483 = vpop.permute.xlu0 %6482
        %6484 = vrot.lane.b32.xlu0 %v6420, 3
        %v6485 = vpop.permute.xlu0 %6484
        %6486 = vrot.lane.b32.xlu0 %v6373, 3
        %v6487 = vpop.permute.xlu0 %6486
        %6488 = vrot.lane.b32.xlu0 %v6389, 3
        %v6489 = vpop.permute.xlu0 %6488
        %6490 = vrot.lane.b32.xlu0 %v6405, 3
        %v6491 = vpop.permute.xlu0 %6490
        %6492 = vrot.lane.b32.xlu0 %v6421, 3
        %v6493 = vpop.permute.xlu0 %6492
        %6494 = vrot.lane.b32.xlu0 %v6374, 3
        %v6495 = vpop.permute.xlu0 %6494
        %6496 = vrot.lane.b32.xlu0 %v6390, 3
        %v6497 = vpop.permute.xlu0 %6496
        %6498 = vrot.lane.b32.xlu0 %v6406, 3
        %v6499 = vpop.permute.xlu0 %6498
        %6500 = vrot.lane.b32.xlu0 %v6422, 3
        %v6501 = vpop.permute.xlu0 %6500
        %6502 = vrot.lane.b32.xlu0 %v6375, 3
        %v6503 = vpop.permute.xlu0 %6502
        %6504 = vrot.lane.b32.xlu0 %v6391, 3
        %v6505 = vpop.permute.xlu0 %6504
        %6506 = vrot.lane.b32.xlu0 %v6407, 3
        %v6507 = vpop.permute.xlu0 %6506
        %6508 = vrot.lane.b32.xlu0 %v6423, 3
        %v6509 = vpop.permute.xlu0 %6508
        %6510 = vrot.lane.b32.xlu0 %v6376, 3
        %v6511 = vpop.permute.xlu0 %6510
        %6512 = vrot.lane.b32.xlu0 %v6392, 3
        %v6513 = vpop.permute.xlu0 %6512
        %6514 = vrot.lane.b32.xlu0 %v6408, 3
        %v6515 = vpop.permute.xlu0 %6514
        %6516 = vrot.lane.b32.xlu0 %v6424, 3
        %v6517 = vpop.permute.xlu0 %6516
        %6518 = vrot.lane.b32.xlu0 %v6377, 3
        %v6519 = vpop.permute.xlu0 %6518
        %6520 = vrot.lane.b32.xlu0 %v6393, 3
        %v6521 = vpop.permute.xlu0 %6520
        %6522 = vrot.lane.b32.xlu0 %v6409, 3
        %v6523 = vpop.permute.xlu0 %6522
        %6524 = vrot.lane.b32.xlu0 %v6425, 3
        %v6525 = vpop.permute.xlu0 %6524
        %6526 = vrot.lane.b32.xlu0 %v6378, 3
        %v6527 = vpop.permute.xlu0 %6526
        %6528 = vrot.lane.b32.xlu0 %v6394, 3
        %v6529 = vpop.permute.xlu0 %6528
        %6530 = vrot.lane.b32.xlu0 %v6410, 3
        %v6531 = vpop.permute.xlu0 %6530
        %6532 = vrot.lane.b32.xlu0 %v6426, 3
        %v6533 = vpop.permute.xlu0 %6532
        %6534 = vrot.lane.b32.xlu0 %v6379, 3
        %v6535 = vpop.permute.xlu0 %6534
        %6536 = vrot.lane.b32.xlu0 %v6395, 3
        %v6537 = vpop.permute.xlu0 %6536
        %6538 = vrot.lane.b32.xlu0 %v6411, 3
        %v6539 = vpop.permute.xlu0 %6538
        %6540 = vrot.lane.b32.xlu0 %v6427, 3
        %v6541 = vpop.permute.xlu0 %6540
        %6542 = vrot.lane.b32.xlu0 %v6380, 3
        %v6543 = vpop.permute.xlu0 %6542
        %6544 = vrot.lane.b32.xlu0 %v6396, 3
        %v6545 = vpop.permute.xlu0 %6544
        %6546 = vrot.lane.b32.xlu0 %v6412, 3
        %v6547 = vpop.permute.xlu0 %6546
        %6548 = vrot.lane.b32.xlu0 %v6428, 3
        %v6549 = vpop.permute.xlu0 %6548
        %6550 = vrot.lane.b32.xlu0 %v6381, 3
        %v6551 = vpop.permute.xlu0 %6550
        %6552 = vrot.lane.b32.xlu0 %v6397, 3
        %v6553 = vpop.permute.xlu0 %6552
        %6554 = vrot.lane.b32.xlu0 %v6413, 3
        %v6555 = vpop.permute.xlu0 %6554
        %6556 = vrot.lane.b32.xlu0 %v6429, 3
        %v6557 = vpop.permute.xlu0 %6556
        %vm6558 = vcmp.lt.s32.totalorder %v410, 3
        %v6559 = vsel %vm6558, %v6543, %v6551
        %v6560 = vsel %vm6558, %v6545, %v6553
        %v6561 = vsel %vm6558, %v6547, %v6555
        %v6562 = vsel %vm6558, %v6549, %v6557
        %v6563 = vsel %vm6558, %v6535, %v6543
        %v6564 = vsel %vm6558, %v6537, %v6545
        %v6565 = vsel %vm6558, %v6539, %v6547
        %v6566 = vsel %vm6558, %v6541, %v6549
        %v6567 = vsel %vm6558, %v6527, %v6535
        %v6568 = vsel %vm6558, %v6529, %v6537
        %v6569 = vsel %vm6558, %v6531, %v6539
        %v6570 = vsel %vm6558, %v6533, %v6541
        %v6571 = vsel %vm6558, %v6519, %v6527
        %v6572 = vsel %vm6558, %v6521, %v6529
        %v6573 = vsel %vm6558, %v6523, %v6531
        %v6574 = vsel %vm6558, %v6525, %v6533
        %v6575 = vsel %vm6558, %v6511, %v6519
        %v6576 = vsel %vm6558, %v6513, %v6521
        %v6577 = vsel %vm6558, %v6515, %v6523
        %v6578 = vsel %vm6558, %v6517, %v6525
        %v6579 = vsel %vm6558, %v6503, %v6511
        %v6580 = vsel %vm6558, %v6505, %v6513
        %v6581 = vsel %vm6558, %v6507, %v6515
        %v6582 = vsel %vm6558, %v6509, %v6517
        %v6583 = vsel %vm6558, %v6495, %v6503
        %v6584 = vsel %vm6558, %v6497, %v6505
        %v6585 = vsel %vm6558, %v6499, %v6507
        %v6586 = vsel %vm6558, %v6501, %v6509
        %v6587 = vsel %vm6558, %v6487, %v6495
        %v6588 = vsel %vm6558, %v6489, %v6497
        %v6589 = vsel %vm6558, %v6491, %v6499
        %v6590 = vsel %vm6558, %v6493, %v6501
        %v6591 = vsel %vm6558, %v6479, %v6487
        %v6592 = vsel %vm6558, %v6481, %v6489
        %v6593 = vsel %vm6558, %v6483, %v6491
        %v6594 = vsel %vm6558, %v6485, %v6493
        %v6595 = vsel %vm6558, %v6471, %v6479
        %v6596 = vsel %vm6558, %v6473, %v6481
        %v6597 = vsel %vm6558, %v6475, %v6483
        %v6598 = vsel %vm6558, %v6477, %v6485
        %v6599 = vsel %vm6558, %v6463, %v6471
        %v6600 = vsel %vm6558, %v6465, %v6473
        %v6601 = vsel %vm6558, %v6467, %v6475
        %v6602 = vsel %vm6558, %v6469, %v6477
        %v6603 = vsel %vm6558, %v6455, %v6463
        %v6604 = vsel %vm6558, %v6457, %v6465
        %v6605 = vsel %vm6558, %v6459, %v6467
        %v6606 = vsel %vm6558, %v6461, %v6469
        %v6607 = vsel %vm6558, %v6447, %v6455
        %v6608 = vsel %vm6558, %v6449, %v6457
        %v6609 = vsel %vm6558, %v6451, %v6459
        %v6610 = vsel %vm6558, %v6453, %v6461
        %v6611 = vsel %vm6558, %v6439, %v6447
        %v6612 = vsel %vm6558, %v6441, %v6449
        %v6613 = vsel %vm6558, %v6443, %v6451
        %v6614 = vsel %vm6558, %v6445, %v6453
        %v6615 = vsel %vm6558, %v6431, %v6439
        %v6616 = vsel %vm6558, %v6433, %v6441
        %v6617 = vsel %vm6558, %v6435, %v6443
        %v6618 = vsel %vm6558, %v6437, %v6445
        %v6619 = vsel %vm6558, %v6551, %v6431
        %v6620 = vsel %vm6558, %v6553, %v6433
        %v6621 = vsel %vm6558, %v6555, %v6435
        %v6622 = vsel %vm6558, %v6557, %v6437
        %vm6623 = vcmp.ge.s32.totalorder %v410, 3
        %vm6624 = vcmp.ge.s32.totalorder %v411, 3
        %v6625 = vsel %vm6623, 1, 0
        %v6626 = vsel %vm6624, 1, 0
        %v6627 = vperm.slane %v6625, 0
        %v6628 = vperm.slane %v6626, 0
        %vm6629 = vcmp.eq.s32.totalorder %v6627, 1
        %vm6630 = vcmp.eq.s32.totalorder %v6628, 1
        %v6631 = vsel %vm6629, %v6619, 0.0
        %v6632 = vsel %vm6630, %v6615, 0.0
        %v6633 = vsel %vm6629, %v6611, 0.0
        %v6634 = vsel %vm6630, %v6607, 0.0
        %v6635 = vsel %vm6629, %v6603, 0.0
        %v6636 = vsel %vm6630, %v6599, 0.0
        %v6637 = vsel %vm6629, %v6595, 0.0
        %v6638 = vsel %vm6630, %v6591, 0.0
        %v6639 = vsel %vm6629, %v6587, 0.0
        %v6640 = vsel %vm6630, %v6583, 0.0
        %v6641 = vsel %vm6629, %v6579, 0.0
        %v6642 = vsel %vm6630, %v6575, 0.0
        %v6643 = vsel %vm6629, %v6571, 0.0
        %v6644 = vsel %vm6630, %v6567, 0.0
        %v6645 = vsel %vm6629, %v6563, 0.0
        %v6646 = vsel %vm6630, %v6559, 0.0
        %v6647 = vsel %vm6629, %v6620, 0.0
        %v6648 = vsel %vm6630, %v6616, 0.0
        %v6649 = vsel %vm6629, %v6612, 0.0
        %v6650 = vsel %vm6630, %v6608, 0.0
        %v6651 = vsel %vm6629, %v6604, 0.0
        %v6652 = vsel %vm6630, %v6600, 0.0
        %v6653 = vsel %vm6629, %v6596, 0.0
        %v6654 = vsel %vm6630, %v6592, 0.0
        %v6655 = vsel %vm6629, %v6588, 0.0
        %v6656 = vsel %vm6630, %v6584, 0.0
        %v6657 = vsel %vm6629, %v6580, 0.0
        %v6658 = vsel %vm6630, %v6576, 0.0
        %v6659 = vsel %vm6629, %v6572, 0.0
        %v6660 = vsel %vm6630, %v6568, 0.0
        %v6661 = vsel %vm6629, %v6564, 0.0
        %v6662 = vsel %vm6630, %v6560, 0.0
        %v6663 = vsel %vm6629, %v6621, 0.0
        %v6664 = vsel %vm6630, %v6617, 0.0
        %v6665 = vsel %vm6629, %v6613, 0.0
        %v6666 = vsel %vm6630, %v6609, 0.0
        %v6667 = vsel %vm6629, %v6605, 0.0
        %v6668 = vsel %vm6630, %v6601, 0.0
        %v6669 = vsel %vm6629, %v6597, 0.0
        %v6670 = vsel %vm6630, %v6593, 0.0
        %v6671 = vsel %vm6629, %v6589, 0.0
        %v6672 = vsel %vm6630, %v6585, 0.0
        %v6673 = vsel %vm6629, %v6581, 0.0
        %v6674 = vsel %vm6630, %v6577, 0.0
        %v6675 = vsel %vm6629, %v6573, 0.0
        %v6676 = vsel %vm6630, %v6569, 0.0
        %v6677 = vsel %vm6629, %v6565, 0.0
        %v6678 = vsel %vm6630, %v6561, 0.0
        %v6679 = vsel %vm6629, %v6622, 0.0
        %v6680 = vsel %vm6630, %v6618, 0.0
        %v6681 = vsel %vm6629, %v6614, 0.0
        %v6682 = vsel %vm6630, %v6610, 0.0
        %v6683 = vsel %vm6629, %v6606, 0.0
        %v6684 = vsel %vm6630, %v6602, 0.0
        %v6685 = vsel %vm6629, %v6598, 0.0
        %v6686 = vsel %vm6630, %v6594, 0.0
        %v6687 = vsel %vm6629, %v6590, 0.0
        %v6688 = vsel %vm6630, %v6586, 0.0
        %v6689 = vsel %vm6629, %v6582, 0.0
        %v6690 = vsel %vm6630, %v6578, 0.0
        %v6691 = vsel %vm6629, %v6574, 0.0
        %v6692 = vsel %vm6630, %v6570, 0.0
        %v6693 = vsel %vm6629, %v6566, 0.0
        %v6694 = vsel %vm6630, %v6562, 0.0
        %v6695 = vpack.c.bf16 %v6632, %v6631
        %v6696 = vpack.c.bf16 %v6634, %v6633
        %v6697 = vpack.c.bf16 %v6636, %v6635
        %v6698 = vpack.c.bf16 %v6638, %v6637
        %v6699 = vpack.c.bf16 %v6640, %v6639
        %v6700 = vpack.c.bf16 %v6642, %v6641
        %v6701 = vpack.c.bf16 %v6644, %v6643
        %v6702 = vpack.c.bf16 %v6646, %v6645
        %v6703 = vpack.c.bf16 %v6648, %v6647
        %v6704 = vpack.c.bf16 %v6650, %v6649
        %v6705 = vpack.c.bf16 %v6652, %v6651
        %v6706 = vpack.c.bf16 %v6654, %v6653
        %v6707 = vpack.c.bf16 %v6656, %v6655
        %v6708 = vpack.c.bf16 %v6658, %v6657
        %v6709 = vpack.c.bf16 %v6660, %v6659
        %v6710 = vpack.c.bf16 %v6662, %v6661
        %v6711 = vpack.c.bf16 %v6664, %v6663
        %v6712 = vpack.c.bf16 %v6666, %v6665
        %v6713 = vpack.c.bf16 %v6668, %v6667
        %v6714 = vpack.c.bf16 %v6670, %v6669
        %v6715 = vpack.c.bf16 %v6672, %v6671
        %v6716 = vpack.c.bf16 %v6674, %v6673
        %v6717 = vpack.c.bf16 %v6676, %v6675
        %v6718 = vpack.c.bf16 %v6678, %v6677
        %v6719 = vpack.c.bf16 %v6680, %v6679
        %v6720 = vpack.c.bf16 %v6682, %v6681
        %v6721 = vpack.c.bf16 %v6684, %v6683
        %v6722 = vpack.c.bf16 %v6686, %v6685
        %v6723 = vpack.c.bf16 %v6688, %v6687
        %v6724 = vpack.c.bf16 %v6690, %v6689
        %v6725 = vpack.c.bf16 %v6692, %v6691
        %v6726 = vpack.c.bf16 %v6694, %v6693
        %6727 = vrot.lane.b32.xlu0 %v6366, 2
        %v6728 = vpop.permute.xlu0 %6727
        %6729 = vrot.lane.b32.xlu0 %v6382, 2
        %v6730 = vpop.permute.xlu0 %6729
        %6731 = vrot.lane.b32.xlu0 %v6398, 2
        %v6732 = vpop.permute.xlu0 %6731
        %6733 = vrot.lane.b32.xlu0 %v6414, 2
        %v6734 = vpop.permute.xlu0 %6733
        %6735 = vrot.lane.b32.xlu0 %v6367, 2
        %v6736 = vpop.permute.xlu0 %6735
        %6737 = vrot.lane.b32.xlu0 %v6383, 2
        %v6738 = vpop.permute.xlu0 %6737
        %6739 = vrot.lane.b32.xlu0 %v6399, 2
        %v6740 = vpop.permute.xlu0 %6739
        %6741 = vrot.lane.b32.xlu0 %v6415, 2
        %v6742 = vpop.permute.xlu0 %6741
        %6743 = vrot.lane.b32.xlu0 %v6368, 2
        %v6744 = vpop.permute.xlu0 %6743
        %6745 = vrot.lane.b32.xlu0 %v6384, 2
        %v6746 = vpop.permute.xlu0 %6745
        %6747 = vrot.lane.b32.xlu0 %v6400, 2
        %v6748 = vpop.permute.xlu0 %6747
        %6749 = vrot.lane.b32.xlu0 %v6416, 2
        %v6750 = vpop.permute.xlu0 %6749
        %6751 = vrot.lane.b32.xlu0 %v6369, 2
        %v6752 = vpop.permute.xlu0 %6751
        %6753 = vrot.lane.b32.xlu0 %v6385, 2
        %v6754 = vpop.permute.xlu0 %6753
        %6755 = vrot.lane.b32.xlu0 %v6401, 2
        %v6756 = vpop.permute.xlu0 %6755
        %6757 = vrot.lane.b32.xlu0 %v6417, 2
        %v6758 = vpop.permute.xlu0 %6757
        %6759 = vrot.lane.b32.xlu0 %v6370, 2
        %v6760 = vpop.permute.xlu0 %6759
        %6761 = vrot.lane.b32.xlu0 %v6386, 2
        %v6762 = vpop.permute.xlu0 %6761
        %6763 = vrot.lane.b32.xlu0 %v6402, 2
        %v6764 = vpop.permute.xlu0 %6763
        %6765 = vrot.lane.b32.xlu0 %v6418, 2
        %v6766 = vpop.permute.xlu0 %6765
        %6767 = vrot.lane.b32.xlu0 %v6371, 2
        %v6768 = vpop.permute.xlu0 %6767
        %6769 = vrot.lane.b32.xlu0 %v6387, 2
        %v6770 = vpop.permute.xlu0 %6769
        %6771 = vrot.lane.b32.xlu0 %v6403, 2
        %v6772 = vpop.permute.xlu0 %6771
        %6773 = vrot.lane.b32.xlu0 %v6419, 2
        %v6774 = vpop.permute.xlu0 %6773
        %6775 = vrot.lane.b32.xlu0 %v6372, 2
        %v6776 = vpop.permute.xlu0 %6775
        %6777 = vrot.lane.b32.xlu0 %v6388, 2
        %v6778 = vpop.permute.xlu0 %6777
        %6779 = vrot.lane.b32.xlu0 %v6404, 2
        %v6780 = vpop.permute.xlu0 %6779
        %6781 = vrot.lane.b32.xlu0 %v6420, 2
        %v6782 = vpop.permute.xlu0 %6781
        %6783 = vrot.lane.b32.xlu0 %v6373, 2
        %v6784 = vpop.permute.xlu0 %6783
        %6785 = vrot.lane.b32.xlu0 %v6389, 2
        %v6786 = vpop.permute.xlu0 %6785
        %6787 = vrot.lane.b32.xlu0 %v6405, 2
        %v6788 = vpop.permute.xlu0 %6787
        %6789 = vrot.lane.b32.xlu0 %v6421, 2
        %v6790 = vpop.permute.xlu0 %6789
        %6791 = vrot.lane.b32.xlu0 %v6374, 2
        %v6792 = vpop.permute.xlu0 %6791
        %6793 = vrot.lane.b32.xlu0 %v6390, 2
        %v6794 = vpop.permute.xlu0 %6793
        %6795 = vrot.lane.b32.xlu0 %v6406, 2
        %v6796 = vpop.permute.xlu0 %6795
        %6797 = vrot.lane.b32.xlu0 %v6422, 2
        %v6798 = vpop.permute.xlu0 %6797
        %6799 = vrot.lane.b32.xlu0 %v6375, 2
        %v6800 = vpop.permute.xlu0 %6799
        %6801 = vrot.lane.b32.xlu0 %v6391, 2
        %v6802 = vpop.permute.xlu0 %6801
        %6803 = vrot.lane.b32.xlu0 %v6407, 2
        %v6804 = vpop.permute.xlu0 %6803
        %6805 = vrot.lane.b32.xlu0 %v6423, 2
        %v6806 = vpop.permute.xlu0 %6805
        %6807 = vrot.lane.b32.xlu0 %v6376, 2
        %v6808 = vpop.permute.xlu0 %6807
        %6809 = vrot.lane.b32.xlu0 %v6392, 2
        %v6810 = vpop.permute.xlu0 %6809
        %6811 = vrot.lane.b32.xlu0 %v6408, 2
        %v6812 = vpop.permute.xlu0 %6811
        %6813 = vrot.lane.b32.xlu0 %v6424, 2
        %v6814 = vpop.permute.xlu0 %6813
        %6815 = vrot.lane.b32.xlu0 %v6377, 2
        %v6816 = vpop.permute.xlu0 %6815
        %6817 = vrot.lane.b32.xlu0 %v6393, 2
        %v6818 = vpop.permute.xlu0 %6817
        %6819 = vrot.lane.b32.xlu0 %v6409, 2
        %v6820 = vpop.permute.xlu0 %6819
        %6821 = vrot.lane.b32.xlu0 %v6425, 2
        %v6822 = vpop.permute.xlu0 %6821
        %6823 = vrot.lane.b32.xlu0 %v6378, 2
        %v6824 = vpop.permute.xlu0 %6823
        %6825 = vrot.lane.b32.xlu0 %v6394, 2
        %v6826 = vpop.permute.xlu0 %6825
        %6827 = vrot.lane.b32.xlu0 %v6410, 2
        %v6828 = vpop.permute.xlu0 %6827
        %6829 = vrot.lane.b32.xlu0 %v6426, 2
        %v6830 = vpop.permute.xlu0 %6829
        %6831 = vrot.lane.b32.xlu0 %v6379, 2
        %v6832 = vpop.permute.xlu0 %6831
        %6833 = vrot.lane.b32.xlu0 %v6395, 2
        %v6834 = vpop.permute.xlu0 %6833
        %6835 = vrot.lane.b32.xlu0 %v6411, 2
        %v6836 = vpop.permute.xlu0 %6835
        %6837 = vrot.lane.b32.xlu0 %v6427, 2
        %v6838 = vpop.permute.xlu0 %6837
        %6839 = vrot.lane.b32.xlu0 %v6380, 2
        %v6840 = vpop.permute.xlu0 %6839
        %6841 = vrot.lane.b32.xlu0 %v6396, 2
        %v6842 = vpop.permute.xlu0 %6841
        %6843 = vrot.lane.b32.xlu0 %v6412, 2
        %v6844 = vpop.permute.xlu0 %6843
        %6845 = vrot.lane.b32.xlu0 %v6428, 2
        %v6846 = vpop.permute.xlu0 %6845
        %6847 = vrot.lane.b32.xlu0 %v6381, 2
        %v6848 = vpop.permute.xlu0 %6847
        %6849 = vrot.lane.b32.xlu0 %v6397, 2
        %v6850 = vpop.permute.xlu0 %6849
        %6851 = vrot.lane.b32.xlu0 %v6413, 2
        %v6852 = vpop.permute.xlu0 %6851
        %6853 = vrot.lane.b32.xlu0 %v6429, 2
        %v6854 = vpop.permute.xlu0 %6853
        %v6855 = vsel %vm3567, %v6840, %v6848
        %v6856 = vsel %vm3567, %v6842, %v6850
        %v6857 = vsel %vm3567, %v6844, %v6852
        %v6858 = vsel %vm3567, %v6846, %v6854
        %v6859 = vsel %vm3567, %v6832, %v6840
        %v6860 = vsel %vm3567, %v6834, %v6842
        %v6861 = vsel %vm3567, %v6836, %v6844
        %v6862 = vsel %vm3567, %v6838, %v6846
        %v6863 = vsel %vm3567, %v6824, %v6832
        %v6864 = vsel %vm3567, %v6826, %v6834
        %v6865 = vsel %vm3567, %v6828, %v6836
        %v6866 = vsel %vm3567, %v6830, %v6838
        %v6867 = vsel %vm3567, %v6816, %v6824
        %v6868 = vsel %vm3567, %v6818, %v6826
        %v6869 = vsel %vm3567, %v6820, %v6828
        %v6870 = vsel %vm3567, %v6822, %v6830
        %v6871 = vsel %vm3567, %v6808, %v6816
        %v6872 = vsel %vm3567, %v6810, %v6818
        %v6873 = vsel %vm3567, %v6812, %v6820
        %v6874 = vsel %vm3567, %v6814, %v6822
        %v6875 = vsel %vm3567, %v6800, %v6808
        %v6876 = vsel %vm3567, %v6802, %v6810
        %v6877 = vsel %vm3567, %v6804, %v6812
        %v6878 = vsel %vm3567, %v6806, %v6814
        %v6879 = vsel %vm3567, %v6792, %v6800
        %v6880 = vsel %vm3567, %v6794, %v6802
        %v6881 = vsel %vm3567, %v6796, %v6804
        %v6882 = vsel %vm3567, %v6798, %v6806
        %v6883 = vsel %vm3567, %v6784, %v6792
        %v6884 = vsel %vm3567, %v6786, %v6794
        %v6885 = vsel %vm3567, %v6788, %v6796
        %v6886 = vsel %vm3567, %v6790, %v6798
        %v6887 = vsel %vm3567, %v6776, %v6784
        %v6888 = vsel %vm3567, %v6778, %v6786
        %v6889 = vsel %vm3567, %v6780, %v6788
        %v6890 = vsel %vm3567, %v6782, %v6790
        %v6891 = vsel %vm3567, %v6768, %v6776
        %v6892 = vsel %vm3567, %v6770, %v6778
        %v6893 = vsel %vm3567, %v6772, %v6780
        %v6894 = vsel %vm3567, %v6774, %v6782
        %v6895 = vsel %vm3567, %v6760, %v6768
        %v6896 = vsel %vm3567, %v6762, %v6770
        %v6897 = vsel %vm3567, %v6764, %v6772
        %v6898 = vsel %vm3567, %v6766, %v6774
        %v6899 = vsel %vm3567, %v6752, %v6760
        %v6900 = vsel %vm3567, %v6754, %v6762
        %v6901 = vsel %vm3567, %v6756, %v6764
        %v6902 = vsel %vm3567, %v6758, %v6766
        %v6903 = vsel %vm3567, %v6744, %v6752
        %v6904 = vsel %vm3567, %v6746, %v6754
        %v6905 = vsel %vm3567, %v6748, %v6756
        %v6906 = vsel %vm3567, %v6750, %v6758
        %v6907 = vsel %vm3567, %v6736, %v6744
        %v6908 = vsel %vm3567, %v6738, %v6746
        %v6909 = vsel %vm3567, %v6740, %v6748
        %v6910 = vsel %vm3567, %v6742, %v6750
        %v6911 = vsel %vm3567, %v6728, %v6736
        %v6912 = vsel %vm3567, %v6730, %v6738
        %v6913 = vsel %vm3567, %v6732, %v6740
        %v6914 = vsel %vm3567, %v6734, %v6742
        %v6915 = vsel %vm3567, %v6848, %v6728
        %v6916 = vsel %vm3567, %v6850, %v6730
        %v6917 = vsel %vm3567, %v6852, %v6732
        %v6918 = vsel %vm3567, %v6854, %v6734
        %v6919 = vsel %vm3638, %v6915, 0.0
        %v6920 = vsel %vm3639, %v6911, 0.0
        %v6921 = vsel %vm3638, %v6907, 0.0
        %v6922 = vsel %vm3639, %v6903, 0.0
        %v6923 = vsel %vm3638, %v6899, 0.0
        %v6924 = vsel %vm3639, %v6895, 0.0
        %v6925 = vsel %vm3638, %v6891, 0.0
        %v6926 = vsel %vm3639, %v6887, 0.0
        %v6927 = vsel %vm3638, %v6883, 0.0
        %v6928 = vsel %vm3639, %v6879, 0.0
        %v6929 = vsel %vm3638, %v6875, 0.0
        %v6930 = vsel %vm3639, %v6871, 0.0
        %v6931 = vsel %vm3638, %v6867, 0.0
        %v6932 = vsel %vm3639, %v6863, 0.0
        %v6933 = vsel %vm3638, %v6859, 0.0
        %v6934 = vsel %vm3639, %v6855, 0.0
        %v6935 = vsel %vm3638, %v6916, 0.0
        %v6936 = vsel %vm3639, %v6912, 0.0
        %v6937 = vsel %vm3638, %v6908, 0.0
        %v6938 = vsel %vm3639, %v6904, 0.0
        %v6939 = vsel %vm3638, %v6900, 0.0
        %v6940 = vsel %vm3639, %v6896, 0.0
        %v6941 = vsel %vm3638, %v6892, 0.0
        %v6942 = vsel %vm3639, %v6888, 0.0
        %v6943 = vsel %vm3638, %v6884, 0.0
        %v6944 = vsel %vm3639, %v6880, 0.0
        %v6945 = vsel %vm3638, %v6876, 0.0
        %v6946 = vsel %vm3639, %v6872, 0.0
        %v6947 = vsel %vm3638, %v6868, 0.0
        %v6948 = vsel %vm3639, %v6864, 0.0
        %v6949 = vsel %vm3638, %v6860, 0.0
        %v6950 = vsel %vm3639, %v6856, 0.0
        %v6951 = vsel %vm3638, %v6917, 0.0
        %v6952 = vsel %vm3639, %v6913, 0.0
        %v6953 = vsel %vm3638, %v6909, 0.0
        %v6954 = vsel %vm3639, %v6905, 0.0
        %v6955 = vsel %vm3638, %v6901, 0.0
        %v6956 = vsel %vm3639, %v6897, 0.0
        %v6957 = vsel %vm3638, %v6893, 0.0
        %v6958 = vsel %vm3639, %v6889, 0.0
        %v6959 = vsel %vm3638, %v6885, 0.0
        %v6960 = vsel %vm3639, %v6881, 0.0
        %v6961 = vsel %vm3638, %v6877, 0.0
        %v6962 = vsel %vm3639, %v6873, 0.0
        %v6963 = vsel %vm3638, %v6869, 0.0
        %v6964 = vsel %vm3639, %v6865, 0.0
        %v6965 = vsel %vm3638, %v6861, 0.0
        %v6966 = vsel %vm3639, %v6857, 0.0
        %v6967 = vsel %vm3638, %v6918, 0.0
        %v6968 = vsel %vm3639, %v6914, 0.0
        %v6969 = vsel %vm3638, %v6910, 0.0
        %v6970 = vsel %vm3639, %v6906, 0.0
        %v6971 = vsel %vm3638, %v6902, 0.0
        %v6972 = vsel %vm3639, %v6898, 0.0
        %v6973 = vsel %vm3638, %v6894, 0.0
        %v6974 = vsel %vm3639, %v6890, 0.0
        %v6975 = vsel %vm3638, %v6886, 0.0
        %v6976 = vsel %vm3639, %v6882, 0.0
        %v6977 = vsel %vm3638, %v6878, 0.0
        %v6978 = vsel %vm3639, %v6874, 0.0
        %v6979 = vsel %vm3638, %v6870, 0.0
        %v6980 = vsel %vm3639, %v6866, 0.0
        %v6981 = vsel %vm3638, %v6862, 0.0
        %v6982 = vsel %vm3639, %v6858, 0.0
        %v6983 = vpack.c.bf16 %v6920, %v6919
        %v6984 = vpack.c.bf16 %v6922, %v6921
        %v6985 = vpack.c.bf16 %v6924, %v6923
        %v6986 = vpack.c.bf16 %v6926, %v6925
        %v6987 = vpack.c.bf16 %v6928, %v6927
        %v6988 = vpack.c.bf16 %v6930, %v6929
        %v6989 = vpack.c.bf16 %v6932, %v6931
        %v6990 = vpack.c.bf16 %v6934, %v6933
        %v6991 = vpack.c.bf16 %v6936, %v6935
        %v6992 = vpack.c.bf16 %v6938, %v6937
        %v6993 = vpack.c.bf16 %v6940, %v6939
        %v6994 = vpack.c.bf16 %v6942, %v6941
        %v6995 = vpack.c.bf16 %v6944, %v6943
        %v6996 = vpack.c.bf16 %v6946, %v6945
        %v6997 = vpack.c.bf16 %v6948, %v6947
        %v6998 = vpack.c.bf16 %v6950, %v6949
        %v6999 = vpack.c.bf16 %v6952, %v6951
        %v7000 = vpack.c.bf16 %v6954, %v6953
        %v7001 = vpack.c.bf16 %v6956, %v6955
        %v7002 = vpack.c.bf16 %v6958, %v6957
        %v7003 = vpack.c.bf16 %v6960, %v6959
        %v7004 = vpack.c.bf16 %v6962, %v6961
        %v7005 = vpack.c.bf16 %v6964, %v6963
        %v7006 = vpack.c.bf16 %v6966, %v6965
        %v7007 = vpack.c.bf16 %v6968, %v6967
        %v7008 = vpack.c.bf16 %v6970, %v6969
        %v7009 = vpack.c.bf16 %v6972, %v6971
        %v7010 = vpack.c.bf16 %v6974, %v6973
        %v7011 = vpack.c.bf16 %v6976, %v6975
        %v7012 = vpack.c.bf16 %v6978, %v6977
        %v7013 = vpack.c.bf16 %v6980, %v6979
        %v7014 = vpack.c.bf16 %v6982, %v6981
        %7015 = vrot.lane.b32.xlu0 %v6366, 1
        %v7016 = vpop.permute.xlu0 %7015
        %7017 = vrot.lane.b32.xlu0 %v6382, 1
        %v7018 = vpop.permute.xlu0 %7017
        %7019 = vrot.lane.b32.xlu0 %v6398, 1
        %v7020 = vpop.permute.xlu0 %7019
        %7021 = vrot.lane.b32.xlu0 %v6414, 1
        %v7022 = vpop.permute.xlu0 %7021
        %7023 = vrot.lane.b32.xlu0 %v6367, 1
        %v7024 = vpop.permute.xlu0 %7023
        %7025 = vrot.lane.b32.xlu0 %v6383, 1
        %v7026 = vpop.permute.xlu0 %7025
        %7027 = vrot.lane.b32.xlu0 %v6399, 1
        %v7028 = vpop.permute.xlu0 %7027
        %7029 = vrot.lane.b32.xlu0 %v6415, 1
        %v7030 = vpop.permute.xlu0 %7029
        %7031 = vrot.lane.b32.xlu0 %v6368, 1
        %v7032 = vpop.permute.xlu0 %7031
        %7033 = vrot.lane.b32.xlu0 %v6384, 1
        %v7034 = vpop.permute.xlu0 %7033
        %7035 = vrot.lane.b32.xlu0 %v6400, 1
        %v7036 = vpop.permute.xlu0 %7035
        %7037 = vrot.lane.b32.xlu0 %v6416, 1
        %v7038 = vpop.permute.xlu0 %7037
        %7039 = vrot.lane.b32.xlu0 %v6369, 1
        %v7040 = vpop.permute.xlu0 %7039
        %7041 = vrot.lane.b32.xlu0 %v6385, 1
        %v7042 = vpop.permute.xlu0 %7041
        %7043 = vrot.lane.b32.xlu0 %v6401, 1
        %v7044 = vpop.permute.xlu0 %7043
        %7045 = vrot.lane.b32.xlu0 %v6417, 1
        %v7046 = vpop.permute.xlu0 %7045
        %7047 = vrot.lane.b32.xlu0 %v6370, 1
        %v7048 = vpop.permute.xlu0 %7047
        %7049 = vrot.lane.b32.xlu0 %v6386, 1
        %v7050 = vpop.permute.xlu0 %7049
        %7051 = vrot.lane.b32.xlu0 %v6402, 1
        %v7052 = vpop.permute.xlu0 %7051
        %7053 = vrot.lane.b32.xlu0 %v6418, 1
        %v7054 = vpop.permute.xlu0 %7053
        %7055 = vrot.lane.b32.xlu0 %v6371, 1
        %v7056 = vpop.permute.xlu0 %7055
        %7057 = vrot.lane.b32.xlu0 %v6387, 1
        %v7058 = vpop.permute.xlu0 %7057
        %7059 = vrot.lane.b32.xlu0 %v6403, 1
        %v7060 = vpop.permute.xlu0 %7059
        %7061 = vrot.lane.b32.xlu0 %v6419, 1
        %v7062 = vpop.permute.xlu0 %7061
        %7063 = vrot.lane.b32.xlu0 %v6372, 1
        %v7064 = vpop.permute.xlu0 %7063
        %7065 = vrot.lane.b32.xlu0 %v6388, 1
        %v7066 = vpop.permute.xlu0 %7065
        %7067 = vrot.lane.b32.xlu0 %v6404, 1
        %v7068 = vpop.permute.xlu0 %7067
        %7069 = vrot.lane.b32.xlu0 %v6420, 1
        %v7070 = vpop.permute.xlu0 %7069
        %7071 = vrot.lane.b32.xlu0 %v6373, 1
        %v7072 = vpop.permute.xlu0 %7071
        %7073 = vrot.lane.b32.xlu0 %v6389, 1
        %v7074 = vpop.permute.xlu0 %7073
        %7075 = vrot.lane.b32.xlu0 %v6405, 1
        %v7076 = vpop.permute.xlu0 %7075
        %7077 = vrot.lane.b32.xlu0 %v6421, 1
        %v7078 = vpop.permute.xlu0 %7077
        %7079 = vrot.lane.b32.xlu0 %v6374, 1
        %v7080 = vpop.permute.xlu0 %7079
        %7081 = vrot.lane.b32.xlu0 %v6390, 1
        %v7082 = vpop.permute.xlu0 %7081
        %7083 = vrot.lane.b32.xlu0 %v6406, 1
        %v7084 = vpop.permute.xlu0 %7083
        %7085 = vrot.lane.b32.xlu0 %v6422, 1
        %v7086 = vpop.permute.xlu0 %7085
        %7087 = vrot.lane.b32.xlu0 %v6375, 1
        %v7088 = vpop.permute.xlu0 %7087
        %7089 = vrot.lane.b32.xlu0 %v6391, 1
        %v7090 = vpop.permute.xlu0 %7089
        %7091 = vrot.lane.b32.xlu0 %v6407, 1
        %v7092 = vpop.permute.xlu0 %7091
        %7093 = vrot.lane.b32.xlu0 %v6423, 1
        %v7094 = vpop.permute.xlu0 %7093
        %7095 = vrot.lane.b32.xlu0 %v6376, 1
        %v7096 = vpop.permute.xlu0 %7095
        %7097 = vrot.lane.b32.xlu0 %v6392, 1
        %v7098 = vpop.permute.xlu0 %7097
        %7099 = vrot.lane.b32.xlu0 %v6408, 1
        %v7100 = vpop.permute.xlu0 %7099
        %7101 = vrot.lane.b32.xlu0 %v6424, 1
        %v7102 = vpop.permute.xlu0 %7101
        %7103 = vrot.lane.b32.xlu0 %v6377, 1
        %v7104 = vpop.permute.xlu0 %7103
        %7105 = vrot.lane.b32.xlu0 %v6393, 1
        %v7106 = vpop.permute.xlu0 %7105
        %7107 = vrot.lane.b32.xlu0 %v6409, 1
        %v7108 = vpop.permute.xlu0 %7107
        %7109 = vrot.lane.b32.xlu0 %v6425, 1
        %v7110 = vpop.permute.xlu0 %7109
        %7111 = vrot.lane.b32.xlu0 %v6378, 1
        %v7112 = vpop.permute.xlu0 %7111
        %7113 = vrot.lane.b32.xlu0 %v6394, 1
        %v7114 = vpop.permute.xlu0 %7113
        %7115 = vrot.lane.b32.xlu0 %v6410, 1
        %v7116 = vpop.permute.xlu0 %7115
        %7117 = vrot.lane.b32.xlu0 %v6426, 1
        %v7118 = vpop.permute.xlu0 %7117
        %7119 = vrot.lane.b32.xlu0 %v6379, 1
        %v7120 = vpop.permute.xlu0 %7119
        %7121 = vrot.lane.b32.xlu0 %v6395, 1
        %v7122 = vpop.permute.xlu0 %7121
        %7123 = vrot.lane.b32.xlu0 %v6411, 1
        %v7124 = vpop.permute.xlu0 %7123
        %7125 = vrot.lane.b32.xlu0 %v6427, 1
        %v7126 = vpop.permute.xlu0 %7125
        %7127 = vrot.lane.b32.xlu0 %v6380, 1
        %v7128 = vpop.permute.xlu0 %7127
        %7129 = vrot.lane.b32.xlu0 %v6396, 1
        %v7130 = vpop.permute.xlu0 %7129
        %7131 = vrot.lane.b32.xlu0 %v6412, 1
        %v7132 = vpop.permute.xlu0 %7131
        %7133 = vrot.lane.b32.xlu0 %v6428, 1
        %v7134 = vpop.permute.xlu0 %7133
        %7135 = vrot.lane.b32.xlu0 %v6381, 1
        %v7136 = vpop.permute.xlu0 %7135
        %7137 = vrot.lane.b32.xlu0 %v6397, 1
        %v7138 = vpop.permute.xlu0 %7137
        %7139 = vrot.lane.b32.xlu0 %v6413, 1
        %v7140 = vpop.permute.xlu0 %7139
        %7141 = vrot.lane.b32.xlu0 %v6429, 1
        %v7142 = vpop.permute.xlu0 %7141
        %v7143 = vsel %vm844, %v7128, %v7136
        %v7144 = vsel %vm844, %v7130, %v7138
        %v7145 = vsel %vm844, %v7132, %v7140
        %v7146 = vsel %vm844, %v7134, %v7142
        %v7147 = vsel %vm844, %v7120, %v7128
        %v7148 = vsel %vm844, %v7122, %v7130
        %v7149 = vsel %vm844, %v7124, %v7132
        %v7150 = vsel %vm844, %v7126, %v7134
        %v7151 = vsel %vm844, %v7112, %v7120
        %v7152 = vsel %vm844, %v7114, %v7122
        %v7153 = vsel %vm844, %v7116, %v7124
        %v7154 = vsel %vm844, %v7118, %v7126
        %v7155 = vsel %vm844, %v7104, %v7112
        %v7156 = vsel %vm844, %v7106, %v7114
        %v7157 = vsel %vm844, %v7108, %v7116
        %v7158 = vsel %vm844, %v7110, %v7118
        %v7159 = vsel %vm844, %v7096, %v7104
        %v7160 = vsel %vm844, %v7098, %v7106
        %v7161 = vsel %vm844, %v7100, %v7108
        %v7162 = vsel %vm844, %v7102, %v7110
        %v7163 = vsel %vm844, %v7088, %v7096
        %v7164 = vsel %vm844, %v7090, %v7098
        %v7165 = vsel %vm844, %v7092, %v7100
        %v7166 = vsel %vm844, %v7094, %v7102
        %v7167 = vsel %vm844, %v7080, %v7088
        %v7168 = vsel %vm844, %v7082, %v7090
        %v7169 = vsel %vm844, %v7084, %v7092
        %v7170 = vsel %vm844, %v7086, %v7094
        %v7171 = vsel %vm844, %v7072, %v7080
        %v7172 = vsel %vm844, %v7074, %v7082
        %v7173 = vsel %vm844, %v7076, %v7084
        %v7174 = vsel %vm844, %v7078, %v7086
        %v7175 = vsel %vm844, %v7064, %v7072
        %v7176 = vsel %vm844, %v7066, %v7074
        %v7177 = vsel %vm844, %v7068, %v7076
        %v7178 = vsel %vm844, %v7070, %v7078
        %v7179 = vsel %vm844, %v7056, %v7064
        %v7180 = vsel %vm844, %v7058, %v7066
        %v7181 = vsel %vm844, %v7060, %v7068
        %v7182 = vsel %vm844, %v7062, %v7070
        %v7183 = vsel %vm844, %v7048, %v7056
        %v7184 = vsel %vm844, %v7050, %v7058
        %v7185 = vsel %vm844, %v7052, %v7060
        %v7186 = vsel %vm844, %v7054, %v7062
        %v7187 = vsel %vm844, %v7040, %v7048
        %v7188 = vsel %vm844, %v7042, %v7050
        %v7189 = vsel %vm844, %v7044, %v7052
        %v7190 = vsel %vm844, %v7046, %v7054
        %v7191 = vsel %vm844, %v7032, %v7040
        %v7192 = vsel %vm844, %v7034, %v7042
        %v7193 = vsel %vm844, %v7036, %v7044
        %v7194 = vsel %vm844, %v7038, %v7046
        %v7195 = vsel %vm844, %v7024, %v7032
        %v7196 = vsel %vm844, %v7026, %v7034
        %v7197 = vsel %vm844, %v7028, %v7036
        %v7198 = vsel %vm844, %v7030, %v7038
        %v7199 = vsel %vm844, %v7016, %v7024
        %v7200 = vsel %vm844, %v7018, %v7026
        %v7201 = vsel %vm844, %v7020, %v7028
        %v7202 = vsel %vm844, %v7022, %v7030
        %v7203 = vsel %vm844, %v7136, %v7016
        %v7204 = vsel %vm844, %v7138, %v7018
        %v7205 = vsel %vm844, %v7140, %v7020
        %v7206 = vsel %vm844, %v7142, %v7022
        %v7207 = vsel %vm867, %v7203, 0.0
        %v7208 = vsel %vm868, %v7199, 0.0
        %v7209 = vsel %vm867, %v7195, 0.0
        %v7210 = vsel %vm868, %v7191, 0.0
        %v7211 = vsel %vm867, %v7187, 0.0
        %v7212 = vsel %vm868, %v7183, 0.0
        %v7213 = vsel %vm867, %v7179, 0.0
        %v7214 = vsel %vm868, %v7175, 0.0
        %v7215 = vsel %vm867, %v7171, 0.0
        %v7216 = vsel %vm868, %v7167, 0.0
        %v7217 = vsel %vm867, %v7163, 0.0
        %v7218 = vsel %vm868, %v7159, 0.0
        %v7219 = vsel %vm867, %v7155, 0.0
        %v7220 = vsel %vm868, %v7151, 0.0
        %v7221 = vsel %vm867, %v7147, 0.0
        %v7222 = vsel %vm868, %v7143, 0.0
        %v7223 = vsel %vm867, %v7204, 0.0
        %v7224 = vsel %vm868, %v7200, 0.0
        %v7225 = vsel %vm867, %v7196, 0.0
        %v7226 = vsel %vm868, %v7192, 0.0
        %v7227 = vsel %vm867, %v7188, 0.0
        %v7228 = vsel %vm868, %v7184, 0.0
        %v7229 = vsel %vm867, %v7180, 0.0
        %v7230 = vsel %vm868, %v7176, 0.0
        %v7231 = vsel %vm867, %v7172, 0.0
        %v7232 = vsel %vm868, %v7168, 0.0
        %v7233 = vsel %vm867, %v7164, 0.0
        %v7234 = vsel %vm868, %v7160, 0.0
        %v7235 = vsel %vm867, %v7156, 0.0
        %v7236 = vsel %vm868, %v7152, 0.0
        %v7237 = vsel %vm867, %v7148, 0.0
        %v7238 = vsel %vm868, %v7144, 0.0
        %v7239 = vsel %vm867, %v7205, 0.0
        %v7240 = vsel %vm868, %v7201, 0.0
        %v7241 = vsel %vm867, %v7197, 0.0
        %v7242 = vsel %vm868, %v7193, 0.0
        %v7243 = vsel %vm867, %v7189, 0.0
        %v7244 = vsel %vm868, %v7185, 0.0
        %v7245 = vsel %vm867, %v7181, 0.0
        %v7246 = vsel %vm868, %v7177, 0.0
        %v7247 = vsel %vm867, %v7173, 0.0
        %v7248 = vsel %vm868, %v7169, 0.0
        %v7249 = vsel %vm867, %v7165, 0.0
        %v7250 = vsel %vm868, %v7161, 0.0
        %v7251 = vsel %vm867, %v7157, 0.0
        %v7252 = vsel %vm868, %v7153, 0.0
        %v7253 = vsel %vm867, %v7149, 0.0
        %v7254 = vsel %vm868, %v7145, 0.0
        %v7255 = vsel %vm867, %v7206, 0.0
        %v7256 = vsel %vm868, %v7202, 0.0
        %v7257 = vsel %vm867, %v7198, 0.0
        %v7258 = vsel %vm868, %v7194, 0.0
        %v7259 = vsel %vm867, %v7190, 0.0
        %v7260 = vsel %vm868, %v7186, 0.0
        %v7261 = vsel %vm867, %v7182, 0.0
        %v7262 = vsel %vm868, %v7178, 0.0
        %v7263 = vsel %vm867, %v7174, 0.0
        %v7264 = vsel %vm868, %v7170, 0.0
        %v7265 = vsel %vm867, %v7166, 0.0
        %v7266 = vsel %vm868, %v7162, 0.0
        %v7267 = vsel %vm867, %v7158, 0.0
        %v7268 = vsel %vm868, %v7154, 0.0
        %v7269 = vsel %vm867, %v7150, 0.0
        %v7270 = vsel %vm868, %v7146, 0.0
        %v7271 = vpack.c.bf16 %v7208, %v7207
        %v7272 = vpack.c.bf16 %v7210, %v7209
        %v7273 = vpack.c.bf16 %v7212, %v7211
        %v7274 = vpack.c.bf16 %v7214, %v7213
        %v7275 = vpack.c.bf16 %v7216, %v7215
        %v7276 = vpack.c.bf16 %v7218, %v7217
        %v7277 = vpack.c.bf16 %v7220, %v7219
        %v7278 = vpack.c.bf16 %v7222, %v7221
        %v7279 = vpack.c.bf16 %v7224, %v7223
        %v7280 = vpack.c.bf16 %v7226, %v7225
        %v7281 = vpack.c.bf16 %v7228, %v7227
        %v7282 = vpack.c.bf16 %v7230, %v7229
        %v7283 = vpack.c.bf16 %v7232, %v7231
        %v7284 = vpack.c.bf16 %v7234, %v7233
        %v7285 = vpack.c.bf16 %v7236, %v7235
        %v7286 = vpack.c.bf16 %v7238, %v7237
        %v7287 = vpack.c.bf16 %v7240, %v7239
        %v7288 = vpack.c.bf16 %v7242, %v7241
        %v7289 = vpack.c.bf16 %v7244, %v7243
        %v7290 = vpack.c.bf16 %v7246, %v7245
        %v7291 = vpack.c.bf16 %v7248, %v7247
        %v7292 = vpack.c.bf16 %v7250, %v7249
        %v7293 = vpack.c.bf16 %v7252, %v7251
        %v7294 = vpack.c.bf16 %v7254, %v7253
        %v7295 = vpack.c.bf16 %v7256, %v7255
        %v7296 = vpack.c.bf16 %v7258, %v7257
        %v7297 = vpack.c.bf16 %v7260, %v7259
        %v7298 = vpack.c.bf16 %v7262, %v7261
        %v7299 = vpack.c.bf16 %v7264, %v7263
        %v7300 = vpack.c.bf16 %v7266, %v7265
        %v7301 = vpack.c.bf16 %v7268, %v7267
        %v7302 = vpack.c.bf16 %v7270, %v7269
        %v7303 = vpack.c.bf16 %v6367, %v6366
        %v7304 = vpack.c.bf16 %v6369, %v6368
        %v7305 = vpack.c.bf16 %v6371, %v6370
        %v7306 = vpack.c.bf16 %v6373, %v6372
        %v7307 = vpack.c.bf16 %v6375, %v6374
        %v7308 = vpack.c.bf16 %v6377, %v6376
        %v7309 = vpack.c.bf16 %v6379, %v6378
        %v7310 = vpack.c.bf16 %v6381, %v6380
        %v7311 = vpack.c.bf16 %v6383, %v6382
        %v7312 = vpack.c.bf16 %v6385, %v6384
        %v7313 = vpack.c.bf16 %v6387, %v6386
        %v7314 = vpack.c.bf16 %v6389, %v6388
        %v7315 = vpack.c.bf16 %v6391, %v6390
        %v7316 = vpack.c.bf16 %v6393, %v6392
        %v7317 = vpack.c.bf16 %v6395, %v6394
        %v7318 = vpack.c.bf16 %v6397, %v6396
        %v7319 = vpack.c.bf16 %v6399, %v6398
        %v7320 = vpack.c.bf16 %v6401, %v6400
        %v7321 = vpack.c.bf16 %v6403, %v6402
        %v7322 = vpack.c.bf16 %v6405, %v6404
        %v7323 = vpack.c.bf16 %v6407, %v6406
        %v7324 = vpack.c.bf16 %v6409, %v6408
        %v7325 = vpack.c.bf16 %v6411, %v6410
        %v7326 = vpack.c.bf16 %v6413, %v6412
        %v7327 = vpack.c.bf16 %v6415, %v6414
        %v7328 = vpack.c.bf16 %v6417, %v6416
        %v7329 = vpack.c.bf16 %v6419, %v6418
        %v7330 = vpack.c.bf16 %v6421, %v6420
        %v7331 = vpack.c.bf16 %v6423, %v6422
        %v7332 = vpack.c.bf16 %v6425, %v6424
        %v7333 = vpack.c.bf16 %v6427, %v6426
        %v7334 = vpack.c.bf16 %v6429, %v6428
        %7335 = vrot.lane.b32.xlu0 %v6366, 127
        %v7336 = vpop.permute.xlu0 %7335
        %7337 = vrot.lane.b32.xlu0 %v6382, 127
        %v7338 = vpop.permute.xlu0 %7337
        %7339 = vrot.lane.b32.xlu0 %v6398, 127
        %v7340 = vpop.permute.xlu0 %7339
        %7341 = vrot.lane.b32.xlu0 %v6414, 127
        %v7342 = vpop.permute.xlu0 %7341
        %7343 = vrot.lane.b32.xlu0 %v6367, 127
        %v7344 = vpop.permute.xlu0 %7343
        %7345 = vrot.lane.b32.xlu0 %v6383, 127
        %v7346 = vpop.permute.xlu0 %7345
        %7347 = vrot.lane.b32.xlu0 %v6399, 127
        %v7348 = vpop.permute.xlu0 %7347
        %7349 = vrot.lane.b32.xlu0 %v6415, 127
        %v7350 = vpop.permute.xlu0 %7349
        %7351 = vrot.lane.b32.xlu0 %v6368, 127
        %v7352 = vpop.permute.xlu0 %7351
        %7353 = vrot.lane.b32.xlu0 %v6384, 127
        %v7354 = vpop.permute.xlu0 %7353
        %7355 = vrot.lane.b32.xlu0 %v6400, 127
        %v7356 = vpop.permute.xlu0 %7355
        %7357 = vrot.lane.b32.xlu0 %v6416, 127
        %v7358 = vpop.permute.xlu0 %7357
        %7359 = vrot.lane.b32.xlu0 %v6369, 127
        %v7360 = vpop.permute.xlu0 %7359
        %7361 = vrot.lane.b32.xlu0 %v6385, 127
        %v7362 = vpop.permute.xlu0 %7361
        %7363 = vrot.lane.b32.xlu0 %v6401, 127
        %v7364 = vpop.permute.xlu0 %7363
        %7365 = vrot.lane.b32.xlu0 %v6417, 127
        %v7366 = vpop.permute.xlu0 %7365
        %7367 = vrot.lane.b32.xlu0 %v6370, 127
        %v7368 = vpop.permute.xlu0 %7367
        %7369 = vrot.lane.b32.xlu0 %v6386, 127
        %v7370 = vpop.permute.xlu0 %7369
        %7371 = vrot.lane.b32.xlu0 %v6402, 127
        %v7372 = vpop.permute.xlu0 %7371
        %7373 = vrot.lane.b32.xlu0 %v6418, 127
        %v7374 = vpop.permute.xlu0 %7373
        %7375 = vrot.lane.b32.xlu0 %v6371, 127
        %v7376 = vpop.permute.xlu0 %7375
        %7377 = vrot.lane.b32.xlu0 %v6387, 127
        %v7378 = vpop.permute.xlu0 %7377
        %7379 = vrot.lane.b32.xlu0 %v6403, 127
        %v7380 = vpop.permute.xlu0 %7379
        %7381 = vrot.lane.b32.xlu0 %v6419, 127
        %v7382 = vpop.permute.xlu0 %7381
        %7383 = vrot.lane.b32.xlu0 %v6372, 127
        %v7384 = vpop.permute.xlu0 %7383
        %7385 = vrot.lane.b32.xlu0 %v6388, 127
        %v7386 = vpop.permute.xlu0 %7385
        %7387 = vrot.lane.b32.xlu0 %v6404, 127
        %v7388 = vpop.permute.xlu0 %7387
        %7389 = vrot.lane.b32.xlu0 %v6420, 127
        %v7390 = vpop.permute.xlu0 %7389
        %7391 = vrot.lane.b32.xlu0 %v6373, 127
        %v7392 = vpop.permute.xlu0 %7391
        %7393 = vrot.lane.b32.xlu0 %v6389, 127
        %v7394 = vpop.permute.xlu0 %7393
        %7395 = vrot.lane.b32.xlu0 %v6405, 127
        %v7396 = vpop.permute.xlu0 %7395
        %7397 = vrot.lane.b32.xlu0 %v6421, 127
        %v7398 = vpop.permute.xlu0 %7397
        %7399 = vrot.lane.b32.xlu0 %v6374, 127
        %v7400 = vpop.permute.xlu0 %7399
        %7401 = vrot.lane.b32.xlu0 %v6390, 127
        %v7402 = vpop.permute.xlu0 %7401
        %7403 = vrot.lane.b32.xlu0 %v6406, 127
        %v7404 = vpop.permute.xlu0 %7403
        %7405 = vrot.lane.b32.xlu0 %v6422, 127
        %v7406 = vpop.permute.xlu0 %7405
        %7407 = vrot.lane.b32.xlu0 %v6375, 127
        %v7408 = vpop.permute.xlu0 %7407
        %7409 = vrot.lane.b32.xlu0 %v6391, 127
        %v7410 = vpop.permute.xlu0 %7409
        %7411 = vrot.lane.b32.xlu0 %v6407, 127
        %v7412 = vpop.permute.xlu0 %7411
        %7413 = vrot.lane.b32.xlu0 %v6423, 127
        %v7414 = vpop.permute.xlu0 %7413
        %7415 = vrot.lane.b32.xlu0 %v6376, 127
        %v7416 = vpop.permute.xlu0 %7415
        %7417 = vrot.lane.b32.xlu0 %v6392, 127
        %v7418 = vpop.permute.xlu0 %7417
        %7419 = vrot.lane.b32.xlu0 %v6408, 127
        %v7420 = vpop.permute.xlu0 %7419
        %7421 = vrot.lane.b32.xlu0 %v6424, 127
        %v7422 = vpop.permute.xlu0 %7421
        %7423 = vrot.lane.b32.xlu0 %v6377, 127
        %v7424 = vpop.permute.xlu0 %7423
        %7425 = vrot.lane.b32.xlu0 %v6393, 127
        %v7426 = vpop.permute.xlu0 %7425
        %7427 = vrot.lane.b32.xlu0 %v6409, 127
        %v7428 = vpop.permute.xlu0 %7427
        %7429 = vrot.lane.b32.xlu0 %v6425, 127
        %v7430 = vpop.permute.xlu0 %7429
        %7431 = vrot.lane.b32.xlu0 %v6378, 127
        %v7432 = vpop.permute.xlu0 %7431
        %7433 = vrot.lane.b32.xlu0 %v6394, 127
        %v7434 = vpop.permute.xlu0 %7433
        %7435 = vrot.lane.b32.xlu0 %v6410, 127
        %v7436 = vpop.permute.xlu0 %7435
        %7437 = vrot.lane.b32.xlu0 %v6426, 127
        %v7438 = vpop.permute.xlu0 %7437
        %7439 = vrot.lane.b32.xlu0 %v6379, 127
        %v7440 = vpop.permute.xlu0 %7439
        %7441 = vrot.lane.b32.xlu0 %v6395, 127
        %v7442 = vpop.permute.xlu0 %7441
        %7443 = vrot.lane.b32.xlu0 %v6411, 127
        %v7444 = vpop.permute.xlu0 %7443
        %7445 = vrot.lane.b32.xlu0 %v6427, 127
        %v7446 = vpop.permute.xlu0 %7445
        %7447 = vrot.lane.b32.xlu0 %v6380, 127
        %v7448 = vpop.permute.xlu0 %7447
        %7449 = vrot.lane.b32.xlu0 %v6396, 127
        %v7450 = vpop.permute.xlu0 %7449
        %7451 = vrot.lane.b32.xlu0 %v6412, 127
        %v7452 = vpop.permute.xlu0 %7451
        %7453 = vrot.lane.b32.xlu0 %v6428, 127
        %v7454 = vpop.permute.xlu0 %7453
        %7455 = vrot.lane.b32.xlu0 %v6381, 127
        %v7456 = vpop.permute.xlu0 %7455
        %7457 = vrot.lane.b32.xlu0 %v6397, 127
        %v7458 = vpop.permute.xlu0 %7457
        %7459 = vrot.lane.b32.xlu0 %v6413, 127
        %v7460 = vpop.permute.xlu0 %7459
        %7461 = vrot.lane.b32.xlu0 %v6429, 127
        %v7462 = vpop.permute.xlu0 %7461
        %v7463 = vsel %vm917, %v7448, %v7456
        %v7464 = vsel %vm917, %v7450, %v7458
        %v7465 = vsel %vm917, %v7452, %v7460
        %v7466 = vsel %vm917, %v7454, %v7462
        %v7467 = vsel %vm917, %v7440, %v7448
        %v7468 = vsel %vm917, %v7442, %v7450
        %v7469 = vsel %vm917, %v7444, %v7452
        %v7470 = vsel %vm917, %v7446, %v7454
        %v7471 = vsel %vm917, %v7432, %v7440
        %v7472 = vsel %vm917, %v7434, %v7442
        %v7473 = vsel %vm917, %v7436, %v7444
        %v7474 = vsel %vm917, %v7438, %v7446
        %v7475 = vsel %vm917, %v7424, %v7432
        %v7476 = vsel %vm917, %v7426, %v7434
        %v7477 = vsel %vm917, %v7428, %v7436
        %v7478 = vsel %vm917, %v7430, %v7438
        %v7479 = vsel %vm917, %v7416, %v7424
        %v7480 = vsel %vm917, %v7418, %v7426
        %v7481 = vsel %vm917, %v7420, %v7428
        %v7482 = vsel %vm917, %v7422, %v7430
        %v7483 = vsel %vm917, %v7408, %v7416
        %v7484 = vsel %vm917, %v7410, %v7418
        %v7485 = vsel %vm917, %v7412, %v7420
        %v7486 = vsel %vm917, %v7414, %v7422
        %v7487 = vsel %vm917, %v7400, %v7408
        %v7488 = vsel %vm917, %v7402, %v7410
        %v7489 = vsel %vm917, %v7404, %v7412
        %v7490 = vsel %vm917, %v7406, %v7414
        %v7491 = vsel %vm917, %v7392, %v7400
        %v7492 = vsel %vm917, %v7394, %v7402
        %v7493 = vsel %vm917, %v7396, %v7404
        %v7494 = vsel %vm917, %v7398, %v7406
        %v7495 = vsel %vm917, %v7384, %v7392
        %v7496 = vsel %vm917, %v7386, %v7394
        %v7497 = vsel %vm917, %v7388, %v7396
        %v7498 = vsel %vm917, %v7390, %v7398
        %v7499 = vsel %vm917, %v7376, %v7384
        %v7500 = vsel %vm917, %v7378, %v7386
        %v7501 = vsel %vm917, %v7380, %v7388
        %v7502 = vsel %vm917, %v7382, %v7390
        %v7503 = vsel %vm917, %v7368, %v7376
        %v7504 = vsel %vm917, %v7370, %v7378
        %v7505 = vsel %vm917, %v7372, %v7380
        %v7506 = vsel %vm917, %v7374, %v7382
        %v7507 = vsel %vm917, %v7360, %v7368
        %v7508 = vsel %vm917, %v7362, %v7370
        %v7509 = vsel %vm917, %v7364, %v7372
        %v7510 = vsel %vm917, %v7366, %v7374
        %v7511 = vsel %vm917, %v7352, %v7360
        %v7512 = vsel %vm917, %v7354, %v7362
        %v7513 = vsel %vm917, %v7356, %v7364
        %v7514 = vsel %vm917, %v7358, %v7366
        %v7515 = vsel %vm917, %v7344, %v7352
        %v7516 = vsel %vm917, %v7346, %v7354
        %v7517 = vsel %vm917, %v7348, %v7356
        %v7518 = vsel %vm917, %v7350, %v7358
        %v7519 = vsel %vm917, %v7336, %v7344
        %v7520 = vsel %vm917, %v7338, %v7346
        %v7521 = vsel %vm917, %v7340, %v7348
        %v7522 = vsel %vm917, %v7342, %v7350
        %v7523 = vsel %vm917, %v7456, %v7336
        %v7524 = vsel %vm917, %v7458, %v7338
        %v7525 = vsel %vm917, %v7460, %v7340
        %v7526 = vsel %vm917, %v7462, %v7342
        %v7527 = vsel %vm940, %v7519, 0.0
        %v7528 = vsel %vm941, %v7515, 0.0
        %v7529 = vsel %vm940, %v7511, 0.0
        %v7530 = vsel %vm941, %v7507, 0.0
        %v7531 = vsel %vm940, %v7503, 0.0
        %v7532 = vsel %vm941, %v7499, 0.0
        %v7533 = vsel %vm940, %v7495, 0.0
        %v7534 = vsel %vm941, %v7491, 0.0
        %v7535 = vsel %vm940, %v7487, 0.0
        %v7536 = vsel %vm941, %v7483, 0.0
        %v7537 = vsel %vm940, %v7479, 0.0
        %v7538 = vsel %vm941, %v7475, 0.0
        %v7539 = vsel %vm940, %v7471, 0.0
        %v7540 = vsel %vm941, %v7467, 0.0
        %v7541 = vsel %vm940, %v7463, 0.0
        %v7542 = vsel %vm941, %v7523, 0.0
        %v7543 = vsel %vm940, %v7520, 0.0
        %v7544 = vsel %vm941, %v7516, 0.0
        %v7545 = vsel %vm940, %v7512, 0.0
        %v7546 = vsel %vm941, %v7508, 0.0
        %v7547 = vsel %vm940, %v7504, 0.0
        %v7548 = vsel %vm941, %v7500, 0.0
        %v7549 = vsel %vm940, %v7496, 0.0
        %v7550 = vsel %vm941, %v7492, 0.0
        %v7551 = vsel %vm940, %v7488, 0.0
        %v7552 = vsel %vm941, %v7484, 0.0
        %v7553 = vsel %vm940, %v7480, 0.0
        %v7554 = vsel %vm941, %v7476, 0.0
        %v7555 = vsel %vm940, %v7472, 0.0
        %v7556 = vsel %vm941, %v7468, 0.0
        %v7557 = vsel %vm940, %v7464, 0.0
        %v7558 = vsel %vm941, %v7524, 0.0
        %v7559 = vsel %vm940, %v7521, 0.0
        %v7560 = vsel %vm941, %v7517, 0.0
        %v7561 = vsel %vm940, %v7513, 0.0
        %v7562 = vsel %vm941, %v7509, 0.0
        %v7563 = vsel %vm940, %v7505, 0.0
        %v7564 = vsel %vm941, %v7501, 0.0
        %v7565 = vsel %vm940, %v7497, 0.0
        %v7566 = vsel %vm941, %v7493, 0.0
        %v7567 = vsel %vm940, %v7489, 0.0
        %v7568 = vsel %vm941, %v7485, 0.0
        %v7569 = vsel %vm940, %v7481, 0.0
        %v7570 = vsel %vm941, %v7477, 0.0
        %v7571 = vsel %vm940, %v7473, 0.0
        %v7572 = vsel %vm941, %v7469, 0.0
        %v7573 = vsel %vm940, %v7465, 0.0
        %v7574 = vsel %vm941, %v7525, 0.0
        %v7575 = vsel %vm940, %v7522, 0.0
        %v7576 = vsel %vm941, %v7518, 0.0
        %v7577 = vsel %vm940, %v7514, 0.0
        %v7578 = vsel %vm941, %v7510, 0.0
        %v7579 = vsel %vm940, %v7506, 0.0
        %v7580 = vsel %vm941, %v7502, 0.0
        %v7581 = vsel %vm940, %v7498, 0.0
        %v7582 = vsel %vm941, %v7494, 0.0
        %v7583 = vsel %vm940, %v7490, 0.0
        %v7584 = vsel %vm941, %v7486, 0.0
        %v7585 = vsel %vm940, %v7482, 0.0
        %v7586 = vsel %vm941, %v7478, 0.0
        %v7587 = vsel %vm940, %v7474, 0.0
        %v7588 = vsel %vm941, %v7470, 0.0
        %v7589 = vsel %vm940, %v7466, 0.0
        %v7590 = vsel %vm941, %v7526, 0.0
        %v7591 = vpack.c.bf16 %v7528, %v7527
        %v7592 = vpack.c.bf16 %v7530, %v7529
        %v7593 = vpack.c.bf16 %v7532, %v7531
        %v7594 = vpack.c.bf16 %v7534, %v7533
        %v7595 = vpack.c.bf16 %v7536, %v7535
        %v7596 = vpack.c.bf16 %v7538, %v7537
        %v7597 = vpack.c.bf16 %v7540, %v7539
        %v7598 = vpack.c.bf16 %v7542, %v7541
        %v7599 = vpack.c.bf16 %v7544, %v7543
        %v7600 = vpack.c.bf16 %v7546, %v7545
        %v7601 = vpack.c.bf16 %v7548, %v7547
        %v7602 = vpack.c.bf16 %v7550, %v7549
        %v7603 = vpack.c.bf16 %v7552, %v7551
        %v7604 = vpack.c.bf16 %v7554, %v7553
        %v7605 = vpack.c.bf16 %v7556, %v7555
        %v7606 = vpack.c.bf16 %v7558, %v7557
        %v7607 = vpack.c.bf16 %v7560, %v7559
        %v7608 = vpack.c.bf16 %v7562, %v7561
        %v7609 = vpack.c.bf16 %v7564, %v7563
        %v7610 = vpack.c.bf16 %v7566, %v7565
        %v7611 = vpack.c.bf16 %v7568, %v7567
        %v7612 = vpack.c.bf16 %v7570, %v7569
        %v7613 = vpack.c.bf16 %v7572, %v7571
        %v7614 = vpack.c.bf16 %v7574, %v7573
        %v7615 = vpack.c.bf16 %v7576, %v7575
        %v7616 = vpack.c.bf16 %v7578, %v7577
        %v7617 = vpack.c.bf16 %v7580, %v7579
        %v7618 = vpack.c.bf16 %v7582, %v7581
        %v7619 = vpack.c.bf16 %v7584, %v7583
        %v7620 = vpack.c.bf16 %v7586, %v7585
        %v7621 = vpack.c.bf16 %v7588, %v7587
        %v7622 = vpack.c.bf16 %v7590, %v7589
        %7623 = vrot.lane.b32.xlu0 %v6366, 126
        %v7624 = vpop.permute.xlu0 %7623
        %7625 = vrot.lane.b32.xlu0 %v6382, 126
        %v7626 = vpop.permute.xlu0 %7625
        %7627 = vrot.lane.b32.xlu0 %v6398, 126
        %v7628 = vpop.permute.xlu0 %7627
        %7629 = vrot.lane.b32.xlu0 %v6414, 126
        %v7630 = vpop.permute.xlu0 %7629
        %7631 = vrot.lane.b32.xlu0 %v6367, 126
        %v7632 = vpop.permute.xlu0 %7631
        %7633 = vrot.lane.b32.xlu0 %v6383, 126
        %v7634 = vpop.permute.xlu0 %7633
        %7635 = vrot.lane.b32.xlu0 %v6399, 126
        %v7636 = vpop.permute.xlu0 %7635
        %7637 = vrot.lane.b32.xlu0 %v6415, 126
        %v7638 = vpop.permute.xlu0 %7637
        %7639 = vrot.lane.b32.xlu0 %v6368, 126
        %v7640 = vpop.permute.xlu0 %7639
        %7641 = vrot.lane.b32.xlu0 %v6384, 126
        %v7642 = vpop.permute.xlu0 %7641
        %7643 = vrot.lane.b32.xlu0 %v6400, 126
        %v7644 = vpop.permute.xlu0 %7643
        %7645 = vrot.lane.b32.xlu0 %v6416, 126
        %v7646 = vpop.permute.xlu0 %7645
        %7647 = vrot.lane.b32.xlu0 %v6369, 126
        %v7648 = vpop.permute.xlu0 %7647
        %7649 = vrot.lane.b32.xlu0 %v6385, 126
        %v7650 = vpop.permute.xlu0 %7649
        %7651 = vrot.lane.b32.xlu0 %v6401, 126
        %v7652 = vpop.permute.xlu0 %7651
        %7653 = vrot.lane.b32.xlu0 %v6417, 126
        %v7654 = vpop.permute.xlu0 %7653
        %7655 = vrot.lane.b32.xlu0 %v6370, 126
        %v7656 = vpop.permute.xlu0 %7655
        %7657 = vrot.lane.b32.xlu0 %v6386, 126
        %v7658 = vpop.permute.xlu0 %7657
        %7659 = vrot.lane.b32.xlu0 %v6402, 126
        %v7660 = vpop.permute.xlu0 %7659
        %7661 = vrot.lane.b32.xlu0 %v6418, 126
        %v7662 = vpop.permute.xlu0 %7661
        %7663 = vrot.lane.b32.xlu0 %v6371, 126
        %v7664 = vpop.permute.xlu0 %7663
        %7665 = vrot.lane.b32.xlu0 %v6387, 126
        %v7666 = vpop.permute.xlu0 %7665
        %7667 = vrot.lane.b32.xlu0 %v6403, 126
        %v7668 = vpop.permute.xlu0 %7667
        %7669 = vrot.lane.b32.xlu0 %v6419, 126
        %v7670 = vpop.permute.xlu0 %7669
        %7671 = vrot.lane.b32.xlu0 %v6372, 126
        %v7672 = vpop.permute.xlu0 %7671
        %7673 = vrot.lane.b32.xlu0 %v6388, 126
        %v7674 = vpop.permute.xlu0 %7673
        %7675 = vrot.lane.b32.xlu0 %v6404, 126
        %v7676 = vpop.permute.xlu0 %7675
        %7677 = vrot.lane.b32.xlu0 %v6420, 126
        %v7678 = vpop.permute.xlu0 %7677
        %7679 = vrot.lane.b32.xlu0 %v6373, 126
        %v7680 = vpop.permute.xlu0 %7679
        %7681 = vrot.lane.b32.xlu0 %v6389, 126
        %v7682 = vpop.permute.xlu0 %7681
        %7683 = vrot.lane.b32.xlu0 %v6405, 126
        %v7684 = vpop.permute.xlu0 %7683
        %7685 = vrot.lane.b32.xlu0 %v6421, 126
        %v7686 = vpop.permute.xlu0 %7685
        %7687 = vrot.lane.b32.xlu0 %v6374, 126
        %v7688 = vpop.permute.xlu0 %7687
        %7689 = vrot.lane.b32.xlu0 %v6390, 126
        %v7690 = vpop.permute.xlu0 %7689
        %7691 = vrot.lane.b32.xlu0 %v6406, 126
        %v7692 = vpop.permute.xlu0 %7691
        %7693 = vrot.lane.b32.xlu0 %v6422, 126
        %v7694 = vpop.permute.xlu0 %7693
        %7695 = vrot.lane.b32.xlu0 %v6375, 126
        %v7696 = vpop.permute.xlu0 %7695
        %7697 = vrot.lane.b32.xlu0 %v6391, 126
        %v7698 = vpop.permute.xlu0 %7697
        %7699 = vrot.lane.b32.xlu0 %v6407, 126
        %v7700 = vpop.permute.xlu0 %7699
        %7701 = vrot.lane.b32.xlu0 %v6423, 126
        %v7702 = vpop.permute.xlu0 %7701
        %7703 = vrot.lane.b32.xlu0 %v6376, 126
        %v7704 = vpop.permute.xlu0 %7703
        %7705 = vrot.lane.b32.xlu0 %v6392, 126
        %v7706 = vpop.permute.xlu0 %7705
        %7707 = vrot.lane.b32.xlu0 %v6408, 126
        %v7708 = vpop.permute.xlu0 %7707
        %7709 = vrot.lane.b32.xlu0 %v6424, 126
        %v7710 = vpop.permute.xlu0 %7709
        %7711 = vrot.lane.b32.xlu0 %v6377, 126
        %v7712 = vpop.permute.xlu0 %7711
        %7713 = vrot.lane.b32.xlu0 %v6393, 126
        %v7714 = vpop.permute.xlu0 %7713
        %7715 = vrot.lane.b32.xlu0 %v6409, 126
        %v7716 = vpop.permute.xlu0 %7715
        %7717 = vrot.lane.b32.xlu0 %v6425, 126
        %v7718 = vpop.permute.xlu0 %7717
        %7719 = vrot.lane.b32.xlu0 %v6378, 126
        %v7720 = vpop.permute.xlu0 %7719
        %7721 = vrot.lane.b32.xlu0 %v6394, 126
        %v7722 = vpop.permute.xlu0 %7721
        %7723 = vrot.lane.b32.xlu0 %v6410, 126
        %v7724 = vpop.permute.xlu0 %7723
        %7725 = vrot.lane.b32.xlu0 %v6426, 126
        %v7726 = vpop.permute.xlu0 %7725
        %7727 = vrot.lane.b32.xlu0 %v6379, 126
        %v7728 = vpop.permute.xlu0 %7727
        %7729 = vrot.lane.b32.xlu0 %v6395, 126
        %v7730 = vpop.permute.xlu0 %7729
        %7731 = vrot.lane.b32.xlu0 %v6411, 126
        %v7732 = vpop.permute.xlu0 %7731
        %7733 = vrot.lane.b32.xlu0 %v6427, 126
        %v7734 = vpop.permute.xlu0 %7733
        %7735 = vrot.lane.b32.xlu0 %v6380, 126
        %v7736 = vpop.permute.xlu0 %7735
        %7737 = vrot.lane.b32.xlu0 %v6396, 126
        %v7738 = vpop.permute.xlu0 %7737
        %7739 = vrot.lane.b32.xlu0 %v6412, 126
        %v7740 = vpop.permute.xlu0 %7739
        %7741 = vrot.lane.b32.xlu0 %v6428, 126
        %v7742 = vpop.permute.xlu0 %7741
        %7743 = vrot.lane.b32.xlu0 %v6381, 126
        %v7744 = vpop.permute.xlu0 %7743
        %7745 = vrot.lane.b32.xlu0 %v6397, 126
        %v7746 = vpop.permute.xlu0 %7745
        %7747 = vrot.lane.b32.xlu0 %v6413, 126
        %v7748 = vpop.permute.xlu0 %7747
        %7749 = vrot.lane.b32.xlu0 %v6429, 126
        %v7750 = vpop.permute.xlu0 %7749
        %v7751 = vsel %vm4472, %v7736, %v7744
        %v7752 = vsel %vm4472, %v7738, %v7746
        %v7753 = vsel %vm4472, %v7740, %v7748
        %v7754 = vsel %vm4472, %v7742, %v7750
        %v7755 = vsel %vm4472, %v7728, %v7736
        %v7756 = vsel %vm4472, %v7730, %v7738
        %v7757 = vsel %vm4472, %v7732, %v7740
        %v7758 = vsel %vm4472, %v7734, %v7742
        %v7759 = vsel %vm4472, %v7720, %v7728
        %v7760 = vsel %vm4472, %v7722, %v7730
        %v7761 = vsel %vm4472, %v7724, %v7732
        %v7762 = vsel %vm4472, %v7726, %v7734
        %v7763 = vsel %vm4472, %v7712, %v7720
        %v7764 = vsel %vm4472, %v7714, %v7722
        %v7765 = vsel %vm4472, %v7716, %v7724
        %v7766 = vsel %vm4472, %v7718, %v7726
        %v7767 = vsel %vm4472, %v7704, %v7712
        %v7768 = vsel %vm4472, %v7706, %v7714
        %v7769 = vsel %vm4472, %v7708, %v7716
        %v7770 = vsel %vm4472, %v7710, %v7718
        %v7771 = vsel %vm4472, %v7696, %v7704
        %v7772 = vsel %vm4472, %v7698, %v7706
        %v7773 = vsel %vm4472, %v7700, %v7708
        %v7774 = vsel %vm4472, %v7702, %v7710
        %v7775 = vsel %vm4472, %v7688, %v7696
        %v7776 = vsel %vm4472, %v7690, %v7698
        %v7777 = vsel %vm4472, %v7692, %v7700
        %v7778 = vsel %vm4472, %v7694, %v7702
        %v7779 = vsel %vm4472, %v7680, %v7688
        %v7780 = vsel %vm4472, %v7682, %v7690
        %v7781 = vsel %vm4472, %v7684, %v7692
        %v7782 = vsel %vm4472, %v7686, %v7694
        %v7783 = vsel %vm4472, %v7672, %v7680
        %v7784 = vsel %vm4472, %v7674, %v7682
        %v7785 = vsel %vm4472, %v7676, %v7684
        %v7786 = vsel %vm4472, %v7678, %v7686
        %v7787 = vsel %vm4472, %v7664, %v7672
        %v7788 = vsel %vm4472, %v7666, %v7674
        %v7789 = vsel %vm4472, %v7668, %v7676
        %v7790 = vsel %vm4472, %v7670, %v7678
        %v7791 = vsel %vm4472, %v7656, %v7664
        %v7792 = vsel %vm4472, %v7658, %v7666
        %v7793 = vsel %vm4472, %v7660, %v7668
        %v7794 = vsel %vm4472, %v7662, %v7670
        %v7795 = vsel %vm4472, %v7648, %v7656
        %v7796 = vsel %vm4472, %v7650, %v7658
        %v7797 = vsel %vm4472, %v7652, %v7660
        %v7798 = vsel %vm4472, %v7654, %v7662
        %v7799 = vsel %vm4472, %v7640, %v7648
        %v7800 = vsel %vm4472, %v7642, %v7650
        %v7801 = vsel %vm4472, %v7644, %v7652
        %v7802 = vsel %vm4472, %v7646, %v7654
        %v7803 = vsel %vm4472, %v7632, %v7640
        %v7804 = vsel %vm4472, %v7634, %v7642
        %v7805 = vsel %vm4472, %v7636, %v7644
        %v7806 = vsel %vm4472, %v7638, %v7646
        %v7807 = vsel %vm4472, %v7624, %v7632
        %v7808 = vsel %vm4472, %v7626, %v7634
        %v7809 = vsel %vm4472, %v7628, %v7636
        %v7810 = vsel %vm4472, %v7630, %v7638
        %v7811 = vsel %vm4472, %v7744, %v7624
        %v7812 = vsel %vm4472, %v7746, %v7626
        %v7813 = vsel %vm4472, %v7748, %v7628
        %v7814 = vsel %vm4472, %v7750, %v7630
        %v7815 = vsel %vm4543, %v7807, 0.0
        %v7816 = vsel %vm4544, %v7803, 0.0
        %v7817 = vsel %vm4543, %v7799, 0.0
        %v7818 = vsel %vm4544, %v7795, 0.0
        %v7819 = vsel %vm4543, %v7791, 0.0
        %v7820 = vsel %vm4544, %v7787, 0.0
        %v7821 = vsel %vm4543, %v7783, 0.0
        %v7822 = vsel %vm4544, %v7779, 0.0
        %v7823 = vsel %vm4543, %v7775, 0.0
        %v7824 = vsel %vm4544, %v7771, 0.0
        %v7825 = vsel %vm4543, %v7767, 0.0
        %v7826 = vsel %vm4544, %v7763, 0.0
        %v7827 = vsel %vm4543, %v7759, 0.0
        %v7828 = vsel %vm4544, %v7755, 0.0
        %v7829 = vsel %vm4543, %v7751, 0.0
        %v7830 = vsel %vm4544, %v7811, 0.0
        %v7831 = vsel %vm4543, %v7808, 0.0
        %v7832 = vsel %vm4544, %v7804, 0.0
        %v7833 = vsel %vm4543, %v7800, 0.0
        %v7834 = vsel %vm4544, %v7796, 0.0
        %v7835 = vsel %vm4543, %v7792, 0.0
        %v7836 = vsel %vm4544, %v7788, 0.0
        %v7837 = vsel %vm4543, %v7784, 0.0
        %v7838 = vsel %vm4544, %v7780, 0.0
        %v7839 = vsel %vm4543, %v7776, 0.0
        %v7840 = vsel %vm4544, %v7772, 0.0
        %v7841 = vsel %vm4543, %v7768, 0.0
        %v7842 = vsel %vm4544, %v7764, 0.0
        %v7843 = vsel %vm4543, %v7760, 0.0
        %v7844 = vsel %vm4544, %v7756, 0.0
        %v7845 = vsel %vm4543, %v7752, 0.0
        %v7846 = vsel %vm4544, %v7812, 0.0
        %v7847 = vsel %vm4543, %v7809, 0.0
        %v7848 = vsel %vm4544, %v7805, 0.0
        %v7849 = vsel %vm4543, %v7801, 0.0
        %v7850 = vsel %vm4544, %v7797, 0.0
        %v7851 = vsel %vm4543, %v7793, 0.0
        %v7852 = vsel %vm4544, %v7789, 0.0
        %v7853 = vsel %vm4543, %v7785, 0.0
        %v7854 = vsel %vm4544, %v7781, 0.0
        %v7855 = vsel %vm4543, %v7777, 0.0
        %v7856 = vsel %vm4544, %v7773, 0.0
        %v7857 = vsel %vm4543, %v7769, 0.0
        %v7858 = vsel %vm4544, %v7765, 0.0
        %v7859 = vsel %vm4543, %v7761, 0.0
        %v7860 = vsel %vm4544, %v7757, 0.0
        %v7861 = vsel %vm4543, %v7753, 0.0
        %v7862 = vsel %vm4544, %v7813, 0.0
        %v7863 = vsel %vm4543, %v7810, 0.0
        %v7864 = vsel %vm4544, %v7806, 0.0
        %v7865 = vsel %vm4543, %v7802, 0.0
        %v7866 = vsel %vm4544, %v7798, 0.0
        %v7867 = vsel %vm4543, %v7794, 0.0
        %v7868 = vsel %vm4544, %v7790, 0.0
        %v7869 = vsel %vm4543, %v7786, 0.0
        %v7870 = vsel %vm4544, %v7782, 0.0
        %v7871 = vsel %vm4543, %v7778, 0.0
        %v7872 = vsel %vm4544, %v7774, 0.0
        %v7873 = vsel %vm4543, %v7770, 0.0
        %v7874 = vsel %vm4544, %v7766, 0.0
        %v7875 = vsel %vm4543, %v7762, 0.0
        %v7876 = vsel %vm4544, %v7758, 0.0
        %v7877 = vsel %vm4543, %v7754, 0.0
        %v7878 = vsel %vm4544, %v7814, 0.0
        %v7879 = vpack.c.bf16 %v7816, %v7815
        %v7880 = vpack.c.bf16 %v7818, %v7817
        %v7881 = vpack.c.bf16 %v7820, %v7819
        %v7882 = vpack.c.bf16 %v7822, %v7821
        %v7883 = vpack.c.bf16 %v7824, %v7823
        %v7884 = vpack.c.bf16 %v7826, %v7825
        %v7885 = vpack.c.bf16 %v7828, %v7827
        %v7886 = vpack.c.bf16 %v7830, %v7829
        %v7887 = vpack.c.bf16 %v7832, %v7831
        %v7888 = vpack.c.bf16 %v7834, %v7833
        %v7889 = vpack.c.bf16 %v7836, %v7835
        %v7890 = vpack.c.bf16 %v7838, %v7837
        %v7891 = vpack.c.bf16 %v7840, %v7839
        %v7892 = vpack.c.bf16 %v7842, %v7841
        %v7893 = vpack.c.bf16 %v7844, %v7843
        %v7894 = vpack.c.bf16 %v7846, %v7845
        %v7895 = vpack.c.bf16 %v7848, %v7847
        %v7896 = vpack.c.bf16 %v7850, %v7849
        %v7897 = vpack.c.bf16 %v7852, %v7851
        %v7898 = vpack.c.bf16 %v7854, %v7853
        %v7899 = vpack.c.bf16 %v7856, %v7855
        %v7900 = vpack.c.bf16 %v7858, %v7857
        %v7901 = vpack.c.bf16 %v7860, %v7859
        %v7902 = vpack.c.bf16 %v7862, %v7861
        %v7903 = vpack.c.bf16 %v7864, %v7863
        %v7904 = vpack.c.bf16 %v7866, %v7865
        %v7905 = vpack.c.bf16 %v7868, %v7867
        %v7906 = vpack.c.bf16 %v7870, %v7869
        %v7907 = vpack.c.bf16 %v7872, %v7871
        %v7908 = vpack.c.bf16 %v7874, %v7873
        %v7909 = vpack.c.bf16 %v7876, %v7875
        %v7910 = vpack.c.bf16 %v7878, %v7877
        %7911 = vrot.lane.b32.xlu0 %v6366, 125
        %v7912 = vpop.permute.xlu0 %7911
        %7913 = vrot.lane.b32.xlu0 %v6382, 125
        %v7914 = vpop.permute.xlu0 %7913
        %7915 = vrot.lane.b32.xlu0 %v6398, 125
        %v7916 = vpop.permute.xlu0 %7915
        %7917 = vrot.lane.b32.xlu0 %v6414, 125
        %v7918 = vpop.permute.xlu0 %7917
        %7919 = vrot.lane.b32.xlu0 %v6367, 125
        %v7920 = vpop.permute.xlu0 %7919
        %7921 = vrot.lane.b32.xlu0 %v6383, 125
        %v7922 = vpop.permute.xlu0 %7921
        %7923 = vrot.lane.b32.xlu0 %v6399, 125
        %v7924 = vpop.permute.xlu0 %7923
        %7925 = vrot.lane.b32.xlu0 %v6415, 125
        %v7926 = vpop.permute.xlu0 %7925
        %7927 = vrot.lane.b32.xlu0 %v6368, 125
        %v7928 = vpop.permute.xlu0 %7927
        %7929 = vrot.lane.b32.xlu0 %v6384, 125
        %v7930 = vpop.permute.xlu0 %7929
        %7931 = vrot.lane.b32.xlu0 %v6400, 125
        %v7932 = vpop.permute.xlu0 %7931
        %7933 = vrot.lane.b32.xlu0 %v6416, 125
        %v7934 = vpop.permute.xlu0 %7933
        %7935 = vrot.lane.b32.xlu0 %v6369, 125
        %v7936 = vpop.permute.xlu0 %7935
        %7937 = vrot.lane.b32.xlu0 %v6385, 125
        %v7938 = vpop.permute.xlu0 %7937
        %7939 = vrot.lane.b32.xlu0 %v6401, 125
        %v7940 = vpop.permute.xlu0 %7939
        %7941 = vrot.lane.b32.xlu0 %v6417, 125
        %v7942 = vpop.permute.xlu0 %7941
        %7943 = vrot.lane.b32.xlu0 %v6370, 125
        %v7944 = vpop.permute.xlu0 %7943
        %7945 = vrot.lane.b32.xlu0 %v6386, 125
        %v7946 = vpop.permute.xlu0 %7945
        %7947 = vrot.lane.b32.xlu0 %v6402, 125
        %v7948 = vpop.permute.xlu0 %7947
        %7949 = vrot.lane.b32.xlu0 %v6418, 125
        %v7950 = vpop.permute.xlu0 %7949
        %7951 = vrot.lane.b32.xlu0 %v6371, 125
        %v7952 = vpop.permute.xlu0 %7951
        %7953 = vrot.lane.b32.xlu0 %v6387, 125
        %v7954 = vpop.permute.xlu0 %7953
        %7955 = vrot.lane.b32.xlu0 %v6403, 125
        %v7956 = vpop.permute.xlu0 %7955
        %7957 = vrot.lane.b32.xlu0 %v6419, 125
        %v7958 = vpop.permute.xlu0 %7957
        %7959 = vrot.lane.b32.xlu0 %v6372, 125
        %v7960 = vpop.permute.xlu0 %7959
        %7961 = vrot.lane.b32.xlu0 %v6388, 125
        %v7962 = vpop.permute.xlu0 %7961
        %7963 = vrot.lane.b32.xlu0 %v6404, 125
        %v7964 = vpop.permute.xlu0 %7963
        %7965 = vrot.lane.b32.xlu0 %v6420, 125
        %v7966 = vpop.permute.xlu0 %7965
        %7967 = vrot.lane.b32.xlu0 %v6373, 125
        %v7968 = vpop.permute.xlu0 %7967
        %7969 = vrot.lane.b32.xlu0 %v6389, 125
        %v7970 = vpop.permute.xlu0 %7969
        %7971 = vrot.lane.b32.xlu0 %v6405, 125
        %v7972 = vpop.permute.xlu0 %7971
        %7973 = vrot.lane.b32.xlu0 %v6421, 125
        %v7974 = vpop.permute.xlu0 %7973
        %7975 = vrot.lane.b32.xlu0 %v6374, 125
        %v7976 = vpop.permute.xlu0 %7975
        %7977 = vrot.lane.b32.xlu0 %v6390, 125
        %v7978 = vpop.permute.xlu0 %7977
        %7979 = vrot.lane.b32.xlu0 %v6406, 125
        %v7980 = vpop.permute.xlu0 %7979
        %7981 = vrot.lane.b32.xlu0 %v6422, 125
        %v7982 = vpop.permute.xlu0 %7981
        %7983 = vrot.lane.b32.xlu0 %v6375, 125
        %v7984 = vpop.permute.xlu0 %7983
        %7985 = vrot.lane.b32.xlu0 %v6391, 125
        %v7986 = vpop.permute.xlu0 %7985
        %7987 = vrot.lane.b32.xlu0 %v6407, 125
        %v7988 = vpop.permute.xlu0 %7987
        %7989 = vrot.lane.b32.xlu0 %v6423, 125
        %v7990 = vpop.permute.xlu0 %7989
        %7991 = vrot.lane.b32.xlu0 %v6376, 125
        %v7992 = vpop.permute.xlu0 %7991
        %7993 = vrot.lane.b32.xlu0 %v6392, 125
        %v7994 = vpop.permute.xlu0 %7993
        %7995 = vrot.lane.b32.xlu0 %v6408, 125
        %v7996 = vpop.permute.xlu0 %7995
        %7997 = vrot.lane.b32.xlu0 %v6424, 125
        %v7998 = vpop.permute.xlu0 %7997
        %7999 = vrot.lane.b32.xlu0 %v6377, 125
        %v8000 = vpop.permute.xlu0 %7999
        %8001 = vrot.lane.b32.xlu0 %v6393, 125
        %v8002 = vpop.permute.xlu0 %8001
        %8003 = vrot.lane.b32.xlu0 %v6409, 125
        %v8004 = vpop.permute.xlu0 %8003
        %8005 = vrot.lane.b32.xlu0 %v6425, 125
        %v8006 = vpop.permute.xlu0 %8005
        %8007 = vrot.lane.b32.xlu0 %v6378, 125
        %v8008 = vpop.permute.xlu0 %8007
        %8009 = vrot.lane.b32.xlu0 %v6394, 125
        %v8010 = vpop.permute.xlu0 %8009
        %8011 = vrot.lane.b32.xlu0 %v6410, 125
        %v8012 = vpop.permute.xlu0 %8011
        %8013 = vrot.lane.b32.xlu0 %v6426, 125
        %v8014 = vpop.permute.xlu0 %8013
        %8015 = vrot.lane.b32.xlu0 %v6379, 125
        %v8016 = vpop.permute.xlu0 %8015
        %8017 = vrot.lane.b32.xlu0 %v6395, 125
        %v8018 = vpop.permute.xlu0 %8017
        %8019 = vrot.lane.b32.xlu0 %v6411, 125
        %v8020 = vpop.permute.xlu0 %8019
        %8021 = vrot.lane.b32.xlu0 %v6427, 125
        %v8022 = vpop.permute.xlu0 %8021
        %8023 = vrot.lane.b32.xlu0 %v6380, 125
        %v8024 = vpop.permute.xlu0 %8023
        %8025 = vrot.lane.b32.xlu0 %v6396, 125
        %v8026 = vpop.permute.xlu0 %8025
        %8027 = vrot.lane.b32.xlu0 %v6412, 125
        %v8028 = vpop.permute.xlu0 %8027
        %8029 = vrot.lane.b32.xlu0 %v6428, 125
        %v8030 = vpop.permute.xlu0 %8029
        %8031 = vrot.lane.b32.xlu0 %v6381, 125
        %v8032 = vpop.permute.xlu0 %8031
        %8033 = vrot.lane.b32.xlu0 %v6397, 125
        %v8034 = vpop.permute.xlu0 %8033
        %8035 = vrot.lane.b32.xlu0 %v6413, 125
        %v8036 = vpop.permute.xlu0 %8035
        %8037 = vrot.lane.b32.xlu0 %v6429, 125
        %v8038 = vpop.permute.xlu0 %8037
        %vm8039 = vcmp.lt.s32.totalorder %v410, 125
        %v8040 = vsel %vm8039, %v8024, %v8032
        %v8041 = vsel %vm8039, %v8026, %v8034
        %v8042 = vsel %vm8039, %v8028, %v8036
        %v8043 = vsel %vm8039, %v8030, %v8038
        %v8044 = vsel %vm8039, %v8016, %v8024
        %v8045 = vsel %vm8039, %v8018, %v8026
        %v8046 = vsel %vm8039, %v8020, %v8028
        %v8047 = vsel %vm8039, %v8022, %v8030
        %v8048 = vsel %vm8039, %v8008, %v8016
        %v8049 = vsel %vm8039, %v8010, %v8018
        %v8050 = vsel %vm8039, %v8012, %v8020
        %v8051 = vsel %vm8039, %v8014, %v8022
        %v8052 = vsel %vm8039, %v8000, %v8008
        %v8053 = vsel %vm8039, %v8002, %v8010
        %v8054 = vsel %vm8039, %v8004, %v8012
        %v8055 = vsel %vm8039, %v8006, %v8014
        %v8056 = vsel %vm8039, %v7992, %v8000
        %v8057 = vsel %vm8039, %v7994, %v8002
        %v8058 = vsel %vm8039, %v7996, %v8004
        %v8059 = vsel %vm8039, %v7998, %v8006
        %v8060 = vsel %vm8039, %v7984, %v7992
        %v8061 = vsel %vm8039, %v7986, %v7994
        %v8062 = vsel %vm8039, %v7988, %v7996
        %v8063 = vsel %vm8039, %v7990, %v7998
        %v8064 = vsel %vm8039, %v7976, %v7984
        %v8065 = vsel %vm8039, %v7978, %v7986
        %v8066 = vsel %vm8039, %v7980, %v7988
        %v8067 = vsel %vm8039, %v7982, %v7990
        %v8068 = vsel %vm8039, %v7968, %v7976
        %v8069 = vsel %vm8039, %v7970, %v7978
        %v8070 = vsel %vm8039, %v7972, %v7980
        %v8071 = vsel %vm8039, %v7974, %v7982
        %v8072 = vsel %vm8039, %v7960, %v7968
        %v8073 = vsel %vm8039, %v7962, %v7970
        %v8074 = vsel %vm8039, %v7964, %v7972
        %v8075 = vsel %vm8039, %v7966, %v7974
        %v8076 = vsel %vm8039, %v7952, %v7960
        %v8077 = vsel %vm8039, %v7954, %v7962
        %v8078 = vsel %vm8039, %v7956, %v7964
        %v8079 = vsel %vm8039, %v7958, %v7966
        %v8080 = vsel %vm8039, %v7944, %v7952
        %v8081 = vsel %vm8039, %v7946, %v7954
        %v8082 = vsel %vm8039, %v7948, %v7956
        %v8083 = vsel %vm8039, %v7950, %v7958
        %v8084 = vsel %vm8039, %v7936, %v7944
        %v8085 = vsel %vm8039, %v7938, %v7946
        %v8086 = vsel %vm8039, %v7940, %v7948
        %v8087 = vsel %vm8039, %v7942, %v7950
        %v8088 = vsel %vm8039, %v7928, %v7936
        %v8089 = vsel %vm8039, %v7930, %v7938
        %v8090 = vsel %vm8039, %v7932, %v7940
        %v8091 = vsel %vm8039, %v7934, %v7942
        %v8092 = vsel %vm8039, %v7920, %v7928
        %v8093 = vsel %vm8039, %v7922, %v7930
        %v8094 = vsel %vm8039, %v7924, %v7932
        %v8095 = vsel %vm8039, %v7926, %v7934
        %v8096 = vsel %vm8039, %v7912, %v7920
        %v8097 = vsel %vm8039, %v7914, %v7922
        %v8098 = vsel %vm8039, %v7916, %v7924
        %v8099 = vsel %vm8039, %v7918, %v7926
        %v8100 = vsel %vm8039, %v8032, %v7912
        %v8101 = vsel %vm8039, %v8034, %v7914
        %v8102 = vsel %vm8039, %v8036, %v7916
        %v8103 = vsel %vm8039, %v8038, %v7918
        %vm8104 = vcmp.lt.s32.totalorder %v410, 253
        %vm8105 = vcmp.lt.s32.totalorder %v411, 253
        %v8106 = vsel %vm8104, 1, 0
        %v8107 = vsel %vm8105, 1, 0
        %v8108 = vperm.slane %v8106, 0
        %v8109 = vperm.slane %v8107, 0
        %vm8110 = vcmp.eq.s32.totalorder %v8108, 1
        %vm8111 = vcmp.eq.s32.totalorder %v8109, 1
        %v8112 = vsel %vm8110, %v8096, 0.0
        %v8113 = vsel %vm8111, %v8092, 0.0
        %v8114 = vsel %vm8110, %v8088, 0.0
        %v8115 = vsel %vm8111, %v8084, 0.0
        %v8116 = vsel %vm8110, %v8080, 0.0
        %v8117 = vsel %vm8111, %v8076, 0.0
        %v8118 = vsel %vm8110, %v8072, 0.0
        %v8119 = vsel %vm8111, %v8068, 0.0
        %v8120 = vsel %vm8110, %v8064, 0.0
        %v8121 = vsel %vm8111, %v8060, 0.0
        %v8122 = vsel %vm8110, %v8056, 0.0
        %v8123 = vsel %vm8111, %v8052, 0.0
        %v8124 = vsel %vm8110, %v8048, 0.0
        %v8125 = vsel %vm8111, %v8044, 0.0
        %v8126 = vsel %vm8110, %v8040, 0.0
        %v8127 = vsel %vm8111, %v8100, 0.0
        %v8128 = vsel %vm8110, %v8097, 0.0
        %v8129 = vsel %vm8111, %v8093, 0.0
        %v8130 = vsel %vm8110, %v8089, 0.0
        %v8131 = vsel %vm8111, %v8085, 0.0
        %v8132 = vsel %vm8110, %v8081, 0.0
        %v8133 = vsel %vm8111, %v8077, 0.0
        %v8134 = vsel %vm8110, %v8073, 0.0
        %v8135 = vsel %vm8111, %v8069, 0.0
        %v8136 = vsel %vm8110, %v8065, 0.0
        %v8137 = vsel %vm8111, %v8061, 0.0
        %v8138 = vsel %vm8110, %v8057, 0.0
        %v8139 = vsel %vm8111, %v8053, 0.0
        %v8140 = vsel %vm8110, %v8049, 0.0
        %v8141 = vsel %vm8111, %v8045, 0.0
        %v8142 = vsel %vm8110, %v8041, 0.0
        %v8143 = vsel %vm8111, %v8101, 0.0
        %v8144 = vsel %vm8110, %v8098, 0.0
        %v8145 = vsel %vm8111, %v8094, 0.0
        %v8146 = vsel %vm8110, %v8090, 0.0
        %v8147 = vsel %vm8111, %v8086, 0.0
        %v8148 = vsel %vm8110, %v8082, 0.0
        %v8149 = vsel %vm8111, %v8078, 0.0
        %v8150 = vsel %vm8110, %v8074, 0.0
        %v8151 = vsel %vm8111, %v8070, 0.0
        %v8152 = vsel %vm8110, %v8066, 0.0
        %v8153 = vsel %vm8111, %v8062, 0.0
        %v8154 = vsel %vm8110, %v8058, 0.0
        %v8155 = vsel %vm8111, %v8054, 0.0
        %v8156 = vsel %vm8110, %v8050, 0.0
        %v8157 = vsel %vm8111, %v8046, 0.0
        %v8158 = vsel %vm8110, %v8042, 0.0
        %v8159 = vsel %vm8111, %v8102, 0.0
        %v8160 = vsel %vm8110, %v8099, 0.0
        %v8161 = vsel %vm8111, %v8095, 0.0
        %v8162 = vsel %vm8110, %v8091, 0.0
        %v8163 = vsel %vm8111, %v8087, 0.0
        %v8164 = vsel %vm8110, %v8083, 0.0
        %v8165 = vsel %vm8111, %v8079, 0.0
        %v8166 = vsel %vm8110, %v8075, 0.0
        %v8167 = vsel %vm8111, %v8071, 0.0
        %v8168 = vsel %vm8110, %v8067, 0.0
        %v8169 = vsel %vm8111, %v8063, 0.0
        %v8170 = vsel %vm8110, %v8059, 0.0
        %v8171 = vsel %vm8111, %v8055, 0.0
        %v8172 = vsel %vm8110, %v8051, 0.0
        %v8173 = vsel %vm8111, %v8047, 0.0
        %v8174 = vsel %vm8110, %v8043, 0.0
        %v8175 = vsel %vm8111, %v8103, 0.0
        %v8176 = vpack.c.bf16 %v8113, %v8112
        %v8177 = vpack.c.bf16 %v8115, %v8114
        %v8178 = vpack.c.bf16 %v8117, %v8116
        %v8179 = vpack.c.bf16 %v8119, %v8118
        %v8180 = vpack.c.bf16 %v8121, %v8120
        %v8181 = vpack.c.bf16 %v8123, %v8122
        %v8182 = vpack.c.bf16 %v8125, %v8124
        %v8183 = vpack.c.bf16 %v8127, %v8126
        %v8184 = vpack.c.bf16 %v8129, %v8128
        %v8185 = vpack.c.bf16 %v8131, %v8130
        %v8186 = vpack.c.bf16 %v8133, %v8132
        %v8187 = vpack.c.bf16 %v8135, %v8134
        %v8188 = vpack.c.bf16 %v8137, %v8136
        %v8189 = vpack.c.bf16 %v8139, %v8138
        %v8190 = vpack.c.bf16 %v8141, %v8140
        %v8191 = vpack.c.bf16 %v8143, %v8142
        %v8192 = vpack.c.bf16 %v8145, %v8144
        %v8193 = vpack.c.bf16 %v8147, %v8146
        %v8194 = vpack.c.bf16 %v8149, %v8148
        %v8195 = vpack.c.bf16 %v8151, %v8150
        %v8196 = vpack.c.bf16 %v8153, %v8152
        %v8197 = vpack.c.bf16 %v8155, %v8154
        %v8198 = vpack.c.bf16 %v8157, %v8156
        %v8199 = vpack.c.bf16 %v8159, %v8158
        %v8200 = vpack.c.bf16 %v8161, %v8160
        %v8201 = vpack.c.bf16 %v8163, %v8162
        %v8202 = vpack.c.bf16 %v8165, %v8164
        %v8203 = vpack.c.bf16 %v8167, %v8166
        %v8204 = vpack.c.bf16 %v8169, %v8168
        %v8205 = vpack.c.bf16 %v8171, %v8170
        %v8206 = vpack.c.bf16 %v8173, %v8172
        %v8207 = vpack.c.bf16 %v8175, %v8174
        %v8240 = vunpack.c.l.b16 %v6695
        %v8241 = vunpack.c.h.b16 %v6695
        %v8242 = vunpack.c.l.b16 %v6696
        %v8243 = vunpack.c.h.b16 %v6696
        %v8244 = vunpack.c.l.b16 %v6697
        %v8245 = vunpack.c.h.b16 %v6697
        %v8246 = vunpack.c.l.b16 %v6698
        %v8247 = vunpack.c.h.b16 %v6698
        %v8248 = vunpack.c.l.b16 %v6699
        %v8249 = vunpack.c.h.b16 %v6699
        %v8250 = vunpack.c.l.b16 %v6700
        %v8251 = vunpack.c.h.b16 %v6700
        %v8252 = vunpack.c.l.b16 %v6701
        %v8253 = vunpack.c.h.b16 %v6701
        %v8254 = vunpack.c.l.b16 %v6702
        %v8255 = vunpack.c.h.b16 %v6702
        %v8256 = vunpack.c.l.b16 %v6703
        %v8257 = vunpack.c.h.b16 %v6703
        %v8258 = vunpack.c.l.b16 %v6704
        %v8259 = vunpack.c.h.b16 %v6704
        %v8260 = vunpack.c.l.b16 %v6705
        %v8261 = vunpack.c.h.b16 %v6705
        %v8262 = vunpack.c.l.b16 %v6706
        %v8263 = vunpack.c.h.b16 %v6706
        %v8264 = vunpack.c.l.b16 %v6707
        %v8265 = vunpack.c.h.b16 %v6707
        %v8266 = vunpack.c.l.b16 %v6708
        %v8267 = vunpack.c.h.b16 %v6708
        %v8268 = vunpack.c.l.b16 %v6709
        %v8269 = vunpack.c.h.b16 %v6709
        %v8270 = vunpack.c.l.b16 %v6710
        %v8271 = vunpack.c.h.b16 %v6710
        %v8272 = vunpack.c.l.b16 %v6711
        %v8273 = vunpack.c.h.b16 %v6711
        %v8274 = vunpack.c.l.b16 %v6712
        %v8275 = vunpack.c.h.b16 %v6712
        %v8276 = vunpack.c.l.b16 %v6713
        %v8277 = vunpack.c.h.b16 %v6713
        %v8278 = vunpack.c.l.b16 %v6714
        %v8279 = vunpack.c.h.b16 %v6714
        %v8280 = vunpack.c.l.b16 %v6715
        %v8281 = vunpack.c.h.b16 %v6715
        %v8282 = vunpack.c.l.b16 %v6716
        %v8283 = vunpack.c.h.b16 %v6716
        %v8284 = vunpack.c.l.b16 %v6717
        %v8285 = vunpack.c.h.b16 %v6717
        %v8286 = vunpack.c.l.b16 %v6718
        %v8287 = vunpack.c.h.b16 %v6718
        %v8288 = vunpack.c.l.b16 %v6719
        %v8289 = vunpack.c.h.b16 %v6719
        %v8290 = vunpack.c.l.b16 %v6720
        %v8291 = vunpack.c.h.b16 %v6720
        %v8292 = vunpack.c.l.b16 %v6721
        %v8293 = vunpack.c.h.b16 %v6721
        %v8294 = vunpack.c.l.b16 %v6722
        %v8295 = vunpack.c.h.b16 %v6722
        %v8296 = vunpack.c.l.b16 %v6723
        %v8297 = vunpack.c.h.b16 %v6723
        %v8298 = vunpack.c.l.b16 %v6724
        %v8299 = vunpack.c.h.b16 %v6724
        %v8300 = vunpack.c.l.b16 %v6725
        %v8301 = vunpack.c.h.b16 %v6725
        %v8302 = vunpack.c.l.b16 %v6726
        %v8303 = vunpack.c.h.b16 %v6726
        %v8304 = vpack.c.b16 %v8256, %v8240
        %v8305 = vpack.c.b16 %v8257, %v8241
        %v8306 = vpack.c.b16 %v8258, %v8242
        %v8307 = vpack.c.b16 %v8259, %v8243
        %v8308 = vpack.c.b16 %v8260, %v8244
        %v8309 = vpack.c.b16 %v8261, %v8245
        %v8310 = vpack.c.b16 %v8262, %v8246
        %v8311 = vpack.c.b16 %v8263, %v8247
        %v8312 = vpack.c.b16 %v8264, %v8248
        %v8313 = vpack.c.b16 %v8265, %v8249
        %v8314 = vpack.c.b16 %v8266, %v8250
        %v8315 = vpack.c.b16 %v8267, %v8251
        %v8316 = vpack.c.b16 %v8268, %v8252
        %v8317 = vpack.c.b16 %v8269, %v8253
        %v8318 = vpack.c.b16 %v8270, %v8254
        %v8319 = vpack.c.b16 %v8271, %v8255
        %v8320 = vpack.c.b16 %v8288, %v8272
        %v8321 = vpack.c.b16 %v8289, %v8273
        %v8322 = vpack.c.b16 %v8290, %v8274
        %v8323 = vpack.c.b16 %v8291, %v8275
        %v8324 = vpack.c.b16 %v8292, %v8276
        %v8325 = vpack.c.b16 %v8293, %v8277
        %v8326 = vpack.c.b16 %v8294, %v8278
        %v8327 = vpack.c.b16 %v8295, %v8279
        %v8328 = vpack.c.b16 %v8296, %v8280
        %v8329 = vpack.c.b16 %v8297, %v8281
        %v8330 = vpack.c.b16 %v8298, %v8282
        %v8331 = vpack.c.b16 %v8299, %v8283
        %v8332 = vpack.c.b16 %v8300, %v8284
        %v8333 = vpack.c.b16 %v8301, %v8285
        %v8334 = vpack.c.b16 %v8302, %v8286
        %v8335 = vpack.c.b16 %v8303, %v8287
        %v8400 = vunpack.c.l.b16 %v6983
        %v8401 = vunpack.c.h.b16 %v6983
        %v8402 = vunpack.c.l.b16 %v6984
        %v8403 = vunpack.c.h.b16 %v6984
        %v8404 = vunpack.c.l.b16 %v6985
        %v8405 = vunpack.c.h.b16 %v6985
        %v8406 = vunpack.c.l.b16 %v6986
        %v8407 = vunpack.c.h.b16 %v6986
        %v8408 = vunpack.c.l.b16 %v6987
        %v8409 = vunpack.c.h.b16 %v6987
        %v8410 = vunpack.c.l.b16 %v6988
        %v8411 = vunpack.c.h.b16 %v6988
        %v8412 = vunpack.c.l.b16 %v6989
        %v8413 = vunpack.c.h.b16 %v6989
        %v8414 = vunpack.c.l.b16 %v6990
        %v8415 = vunpack.c.h.b16 %v6990
        %v8416 = vunpack.c.l.b16 %v6991
        %v8417 = vunpack.c.h.b16 %v6991
        %v8418 = vunpack.c.l.b16 %v6992
        %v8419 = vunpack.c.h.b16 %v6992
        %v8420 = vunpack.c.l.b16 %v6993
        %v8421 = vunpack.c.h.b16 %v6993
        %v8422 = vunpack.c.l.b16 %v6994
        %v8423 = vunpack.c.h.b16 %v6994
        %v8424 = vunpack.c.l.b16 %v6995
        %v8425 = vunpack.c.h.b16 %v6995
        %v8426 = vunpack.c.l.b16 %v6996
        %v8427 = vunpack.c.h.b16 %v6996
        %v8428 = vunpack.c.l.b16 %v6997
        %v8429 = vunpack.c.h.b16 %v6997
        %v8430 = vunpack.c.l.b16 %v6998
        %v8431 = vunpack.c.h.b16 %v6998
        %v8432 = vunpack.c.l.b16 %v6999
        %v8433 = vunpack.c.h.b16 %v6999
        %v8434 = vunpack.c.l.b16 %v7000
        %v8435 = vunpack.c.h.b16 %v7000
        %v8436 = vunpack.c.l.b16 %v7001
        %v8437 = vunpack.c.h.b16 %v7001
        %v8438 = vunpack.c.l.b16 %v7002
        %v8439 = vunpack.c.h.b16 %v7002
        %v8440 = vunpack.c.l.b16 %v7003
        %v8441 = vunpack.c.h.b16 %v7003
        %v8442 = vunpack.c.l.b16 %v7004
        %v8443 = vunpack.c.h.b16 %v7004
        %v8444 = vunpack.c.l.b16 %v7005
        %v8445 = vunpack.c.h.b16 %v7005
        %v8446 = vunpack.c.l.b16 %v7006
        %v8447 = vunpack.c.h.b16 %v7006
        %v8448 = vunpack.c.l.b16 %v7007
        %v8449 = vunpack.c.h.b16 %v7007
        %v8450 = vunpack.c.l.b16 %v7008
        %v8451 = vunpack.c.h.b16 %v7008
        %v8452 = vunpack.c.l.b16 %v7009
        %v8453 = vunpack.c.h.b16 %v7009
        %v8454 = vunpack.c.l.b16 %v7010
        %v8455 = vunpack.c.h.b16 %v7010
        %v8456 = vunpack.c.l.b16 %v7011
        %v8457 = vunpack.c.h.b16 %v7011
        %v8458 = vunpack.c.l.b16 %v7012
        %v8459 = vunpack.c.h.b16 %v7012
        %v8460 = vunpack.c.l.b16 %v7013
        %v8461 = vunpack.c.h.b16 %v7013
        %v8462 = vunpack.c.l.b16 %v7014
        %v8463 = vunpack.c.h.b16 %v7014
        %v8464 = vpack.c.b16 %v8416, %v8400
        %v8465 = vpack.c.b16 %v8417, %v8401
        %v8466 = vpack.c.b16 %v8418, %v8402
        %v8467 = vpack.c.b16 %v8419, %v8403
        %v8468 = vpack.c.b16 %v8420, %v8404
        %v8469 = vpack.c.b16 %v8421, %v8405
        %v8470 = vpack.c.b16 %v8422, %v8406
        %v8471 = vpack.c.b16 %v8423, %v8407
        %v8472 = vpack.c.b16 %v8424, %v8408
        %v8473 = vpack.c.b16 %v8425, %v8409
        %v8474 = vpack.c.b16 %v8426, %v8410
        %v8475 = vpack.c.b16 %v8427, %v8411
        %v8476 = vpack.c.b16 %v8428, %v8412
        %v8477 = vpack.c.b16 %v8429, %v8413
        %v8478 = vpack.c.b16 %v8430, %v8414
        %v8479 = vpack.c.b16 %v8431, %v8415
        %v8480 = vpack.c.b16 %v8448, %v8432
        %v8481 = vpack.c.b16 %v8449, %v8433
        %v8482 = vpack.c.b16 %v8450, %v8434
        %v8483 = vpack.c.b16 %v8451, %v8435
        %v8484 = vpack.c.b16 %v8452, %v8436
        %v8485 = vpack.c.b16 %v8453, %v8437
        %v8486 = vpack.c.b16 %v8454, %v8438
        %v8487 = vpack.c.b16 %v8455, %v8439
        %v8488 = vpack.c.b16 %v8456, %v8440
        %v8489 = vpack.c.b16 %v8457, %v8441
        %v8490 = vpack.c.b16 %v8458, %v8442
        %v8491 = vpack.c.b16 %v8459, %v8443
        %v8492 = vpack.c.b16 %v8460, %v8444
        %v8493 = vpack.c.b16 %v8461, %v8445
        %v8494 = vpack.c.b16 %v8462, %v8446
        %v8495 = vpack.c.b16 %v8463, %v8447
        %v8560 = vunpack.c.l.b16 %v7271
        %v8561 = vunpack.c.h.b16 %v7271
        %v8562 = vunpack.c.l.b16 %v7272
        %v8563 = vunpack.c.h.b16 %v7272
        %v8564 = vunpack.c.l.b16 %v7273
        %v8565 = vunpack.c.h.b16 %v7273
        %v8566 = vunpack.c.l.b16 %v7274
        %v8567 = vunpack.c.h.b16 %v7274
        %v8568 = vunpack.c.l.b16 %v7275
        %v8569 = vunpack.c.h.b16 %v7275
        %v8570 = vunpack.c.l.b16 %v7276
        %v8571 = vunpack.c.h.b16 %v7276
        %v8572 = vunpack.c.l.b16 %v7277
        %v8573 = vunpack.c.h.b16 %v7277
        %v8574 = vunpack.c.l.b16 %v7278
        %v8575 = vunpack.c.h.b16 %v7278
        %v8576 = vunpack.c.l.b16 %v7279
        %v8577 = vunpack.c.h.b16 %v7279
        %v8578 = vunpack.c.l.b16 %v7280
        %v8579 = vunpack.c.h.b16 %v7280
        %v8580 = vunpack.c.l.b16 %v7281
        %v8581 = vunpack.c.h.b16 %v7281
        %v8582 = vunpack.c.l.b16 %v7282
        %v8583 = vunpack.c.h.b16 %v7282
        %v8584 = vunpack.c.l.b16 %v7283
        %v8585 = vunpack.c.h.b16 %v7283
        %v8586 = vunpack.c.l.b16 %v7284
        %v8587 = vunpack.c.h.b16 %v7284
        %v8588 = vunpack.c.l.b16 %v7285
        %v8589 = vunpack.c.h.b16 %v7285
        %v8590 = vunpack.c.l.b16 %v7286
        %v8591 = vunpack.c.h.b16 %v7286
        %v8592 = vunpack.c.l.b16 %v7287
        %v8593 = vunpack.c.h.b16 %v7287
        %v8594 = vunpack.c.l.b16 %v7288
        %v8595 = vunpack.c.h.b16 %v7288
        %v8596 = vunpack.c.l.b16 %v7289
        %v8597 = vunpack.c.h.b16 %v7289
        %v8598 = vunpack.c.l.b16 %v7290
        %v8599 = vunpack.c.h.b16 %v7290
        %v8600 = vunpack.c.l.b16 %v7291
        %v8601 = vunpack.c.h.b16 %v7291
        %v8602 = vunpack.c.l.b16 %v7292
        %v8603 = vunpack.c.h.b16 %v7292
        %v8604 = vunpack.c.l.b16 %v7293
        %v8605 = vunpack.c.h.b16 %v7293
        %v8606 = vunpack.c.l.b16 %v7294
        %v8607 = vunpack.c.h.b16 %v7294
        %v8608 = vunpack.c.l.b16 %v7295
        %v8609 = vunpack.c.h.b16 %v7295
        %v8610 = vunpack.c.l.b16 %v7296
        %v8611 = vunpack.c.h.b16 %v7296
        %v8612 = vunpack.c.l.b16 %v7297
        %v8613 = vunpack.c.h.b16 %v7297
        %v8614 = vunpack.c.l.b16 %v7298
        %v8615 = vunpack.c.h.b16 %v7298
        %v8616 = vunpack.c.l.b16 %v7299
        %v8617 = vunpack.c.h.b16 %v7299
        %v8618 = vunpack.c.l.b16 %v7300
        %v8619 = vunpack.c.h.b16 %v7300
        %v8620 = vunpack.c.l.b16 %v7301
        %v8621 = vunpack.c.h.b16 %v7301
        %v8622 = vunpack.c.l.b16 %v7302
        %v8623 = vunpack.c.h.b16 %v7302
        %v8624 = vpack.c.b16 %v8576, %v8560
        %v8625 = vpack.c.b16 %v8577, %v8561
        %v8626 = vpack.c.b16 %v8578, %v8562
        %v8627 = vpack.c.b16 %v8579, %v8563
        %v8628 = vpack.c.b16 %v8580, %v8564
        %v8629 = vpack.c.b16 %v8581, %v8565
        %v8630 = vpack.c.b16 %v8582, %v8566
        %v8631 = vpack.c.b16 %v8583, %v8567
        %v8632 = vpack.c.b16 %v8584, %v8568
        %v8633 = vpack.c.b16 %v8585, %v8569
        %v8634 = vpack.c.b16 %v8586, %v8570
        %v8635 = vpack.c.b16 %v8587, %v8571
        %v8636 = vpack.c.b16 %v8588, %v8572
        %v8637 = vpack.c.b16 %v8589, %v8573
        %v8638 = vpack.c.b16 %v8590, %v8574
        %v8639 = vpack.c.b16 %v8591, %v8575
        %v8640 = vpack.c.b16 %v8608, %v8592
        %v8641 = vpack.c.b16 %v8609, %v8593
        %v8642 = vpack.c.b16 %v8610, %v8594
        %v8643 = vpack.c.b16 %v8611, %v8595
        %v8644 = vpack.c.b16 %v8612, %v8596
        %v8645 = vpack.c.b16 %v8613, %v8597
        %v8646 = vpack.c.b16 %v8614, %v8598
        %v8647 = vpack.c.b16 %v8615, %v8599
        %v8648 = vpack.c.b16 %v8616, %v8600
        %v8649 = vpack.c.b16 %v8617, %v8601
        %v8650 = vpack.c.b16 %v8618, %v8602
        %v8651 = vpack.c.b16 %v8619, %v8603
        %v8652 = vpack.c.b16 %v8620, %v8604
        %v8653 = vpack.c.b16 %v8621, %v8605
        %v8654 = vpack.c.b16 %v8622, %v8606
        %v8655 = vpack.c.b16 %v8623, %v8607
        %v8720 = vunpack.c.l.b16 %v7303
        %v8721 = vunpack.c.h.b16 %v7303
        %v8722 = vunpack.c.l.b16 %v7304
        %v8723 = vunpack.c.h.b16 %v7304
        %v8724 = vunpack.c.l.b16 %v7305
        %v8725 = vunpack.c.h.b16 %v7305
        %v8726 = vunpack.c.l.b16 %v7306
        %v8727 = vunpack.c.h.b16 %v7306
        %v8728 = vunpack.c.l.b16 %v7307
        %v8729 = vunpack.c.h.b16 %v7307
        %v8730 = vunpack.c.l.b16 %v7308
        %v8731 = vunpack.c.h.b16 %v7308
        %v8732 = vunpack.c.l.b16 %v7309
        %v8733 = vunpack.c.h.b16 %v7309
        %v8734 = vunpack.c.l.b16 %v7310
        %v8735 = vunpack.c.h.b16 %v7310
        %v8736 = vunpack.c.l.b16 %v7311
        %v8737 = vunpack.c.h.b16 %v7311
        %v8738 = vunpack.c.l.b16 %v7312
        %v8739 = vunpack.c.h.b16 %v7312
        %v8740 = vunpack.c.l.b16 %v7313
        %v8741 = vunpack.c.h.b16 %v7313
        %v8742 = vunpack.c.l.b16 %v7314
        %v8743 = vunpack.c.h.b16 %v7314
        %v8744 = vunpack.c.l.b16 %v7315
        %v8745 = vunpack.c.h.b16 %v7315
        %v8746 = vunpack.c.l.b16 %v7316
        %v8747 = vunpack.c.h.b16 %v7316
        %v8748 = vunpack.c.l.b16 %v7317
        %v8749 = vunpack.c.h.b16 %v7317
        %v8750 = vunpack.c.l.b16 %v7318
        %v8751 = vunpack.c.h.b16 %v7318
        %v8752 = vunpack.c.l.b16 %v7319
        %v8753 = vunpack.c.h.b16 %v7319
        %v8754 = vunpack.c.l.b16 %v7320
        %v8755 = vunpack.c.h.b16 %v7320
        %v8756 = vunpack.c.l.b16 %v7321
        %v8757 = vunpack.c.h.b16 %v7321
        %v8758 = vunpack.c.l.b16 %v7322
        %v8759 = vunpack.c.h.b16 %v7322
        %v8760 = vunpack.c.l.b16 %v7323
        %v8761 = vunpack.c.h.b16 %v7323
        %v8762 = vunpack.c.l.b16 %v7324
        %v8763 = vunpack.c.h.b16 %v7324
        %v8764 = vunpack.c.l.b16 %v7325
        %v8765 = vunpack.c.h.b16 %v7325
        %v8766 = vunpack.c.l.b16 %v7326
        %v8767 = vunpack.c.h.b16 %v7326
        %v8768 = vunpack.c.l.b16 %v7327
        %v8769 = vunpack.c.h.b16 %v7327
        %v8770 = vunpack.c.l.b16 %v7328
        %v8771 = vunpack.c.h.b16 %v7328
        %v8772 = vunpack.c.l.b16 %v7329
        %v8773 = vunpack.c.h.b16 %v7329
        %v8774 = vunpack.c.l.b16 %v7330
        %v8775 = vunpack.c.h.b16 %v7330
        %v8776 = vunpack.c.l.b16 %v7331
        %v8777 = vunpack.c.h.b16 %v7331
        %v8778 = vunpack.c.l.b16 %v7332
        %v8779 = vunpack.c.h.b16 %v7332
        %v8780 = vunpack.c.l.b16 %v7333
        %v8781 = vunpack.c.h.b16 %v7333
        %v8782 = vunpack.c.l.b16 %v7334
        %v8783 = vunpack.c.h.b16 %v7334
        %v8784 = vpack.c.b16 %v8736, %v8720
        %v8785 = vpack.c.b16 %v8737, %v8721
        %v8786 = vpack.c.b16 %v8738, %v8722
        %v8787 = vpack.c.b16 %v8739, %v8723
        %v8788 = vpack.c.b16 %v8740, %v8724
        %v8789 = vpack.c.b16 %v8741, %v8725
        %v8790 = vpack.c.b16 %v8742, %v8726
        %v8791 = vpack.c.b16 %v8743, %v8727
        %v8792 = vpack.c.b16 %v8744, %v8728
        %v8793 = vpack.c.b16 %v8745, %v8729
        %v8794 = vpack.c.b16 %v8746, %v8730
        %v8795 = vpack.c.b16 %v8747, %v8731
        %v8796 = vpack.c.b16 %v8748, %v8732
        %v8797 = vpack.c.b16 %v8749, %v8733
        %v8798 = vpack.c.b16 %v8750, %v8734
        %v8799 = vpack.c.b16 %v8751, %v8735
        %v8800 = vpack.c.b16 %v8768, %v8752
        %v8801 = vpack.c.b16 %v8769, %v8753
        %v8802 = vpack.c.b16 %v8770, %v8754
        %v8803 = vpack.c.b16 %v8771, %v8755
        %v8804 = vpack.c.b16 %v8772, %v8756
        %v8805 = vpack.c.b16 %v8773, %v8757
        %v8806 = vpack.c.b16 %v8774, %v8758
        %v8807 = vpack.c.b16 %v8775, %v8759
        %v8808 = vpack.c.b16 %v8776, %v8760
        %v8809 = vpack.c.b16 %v8777, %v8761
        %v8810 = vpack.c.b16 %v8778, %v8762
        %v8811 = vpack.c.b16 %v8779, %v8763
        %v8812 = vpack.c.b16 %v8780, %v8764
        %v8813 = vpack.c.b16 %v8781, %v8765
        %v8814 = vpack.c.b16 %v8782, %v8766
        %v8815 = vpack.c.b16 %v8783, %v8767
        %v8880 = vunpack.c.l.b16 %v7591
        %v8881 = vunpack.c.h.b16 %v7591
        %v8882 = vunpack.c.l.b16 %v7592
        %v8883 = vunpack.c.h.b16 %v7592
        %v8884 = vunpack.c.l.b16 %v7593
        %v8885 = vunpack.c.h.b16 %v7593
        %v8886 = vunpack.c.l.b16 %v7594
        %v8887 = vunpack.c.h.b16 %v7594
        %v8888 = vunpack.c.l.b16 %v7595
        %v8889 = vunpack.c.h.b16 %v7595
        %v8890 = vunpack.c.l.b16 %v7596
        %v8891 = vunpack.c.h.b16 %v7596
        %v8892 = vunpack.c.l.b16 %v7597
        %v8893 = vunpack.c.h.b16 %v7597
        %v8894 = vunpack.c.l.b16 %v7598
        %v8895 = vunpack.c.h.b16 %v7598
        %v8896 = vunpack.c.l.b16 %v7599
        %v8897 = vunpack.c.h.b16 %v7599
        %v8898 = vunpack.c.l.b16 %v7600
        %v8899 = vunpack.c.h.b16 %v7600
        %v8900 = vunpack.c.l.b16 %v7601
        %v8901 = vunpack.c.h.b16 %v7601
        %v8902 = vunpack.c.l.b16 %v7602
        %v8903 = vunpack.c.h.b16 %v7602
        %v8904 = vunpack.c.l.b16 %v7603
        %v8905 = vunpack.c.h.b16 %v7603
        %v8906 = vunpack.c.l.b16 %v7604
        %v8907 = vunpack.c.h.b16 %v7604
        %v8908 = vunpack.c.l.b16 %v7605
        %v8909 = vunpack.c.h.b16 %v7605
        %v8910 = vunpack.c.l.b16 %v7606
        %v8911 = vunpack.c.h.b16 %v7606
        %v8912 = vunpack.c.l.b16 %v7607
        %v8913 = vunpack.c.h.b16 %v7607
        %v8914 = vunpack.c.l.b16 %v7608
        %v8915 = vunpack.c.h.b16 %v7608
        %v8916 = vunpack.c.l.b16 %v7609
        %v8917 = vunpack.c.h.b16 %v7609
        %v8918 = vunpack.c.l.b16 %v7610
        %v8919 = vunpack.c.h.b16 %v7610
        %v8920 = vunpack.c.l.b16 %v7611
        %v8921 = vunpack.c.h.b16 %v7611
        %v8922 = vunpack.c.l.b16 %v7612
        %v8923 = vunpack.c.h.b16 %v7612
        %v8924 = vunpack.c.l.b16 %v7613
        %v8925 = vunpack.c.h.b16 %v7613
        %v8926 = vunpack.c.l.b16 %v7614
        %v8927 = vunpack.c.h.b16 %v7614
        %v8928 = vunpack.c.l.b16 %v7615
        %v8929 = vunpack.c.h.b16 %v7615
        %v8930 = vunpack.c.l.b16 %v7616
        %v8931 = vunpack.c.h.b16 %v7616
        %v8932 = vunpack.c.l.b16 %v7617
        %v8933 = vunpack.c.h.b16 %v7617
        %v8934 = vunpack.c.l.b16 %v7618
        %v8935 = vunpack.c.h.b16 %v7618
        %v8936 = vunpack.c.l.b16 %v7619
        %v8937 = vunpack.c.h.b16 %v7619
        %v8938 = vunpack.c.l.b16 %v7620
        %v8939 = vunpack.c.h.b16 %v7620
        %v8940 = vunpack.c.l.b16 %v7621
        %v8941 = vunpack.c.h.b16 %v7621
        %v8942 = vunpack.c.l.b16 %v7622
        %v8943 = vunpack.c.h.b16 %v7622
        %v8944 = vpack.c.b16 %v8896, %v8880
        %v8945 = vpack.c.b16 %v8897, %v8881
        %v8946 = vpack.c.b16 %v8898, %v8882
        %v8947 = vpack.c.b16 %v8899, %v8883
        %v8948 = vpack.c.b16 %v8900, %v8884
        %v8949 = vpack.c.b16 %v8901, %v8885
        %v8950 = vpack.c.b16 %v8902, %v8886
        %v8951 = vpack.c.b16 %v8903, %v8887
        %v8952 = vpack.c.b16 %v8904, %v8888
        %v8953 = vpack.c.b16 %v8905, %v8889
        %v8954 = vpack.c.b16 %v8906, %v8890
        %v8955 = vpack.c.b16 %v8907, %v8891
        %v8956 = vpack.c.b16 %v8908, %v8892
        %v8957 = vpack.c.b16 %v8909, %v8893
        %v8958 = vpack.c.b16 %v8910, %v8894
        %v8959 = vpack.c.b16 %v8911, %v8895
        %v8960 = vpack.c.b16 %v8928, %v8912
        %v8961 = vpack.c.b16 %v8929, %v8913
        %v8962 = vpack.c.b16 %v8930, %v8914
        %v8963 = vpack.c.b16 %v8931, %v8915
        %v8964 = vpack.c.b16 %v8932, %v8916
        %v8965 = vpack.c.b16 %v8933, %v8917
        %v8966 = vpack.c.b16 %v8934, %v8918
        %v8967 = vpack.c.b16 %v8935, %v8919
        %v8968 = vpack.c.b16 %v8936, %v8920
        %v8969 = vpack.c.b16 %v8937, %v8921
        %v8970 = vpack.c.b16 %v8938, %v8922
        %v8971 = vpack.c.b16 %v8939, %v8923
        %v8972 = vpack.c.b16 %v8940, %v8924
        %v8973 = vpack.c.b16 %v8941, %v8925
        %v8974 = vpack.c.b16 %v8942, %v8926
        %v8975 = vpack.c.b16 %v8943, %v8927
        %v9040 = vunpack.c.l.b16 %v7879
        %v9041 = vunpack.c.h.b16 %v7879
        %v9042 = vunpack.c.l.b16 %v7880
        %v9043 = vunpack.c.h.b16 %v7880
        %v9044 = vunpack.c.l.b16 %v7881
        %v9045 = vunpack.c.h.b16 %v7881
        %v9046 = vunpack.c.l.b16 %v7882
        %v9047 = vunpack.c.h.b16 %v7882
        %v9048 = vunpack.c.l.b16 %v7883
        %v9049 = vunpack.c.h.b16 %v7883
        %v9050 = vunpack.c.l.b16 %v7884
        %v9051 = vunpack.c.h.b16 %v7884
        %v9052 = vunpack.c.l.b16 %v7885
        %v9053 = vunpack.c.h.b16 %v7885
        %v9054 = vunpack.c.l.b16 %v7886
        %v9055 = vunpack.c.h.b16 %v7886
        %v9056 = vunpack.c.l.b16 %v7887
        %v9057 = vunpack.c.h.b16 %v7887
        %v9058 = vunpack.c.l.b16 %v7888
        %v9059 = vunpack.c.h.b16 %v7888
        %v9060 = vunpack.c.l.b16 %v7889
        %v9061 = vunpack.c.h.b16 %v7889
        %v9062 = vunpack.c.l.b16 %v7890
        %v9063 = vunpack.c.h.b16 %v7890
        %v9064 = vunpack.c.l.b16 %v7891
        %v9065 = vunpack.c.h.b16 %v7891
        %v9066 = vunpack.c.l.b16 %v7892
        %v9067 = vunpack.c.h.b16 %v7892
        %v9068 = vunpack.c.l.b16 %v7893
        %v9069 = vunpack.c.h.b16 %v7893
        %v9070 = vunpack.c.l.b16 %v7894
        %v9071 = vunpack.c.h.b16 %v7894
        %v9072 = vunpack.c.l.b16 %v7895
        %v9073 = vunpack.c.h.b16 %v7895
        %v9074 = vunpack.c.l.b16 %v7896
        %v9075 = vunpack.c.h.b16 %v7896
        %v9076 = vunpack.c.l.b16 %v7897
        %v9077 = vunpack.c.h.b16 %v7897
        %v9078 = vunpack.c.l.b16 %v7898
        %v9079 = vunpack.c.h.b16 %v7898
        %v9080 = vunpack.c.l.b16 %v7899
        %v9081 = vunpack.c.h.b16 %v7899
        %v9082 = vunpack.c.l.b16 %v7900
        %v9083 = vunpack.c.h.b16 %v7900
        %v9084 = vunpack.c.l.b16 %v7901
        %v9085 = vunpack.c.h.b16 %v7901
        %v9086 = vunpack.c.l.b16 %v7902
        %v9087 = vunpack.c.h.b16 %v7902
        %v9088 = vunpack.c.l.b16 %v7903
        %v9089 = vunpack.c.h.b16 %v7903
        %v9090 = vunpack.c.l.b16 %v7904
        %v9091 = vunpack.c.h.b16 %v7904
        %v9092 = vunpack.c.l.b16 %v7905
        %v9093 = vunpack.c.h.b16 %v7905
        %v9094 = vunpack.c.l.b16 %v7906
        %v9095 = vunpack.c.h.b16 %v7906
        %v9096 = vunpack.c.l.b16 %v7907
        %v9097 = vunpack.c.h.b16 %v7907
        %v9098 = vunpack.c.l.b16 %v7908
        %v9099 = vunpack.c.h.b16 %v7908
        %v9100 = vunpack.c.l.b16 %v7909
        %v9101 = vunpack.c.h.b16 %v7909
        %v9102 = vunpack.c.l.b16 %v7910
        %v9103 = vunpack.c.h.b16 %v7910
        %v9104 = vpack.c.b16 %v9056, %v9040
        %v9105 = vpack.c.b16 %v9057, %v9041
        %v9106 = vpack.c.b16 %v9058, %v9042
        %v9107 = vpack.c.b16 %v9059, %v9043
        %v9108 = vpack.c.b16 %v9060, %v9044
        %v9109 = vpack.c.b16 %v9061, %v9045
        %v9110 = vpack.c.b16 %v9062, %v9046
        %v9111 = vpack.c.b16 %v9063, %v9047
        %v9112 = vpack.c.b16 %v9064, %v9048
        %v9113 = vpack.c.b16 %v9065, %v9049
        %v9114 = vpack.c.b16 %v9066, %v9050
        %v9115 = vpack.c.b16 %v9067, %v9051
        %v9116 = vpack.c.b16 %v9068, %v9052
        %v9117 = vpack.c.b16 %v9069, %v9053
        %v9118 = vpack.c.b16 %v9070, %v9054
        %v9119 = vpack.c.b16 %v9071, %v9055
        %v9120 = vpack.c.b16 %v9088, %v9072
        %v9121 = vpack.c.b16 %v9089, %v9073
        %v9122 = vpack.c.b16 %v9090, %v9074
        %v9123 = vpack.c.b16 %v9091, %v9075
        %v9124 = vpack.c.b16 %v9092, %v9076
        %v9125 = vpack.c.b16 %v9093, %v9077
        %v9126 = vpack.c.b16 %v9094, %v9078
        %v9127 = vpack.c.b16 %v9095, %v9079
        %v9128 = vpack.c.b16 %v9096, %v9080
        %v9129 = vpack.c.b16 %v9097, %v9081
        %v9130 = vpack.c.b16 %v9098, %v9082
        %v9131 = vpack.c.b16 %v9099, %v9083
        %v9132 = vpack.c.b16 %v9100, %v9084
        %v9133 = vpack.c.b16 %v9101, %v9085
        %v9134 = vpack.c.b16 %v9102, %v9086
        %v9135 = vpack.c.b16 %v9103, %v9087
        %v9200 = vunpack.c.l.b16 %v8176
        %v9201 = vunpack.c.h.b16 %v8176
        %v9202 = vunpack.c.l.b16 %v8177
        %v9203 = vunpack.c.h.b16 %v8177
        %v9204 = vunpack.c.l.b16 %v8178
        %v9205 = vunpack.c.h.b16 %v8178
        %v9206 = vunpack.c.l.b16 %v8179
        %v9207 = vunpack.c.h.b16 %v8179
        %v9208 = vunpack.c.l.b16 %v8180
        %v9209 = vunpack.c.h.b16 %v8180
        %v9210 = vunpack.c.l.b16 %v8181
        %v9211 = vunpack.c.h.b16 %v8181
        %v9212 = vunpack.c.l.b16 %v8182
        %v9213 = vunpack.c.h.b16 %v8182
        %v9214 = vunpack.c.l.b16 %v8183
        %v9215 = vunpack.c.h.b16 %v8183
        %v9216 = vunpack.c.l.b16 %v8184
        %v9217 = vunpack.c.h.b16 %v8184
        %v9218 = vunpack.c.l.b16 %v8185
        %v9219 = vunpack.c.h.b16 %v8185
        %v9220 = vunpack.c.l.b16 %v8186
        %v9221 = vunpack.c.h.b16 %v8186
        %v9222 = vunpack.c.l.b16 %v8187
        %v9223 = vunpack.c.h.b16 %v8187
        %v9224 = vunpack.c.l.b16 %v8188
        %v9225 = vunpack.c.h.b16 %v8188
        %v9226 = vunpack.c.l.b16 %v8189
        %v9227 = vunpack.c.h.b16 %v8189
        %v9228 = vunpack.c.l.b16 %v8190
        %v9229 = vunpack.c.h.b16 %v8190
        %v9230 = vunpack.c.l.b16 %v8191
        %v9231 = vunpack.c.h.b16 %v8191
        %v9232 = vunpack.c.l.b16 %v8192
        %v9233 = vunpack.c.h.b16 %v8192
        %v9234 = vunpack.c.l.b16 %v8193
        %v9235 = vunpack.c.h.b16 %v8193
        %v9236 = vunpack.c.l.b16 %v8194
        %v9237 = vunpack.c.h.b16 %v8194
        %v9238 = vunpack.c.l.b16 %v8195
        %v9239 = vunpack.c.h.b16 %v8195
        %v9240 = vunpack.c.l.b16 %v8196
        %v9241 = vunpack.c.h.b16 %v8196
        %v9242 = vunpack.c.l.b16 %v8197
        %v9243 = vunpack.c.h.b16 %v8197
        %v9244 = vunpack.c.l.b16 %v8198
        %v9245 = vunpack.c.h.b16 %v8198
        %v9246 = vunpack.c.l.b16 %v8199
        %v9247 = vunpack.c.h.b16 %v8199
        %v9248 = vunpack.c.l.b16 %v8200
        %v9249 = vunpack.c.h.b16 %v8200
        %v9250 = vunpack.c.l.b16 %v8201
        %v9251 = vunpack.c.h.b16 %v8201
        %v9252 = vunpack.c.l.b16 %v8202
        %v9253 = vunpack.c.h.b16 %v8202
        %v9254 = vunpack.c.l.b16 %v8203
        %v9255 = vunpack.c.h.b16 %v8203
        %v9256 = vunpack.c.l.b16 %v8204
        %v9257 = vunpack.c.h.b16 %v8204
        %v9258 = vunpack.c.l.b16 %v8205
        %v9259 = vunpack.c.h.b16 %v8205
        %v9260 = vunpack.c.l.b16 %v8206
        %v9261 = vunpack.c.h.b16 %v8206
        %v9262 = vunpack.c.l.b16 %v8207
        %v9263 = vunpack.c.h.b16 %v8207
        %v9264 = vpack.c.b16 %v9216, %v9200
        %v9265 = vpack.c.b16 %v9217, %v9201
        %v9266 = vpack.c.b16 %v9218, %v9202
        %v9267 = vpack.c.b16 %v9219, %v9203
        %v9268 = vpack.c.b16 %v9220, %v9204
        %v9269 = vpack.c.b16 %v9221, %v9205
        %v9270 = vpack.c.b16 %v9222, %v9206
        %v9271 = vpack.c.b16 %v9223, %v9207
        %v9272 = vpack.c.b16 %v9224, %v9208
        %v9273 = vpack.c.b16 %v9225, %v9209
        %v9274 = vpack.c.b16 %v9226, %v9210
        %v9275 = vpack.c.b16 %v9227, %v9211
        %v9276 = vpack.c.b16 %v9228, %v9212
        %v9277 = vpack.c.b16 %v9229, %v9213
        %v9278 = vpack.c.b16 %v9230, %v9214
        %v9279 = vpack.c.b16 %v9231, %v9215
        %v9280 = vpack.c.b16 %v9248, %v9232
        %v9281 = vpack.c.b16 %v9249, %v9233
        %v9282 = vpack.c.b16 %v9250, %v9234
        %v9283 = vpack.c.b16 %v9251, %v9235
        %v9284 = vpack.c.b16 %v9252, %v9236
        %v9285 = vpack.c.b16 %v9253, %v9237
        %v9286 = vpack.c.b16 %v9254, %v9238
        %v9287 = vpack.c.b16 %v9255, %v9239
        %v9288 = vpack.c.b16 %v9256, %v9240
        %v9289 = vpack.c.b16 %v9257, %v9241
        %v9290 = vpack.c.b16 %v9258, %v9242
        %v9291 = vpack.c.b16 %v9259, %v9243
        %v9292 = vpack.c.b16 %v9260, %v9244
        %v9293 = vpack.c.b16 %v9261, %v9245
        %v9294 = vpack.c.b16 %v9262, %v9246
        %v9295 = vpack.c.b16 %v9263, %v9247
        %v9332 = vunpack.c.l.b16 %v381
        %v9333 = vunpack.c.h.b16 %v381
        %v9334 = vunpack.c.l.b16 %v382
        %v9335 = vunpack.c.h.b16 %v382
        %v9336 = vunpack.c.l.b16 %v383
        %v9337 = vunpack.c.h.b16 %v383
        %v9338 = vunpack.c.l.b16 %v384
        %v9339 = vunpack.c.h.b16 %v384
        %v9340 = vpack.c.b16 %v9334, %v9332
        %v9341 = vpack.c.b16 %v9335, %v9333
        %v9342 = vpack.c.b16 %v9338, %v9336
        %v9343 = vpack.c.b16 %v9339, %v9337
        %v9347 = vsel %vm2765, %v9341, 0
        %v9350 = vsel %vm2765, %v9343, 0
        %9352 = vmatpush.bf16.msra.mxu0 %v8800
        %9353 = vmatpush.bf16.msra.mxu0 %v8784
        %9354 = vmatpush.bf16.msra.mxu0 %v8640
        %9355 = vmatpush.bf16.msra.mxu0 %v8624
        %9356 = vmatpush.bf16.msra.mxu0 %v8480
        %9357 = vmatpush.bf16.msra.mxu0 %v8464
        %9358 = vmatpush.bf16.msra.mxu0 %v8320
        %9359 = vmatpush.bf16.msra.mxu0 %v8304
        %9360 = vmatmul.bf16.gmra.mxu0 %v9340
        %v9361 = vpop.f32.mrf.mxu0
        %v9362 = vadd.f32 0.0, %v9361
        %v9363 = vpop.f32.mrf.mxu0
        %v9364 = vadd.f32 0.0, %v9363
        %9365 = vmatmul.bf16.gmra.mxu0 %v9342
        %v9366 = vpop.f32.mrf.mxu0
        %v9367 = vadd.f32 0.0, %v9366
        %v9368 = vpop.f32.mrf.mxu0
        %v9369 = vadd.f32 0.0, %v9368
        %9370 = vdwg.mxu0
        %9371 = vmatpush.bf16.msra.mxu0 0
        %9372 = vmatpush.bf16.msra.mxu0 0
        %9373 = vmatpush.bf16.msra.mxu0 %v9280
        %9374 = vmatpush.bf16.msra.mxu0 %v9264
        %9375 = vmatpush.bf16.msra.mxu0 %v9120
        %9376 = vmatpush.bf16.msra.mxu0 %v9104
        %9377 = vmatpush.bf16.msra.mxu0 %v8960
        %9378 = vmatpush.bf16.msra.mxu0 %v8944
        %9379 = vmatmul.bf16.gmra.mxu0 %v9347
        %v9380 = vpop.f32.mrf.mxu0
        %v9381 = vadd.f32 %v9362, %v9380
        %v9382 = vpop.f32.mrf.mxu0
        %v9383 = vadd.f32 %v9364, %v9382
        %9384 = vmatmul.bf16.gmra.mxu0 %v9350
        %v9385 = vpop.f32.mrf.mxu0
        %v9386 = vadd.f32 %v9367, %v9385
        %v9387 = vpop.f32.mrf.mxu0
        %v9388 = vadd.f32 %v9369, %v9387
        %9389 = vdwg.mxu0
        %9390 = vmatpush.bf16.msra.mxu0 %v8801
        %9391 = vmatpush.bf16.msra.mxu0 %v8785
        %9392 = vmatpush.bf16.msra.mxu0 %v8641
        %9393 = vmatpush.bf16.msra.mxu0 %v8625
        %9394 = vmatpush.bf16.msra.mxu0 %v8481
        %9395 = vmatpush.bf16.msra.mxu0 %v8465
        %9396 = vmatpush.bf16.msra.mxu0 %v8321
        %9397 = vmatpush.bf16.msra.mxu0 %v8305
        %9398 = vmatmul.bf16.gmra.mxu0 %v9340
        %v9399 = vpop.f32.mrf.mxu0
        %v9400 = vadd.f32 0.0, %v9399
        %v9401 = vpop.f32.mrf.mxu0
        %v9402 = vadd.f32 0.0, %v9401
        %9403 = vmatmul.bf16.gmra.mxu0 %v9342
        %v9404 = vpop.f32.mrf.mxu0
        %v9405 = vadd.f32 0.0, %v9404
        %v9406 = vpop.f32.mrf.mxu0
        %v9407 = vadd.f32 0.0, %v9406
        %9408 = vdwg.mxu0
        %9409 = vmatpush.bf16.msra.mxu0 0
        %9410 = vmatpush.bf16.msra.mxu0 0
        %9411 = vmatpush.bf16.msra.mxu0 %v9281
        %9412 = vmatpush.bf16.msra.mxu0 %v9265
        %9413 = vmatpush.bf16.msra.mxu0 %v9121
        %9414 = vmatpush.bf16.msra.mxu0 %v9105
        %9415 = vmatpush.bf16.msra.mxu0 %v8961
        %9416 = vmatpush.bf16.msra.mxu0 %v8945
        %9417 = vmatmul.bf16.gmra.mxu0 %v9347
        %v9418 = vpop.f32.mrf.mxu0
        %v9419 = vadd.f32 %v9400, %v9418
        %v9420 = vpop.f32.mrf.mxu0
        %v9421 = vadd.f32 %v9402, %v9420
        %9422 = vmatmul.bf16.gmra.mxu0 %v9350
        %v9423 = vpop.f32.mrf.mxu0
        %v9424 = vadd.f32 %v9405, %v9423
        %v9425 = vpop.f32.mrf.mxu0
        %v9426 = vadd.f32 %v9407, %v9425
        %9427 = vdwg.mxu0
        %9428 = vmatpush.bf16.msra.mxu0 %v8802
        %9429 = vmatpush.bf16.msra.mxu0 %v8786
        %9430 = vmatpush.bf16.msra.mxu0 %v8642
        %9431 = vmatpush.bf16.msra.mxu0 %v8626
        %9432 = vmatpush.bf16.msra.mxu0 %v8482
        %9433 = vmatpush.bf16.msra.mxu0 %v8466
        %9434 = vmatpush.bf16.msra.mxu0 %v8322
        %9435 = vmatpush.bf16.msra.mxu0 %v8306
        %9436 = vmatmul.bf16.gmra.mxu0 %v9340
        %v9437 = vpop.f32.mrf.mxu0
        %v9438 = vadd.f32 0.0, %v9437
        %v9439 = vpop.f32.mrf.mxu0
        %v9440 = vadd.f32 0.0, %v9439
        %9441 = vmatmul.bf16.gmra.mxu0 %v9342
        %v9442 = vpop.f32.mrf.mxu0
        %v9443 = vadd.f32 0.0, %v9442
        %v9444 = vpop.f32.mrf.mxu0
        %v9445 = vadd.f32 0.0, %v9444
        %9446 = vdwg.mxu0
        %9447 = vmatpush.bf16.msra.mxu0 0
        %9448 = vmatpush.bf16.msra.mxu0 0
        %9449 = vmatpush.bf16.msra.mxu0 %v9282
        %9450 = vmatpush.bf16.msra.mxu0 %v9266
        %9451 = vmatpush.bf16.msra.mxu0 %v9122
        %9452 = vmatpush.bf16.msra.mxu0 %v9106
        %9453 = vmatpush.bf16.msra.mxu0 %v8962
        %9454 = vmatpush.bf16.msra.mxu0 %v8946
        %9455 = vmatmul.bf16.gmra.mxu0 %v9347
        %v9456 = vpop.f32.mrf.mxu0
        %v9457 = vadd.f32 %v9438, %v9456
        %v9458 = vpop.f32.mrf.mxu0
        %v9459 = vadd.f32 %v9440, %v9458
        %9460 = vmatmul.bf16.gmra.mxu0 %v9350
        %v9461 = vpop.f32.mrf.mxu0
        %v9462 = vadd.f32 %v9443, %v9461
        %v9463 = vpop.f32.mrf.mxu0
        %v9464 = vadd.f32 %v9445, %v9463
        %9465 = vdwg.mxu0
        %9466 = vmatpush.bf16.msra.mxu0 %v8803
        %9467 = vmatpush.bf16.msra.mxu0 %v8787
        %9468 = vmatpush.bf16.msra.mxu0 %v8643
        %9469 = vmatpush.bf16.msra.mxu0 %v8627
        %9470 = vmatpush.bf16.msra.mxu0 %v8483
        %9471 = vmatpush.bf16.msra.mxu0 %v8467
        %9472 = vmatpush.bf16.msra.mxu0 %v8323
        %9473 = vmatpush.bf16.msra.mxu0 %v8307
        %9474 = vmatmul.bf16.gmra.mxu0 %v9340
        %v9475 = vpop.f32.mrf.mxu0
        %v9476 = vadd.f32 0.0, %v9475
        %v9477 = vpop.f32.mrf.mxu0
        %v9478 = vadd.f32 0.0, %v9477
        %9479 = vmatmul.bf16.gmra.mxu0 %v9342
        %v9480 = vpop.f32.mrf.mxu0
        %v9481 = vadd.f32 0.0, %v9480
        %v9482 = vpop.f32.mrf.mxu0
        %v9483 = vadd.f32 0.0, %v9482
        %9484 = vdwg.mxu0
        %9485 = vmatpush.bf16.msra.mxu0 0
        %9486 = vmatpush.bf16.msra.mxu0 0
        %9487 = vmatpush.bf16.msra.mxu0 %v9283
        %9488 = vmatpush.bf16.msra.mxu0 %v9267
        %9489 = vmatpush.bf16.msra.mxu0 %v9123
        %9490 = vmatpush.bf16.msra.mxu0 %v9107
        %9491 = vmatpush.bf16.msra.mxu0 %v8963
        %9492 = vmatpush.bf16.msra.mxu0 %v8947
        %9493 = vmatmul.bf16.gmra.mxu0 %v9347
        %v9494 = vpop.f32.mrf.mxu0
        %v9495 = vadd.f32 %v9476, %v9494
        %v9496 = vpop.f32.mrf.mxu0
        %v9497 = vadd.f32 %v9478, %v9496
        %9498 = vmatmul.bf16.gmra.mxu0 %v9350
        %v9499 = vpop.f32.mrf.mxu0
        %v9500 = vadd.f32 %v9481, %v9499
        %v9501 = vpop.f32.mrf.mxu0
        %v9502 = vadd.f32 %v9483, %v9501
        %9503 = vdwg.mxu0
        %9504 = vmatpush.bf16.msra.mxu0 %v8804
        %9505 = vmatpush.bf16.msra.mxu0 %v8788
        %9506 = vmatpush.bf16.msra.mxu0 %v8644
        %9507 = vmatpush.bf16.msra.mxu0 %v8628
        %9508 = vmatpush.bf16.msra.mxu0 %v8484
        %9509 = vmatpush.bf16.msra.mxu0 %v8468
        %9510 = vmatpush.bf16.msra.mxu0 %v8324
        %9511 = vmatpush.bf16.msra.mxu0 %v8308
        %9512 = vmatmul.bf16.gmra.mxu0 %v9340
        %v9513 = vpop.f32.mrf.mxu0
        %v9514 = vadd.f32 0.0, %v9513
        %v9515 = vpop.f32.mrf.mxu0
        %v9516 = vadd.f32 0.0, %v9515
        %9517 = vmatmul.bf16.gmra.mxu0 %v9342
        %v9518 = vpop.f32.mrf.mxu0
        %v9519 = vadd.f32 0.0, %v9518
        %v9520 = vpop.f32.mrf.mxu0
        %v9521 = vadd.f32 0.0, %v9520
        %9522 = vdwg.mxu0
        %9523 = vmatpush.bf16.msra.mxu0 0
        %9524 = vmatpush.bf16.msra.mxu0 0
        %9525 = vmatpush.bf16.msra.mxu0 %v9284
        %9526 = vmatpush.bf16.msra.mxu0 %v9268
        %9527 = vmatpush.bf16.msra.mxu0 %v9124
        %9528 = vmatpush.bf16.msra.mxu0 %v9108
        %9529 = vmatpush.bf16.msra.mxu0 %v8964
        %9530 = vmatpush.bf16.msra.mxu0 %v8948
        %9531 = vmatmul.bf16.gmra.mxu0 %v9347
        %v9532 = vpop.f32.mrf.mxu0
        %v9533 = vadd.f32 %v9514, %v9532
        %v9534 = vpop.f32.mrf.mxu0
        %v9535 = vadd.f32 %v9516, %v9534
        %9536 = vmatmul.bf16.gmra.mxu0 %v9350
        %v9537 = vpop.f32.mrf.mxu0
        %v9538 = vadd.f32 %v9519, %v9537
        %v9539 = vpop.f32.mrf.mxu0
        %v9540 = vadd.f32 %v9521, %v9539
        %9541 = vdwg.mxu0
        %9542 = vmatpush.bf16.msra.mxu0 %v8805
        %9543 = vmatpush.bf16.msra.mxu0 %v8789
        %9544 = vmatpush.bf16.msra.mxu0 %v8645
        %9545 = vmatpush.bf16.msra.mxu0 %v8629
        %9546 = vmatpush.bf16.msra.mxu0 %v8485
        %9547 = vmatpush.bf16.msra.mxu0 %v8469
        %9548 = vmatpush.bf16.msra.mxu0 %v8325
        %9549 = vmatpush.bf16.msra.mxu0 %v8309
        %9550 = vmatmul.bf16.gmra.mxu0 %v9340
        %v9551 = vpop.f32.mrf.mxu0
        %v9552 = vadd.f32 0.0, %v9551
        %v9553 = vpop.f32.mrf.mxu0
        %v9554 = vadd.f32 0.0, %v9553
        %9555 = vmatmul.bf16.gmra.mxu0 %v9342
        %v9556 = vpop.f32.mrf.mxu0
        %v9557 = vadd.f32 0.0, %v9556
        %v9558 = vpop.f32.mrf.mxu0
        %v9559 = vadd.f32 0.0, %v9558
        %9560 = vdwg.mxu0
        %9561 = vmatpush.bf16.msra.mxu0 0
        %9562 = vmatpush.bf16.msra.mxu0 0
        %9563 = vmatpush.bf16.msra.mxu0 %v9285
        %9564 = vmatpush.bf16.msra.mxu0 %v9269
        %9565 = vmatpush.bf16.msra.mxu0 %v9125
        %9566 = vmatpush.bf16.msra.mxu0 %v9109
        %9567 = vmatpush.bf16.msra.mxu0 %v8965
        %9568 = vmatpush.bf16.msra.mxu0 %v8949
        %9569 = vmatmul.bf16.gmra.mxu0 %v9347
        %v9570 = vpop.f32.mrf.mxu0
        %v9571 = vadd.f32 %v9552, %v9570
        %v9572 = vpop.f32.mrf.mxu0
        %v9573 = vadd.f32 %v9554, %v9572
        %9574 = vmatmul.bf16.gmra.mxu0 %v9350
        %v9575 = vpop.f32.mrf.mxu0
        %v9576 = vadd.f32 %v9557, %v9575
        %v9577 = vpop.f32.mrf.mxu0
        %v9578 = vadd.f32 %v9559, %v9577
        %9579 = vdwg.mxu0
        %9580 = vmatpush.bf16.msra.mxu0 %v8806
        %9581 = vmatpush.bf16.msra.mxu0 %v8790
        %9582 = vmatpush.bf16.msra.mxu0 %v8646
        %9583 = vmatpush.bf16.msra.mxu0 %v8630
        %9584 = vmatpush.bf16.msra.mxu0 %v8486
        %9585 = vmatpush.bf16.msra.mxu0 %v8470
        %9586 = vmatpush.bf16.msra.mxu0 %v8326
        %9587 = vmatpush.bf16.msra.mxu0 %v8310
        %9588 = vmatmul.bf16.gmra.mxu0 %v9340
        %v9589 = vpop.f32.mrf.mxu0
        %v9590 = vadd.f32 0.0, %v9589
        %v9591 = vpop.f32.mrf.mxu0
        %v9592 = vadd.f32 0.0, %v9591
        %9593 = vmatmul.bf16.gmra.mxu0 %v9342
        %v9594 = vpop.f32.mrf.mxu0
        %v9595 = vadd.f32 0.0, %v9594
        %v9596 = vpop.f32.mrf.mxu0
        %v9597 = vadd.f32 0.0, %v9596
        %9598 = vdwg.mxu0
        %9599 = vmatpush.bf16.msra.mxu0 0
        %9600 = vmatpush.bf16.msra.mxu0 0
        %9601 = vmatpush.bf16.msra.mxu0 %v9286
        %9602 = vmatpush.bf16.msra.mxu0 %v9270
        %9603 = vmatpush.bf16.msra.mxu0 %v9126
        %9604 = vmatpush.bf16.msra.mxu0 %v9110
        %9605 = vmatpush.bf16.msra.mxu0 %v8966
        %9606 = vmatpush.bf16.msra.mxu0 %v8950
        %9607 = vmatmul.bf16.gmra.mxu0 %v9347
        %v9608 = vpop.f32.mrf.mxu0
        %v9609 = vadd.f32 %v9590, %v9608
        %v9610 = vpop.f32.mrf.mxu0
        %v9611 = vadd.f32 %v9592, %v9610
        %9612 = vmatmul.bf16.gmra.mxu0 %v9350
        %v9613 = vpop.f32.mrf.mxu0
        %v9614 = vadd.f32 %v9595, %v9613
        %v9615 = vpop.f32.mrf.mxu0
        %v9616 = vadd.f32 %v9597, %v9615
        %9617 = vdwg.mxu0
        %9618 = vmatpush.bf16.msra.mxu0 %v8807
        %9619 = vmatpush.bf16.msra.mxu0 %v8791
        %9620 = vmatpush.bf16.msra.mxu0 %v8647
        %9621 = vmatpush.bf16.msra.mxu0 %v8631
        %9622 = vmatpush.bf16.msra.mxu0 %v8487
        %9623 = vmatpush.bf16.msra.mxu0 %v8471
        %9624 = vmatpush.bf16.msra.mxu0 %v8327
        %9625 = vmatpush.bf16.msra.mxu0 %v8311
        %9626 = vmatmul.bf16.gmra.mxu0 %v9340
        %v9627 = vpop.f32.mrf.mxu0
        %v9628 = vadd.f32 0.0, %v9627
        %v9629 = vpop.f32.mrf.mxu0
        %v9630 = vadd.f32 0.0, %v9629
        %9631 = vmatmul.bf16.gmra.mxu0 %v9342
        %v9632 = vpop.f32.mrf.mxu0
        %v9633 = vadd.f32 0.0, %v9632
        %v9634 = vpop.f32.mrf.mxu0
        %v9635 = vadd.f32 0.0, %v9634
        %9636 = vdwg.mxu0
        %9637 = vmatpush.bf16.msra.mxu0 0
        %9638 = vmatpush.bf16.msra.mxu0 0
        %9639 = vmatpush.bf16.msra.mxu0 %v9287
        %9640 = vmatpush.bf16.msra.mxu0 %v9271
        %9641 = vmatpush.bf16.msra.mxu0 %v9127
        %9642 = vmatpush.bf16.msra.mxu0 %v9111
        %9643 = vmatpush.bf16.msra.mxu0 %v8967
        %9644 = vmatpush.bf16.msra.mxu0 %v8951
        %9645 = vmatmul.bf16.gmra.mxu0 %v9347
        %v9646 = vpop.f32.mrf.mxu0
        %v9647 = vadd.f32 %v9628, %v9646
        %v9648 = vpop.f32.mrf.mxu0
        %v9649 = vadd.f32 %v9630, %v9648
        %9650 = vmatmul.bf16.gmra.mxu0 %v9350
        %v9651 = vpop.f32.mrf.mxu0
        %v9652 = vadd.f32 %v9633, %v9651
        %v9653 = vpop.f32.mrf.mxu0
        %v9654 = vadd.f32 %v9635, %v9653
        %9655 = vdwg.mxu0
        %9656 = vmatpush.bf16.msra.mxu0 %v8808
        %9657 = vmatpush.bf16.msra.mxu0 %v8792
        %9658 = vmatpush.bf16.msra.mxu0 %v8648
        %9659 = vmatpush.bf16.msra.mxu0 %v8632
        %9660 = vmatpush.bf16.msra.mxu0 %v8488
        %9661 = vmatpush.bf16.msra.mxu0 %v8472
        %9662 = vmatpush.bf16.msra.mxu0 %v8328
        %9663 = vmatpush.bf16.msra.mxu0 %v8312
        %9664 = vmatmul.bf16.gmra.mxu0 %v9340
        %v9665 = vpop.f32.mrf.mxu0
        %v9666 = vadd.f32 0.0, %v9665
        %v9667 = vpop.f32.mrf.mxu0
        %v9668 = vadd.f32 0.0, %v9667
        %9669 = vmatmul.bf16.gmra.mxu0 %v9342
        %v9670 = vpop.f32.mrf.mxu0
        %v9671 = vadd.f32 0.0, %v9670
        %v9672 = vpop.f32.mrf.mxu0
        %v9673 = vadd.f32 0.0, %v9672
        %9674 = vdwg.mxu0
        %9675 = vmatpush.bf16.msra.mxu0 0
        %9676 = vmatpush.bf16.msra.mxu0 0
        %9677 = vmatpush.bf16.msra.mxu0 %v9288
        %9678 = vmatpush.bf16.msra.mxu0 %v9272
        %9679 = vmatpush.bf16.msra.mxu0 %v9128
        %9680 = vmatpush.bf16.msra.mxu0 %v9112
        %9681 = vmatpush.bf16.msra.mxu0 %v8968
        %9682 = vmatpush.bf16.msra.mxu0 %v8952
        %9683 = vmatmul.bf16.gmra.mxu0 %v9347
        %v9684 = vpop.f32.mrf.mxu0
        %v9685 = vadd.f32 %v9666, %v9684
        %v9686 = vpop.f32.mrf.mxu0
        %v9687 = vadd.f32 %v9668, %v9686
        %9688 = vmatmul.bf16.gmra.mxu0 %v9350
        %v9689 = vpop.f32.mrf.mxu0
        %v9690 = vadd.f32 %v9671, %v9689
        %v9691 = vpop.f32.mrf.mxu0
        %v9692 = vadd.f32 %v9673, %v9691
        %9693 = vdwg.mxu0
        %9694 = vmatpush.bf16.msra.mxu0 %v8809
        %9695 = vmatpush.bf16.msra.mxu0 %v8793
        %9696 = vmatpush.bf16.msra.mxu0 %v8649
        %9697 = vmatpush.bf16.msra.mxu0 %v8633
        %9698 = vmatpush.bf16.msra.mxu0 %v8489
        %9699 = vmatpush.bf16.msra.mxu0 %v8473
        %9700 = vmatpush.bf16.msra.mxu0 %v8329
        %9701 = vmatpush.bf16.msra.mxu0 %v8313
        %9702 = vmatmul.bf16.gmra.mxu0 %v9340
        %v9703 = vpop.f32.mrf.mxu0
        %v9704 = vadd.f32 0.0, %v9703
        %v9705 = vpop.f32.mrf.mxu0
        %v9706 = vadd.f32 0.0, %v9705
        %9707 = vmatmul.bf16.gmra.mxu0 %v9342
        %v9708 = vpop.f32.mrf.mxu0
        %v9709 = vadd.f32 0.0, %v9708
        %v9710 = vpop.f32.mrf.mxu0
        %v9711 = vadd.f32 0.0, %v9710
        %9712 = vdwg.mxu0
        %9713 = vmatpush.bf16.msra.mxu0 0
        %9714 = vmatpush.bf16.msra.mxu0 0
        %9715 = vmatpush.bf16.msra.mxu0 %v9289
        %9716 = vmatpush.bf16.msra.mxu0 %v9273
        %9717 = vmatpush.bf16.msra.mxu0 %v9129
        %9718 = vmatpush.bf16.msra.mxu0 %v9113
        %9719 = vmatpush.bf16.msra.mxu0 %v8969
        %9720 = vmatpush.bf16.msra.mxu0 %v8953
        %9721 = vmatmul.bf16.gmra.mxu0 %v9347
        %v9722 = vpop.f32.mrf.mxu0
        %v9723 = vadd.f32 %v9704, %v9722
        %v9724 = vpop.f32.mrf.mxu0
        %v9725 = vadd.f32 %v9706, %v9724
        %9726 = vmatmul.bf16.gmra.mxu0 %v9350
        %v9727 = vpop.f32.mrf.mxu0
        %v9728 = vadd.f32 %v9709, %v9727
        %v9729 = vpop.f32.mrf.mxu0
        %v9730 = vadd.f32 %v9711, %v9729
        %9731 = vdwg.mxu0
        %9732 = vmatpush.bf16.msra.mxu0 %v8810
        %9733 = vmatpush.bf16.msra.mxu0 %v8794
        %9734 = vmatpush.bf16.msra.mxu0 %v8650
        %9735 = vmatpush.bf16.msra.mxu0 %v8634
        %9736 = vmatpush.bf16.msra.mxu0 %v8490
        %9737 = vmatpush.bf16.msra.mxu0 %v8474
        %9738 = vmatpush.bf16.msra.mxu0 %v8330
        %9739 = vmatpush.bf16.msra.mxu0 %v8314
        %9740 = vmatmul.bf16.gmra.mxu0 %v9340
        %v9741 = vpop.f32.mrf.mxu0
        %v9742 = vadd.f32 0.0, %v9741
        %v9743 = vpop.f32.mrf.mxu0
        %v9744 = vadd.f32 0.0, %v9743
        %9745 = vmatmul.bf16.gmra.mxu0 %v9342
        %v9746 = vpop.f32.mrf.mxu0
        %v9747 = vadd.f32 0.0, %v9746
        %v9748 = vpop.f32.mrf.mxu0
        %v9749 = vadd.f32 0.0, %v9748
        %9750 = vdwg.mxu0
        %9751 = vmatpush.bf16.msra.mxu0 0
        %9752 = vmatpush.bf16.msra.mxu0 0
        %9753 = vmatpush.bf16.msra.mxu0 %v9290
        %9754 = vmatpush.bf16.msra.mxu0 %v9274
        %9755 = vmatpush.bf16.msra.mxu0 %v9130
        %9756 = vmatpush.bf16.msra.mxu0 %v9114
        %9757 = vmatpush.bf16.msra.mxu0 %v8970
        %9758 = vmatpush.bf16.msra.mxu0 %v8954
        %9759 = vmatmul.bf16.gmra.mxu0 %v9347
        %v9760 = vpop.f32.mrf.mxu0
        %v9761 = vadd.f32 %v9742, %v9760
        %v9762 = vpop.f32.mrf.mxu0
        %v9763 = vadd.f32 %v9744, %v9762
        %9764 = vmatmul.bf16.gmra.mxu0 %v9350
        %v9765 = vpop.f32.mrf.mxu0
        %v9766 = vadd.f32 %v9747, %v9765
        %v9767 = vpop.f32.mrf.mxu0
        %v9768 = vadd.f32 %v9749, %v9767
        %9769 = vdwg.mxu0
        %9770 = vmatpush.bf16.msra.mxu0 %v8811
        %9771 = vmatpush.bf16.msra.mxu0 %v8795
        %9772 = vmatpush.bf16.msra.mxu0 %v8651
        %9773 = vmatpush.bf16.msra.mxu0 %v8635
        %9774 = vmatpush.bf16.msra.mxu0 %v8491
        %9775 = vmatpush.bf16.msra.mxu0 %v8475
        %9776 = vmatpush.bf16.msra.mxu0 %v8331
        %9777 = vmatpush.bf16.msra.mxu0 %v8315
        %9778 = vmatmul.bf16.gmra.mxu0 %v9340
        %v9779 = vpop.f32.mrf.mxu0
        %v9780 = vadd.f32 0.0, %v9779
        %v9781 = vpop.f32.mrf.mxu0
        %v9782 = vadd.f32 0.0, %v9781
        %9783 = vmatmul.bf16.gmra.mxu0 %v9342
        %v9784 = vpop.f32.mrf.mxu0
        %v9785 = vadd.f32 0.0, %v9784
        %v9786 = vpop.f32.mrf.mxu0
        %v9787 = vadd.f32 0.0, %v9786
        %9788 = vdwg.mxu0
        %9789 = vmatpush.bf16.msra.mxu0 0
        %9790 = vmatpush.bf16.msra.mxu0 0
        %9791 = vmatpush.bf16.msra.mxu0 %v9291
        %9792 = vmatpush.bf16.msra.mxu0 %v9275
        %9793 = vmatpush.bf16.msra.mxu0 %v9131
        %9794 = vmatpush.bf16.msra.mxu0 %v9115
        %9795 = vmatpush.bf16.msra.mxu0 %v8971
        %9796 = vmatpush.bf16.msra.mxu0 %v8955
        %9797 = vmatmul.bf16.gmra.mxu0 %v9347
        %v9798 = vpop.f32.mrf.mxu0
        %v9799 = vadd.f32 %v9780, %v9798
        %v9800 = vpop.f32.mrf.mxu0
        %v9801 = vadd.f32 %v9782, %v9800
        %9802 = vmatmul.bf16.gmra.mxu0 %v9350
        %v9803 = vpop.f32.mrf.mxu0
        %v9804 = vadd.f32 %v9785, %v9803
        %v9805 = vpop.f32.mrf.mxu0
        %v9806 = vadd.f32 %v9787, %v9805
        %9807 = vdwg.mxu0
        %9808 = vmatpush.bf16.msra.mxu0 %v8812
        %9809 = vmatpush.bf16.msra.mxu0 %v8796
        %9810 = vmatpush.bf16.msra.mxu0 %v8652
        %9811 = vmatpush.bf16.msra.mxu0 %v8636
        %9812 = vmatpush.bf16.msra.mxu0 %v8492
        %9813 = vmatpush.bf16.msra.mxu0 %v8476
        %9814 = vmatpush.bf16.msra.mxu0 %v8332
        %9815 = vmatpush.bf16.msra.mxu0 %v8316
        %9816 = vmatmul.bf16.gmra.mxu0 %v9340
        %v9817 = vpop.f32.mrf.mxu0
        %v9818 = vadd.f32 0.0, %v9817
        %v9819 = vpop.f32.mrf.mxu0
        %v9820 = vadd.f32 0.0, %v9819
        %9821 = vmatmul.bf16.gmra.mxu0 %v9342
        %v9822 = vpop.f32.mrf.mxu0
        %v9823 = vadd.f32 0.0, %v9822
        %v9824 = vpop.f32.mrf.mxu0
        %v9825 = vadd.f32 0.0, %v9824
        %9826 = vdwg.mxu0
        %9827 = vmatpush.bf16.msra.mxu0 0
        %9828 = vmatpush.bf16.msra.mxu0 0
        %9829 = vmatpush.bf16.msra.mxu0 %v9292
        %9830 = vmatpush.bf16.msra.mxu0 %v9276
        %9831 = vmatpush.bf16.msra.mxu0 %v9132
        %9832 = vmatpush.bf16.msra.mxu0 %v9116
        %9833 = vmatpush.bf16.msra.mxu0 %v8972
        %9834 = vmatpush.bf16.msra.mxu0 %v8956
        %9835 = vmatmul.bf16.gmra.mxu0 %v9347
        %v9836 = vpop.f32.mrf.mxu0
        %v9837 = vadd.f32 %v9818, %v9836
        %v9838 = vpop.f32.mrf.mxu0
        %v9839 = vadd.f32 %v9820, %v9838
        %9840 = vmatmul.bf16.gmra.mxu0 %v9350
        %v9841 = vpop.f32.mrf.mxu0
        %v9842 = vadd.f32 %v9823, %v9841
        %v9843 = vpop.f32.mrf.mxu0
        %v9844 = vadd.f32 %v9825, %v9843
        %9845 = vdwg.mxu0
        %9846 = vmatpush.bf16.msra.mxu0 %v8813
        %9847 = vmatpush.bf16.msra.mxu0 %v8797
        %9848 = vmatpush.bf16.msra.mxu0 %v8653
        %9849 = vmatpush.bf16.msra.mxu0 %v8637
        %9850 = vmatpush.bf16.msra.mxu0 %v8493
        %9851 = vmatpush.bf16.msra.mxu0 %v8477
        %9852 = vmatpush.bf16.msra.mxu0 %v8333
        %9853 = vmatpush.bf16.msra.mxu0 %v8317
        %9854 = vmatmul.bf16.gmra.mxu0 %v9340
        %v9855 = vpop.f32.mrf.mxu0
        %v9856 = vadd.f32 0.0, %v9855
        %v9857 = vpop.f32.mrf.mxu0
        %v9858 = vadd.f32 0.0, %v9857
        %9859 = vmatmul.bf16.gmra.mxu0 %v9342
        %v9860 = vpop.f32.mrf.mxu0
        %v9861 = vadd.f32 0.0, %v9860
        %v9862 = vpop.f32.mrf.mxu0
        %v9863 = vadd.f32 0.0, %v9862
        %9864 = vdwg.mxu0
        %9865 = vmatpush.bf16.msra.mxu0 0
        %9866 = vmatpush.bf16.msra.mxu0 0
        %9867 = vmatpush.bf16.msra.mxu0 %v9293
        %9868 = vmatpush.bf16.msra.mxu0 %v9277
        %9869 = vmatpush.bf16.msra.mxu0 %v9133
        %9870 = vmatpush.bf16.msra.mxu0 %v9117
        %9871 = vmatpush.bf16.msra.mxu0 %v8973
        %9872 = vmatpush.bf16.msra.mxu0 %v8957
        %9873 = vmatmul.bf16.gmra.mxu0 %v9347
        %v9874 = vpop.f32.mrf.mxu0
        %v9875 = vadd.f32 %v9856, %v9874
        %v9876 = vpop.f32.mrf.mxu0
        %v9877 = vadd.f32 %v9858, %v9876
        %9878 = vmatmul.bf16.gmra.mxu0 %v9350
        %v9879 = vpop.f32.mrf.mxu0
        %v9880 = vadd.f32 %v9861, %v9879
        %v9881 = vpop.f32.mrf.mxu0
        %v9882 = vadd.f32 %v9863, %v9881
        %9883 = vdwg.mxu0
        %9884 = vmatpush.bf16.msra.mxu0 %v8814
        %9885 = vmatpush.bf16.msra.mxu0 %v8798
        %9886 = vmatpush.bf16.msra.mxu0 %v8654
        %9887 = vmatpush.bf16.msra.mxu0 %v8638
        %9888 = vmatpush.bf16.msra.mxu0 %v8494
        %9889 = vmatpush.bf16.msra.mxu0 %v8478
        %9890 = vmatpush.bf16.msra.mxu0 %v8334
        %9891 = vmatpush.bf16.msra.mxu0 %v8318
        %9892 = vmatmul.bf16.gmra.mxu0 %v9340
        %v9893 = vpop.f32.mrf.mxu0
        %v9894 = vadd.f32 0.0, %v9893
        %v9895 = vpop.f32.mrf.mxu0
        %v9896 = vadd.f32 0.0, %v9895
        %9897 = vmatmul.bf16.gmra.mxu0 %v9342
        %v9898 = vpop.f32.mrf.mxu0
        %v9899 = vadd.f32 0.0, %v9898
        %v9900 = vpop.f32.mrf.mxu0
        %v9901 = vadd.f32 0.0, %v9900
        %9902 = vdwg.mxu0
        %9903 = vmatpush.bf16.msra.mxu0 0
        %9904 = vmatpush.bf16.msra.mxu0 0
        %9905 = vmatpush.bf16.msra.mxu0 %v9294
        %9906 = vmatpush.bf16.msra.mxu0 %v9278
        %9907 = vmatpush.bf16.msra.mxu0 %v9134
        %9908 = vmatpush.bf16.msra.mxu0 %v9118
        %9909 = vmatpush.bf16.msra.mxu0 %v8974
        %9910 = vmatpush.bf16.msra.mxu0 %v8958
        %9911 = vmatmul.bf16.gmra.mxu0 %v9347
        %v9912 = vpop.f32.mrf.mxu0
        %v9913 = vadd.f32 %v9894, %v9912
        %v9914 = vpop.f32.mrf.mxu0
        %v9915 = vadd.f32 %v9896, %v9914
        %9916 = vmatmul.bf16.gmra.mxu0 %v9350
        %v9917 = vpop.f32.mrf.mxu0
        %v9918 = vadd.f32 %v9899, %v9917
        %v9919 = vpop.f32.mrf.mxu0
        %v9920 = vadd.f32 %v9901, %v9919
        %9921 = vdwg.mxu0
        %9922 = vmatpush.bf16.msra.mxu0 %v8815
        %9923 = vmatpush.bf16.msra.mxu0 %v8799
        %9924 = vmatpush.bf16.msra.mxu0 %v8655
        %9925 = vmatpush.bf16.msra.mxu0 %v8639
        %9926 = vmatpush.bf16.msra.mxu0 %v8495
        %9927 = vmatpush.bf16.msra.mxu0 %v8479
        %9928 = vmatpush.bf16.msra.mxu0 %v8335
        %9929 = vmatpush.bf16.msra.mxu0 %v8319
        %9930 = vmatmul.bf16.gmra.mxu0 %v9340
        %v9931 = vpop.f32.mrf.mxu0
        %v9932 = vadd.f32 0.0, %v9931
        %v9933 = vpop.f32.mrf.mxu0
        %v9934 = vadd.f32 0.0, %v9933
        %9935 = vmatmul.bf16.gmra.mxu0 %v9342
        %v9936 = vpop.f32.mrf.mxu0
        %v9937 = vadd.f32 0.0, %v9936
        %v9938 = vpop.f32.mrf.mxu0
        %v9939 = vadd.f32 0.0, %v9938
        %9940 = vdwg.mxu0
        %9941 = vmatpush.bf16.msra.mxu0 0
        %9942 = vmatpush.bf16.msra.mxu0 0
        %9943 = vmatpush.bf16.msra.mxu0 %v9295
        %9944 = vmatpush.bf16.msra.mxu0 %v9279
        %9945 = vmatpush.bf16.msra.mxu0 %v9135
        %9946 = vmatpush.bf16.msra.mxu0 %v9119
        %9947 = vmatpush.bf16.msra.mxu0 %v8975
        %9948 = vmatpush.bf16.msra.mxu0 %v8959
        %9949 = vmatmul.bf16.gmra.mxu0 %v9347
        %v9950 = vpop.f32.mrf.mxu0
        %v9951 = vadd.f32 %v9932, %v9950
        %v9952 = vpop.f32.mrf.mxu0
        %v9953 = vadd.f32 %v9934, %v9952
        %9954 = vmatmul.bf16.gmra.mxu0 %v9350
        %v9955 = vpop.f32.mrf.mxu0
        %v9956 = vadd.f32 %v9937, %v9955
        %v9957 = vpop.f32.mrf.mxu0
        %v9958 = vadd.f32 %v9939, %v9957
        %9959 = vdwg.mxu0
        %v9960 = vmax.f32 %v9381, %v9419
        %9961 = vmax.xlane.f32.xlu0 %v9960
        %v9962 = vpop.xlane.xlu0 %9961
        %v9963 = vmax.f32 %v9383, %v9421
        %9964 = vmax.xlane.f32.xlu0 %v9963
        %v9965 = vpop.xlane.xlu0 %9964
        %v9966 = vmax.f32 %v9386, %v9424
        %9967 = vmax.xlane.f32.xlu0 %v9966
        %v9968 = vpop.xlane.xlu0 %9967
        %v9969 = vmax.f32 %v9388, %v9426
        %9970 = vmax.xlane.f32.xlu0 %v9969
        %v9971 = vpop.xlane.xlu0 %9970
        %v9972 = vmax.f32 %v9457, %v9495
        %9973 = vmax.xlane.f32.xlu0 %v9972
        %v9974 = vpop.xlane.xlu0 %9973
        %v9975 = vmax.f32 %v9459, %v9497
        %9976 = vmax.xlane.f32.xlu0 %v9975
        %v9977 = vpop.xlane.xlu0 %9976
        %v9978 = vmax.f32 %v9462, %v9500
        %9979 = vmax.xlane.f32.xlu0 %v9978
        %v9980 = vpop.xlane.xlu0 %9979
        %v9981 = vmax.f32 %v9464, %v9502
        %9982 = vmax.xlane.f32.xlu0 %v9981
        %v9983 = vpop.xlane.xlu0 %9982
        %v9984 = vmax.f32 %v9533, %v9571
        %9985 = vmax.xlane.f32.xlu0 %v9984
        %v9986 = vpop.xlane.xlu0 %9985
        %v9987 = vmax.f32 %v9535, %v9573
        %9988 = vmax.xlane.f32.xlu0 %v9987
        %v9989 = vpop.xlane.xlu0 %9988
        %v9990 = vmax.f32 %v9538, %v9576
        %9991 = vmax.xlane.f32.xlu0 %v9990
        %v9992 = vpop.xlane.xlu0 %9991
        %v9993 = vmax.f32 %v9540, %v9578
        %9994 = vmax.xlane.f32.xlu0 %v9993
        %v9995 = vpop.xlane.xlu0 %9994
        %v9996 = vmax.f32 %v9609, %v9647
        %9997 = vmax.xlane.f32.xlu0 %v9996
        %v9998 = vpop.xlane.xlu0 %9997
        %v9999 = vmax.f32 %v9611, %v9649
        %10000 = vmax.xlane.f32.xlu0 %v9999
        %v10001 = vpop.xlane.xlu0 %10000
        %v10002 = vmax.f32 %v9614, %v9652
        %10003 = vmax.xlane.f32.xlu0 %v10002
        %v10004 = vpop.xlane.xlu0 %10003
        %v10005 = vmax.f32 %v9616, %v9654
        %10006 = vmax.xlane.f32.xlu0 %v10005
        %v10007 = vpop.xlane.xlu0 %10006
        %v10008 = vmax.f32 %v9685, %v9723
        %10009 = vmax.xlane.f32.xlu0 %v10008
        %v10010 = vpop.xlane.xlu0 %10009
        %v10011 = vmax.f32 %v9687, %v9725
        %10012 = vmax.xlane.f32.xlu0 %v10011
        %v10013 = vpop.xlane.xlu0 %10012
        %v10014 = vmax.f32 %v9690, %v9728
        %10015 = vmax.xlane.f32.xlu0 %v10014
        %v10016 = vpop.xlane.xlu0 %10015
        %v10017 = vmax.f32 %v9692, %v9730
        %10018 = vmax.xlane.f32.xlu0 %v10017
        %v10019 = vpop.xlane.xlu0 %10018
        %v10020 = vmax.f32 %v9761, %v9799
        %10021 = vmax.xlane.f32.xlu0 %v10020
        %v10022 = vpop.xlane.xlu0 %10021
        %v10023 = vmax.f32 %v9763, %v9801
        %10024 = vmax.xlane.f32.xlu0 %v10023
        %v10025 = vpop.xlane.xlu0 %10024
        %v10026 = vmax.f32 %v9766, %v9804
        %10027 = vmax.xlane.f32.xlu0 %v10026
        %v10028 = vpop.xlane.xlu0 %10027
        %v10029 = vmax.f32 %v9768, %v9806
        %10030 = vmax.xlane.f32.xlu0 %v10029
        %v10031 = vpop.xlane.xlu0 %10030
        %v10032 = vmax.f32 %v9837, %v9875
        %10033 = vmax.xlane.f32.xlu0 %v10032
        %v10034 = vpop.xlane.xlu0 %10033
        %v10035 = vmax.f32 %v9839, %v9877
        %10036 = vmax.xlane.f32.xlu0 %v10035
        %v10037 = vpop.xlane.xlu0 %10036
        %v10038 = vmax.f32 %v9842, %v9880
        %10039 = vmax.xlane.f32.xlu0 %v10038
        %v10040 = vpop.xlane.xlu0 %10039
        %v10041 = vmax.f32 %v9844, %v9882
        %10042 = vmax.xlane.f32.xlu0 %v10041
        %v10043 = vpop.xlane.xlu0 %10042
        %v10044 = vmax.f32 %v9913, %v9951
        %10045 = vmax.xlane.f32.xlu0 %v10044
        %v10046 = vpop.xlane.xlu0 %10045
        %v10047 = vmax.f32 %v9915, %v9953
        %10048 = vmax.xlane.f32.xlu0 %v10047
        %v10049 = vpop.xlane.xlu0 %10048
        %v10050 = vmax.f32 %v9918, %v9956
        %10051 = vmax.xlane.f32.xlu0 %v10050
        %v10052 = vpop.xlane.xlu0 %10051
        %v10053 = vmax.f32 %v9920, %v9958
        %10054 = vmax.xlane.f32.xlu0 %v10053
        %v10055 = vpop.xlane.xlu0 %10054
        %v10056 = vsel %vm3172, %v9962, %v9974
        %v10057 = vsel %vm3172, %v9965, %v9977
        %v10058 = vsel %vm3172, %v9968, %v9980
        %v10059 = vsel %vm3172, %v9971, %v9983
        %v10060 = vsel %vm3177, %v10056, %v9986
        %v10061 = vsel %vm3177, %v10057, %v9989
        %v10062 = vsel %vm3177, %v10058, %v9992
        %v10063 = vsel %vm3177, %v10059, %v9995
        %v10064 = vsel %vm3182, %v10060, %v9998
        %v10065 = vsel %vm3182, %v10061, %v10001
        %v10066 = vsel %vm3182, %v10062, %v10004
        %v10067 = vsel %vm3182, %v10063, %v10007
        %v10068 = vsel %vm3187, %v10064, %v10010
        %v10069 = vsel %vm3187, %v10065, %v10013
        %v10070 = vsel %vm3187, %v10066, %v10016
        %v10071 = vsel %vm3187, %v10067, %v10019
        %v10072 = vsel %vm3192, %v10068, %v10022
        %v10073 = vsel %vm3192, %v10069, %v10025
        %v10074 = vsel %vm3192, %v10070, %v10028
        %v10075 = vsel %vm3192, %v10071, %v10031
        %v10076 = vsel %vm3197, %v10072, %v10034
        %v10077 = vsel %vm3197, %v10073, %v10037
        %v10078 = vsel %vm3197, %v10074, %v10040
        %v10079 = vsel %vm3197, %v10075, %v10043
        %v10080 = vsel %vm3202, %v10076, %v10046
        %v10081 = vsel %vm3202, %v10077, %v10049
        %v10082 = vsel %vm3202, %v10078, %v10052
        %v10083 = vsel %vm3202, %v10079, %v10055
        %v10084 = vmax.f32 %v989, %v1018
        %10085 = vmax.xlane.f32.xlu0 %v10084
        %v10086 = vpop.xlane.xlu0 %10085
        %v10087 = vmax.f32 %v992, %v1021
        %10088 = vmax.xlane.f32.xlu0 %v10087
        %v10089 = vpop.xlane.xlu0 %10088
        %v10090 = vmax.f32 %v995, %v1024
        %10091 = vmax.xlane.f32.xlu0 %v10090
        %v10092 = vpop.xlane.xlu0 %10091
        %v10093 = vmax.f32 %v998, %v1027
        %10094 = vmax.xlane.f32.xlu0 %v10093
        %v10095 = vpop.xlane.xlu0 %10094
        %v10096 = vmax.f32 %v1047, %v1076
        %10097 = vmax.xlane.f32.xlu0 %v10096
        %v10098 = vpop.xlane.xlu0 %10097
        %v10099 = vmax.f32 %v1050, %v1079
        %10100 = vmax.xlane.f32.xlu0 %v10099
        %v10101 = vpop.xlane.xlu0 %10100
        %v10102 = vmax.f32 %v1053, %v1082
        %10103 = vmax.xlane.f32.xlu0 %v10102
        %v10104 = vpop.xlane.xlu0 %10103
        %v10105 = vmax.f32 %v1056, %v1085
        %10106 = vmax.xlane.f32.xlu0 %v10105
        %v10107 = vpop.xlane.xlu0 %10106
        %v10108 = vmax.f32 %v1105, %v1134
        %10109 = vmax.xlane.f32.xlu0 %v10108
        %v10110 = vpop.xlane.xlu0 %10109
        %v10111 = vmax.f32 %v1108, %v1137
        %10112 = vmax.xlane.f32.xlu0 %v10111
        %v10113 = vpop.xlane.xlu0 %10112
        %v10114 = vmax.f32 %v1111, %v1140
        %10115 = vmax.xlane.f32.xlu0 %v10114
        %v10116 = vpop.xlane.xlu0 %10115
        %v10117 = vmax.f32 %v1114, %v1143
        %10118 = vmax.xlane.f32.xlu0 %v10117
        %v10119 = vpop.xlane.xlu0 %10118
        %v10120 = vmax.f32 %v1163, %v1192
        %10121 = vmax.xlane.f32.xlu0 %v10120
        %v10122 = vpop.xlane.xlu0 %10121
        %v10123 = vmax.f32 %v1166, %v1195
        %10124 = vmax.xlane.f32.xlu0 %v10123
        %v10125 = vpop.xlane.xlu0 %10124
        %v10126 = vmax.f32 %v1169, %v1198
        %10127 = vmax.xlane.f32.xlu0 %v10126
        %v10128 = vpop.xlane.xlu0 %10127
        %v10129 = vmax.f32 %v1172, %v1201
        %10130 = vmax.xlane.f32.xlu0 %v10129
        %v10131 = vpop.xlane.xlu0 %10130
        %v10132 = vmax.f32 %v1221, %v1250
        %10133 = vmax.xlane.f32.xlu0 %v10132
        %v10134 = vpop.xlane.xlu0 %10133
        %v10135 = vmax.f32 %v1224, %v1253
        %10136 = vmax.xlane.f32.xlu0 %v10135
        %v10137 = vpop.xlane.xlu0 %10136
        %v10138 = vmax.f32 %v1227, %v1256
        %10139 = vmax.xlane.f32.xlu0 %v10138
        %v10140 = vpop.xlane.xlu0 %10139
        %v10141 = vmax.f32 %v1230, %v1259
        %10142 = vmax.xlane.f32.xlu0 %v10141
        %v10143 = vpop.xlane.xlu0 %10142
        %v10144 = vmax.f32 %v1279, %v1308
        %10145 = vmax.xlane.f32.xlu0 %v10144
        %v10146 = vpop.xlane.xlu0 %10145
        %v10147 = vmax.f32 %v1282, %v1311
        %10148 = vmax.xlane.f32.xlu0 %v10147
        %v10149 = vpop.xlane.xlu0 %10148
        %v10150 = vmax.f32 %v1285, %v1314
        %10151 = vmax.xlane.f32.xlu0 %v10150
        %v10152 = vpop.xlane.xlu0 %10151
        %v10153 = vmax.f32 %v1288, %v1317
        %10154 = vmax.xlane.f32.xlu0 %v10153
        %v10155 = vpop.xlane.xlu0 %10154
        %v10156 = vmax.f32 %v1337, %v1366
        %10157 = vmax.xlane.f32.xlu0 %v10156
        %v10158 = vpop.xlane.xlu0 %10157
        %v10159 = vmax.f32 %v1340, %v1369
        %10160 = vmax.xlane.f32.xlu0 %v10159
        %v10161 = vpop.xlane.xlu0 %10160
        %v10162 = vmax.f32 %v1343, %v1372
        %10163 = vmax.xlane.f32.xlu0 %v10162
        %v10164 = vpop.xlane.xlu0 %10163
        %v10165 = vmax.f32 %v1346, %v1375
        %10166 = vmax.xlane.f32.xlu0 %v10165
        %v10167 = vpop.xlane.xlu0 %10166
        %v10168 = vmax.f32 %v1395, %v1424
        %10169 = vmax.xlane.f32.xlu0 %v10168
        %v10170 = vpop.xlane.xlu0 %10169
        %v10171 = vmax.f32 %v1398, %v1427
        %10172 = vmax.xlane.f32.xlu0 %v10171
        %v10173 = vpop.xlane.xlu0 %10172
        %v10174 = vmax.f32 %v1401, %v1430
        %10175 = vmax.xlane.f32.xlu0 %v10174
        %v10176 = vpop.xlane.xlu0 %10175
        %v10177 = vmax.f32 %v1404, %v1433
        %10178 = vmax.xlane.f32.xlu0 %v10177
        %v10179 = vpop.xlane.xlu0 %10178
        %v10180 = vsel %vm3172, %v10086, %v10098
        %v10181 = vsel %vm3172, %v10089, %v10101
        %v10182 = vsel %vm3172, %v10092, %v10104
        %v10183 = vsel %vm3172, %v10095, %v10107
        %v10184 = vsel %vm3177, %v10180, %v10110
        %v10185 = vsel %vm3177, %v10181, %v10113
        %v10186 = vsel %vm3177, %v10182, %v10116
        %v10187 = vsel %vm3177, %v10183, %v10119
        %v10188 = vsel %vm3182, %v10184, %v10122
        %v10189 = vsel %vm3182, %v10185, %v10125
        %v10190 = vsel %vm3182, %v10186, %v10128
        %v10191 = vsel %vm3182, %v10187, %v10131
        %v10192 = vsel %vm3187, %v10188, %v10134
        %v10193 = vsel %vm3187, %v10189, %v10137
        %v10194 = vsel %vm3187, %v10190, %v10140
        %v10195 = vsel %vm3187, %v10191, %v10143
        %v10196 = vsel %vm3192, %v10192, %v10146
        %v10197 = vsel %vm3192, %v10193, %v10149
        %v10198 = vsel %vm3192, %v10194, %v10152
        %v10199 = vsel %vm3192, %v10195, %v10155
        %v10200 = vsel %vm3197, %v10196, %v10158
        %v10201 = vsel %vm3197, %v10197, %v10161
        %v10202 = vsel %vm3197, %v10198, %v10164
        %v10203 = vsel %vm3197, %v10199, %v10167
        %v10204 = vsel %vm3202, %v10200, %v10170
        %v10205 = vsel %vm3202, %v10201, %v10173
        %v10206 = vsel %vm3202, %v10202, %v10176
        %v10207 = vsel %vm3202, %v10203, %v10179
        %v10208 = vld [vmem:[%s7] sm:$0xff]
        %v10209 = vld [vmem:[%s7 + $0x8] sm:$0xff]
        %v10210 = vld [vmem:[%s7 + $0x10] sm:$0xff]
        %v10211 = vld [vmem:[%s7 + $0x18] sm:$0xff]
        %v10212 = vld [vmem:[%s7 + $0x20] sm:$0xff]
        %v10213 = vld [vmem:[%s7 + $0x28] sm:$0xff]
        %v10214 = vld [vmem:[%s7 + $0x30] sm:$0xff]
        %v10215 = vld [vmem:[%s7 + $0x38] sm:$0xff]
        %v10216 = vld [vmem:[%s7 + $0x40] sm:$0xff]
        %v10217 = vld [vmem:[%s7 + $0x48] sm:$0xff]
        %v10218 = vld [vmem:[%s7 + $0x50] sm:$0xff]
        %v10219 = vld [vmem:[%s7 + $0x58] sm:$0xff]
        %v10220 = vld [vmem:[%s7 + $0x60] sm:$0xff]
        %v10221 = vld [vmem:[%s7 + $0x68] sm:$0xff]
        %v10222 = vld [vmem:[%s7 + $0x70] sm:$0xff]
        %v10223 = vld [vmem:[%s7 + $0x78] sm:$0xff]
        %v10224 = vld [vmem:[%s8] sm:$0x1]
        %v10226 = vperm.slane %v10224, 0
        %10228 = vxpose.xlu0.b32.start [1/16] %v3203, 128
        %10229 = vxpose.xlu0.b32.cont [2/16] %v3204, 128
        %10230 = vxpose.xlu0.b32.cont [3/16] %v3205, 128
        %10231 = vxpose.xlu0.b32.cont [4/16] %v3206, 128
        %10232 = vxpose.xlu0.b32.cont [5/16] %v6194, 128
        %10233 = vxpose.xlu0.b32.cont [6/16] %v6195, 128
        %10234 = vxpose.xlu0.b32.cont [7/16] %v6196, 128
        %10235 = vxpose.xlu0.b32.cont [8/16] %v6197, 128
        %10236 = vxpose.xlu0.b32.cont [9/16] %v10080, 128
        %10237 = vxpose.xlu0.b32.cont [10/16] %v10081, 128
        %10238 = vxpose.xlu0.b32.cont [11/16] %v10082, 128
        %10239 = vxpose.xlu0.b32.cont [12/16] %v10083, 128
        %10240 = vxpose.xlu0.b32.cont [13/16] %v10204, 128
        %10241 = vxpose.xlu0.b32.cont [14/16] %v10205, 128
        %10242 = vxpose.xlu0.b32.cont [15/16] %v10206, 128
        %10243 = vxpose.xlu0.b32.end [16/16] %v10207, 128
        %v10244 = vpop.trf.xlu0
        %v10245 = vpop.trf.xlu0
        %v10246 = vpop.trf.xlu0
        %v10247 = vpop.trf.xlu0
        %v10248 = vpop.trf.xlu0
        %v10249 = vpop.trf.xlu0
        %v10250 = vpop.trf.xlu0
        %v10251 = vpop.trf.xlu0
        %v10252 = vpop.trf.xlu0
        %v10253 = vpop.trf.xlu0
        %v10254 = vpop.trf.xlu0
        %v10255 = vpop.trf.xlu0
        %v10256 = vpop.trf.xlu0
        %v10257 = vpop.trf.xlu0
        %v10258 = vpop.trf.xlu0
        %v10259 = vpop.trf.xlu0
        %10260 = vmatpush.msra.mxu0 %v10223
        %10261 = vmatpush.msra.mxu0 %v10222
        %10262 = vmatpush.msra.mxu0 %v10221
        %10263 = vmatpush.msra.mxu0 %v10220
        %10264 = vmatpush.msra.mxu0 %v10219
        %10265 = vmatpush.msra.mxu0 %v10218
        %10266 = vmatpush.msra.mxu0 %v10217
        %10267 = vmatpush.msra.mxu0 %v10216
        %10268 = vmatpush.msra.mxu0 %v10215
        %10269 = vmatpush.msra.mxu0 %v10214
        %10270 = vmatpush.msra.mxu0 %v10213
        %10271 = vmatpush.msra.mxu0 %v10212
        %10272 = vmatpush.msra.mxu0 %v10211
        %10273 = vmatpush.msra.mxu0 %v10210
        %10274 = vmatpush.msra.mxu0 %v10209
        %10275 = vmatpush.msra.mxu0 %v10208
        %10276 = vmatmul.f32.gmra.mxu0 %v10244
        %v10277 = vpop.f32.mrf.mxu0
        %v10278 = vadd.f32 %v10226, %v10277
        %10279 = vdwg.mxu0
        %10280 = vst [vmem:[%s350] sm:$0xff] %v10278
        %s10281 = sand.u32 %s228, 1
        %s10282 = scalar_lea.sflag [#allocation4], %s10281
        %s10283 = sand.u32 %s228, 1
        %s10284 = smul.addr %s10283, 8
        %s10285 = scalar_lea.vmem [#allocation5], %s10284
        // Predicated region
        $region61: #{tpu_custom_call.1} parent=55 // pred_check
          %p10286 = pneg %p238
        $region62: #{tpu_custom_call.1} parent=55 // pred_check_branch
          %10288 = sbr.rel (%p10286) target = $region64
        $region63: #{tpu_custom_call.1} parent=55 // pred_region
          %10290 = vsyncadd %s10282, 0
          %s10291 = smul.addr %s26, 8
          %s10292 = scalar_lea.hbm %s9, %s10291
          %s10294 = sshll.u32 %s10285, 4
          %s10295 = int_to_ptr.vmem [resolvable:$true] %s10294
          %s10296 = sshll.u32 %s10292, 4
          %s10297 = int_to_ptr.hbm [resolvable:$true] %s10296
          %10299 = dma.vmem_to_hbm [thread:$0]  %s10295, 128, %s10297, %s10282
        $region64: #{tpu_custom_call.1} parent=55 // pred_fallthru
          _
      $region56: #{tpu_custom_call.1} parent=5 // pred_fallthru
        _
      %p10300 = scmp.le.s32.totalorder 2, %s21
      // Predicated region
      $region65: #{tpu_custom_call.1} parent=5 // pred_check
        %p10301 = pneg %p10300
      $region66: #{tpu_custom_call.1} parent=5 // pred_check_branch
        %10303 = sbr.rel (%p10301) target = $region68
      $region67: #{tpu_custom_call.1} parent=5 // pred_region
        %s10304 = ssub.s32 %s21, 2
        // Predicated region
        $region69: #{tpu_custom_call.1} parent=67 // pred_check
          %p10305 = pneg %p244
        $region70: #{tpu_custom_call.1} parent=67 // pred_check_branch
          %10307 = sbr.rel (%p10305) target = $region72
        $region71: #{tpu_custom_call.1} parent=67 // pred_region
          %s10308 = sand.u32 %s229, 1
          %s10309 = scalar_lea.sflag [#allocation4], %s10308
          %s10310 = sand.u32 %s229, 1
          %s10311 = smul.addr %s10310, 8
          %s10312 = scalar_lea.vmem [#allocation5], %s10311
          %10314 = dma.done %s10309, 128
        $region72: #{tpu_custom_call.1} parent=67 // pred_fallthru
          _
      $region68: #{tpu_custom_call.1} parent=5 // pred_fallthru
        _
    $region6: #{tpu_custom_call.1} parent=1 // loop_footer
      %s25 = sadd.s32 1, %s21
    $region7: #{tpu_custom_call.1} parent=1 // loop_footer_branch
      %20 = sbr.rel target = $region3
    $region8: #{tpu_custom_call.1} parent=1 // loop_exit
      _
    %10315 = vsyncpa [#allocation3], 1
    %s10316 = scalar_lea.sflag [#allocation3], 1
    %10317 = vsyncpa %s10316, 1
    %10318 = vsyncpa [#allocation4], 1
    %s10319 = scalar_lea.sflag [#allocation4], 1
    %10320 = vsyncpa %s10319, 1

</llo_original>
